<compile_context>
chip_gen: v5e
topology: v5e:2x2
jax: 0.10.0
libtpu: 0.0.40
codegen_flags: <defaults>
</compile_context>

<pallas_src>
import numpy as np
import jax
import jax.numpy as jnp
from jax import lax
from jax.experimental import pallas as pl
from jax.experimental.pallas import tpu as pltpu


# --------------------------- Pallas kernel ----------------------------------

def _ndvi_kernel(x_ref, w1t_ref, b1t_ref, w2b_ref, b2t_ref, w3t_ref, b3_ref,
                 out_ref):
    """Fused conv(9x9)->ReLU->conv(1x1)->ReLU->conv(5x5), whole batch resident.

    Block shapes (single grid step, everything in VMEM):
      x_ref   : (B, H, W*Cin)        images; W and Cin merged on the lane axis
      w1t_ref : (K1, W*Cin, W1*C1)   conv1 Toeplitz slabs (one per ky)
      b1t_ref : (1, W1*C1)           conv1 bias tiled over W1
      w2b_ref : (G*C1, G*C2)         conv2 (1x1) block-diag over G=4 columns
      b2t_ref : (1, G*C2)            conv2 bias tiled over G
      w3t_ref : (K3, W1*C2, W3)      conv3 Toeplitz slabs (one per ky)
      b3_ref  : (1,) in SMEM         conv3 scalar bias
      out_ref : (B, H3, W3)
    """
    B, H, _ = x_ref.shape
    K1, _, N1 = w1t_ref.shape                       # N1 = W1*C1
    K3, _, _ = w3t_ref.shape
    cin_chunk, _ = w2b_ref.shape                    # 256-lane input chunks
    n_chunks = N1 // cin_chunk
    H1 = H - K1 + 1
    H3 = H1 - K3 + 1

    w2b = w2b_ref[...]
    b1t = b1t_ref[...]
    b2t = b2t_ref[...]
    b3 = b3_ref[0]

    for b in range(B):                              # static loop, B is tiny
        x = x_ref[b]                                # (H, W*Cin)

        # ---- Conv1 (9x9 valid, 4->64): kx and cin folded into the
        # contraction; only the ky offset remains as 9 wide MXU matmuls.
        acc1 = jnp.dot(x[0:H1, :], w1t_ref[0],
                       preferred_element_type=jnp.float32)
        for ky in range(1, K1):
            acc1 = acc1 + jnp.dot(x[ky:ky + H1, :], w1t_ref[ky],
                                  preferred_element_type=jnp.float32)
        a1 = jnp.maximum(acc1 + b1t, 0.0)           # (H1, W1*64), lane-dense

        # ---- Conv2 (1x1, 64->32): small block-diagonal weight applied to
        # 128-aligned lane chunks (identical math to the full W1-block-diag,
        # 16x less weight).  Chunk c covers output columns 4c..4c+3.
        chunks = []
        for c in range(n_chunks):
            z = jnp.dot(a1[:, c * cin_chunk:(c + 1) * cin_chunk], w2b,
                        preferred_element_type=jnp.float32)
            chunks.append(jnp.maximum(z + b2t, 0.0))
        a2 = jnp.concatenate(chunks, axis=1)        # (H1, W1*32)

        # ---- Conv3 (5x5 valid, 32->1): Toeplitz-folded; 5 matmuls.
        acc3 = jnp.dot(a2[0:H3, :], w3t_ref[0],
                       preferred_element_type=jnp.float32)
        for ky in range(1, K3):
            acc3 = acc3 + jnp.dot(a2[ky:ky + H3, :], w3t_ref[ky],
                                  preferred_element_type=jnp.float32)
        out_ref[b] = (acc3 + b3).astype(out_ref.dtype)


# ------------------- one-time host-side weight folding ----------------------

def _toeplitz_weight_np(w_hwio, in_w):
    """(K, K, Cin, Cout) HWIO conv weight -> (K, in_w*Cin, out_w*Cout) slabs.

    T[ky, (x+kx)*Cin + c, x*Cout + o] = w[ky, kx, c, o]; zeros elsewhere.
    A 'valid' conv then becomes  sum_ky  band(ky) @ T[ky].
    """
    K, K2, Cin, Cout = w_hwio.shape
    assert K == K2
    out_w = in_w - K + 1
    w_flat = w_hwio.reshape(K, K * Cin, Cout)
    t = np.zeros((K, in_w * Cin, out_w * Cout), w_hwio.dtype)
    for x in range(out_w):
        t[:, x * Cin:(x + K) * Cin, x * Cout:(x + 1) * Cout] = w_flat
    return t


def fold_params(params, H, W, group=4):
    """One-time restructuring of the conv weights (host-side numpy, no XLA)."""
    w1, b1, w2, b2, w3, b3 = (np.asarray(p, np.float32) for p in params)
    K1, _, Cin, C1 = w1.shape                       # (9, 9, 4, 64)
    K3, _, C2, C3 = w3.shape                        # (5, 5, 32, 1)
    W1 = W - K1 + 1
    assert W1 % group == 0, "conv2 chunking requires group | W1"

    w1t = _toeplitz_weight_np(w1, W)                               # (K1, W*Cin, W1*C1)
    w2b = np.kron(np.eye(group, dtype=np.float32),
                  w2.reshape(C1, C2))                              # (G*C1, G*C2)
    w3t = _toeplitz_weight_np(w3, W1)                              # (K3, W1*C2, W3)
    b1t = np.tile(b1, W1).reshape(1, W1 * C1)
    b2t = np.tile(b2, group).reshape(1, group * C2)
    b3s = b3.reshape(1)
    return tuple(jnp.asarray(a) for a in (w1t, b1t, w2b, b2t, w3t, b3s))


# ------------------------------ forward -------------------------------------

def ndvi_model_net(x_nchw, folded):
    """x_nchw: (B, 4, H, W) float32.  Returns (B, 1, H-12, W-12) float32."""
    w1t, b1t, w2b, b2t, w3t, b3s = folded
    B, Cin, H, W = x_nchw.shape
    K1, K3 = w1t.shape[0], w3t.shape[0]
    H1, W1 = H - K1 + 1, W - K1 + 1
    H3, W3 = H1 - K3 + 1, w3t.shape[2]
    C1 = w1t.shape[2] // W1
    C2 = w3t.shape[1] // W1

    # Only per-call prep: NCHW -> (B, H, W*Cin); W and Cin share the lane axis.
    x2 = jnp.transpose(x_nchw, (0, 2, 3, 1)).reshape(B, H, W * Cin)

    # Honest conv FLOPs (not counting the structural zeros of the fold).
    flops = 2 * B * (H1 * W1 * C1 * (K1 * K1 * Cin)
                     + H1 * W1 * C2 * C1
                     + H3 * W3 * (K3 * K3 * C2))
    bytes_accessed = 4 * (x2.size + sum(int(a.size) for a in folded)
                          + B * H3 * W3)

    out = pl.pallas_call(
        _ndvi_kernel,
        out_shape=jax.ShapeDtypeStruct((B, H3, W3), jnp.float32),
        grid_spec=pltpu.PrefetchScalarGridSpec(
            num_scalar_prefetch=0,
            grid=(1,),                               # single step: one weight
            in_specs=[                               # fetch, no step overhead
                pl.BlockSpec((B, H, W * Cin), lambda i: (0, 0, 0)),
                pl.BlockSpec(w1t.shape, lambda i: (0, 0, 0)),
                pl.BlockSpec(b1t.shape, lambda i: (0, 0)),
                pl.BlockSpec(w2b.shape, lambda i: (0, 0)),
                pl.BlockSpec(b2t.shape, lambda i: (0, 0)),
                pl.BlockSpec(w3t.shape, lambda i: (0, 0, 0)),
                pl.BlockSpec(memory_space=pltpu.MemorySpace.SMEM),  # scalar b3
            ],
            out_specs=pl.BlockSpec((B, H3, W3), lambda i: (0, 0, 0)),
        ),
        compiler_params=pltpu.CompilerParams(
            dimension_semantics=("arbitrary",),
            vmem_limit_bytes=16 * 1024 * 1024,       # ~10 MiB actually needed
        ),
        cost_estimate=pl.CostEstimate(
            flops=flops, transcendentals=0, bytes_accessed=bytes_accessed),
    )(x2, w1t, b1t, w2b, b2t, w3t, b3s)

    return out.reshape(B, 1, H3, W3)                 # back to NCHW


# ---------------------------- reference / init -------------------------------

def _reference(x_nchw, params):
    """Plain-JAX reference (lax conv) mirroring the PyTorch forward."""
    w1, b1, w2, b2, w3, b3 = params
    dn = lax.conv_dimension_numbers(x_nchw.shape, (1, 1, 1, 1),
                                    ("NCHW", "OIHW", "NCHW"))

    def conv(x, w_hwio, b):
        w_oihw = jnp.transpose(w_hwio, (3, 2, 0, 1))
        y = lax.conv_general_dilated(x, w_oihw, (1, 1), "VALID",
                                     dimension_numbers=dn)
        return y + b.reshape(1, -1, 1, 1)

    y = jax.nn.relu(conv(x_nchw, w1, b1))
    y = jax.nn.relu(conv(y, w2, b2))
    return conv(y, w3, b3)


def init_params(key):
    """Deterministic synthetic init (shapes match the nn.Conv2d layers, HWIO)."""
    ks = jax.random.split(key, 6)

    def uni(k, shape, fan_in):
        bound = 1.0 / jnp.sqrt(float(fan_in))
        return jax.random.uniform(k, shape, jnp.float32, -bound, bound)

    w1 = uni(ks[0], (9, 9, 4, 64), 4 * 9 * 9)
    b1 = uni(ks[1], (64,), 4 * 9 * 9)
    w2 = uni(ks[2], (1, 1, 64, 32), 64 * 1 * 1)
    b2 = uni(ks[3], (32,), 64 * 1 * 1)
    w3 = uni(ks[4], (5, 5, 32, 1), 32 * 5 * 5)
    b3 = uni(ks[5], (1,), 32 * 5 * 5)
    return (w1, b1, w2, b2, w3, b3)


if __name__ == "__main__":
    key = jax.random.PRNGKey(0)
    k_x, k_p = jax.random.split(key)

    B, C, H, W = 2, 4, 24, 24     # output spatial = 12x12
    x = jax.random.normal(k_x, (B, C, H, W), jnp.float32)
    params = init_params(k_p)

    folded = fold_params(params, H, W)     # one-time, host-side (cached weights)
    fwd = jax.jit(ndvi_model_net)          # per-call path: transpose + kernel

    out = jax.block_until_ready(fwd(x, folded))
    ref = jax.block_until_ready(_reference(x, params))

    assert out.shape == (B, 1, H - 12, W - 12), out.shape
    assert jnp.allclose(out, ref, atol=1e-4, rtol=1e-4), (
        float(jnp.max(jnp.abs(out - ref))))
    print("KERNEL_OK")
</pallas_src>

<mosaic_0001>
module attributes {stable_mosaic.version = 11 : i64} {
  func.func @_ndvi_kernel(%arg0: i32, %arg1: memref<2x24x96xf32, #tpu.memory_space<vmem>>, %arg2: memref<9x96x1024xf32, #tpu.memory_space<vmem>>, %arg3: memref<1x1024xf32, #tpu.memory_space<vmem>>, %arg4: memref<256x128xf32, #tpu.memory_space<vmem>>, %arg5: memref<1x128xf32, #tpu.memory_space<vmem>>, %arg6: memref<5x512x12xf32, #tpu.memory_space<vmem>>, %arg7: memref<1xf32, #tpu.memory_space<smem>>, %arg8: memref<2x12x12xf32, #tpu.memory_space<vmem>>) attributes {dimension_semantics = [#tpu.dimension_semantics<arbitrary>], iteration_bounds = array<i64: 1>, scalar_prefetch = 0 : i64, scratch_operands = 0 : i64, tpu.core_type = #tpu.core_type<tc>, window_params = [{pipeline_mode = #tpu.pipeline_mode<synchronous>, transform_indices = @transform_0, window_bounds = array<i64: 2, 24, 96>}, {pipeline_mode = #tpu.pipeline_mode<synchronous>, transform_indices = @transform_1, window_bounds = array<i64: 9, 96, 1024>}, {pipeline_mode = #tpu.pipeline_mode<synchronous>, transform_indices = @transform_2, window_bounds = array<i64: 1, 1024>}, {pipeline_mode = #tpu.pipeline_mode<synchronous>, transform_indices = @transform_3, window_bounds = array<i64: 256, 128>}, {pipeline_mode = #tpu.pipeline_mode<synchronous>, transform_indices = @transform_4, window_bounds = array<i64: 1, 128>}, {pipeline_mode = #tpu.pipeline_mode<synchronous>, transform_indices = @transform_5, window_bounds = array<i64: 5, 512, 12>}, {transform_indices = @transform_6, window_bounds = array<i64: 1>}, {pipeline_mode = #tpu.pipeline_mode<synchronous>, transform_indices = @transform_7, window_bounds = array<i64: 2, 12, 12>}]} {
    %c0 = arith.constant 0 : index
    %c0_0 = arith.constant 0 : index
    %0 = vector.load %arg4[%c0, %c0_0] : memref<256x128xf32, #tpu.memory_space<vmem>>, vector<256x128xf32>
    %c0_1 = arith.constant 0 : index
    %c0_2 = arith.constant 0 : index
    %1 = vector.load %arg3[%c0_1, %c0_2] : memref<1x1024xf32, #tpu.memory_space<vmem>>, vector<1x1024xf32>
    %c0_3 = arith.constant 0 : index
    %c0_4 = arith.constant 0 : index
    %2 = vector.load %arg5[%c0_3, %c0_4] : memref<1x128xf32, #tpu.memory_space<vmem>>, vector<1x128xf32>
    %c0_5 = arith.constant 0 : index
    %3 = memref.load %arg7[%c0_5] : memref<1xf32, #tpu.memory_space<smem>>
    %c0_6 = arith.constant 0 : index
    %c0_7 = arith.constant 0 : index
    %c0_8 = arith.constant 0 : index
    %4 = vector.load %arg1[%c0_6, %c0_7, %c0_8] : memref<2x24x96xf32, #tpu.memory_space<vmem>>, vector<1x24x96xf32>
    %5 = vector.shape_cast %4 : vector<1x24x96xf32> to vector<24x96xf32>
    %6 = vector.extract_strided_slice %5 {offsets = [0, 0], sizes = [16, 96], strides = [1, 1]} : vector<24x96xf32> to vector<16x96xf32>
    %c0_9 = arith.constant 0 : index
    %c0_10 = arith.constant 0 : index
    %c0_11 = arith.constant 0 : index
    %7 = vector.load %arg2[%c0_9, %c0_10, %c0_11] : memref<9x96x1024xf32, #tpu.memory_space<vmem>>, vector<1x96x1024xf32>
    %8 = vector.shape_cast %7 : vector<1x96x1024xf32> to vector<96x1024xf32>
    %cst = arith.constant dense<0.000000e+00> : vector<16x1024xf32>
    %9 = tpu.matmul %6, %8, %cst {dimension_numbers = #tpu.dot_dimension_numbers<[1], [0], [0], [1], [0, 0, 1, 1], [], []>} : vector<16x96xf32>, vector<96x1024xf32>, vector<16x1024xf32> -> vector<16x1024xf32>
    %10 = vector.extract_strided_slice %5 {offsets = [1, 0], sizes = [16, 96], strides = [1, 1]} : vector<24x96xf32> to vector<16x96xf32>
    %c1 = arith.constant 1 : index
    %c0_12 = arith.constant 0 : index
    %c0_13 = arith.constant 0 : index
    %11 = vector.load %arg2[%c1, %c0_12, %c0_13] : memref<9x96x1024xf32, #tpu.memory_space<vmem>>, vector<1x96x1024xf32>
    %12 = vector.shape_cast %11 : vector<1x96x1024xf32> to vector<96x1024xf32>
    %cst_14 = arith.constant dense<0.000000e+00> : vector<16x1024xf32>
    %13 = tpu.matmul %10, %12, %cst_14 {dimension_numbers = #tpu.dot_dimension_numbers<[1], [0], [0], [1], [0, 0, 1, 1], [], []>} : vector<16x96xf32>, vector<96x1024xf32>, vector<16x1024xf32> -> vector<16x1024xf32>
    %14 = arith.addf %9, %13 : vector<16x1024xf32>
    %15 = vector.extract_strided_slice %5 {offsets = [2, 0], sizes = [16, 96], strides = [1, 1]} : vector<24x96xf32> to vector<16x96xf32>
    %c2 = arith.constant 2 : index
    %c0_15 = arith.constant 0 : index
    %c0_16 = arith.constant 0 : index
    %16 = vector.load %arg2[%c2, %c0_15, %c0_16] : memref<9x96x1024xf32, #tpu.memory_space<vmem>>, vector<1x96x1024xf32>
    %17 = vector.shape_cast %16 : vector<1x96x1024xf32> to vector<96x1024xf32>
    %cst_17 = arith.constant dense<0.000000e+00> : vector<16x1024xf32>
    %18 = tpu.matmul %15, %17, %cst_17 {dimension_numbers = #tpu.dot_dimension_numbers<[1], [0], [0], [1], [0, 0, 1, 1], [], []>} : vector<16x96xf32>, vector<96x1024xf32>, vector<16x1024xf32> -> vector<16x1024xf32>
    %19 = arith.addf %14, %18 : vector<16x1024xf32>
    %20 = vector.extract_strided_slice %5 {offsets = [3, 0], sizes = [16, 96], strides = [1, 1]} : vector<24x96xf32> to vector<16x96xf32>
    %c3 = arith.constant 3 : index
    %c0_18 = arith.constant 0 : index
    %c0_19 = arith.constant 0 : index
    %21 = vector.load %arg2[%c3, %c0_18, %c0_19] : memref<9x96x1024xf32, #tpu.memory_space<vmem>>, vector<1x96x1024xf32>
    %22 = vector.shape_cast %21 : vector<1x96x1024xf32> to vector<96x1024xf32>
    %cst_20 = arith.constant dense<0.000000e+00> : vector<16x1024xf32>
    %23 = tpu.matmul %20, %22, %cst_20 {dimension_numbers = #tpu.dot_dimension_numbers<[1], [0], [0], [1], [0, 0, 1, 1], [], []>} : vector<16x96xf32>, vector<96x1024xf32>, vector<16x1024xf32> -> vector<16x1024xf32>
    %24 = arith.addf %19, %23 : vector<16x1024xf32>
    %25 = vector.extract_strided_slice %5 {offsets = [4, 0], sizes = [16, 96], strides = [1, 1]} : vector<24x96xf32> to vector<16x96xf32>
    %c4 = arith.constant 4 : index
    %c0_21 = arith.constant 0 : index
    %c0_22 = arith.constant 0 : index
    %26 = vector.load %arg2[%c4, %c0_21, %c0_22] : memref<9x96x1024xf32, #tpu.memory_space<vmem>>, vector<1x96x1024xf32>
    %27 = vector.shape_cast %26 : vector<1x96x1024xf32> to vector<96x1024xf32>
    %cst_23 = arith.constant dense<0.000000e+00> : vector<16x1024xf32>
    %28 = tpu.matmul %25, %27, %cst_23 {dimension_numbers = #tpu.dot_dimension_numbers<[1], [0], [0], [1], [0, 0, 1, 1], [], []>} : vector<16x96xf32>, vector<96x1024xf32>, vector<16x1024xf32> -> vector<16x1024xf32>
    %29 = arith.addf %24, %28 : vector<16x1024xf32>
    %30 = vector.extract_strided_slice %5 {offsets = [5, 0], sizes = [16, 96], strides = [1, 1]} : vector<24x96xf32> to vector<16x96xf32>
    %c5 = arith.constant 5 : index
    %c0_24 = arith.constant 0 : index
    %c0_25 = arith.constant 0 : index
    %31 = vector.load %arg2[%c5, %c0_24, %c0_25] : memref<9x96x1024xf32, #tpu.memory_space<vmem>>, vector<1x96x1024xf32>
    %32 = vector.shape_cast %31 : vector<1x96x1024xf32> to vector<96x1024xf32>
    %cst_26 = arith.constant dense<0.000000e+00> : vector<16x1024xf32>
    %33 = tpu.matmul %30, %32, %cst_26 {dimension_numbers = #tpu.dot_dimension_numbers<[1], [0], [0], [1], [0, 0, 1, 1], [], []>} : vector<16x96xf32>, vector<96x1024xf32>, vector<16x1024xf32> -> vector<16x1024xf32>
    %34 = arith.addf %29, %33 : vector<16x1024xf32>
    %35 = vector.extract_strided_slice %5 {offsets = [6, 0], sizes = [16, 96], strides = [1, 1]} : vector<24x96xf32> to vector<16x96xf32>
    %c6 = arith.constant 6 : index
    %c0_27 = arith.constant 0 : index
    %c0_28 = arith.constant 0 : index
    %36 = vector.load %arg2[%c6, %c0_27, %c0_28] : memref<9x96x1024xf32, #tpu.memory_space<vmem>>, vector<1x96x1024xf32>
    %37 = vector.shape_cast %36 : vector<1x96x1024xf32> to vector<96x1024xf32>
    %cst_29 = arith.constant dense<0.000000e+00> : vector<16x1024xf32>
    %38 = tpu.matmul %35, %37, %cst_29 {dimension_numbers = #tpu.dot_dimension_numbers<[1], [0], [0], [1], [0, 0, 1, 1], [], []>} : vector<16x96xf32>, vector<96x1024xf32>, vector<16x1024xf32> -> vector<16x1024xf32>
    %39 = arith.addf %34, %38 : vector<16x1024xf32>
    %40 = vector.extract_strided_slice %5 {offsets = [7, 0], sizes = [16, 96], strides = [1, 1]} : vector<24x96xf32> to vector<16x96xf32>
    %c7 = arith.constant 7 : index
    %c0_30 = arith.constant 0 : index
    %c0_31 = arith.constant 0 : index
    %41 = vector.load %arg2[%c7, %c0_30, %c0_31] : memref<9x96x1024xf32, #tpu.memory_space<vmem>>, vector<1x96x1024xf32>
    %42 = vector.shape_cast %41 : vector<1x96x1024xf32> to vector<96x1024xf32>
    %cst_32 = arith.constant dense<0.000000e+00> : vector<16x1024xf32>
    %43 = tpu.matmul %40, %42, %cst_32 {dimension_numbers = #tpu.dot_dimension_numbers<[1], [0], [0], [1], [0, 0, 1, 1], [], []>} : vector<16x96xf32>, vector<96x1024xf32>, vector<16x1024xf32> -> vector<16x1024xf32>
    %44 = arith.addf %39, %43 : vector<16x1024xf32>
    %45 = vector.extract_strided_slice %5 {offsets = [8, 0], sizes = [16, 96], strides = [1, 1]} : vector<24x96xf32> to vector<16x96xf32>
    %c8 = arith.constant 8 : index
    %c0_33 = arith.constant 0 : index
    %c0_34 = arith.constant 0 : index
    %46 = vector.load %arg2[%c8, %c0_33, %c0_34] : memref<9x96x1024xf32, #tpu.memory_space<vmem>>, vector<1x96x1024xf32>
    %47 = vector.shape_cast %46 : vector<1x96x1024xf32> to vector<96x1024xf32>
    %cst_35 = arith.constant dense<0.000000e+00> : vector<16x1024xf32>
    %48 = tpu.matmul %45, %47, %cst_35 {dimension_numbers = #tpu.dot_dimension_numbers<[1], [0], [0], [1], [0, 0, 1, 1], [], []>} : vector<16x96xf32>, vector<96x1024xf32>, vector<16x1024xf32> -> vector<16x1024xf32>
    %49 = arith.addf %44, %48 : vector<16x1024xf32>
    %50 = vector.broadcast %1 : vector<1x1024xf32> to vector<16x1024xf32>
    %51 = arith.addf %49, %50 : vector<16x1024xf32>
    %cst_36 = arith.constant 0.000000e+00 : f32
    %52 = vector.broadcast %cst_36 : f32 to vector<16x1024xf32>
    %53 = arith.maximumf %51, %52 : vector<16x1024xf32>
    %54 = vector.extract_strided_slice %53 {offsets = [0, 0], sizes = [16, 256], strides = [1, 1]} : vector<16x1024xf32> to vector<16x256xf32>
    %cst_37 = arith.constant dense<0.000000e+00> : vector<16x128xf32>
    %55 = tpu.matmul %54, %0, %cst_37 {dimension_numbers = #tpu.dot_dimension_numbers<[1], [0], [0], [1], [0, 0, 1, 1], [], []>} : vector<16x256xf32>, vector<256x128xf32>, vector<16x128xf32> -> vector<16x128xf32>
    %56 = vector.broadcast %2 : vector<1x128xf32> to vector<16x128xf32>
    %57 = arith.addf %55, %56 : vector<16x128xf32>
    %cst_38 = arith.constant 0.000000e+00 : f32
    %58 = vector.broadcast %cst_38 : f32 to vector<16x128xf32>
    %59 = arith.maximumf %57, %58 : vector<16x128xf32>
    %60 = vector.extract_strided_slice %53 {offsets = [0, 256], sizes = [16, 256], strides = [1, 1]} : vector<16x1024xf32> to vector<16x256xf32>
    %cst_39 = arith.constant dense<0.000000e+00> : vector<16x128xf32>
    %61 = tpu.matmul %60, %0, %cst_39 {dimension_numbers = #tpu.dot_dimension_numbers<[1], [0], [0], [1], [0, 0, 1, 1], [], []>} : vector<16x256xf32>, vector<256x128xf32>, vector<16x128xf32> -> vector<16x128xf32>
    %62 = vector.broadcast %2 : vector<1x128xf32> to vector<16x128xf32>
    %63 = arith.addf %61, %62 : vector<16x128xf32>
    %cst_40 = arith.constant 0.000000e+00 : f32
    %64 = vector.broadcast %cst_40 : f32 to vector<16x128xf32>
    %65 = arith.maximumf %63, %64 : vector<16x128xf32>
    %66 = vector.extract_strided_slice %53 {offsets = [0, 512], sizes = [16, 256], strides = [1, 1]} : vector<16x1024xf32> to vector<16x256xf32>
    %cst_41 = arith.constant dense<0.000000e+00> : vector<16x128xf32>
    %67 = tpu.matmul %66, %0, %cst_41 {dimension_numbers = #tpu.dot_dimension_numbers<[1], [0], [0], [1], [0, 0, 1, 1], [], []>} : vector<16x256xf32>, vector<256x128xf32>, vector<16x128xf32> -> vector<16x128xf32>
    %68 = vector.broadcast %2 : vector<1x128xf32> to vector<16x128xf32>
    %69 = arith.addf %67, %68 : vector<16x128xf32>
    %cst_42 = arith.constant 0.000000e+00 : f32
    %70 = vector.broadcast %cst_42 : f32 to vector<16x128xf32>
    %71 = arith.maximumf %69, %70 : vector<16x128xf32>
    %72 = vector.extract_strided_slice %53 {offsets = [0, 768], sizes = [16, 256], strides = [1, 1]} : vector<16x1024xf32> to vector<16x256xf32>
    %cst_43 = arith.constant dense<0.000000e+00> : vector<16x128xf32>
    %73 = tpu.matmul %72, %0, %cst_43 {dimension_numbers = #tpu.dot_dimension_numbers<[1], [0], [0], [1], [0, 0, 1, 1], [], []>} : vector<16x256xf32>, vector<256x128xf32>, vector<16x128xf32> -> vector<16x128xf32>
    %74 = vector.broadcast %2 : vector<1x128xf32> to vector<16x128xf32>
    %75 = arith.addf %73, %74 : vector<16x128xf32>
    %cst_44 = arith.constant 0.000000e+00 : f32
    %76 = vector.broadcast %cst_44 : f32 to vector<16x128xf32>
    %77 = arith.maximumf %75, %76 : vector<16x128xf32>
    %78 = tpu.concatenate %59, %65, %71, %77 in 1 : vector<16x128xf32>, vector<16x128xf32>, vector<16x128xf32>, vector<16x128xf32> -> vector<16x512xf32>
    %79 = vector.extract_strided_slice %78 {offsets = [0, 0], sizes = [12, 512], strides = [1, 1]} : vector<16x512xf32> to vector<12x512xf32>
    %c0_45 = arith.constant 0 : index
    %c0_46 = arith.constant 0 : index
    %c0_47 = arith.constant 0 : index
    %80 = vector.load %arg6[%c0_45, %c0_46, %c0_47] : memref<5x512x12xf32, #tpu.memory_space<vmem>>, vector<1x512x12xf32>
    %81 = vector.shape_cast %80 : vector<1x512x12xf32> to vector<512x12xf32>
    %cst_48 = arith.constant dense<0.000000e+00> : vector<12x12xf32>
    %82 = tpu.matmul %79, %81, %cst_48 {dimension_numbers = #tpu.dot_dimension_numbers<[1], [0], [0], [1], [0, 0, 1, 1], [], []>} : vector<12x512xf32>, vector<512x12xf32>, vector<12x12xf32> -> vector<12x12xf32>
    %83 = vector.extract_strided_slice %78 {offsets = [1, 0], sizes = [12, 512], strides = [1, 1]} : vector<16x512xf32> to vector<12x512xf32>
    %c1_49 = arith.constant 1 : index
    %c0_50 = arith.constant 0 : index
    %c0_51 = arith.constant 0 : index
    %84 = vector.load %arg6[%c1_49, %c0_50, %c0_51] : memref<5x512x12xf32, #tpu.memory_space<vmem>>, vector<1x512x12xf32>
    %85 = vector.shape_cast %84 : vector<1x512x12xf32> to vector<512x12xf32>
    %cst_52 = arith.constant dense<0.000000e+00> : vector<12x12xf32>
    %86 = tpu.matmul %83, %85, %cst_52 {dimension_numbers = #tpu.dot_dimension_numbers<[1], [0], [0], [1], [0, 0, 1, 1], [], []>} : vector<12x512xf32>, vector<512x12xf32>, vector<12x12xf32> -> vector<12x12xf32>
    %87 = arith.addf %82, %86 : vector<12x12xf32>
    %88 = vector.extract_strided_slice %78 {offsets = [2, 0], sizes = [12, 512], strides = [1, 1]} : vector<16x512xf32> to vector<12x512xf32>
    %c2_53 = arith.constant 2 : index
    %c0_54 = arith.constant 0 : index
    %c0_55 = arith.constant 0 : index
    %89 = vector.load %arg6[%c2_53, %c0_54, %c0_55] : memref<5x512x12xf32, #tpu.memory_space<vmem>>, vector<1x512x12xf32>
    %90 = vector.shape_cast %89 : vector<1x512x12xf32> to vector<512x12xf32>
    %cst_56 = arith.constant dense<0.000000e+00> : vector<12x12xf32>
    %91 = tpu.matmul %88, %90, %cst_56 {dimension_numbers = #tpu.dot_dimension_numbers<[1], [0], [0], [1], [0, 0, 1, 1], [], []>} : vector<12x512xf32>, vector<512x12xf32>, vector<12x12xf32> -> vector<12x12xf32>
    %92 = arith.addf %87, %91 : vector<12x12xf32>
    %93 = vector.extract_strided_slice %78 {offsets = [3, 0], sizes = [12, 512], strides = [1, 1]} : vector<16x512xf32> to vector<12x512xf32>
    %c3_57 = arith.constant 3 : index
    %c0_58 = arith.constant 0 : index
    %c0_59 = arith.constant 0 : index
    %94 = vector.load %arg6[%c3_57, %c0_58, %c0_59] : memref<5x512x12xf32, #tpu.memory_space<vmem>>, vector<1x512x12xf32>
    %95 = vector.shape_cast %94 : vector<1x512x12xf32> to vector<512x12xf32>
    %cst_60 = arith.constant dense<0.000000e+00> : vector<12x12xf32>
    %96 = tpu.matmul %93, %95, %cst_60 {dimension_numbers = #tpu.dot_dimension_numbers<[1], [0], [0], [1], [0, 0, 1, 1], [], []>} : vector<12x512xf32>, vector<512x12xf32>, vector<12x12xf32> -> vector<12x12xf32>
    %97 = arith.addf %92, %96 : vector<12x12xf32>
    %98 = vector.extract_strided_slice %78 {offsets = [4, 0], sizes = [12, 512], strides = [1, 1]} : vector<16x512xf32> to vector<12x512xf32>
    %c4_61 = arith.constant 4 : index
    %c0_62 = arith.constant 0 : index
    %c0_63 = arith.constant 0 : index
    %99 = vector.load %arg6[%c4_61, %c0_62, %c0_63] : memref<5x512x12xf32, #tpu.memory_space<vmem>>, vector<1x512x12xf32>
    %100 = vector.shape_cast %99 : vector<1x512x12xf32> to vector<512x12xf32>
    %cst_64 = arith.constant dense<0.000000e+00> : vector<12x12xf32>
    %101 = tpu.matmul %98, %100, %cst_64 {dimension_numbers = #tpu.dot_dimension_numbers<[1], [0], [0], [1], [0, 0, 1, 1], [], []>} : vector<12x512xf32>, vector<512x12xf32>, vector<12x12xf32> -> vector<12x12xf32>
    %102 = arith.addf %97, %101 : vector<12x12xf32>
    %103 = vector.broadcast %3 : f32 to vector<12x12xf32>
    %104 = arith.addf %102, %103 : vector<12x12xf32>
    %c0_65 = arith.constant 0 : index
    %c0_66 = arith.constant 0 : index
    %c0_67 = arith.constant 0 : index
    %105 = vector.load %arg8[%c0_65, %c0_66, %c0_67] : memref<2x12x12xf32, #tpu.memory_space<vmem>>, vector<1x12x12xf32>
    %106 = vector.shape_cast %105 : vector<1x12x12xf32> to vector<12x12xf32>
    %107 = vector.shape_cast %104 : vector<12x12xf32> to vector<1x12x12xf32>
    tpu.vector_store %arg8[%c0_65, %c0_66, %c0_67], %107 {strides = array<i32>} : memref<2x12x12xf32, #tpu.memory_space<vmem>>, vector<1x12x12xf32>,
    %c1_68 = arith.constant 1 : index
    %c0_69 = arith.constant 0 : index
    %c0_70 = arith.constant 0 : index
    %108 = vector.load %arg1[%c1_68, %c0_69, %c0_70] : memref<2x24x96xf32, #tpu.memory_space<vmem>>, vector<1x24x96xf32>
    %109 = vector.shape_cast %108 : vector<1x24x96xf32> to vector<24x96xf32>
    %110 = vector.extract_strided_slice %109 {offsets = [0, 0], sizes = [16, 96], strides = [1, 1]} : vector<24x96xf32> to vector<16x96xf32>
    %c0_71 = arith.constant 0 : index
    %c0_72 = arith.constant 0 : index
    %c0_73 = arith.constant 0 : index
    %111 = vector.load %arg2[%c0_71, %c0_72, %c0_73] : memref<9x96x1024xf32, #tpu.memory_space<vmem>>, vector<1x96x1024xf32>
    %112 = vector.shape_cast %111 : vector<1x96x1024xf32> to vector<96x1024xf32>
    %cst_74 = arith.constant dense<0.000000e+00> : vector<16x1024xf32>
    %113 = tpu.matmul %110, %112, %cst_74 {dimension_numbers = #tpu.dot_dimension_numbers<[1], [0], [0], [1], [0, 0, 1, 1], [], []>} : vector<16x96xf32>, vector<96x1024xf32>, vector<16x1024xf32> -> vector<16x1024xf32>
    %114 = vector.extract_strided_slice %109 {offsets = [1, 0], sizes = [16, 96], strides = [1, 1]} : vector<24x96xf32> to vector<16x96xf32>
    %c1_75 = arith.constant 1 : index
    %c0_76 = arith.constant 0 : index
    %c0_77 = arith.constant 0 : index
    %115 = vector.load %arg2[%c1_75, %c0_76, %c0_77] : memref<9x96x1024xf32, #tpu.memory_space<vmem>>, vector<1x96x1024xf32>
    %116 = vector.shape_cast %115 : vector<1x96x1024xf32> to vector<96x1024xf32>
    %cst_78 = arith.constant dense<0.000000e+00> : vector<16x1024xf32>
    %117 = tpu.matmul %114, %116, %cst_78 {dimension_numbers = #tpu.dot_dimension_numbers<[1], [0], [0], [1], [0, 0, 1, 1], [], []>} : vector<16x96xf32>, vector<96x1024xf32>, vector<16x1024xf32> -> vector<16x1024xf32>
    %118 = arith.addf %113, %117 : vector<16x1024xf32>
    %119 = vector.extract_strided_slice %109 {offsets = [2, 0], sizes = [16, 96], strides = [1, 1]} : vector<24x96xf32> to vector<16x96xf32>
    %c2_79 = arith.constant 2 : index
    %c0_80 = arith.constant 0 : index
    %c0_81 = arith.constant 0 : index
    %120 = vector.load %arg2[%c2_79, %c0_80, %c0_81] : memref<9x96x1024xf32, #tpu.memory_space<vmem>>, vector<1x96x1024xf32>
    %121 = vector.shape_cast %120 : vector<1x96x1024xf32> to vector<96x1024xf32>
    %cst_82 = arith.constant dense<0.000000e+00> : vector<16x1024xf32>
    %122 = tpu.matmul %119, %121, %cst_82 {dimension_numbers = #tpu.dot_dimension_numbers<[1], [0], [0], [1], [0, 0, 1, 1], [], []>} : vector<16x96xf32>, vector<96x1024xf32>, vector<16x1024xf32> -> vector<16x1024xf32>
    %123 = arith.addf %118, %122 : vector<16x1024xf32>
    %124 = vector.extract_strided_slice %109 {offsets = [3, 0], sizes = [16, 96], strides = [1, 1]} : vector<24x96xf32> to vector<16x96xf32>
    %c3_83 = arith.constant 3 : index
    %c0_84 = arith.constant 0 : index
    %c0_85 = arith.constant 0 : index
    %125 = vector.load %arg2[%c3_83, %c0_84, %c0_85] : memref<9x96x1024xf32, #tpu.memory_space<vmem>>, vector<1x96x1024xf32>
    %126 = vector.shape_cast %125 : vector<1x96x1024xf32> to vector<96x1024xf32>
    %cst_86 = arith.constant dense<0.000000e+00> : vector<16x1024xf32>
    %127 = tpu.matmul %124, %126, %cst_86 {dimension_numbers = #tpu.dot_dimension_numbers<[1], [0], [0], [1], [0, 0, 1, 1], [], []>} : vector<16x96xf32>, vector<96x1024xf32>, vector<16x1024xf32> -> vector<16x1024xf32>
    %128 = arith.addf %123, %127 : vector<16x1024xf32>
    %129 = vector.extract_strided_slice %109 {offsets = [4, 0], sizes = [16, 96], strides = [1, 1]} : vector<24x96xf32> to vector<16x96xf32>
    %c4_87 = arith.constant 4 : index
    %c0_88 = arith.constant 0 : index
    %c0_89 = arith.constant 0 : index
    %130 = vector.load %arg2[%c4_87, %c0_88, %c0_89] : memref<9x96x1024xf32, #tpu.memory_space<vmem>>, vector<1x96x1024xf32>
    %131 = vector.shape_cast %130 : vector<1x96x1024xf32> to vector<96x1024xf32>
    %cst_90 = arith.constant dense<0.000000e+00> : vector<16x1024xf32>
    %132 = tpu.matmul %129, %131, %cst_90 {dimension_numbers = #tpu.dot_dimension_numbers<[1], [0], [0], [1], [0, 0, 1, 1], [], []>} : vector<16x96xf32>, vector<96x1024xf32>, vector<16x1024xf32> -> vector<16x1024xf32>
    %133 = arith.addf %128, %132 : vector<16x1024xf32>
    %134 = vector.extract_strided_slice %109 {offsets = [5, 0], sizes = [16, 96], strides = [1, 1]} : vector<24x96xf32> to vector<16x96xf32>
    %c5_91 = arith.constant 5 : index
    %c0_92 = arith.constant 0 : index
    %c0_93 = arith.constant 0 : index
    %135 = vector.load %arg2[%c5_91, %c0_92, %c0_93] : memref<9x96x1024xf32, #tpu.memory_space<vmem>>, vector<1x96x1024xf32>
    %136 = vector.shape_cast %135 : vector<1x96x1024xf32> to vector<96x1024xf32>
    %cst_94 = arith.constant dense<0.000000e+00> : vector<16x1024xf32>
    %137 = tpu.matmul %134, %136, %cst_94 {dimension_numbers = #tpu.dot_dimension_numbers<[1], [0], [0], [1], [0, 0, 1, 1], [], []>} : vector<16x96xf32>, vector<96x1024xf32>, vector<16x1024xf32> -> vector<16x1024xf32>
    %138 = arith.addf %133, %137 : vector<16x1024xf32>
    %139 = vector.extract_strided_slice %109 {offsets = [6, 0], sizes = [16, 96], strides = [1, 1]} : vector<24x96xf32> to vector<16x96xf32>
    %c6_95 = arith.constant 6 : index
    %c0_96 = arith.constant 0 : index
    %c0_97 = arith.constant 0 : index
    %140 = vector.load %arg2[%c6_95, %c0_96, %c0_97] : memref<9x96x1024xf32, #tpu.memory_space<vmem>>, vector<1x96x1024xf32>
    %141 = vector.shape_cast %140 : vector<1x96x1024xf32> to vector<96x1024xf32>
    %cst_98 = arith.constant dense<0.000000e+00> : vector<16x1024xf32>
    %142 = tpu.matmul %139, %141, %cst_98 {dimension_numbers = #tpu.dot_dimension_numbers<[1], [0], [0], [1], [0, 0, 1, 1], [], []>} : vector<16x96xf32>, vector<96x1024xf32>, vector<16x1024xf32> -> vector<16x1024xf32>
    %143 = arith.addf %138, %142 : vector<16x1024xf32>
    %144 = vector.extract_strided_slice %109 {offsets = [7, 0], sizes = [16, 96], strides = [1, 1]} : vector<24x96xf32> to vector<16x96xf32>
    %c7_99 = arith.constant 7 : index
    %c0_100 = arith.constant 0 : index
    %c0_101 = arith.constant 0 : index
    %145 = vector.load %arg2[%c7_99, %c0_100, %c0_101] : memref<9x96x1024xf32, #tpu.memory_space<vmem>>, vector<1x96x1024xf32>
    %146 = vector.shape_cast %145 : vector<1x96x1024xf32> to vector<96x1024xf32>
    %cst_102 = arith.constant dense<0.000000e+00> : vector<16x1024xf32>
    %147 = tpu.matmul %144, %146, %cst_102 {dimension_numbers = #tpu.dot_dimension_numbers<[1], [0], [0], [1], [0, 0, 1, 1], [], []>} : vector<16x96xf32>, vector<96x1024xf32>, vector<16x1024xf32> -> vector<16x1024xf32>
    %148 = arith.addf %143, %147 : vector<16x1024xf32>
    %149 = vector.extract_strided_slice %109 {offsets = [8, 0], sizes = [16, 96], strides = [1, 1]} : vector<24x96xf32> to vector<16x96xf32>
    %c8_103 = arith.constant 8 : index
    %c0_104 = arith.constant 0 : index
    %c0_105 = arith.constant 0 : index
    %150 = vector.load %arg2[%c8_103, %c0_104, %c0_105] : memref<9x96x1024xf32, #tpu.memory_space<vmem>>, vector<1x96x1024xf32>
    %151 = vector.shape_cast %150 : vector<1x96x1024xf32> to vector<96x1024xf32>
    %cst_106 = arith.constant dense<0.000000e+00> : vector<16x1024xf32>
    %152 = tpu.matmul %149, %151, %cst_106 {dimension_numbers = #tpu.dot_dimension_numbers<[1], [0], [0], [1], [0, 0, 1, 1], [], []>} : vector<16x96xf32>, vector<96x1024xf32>, vector<16x1024xf32> -> vector<16x1024xf32>
    %153 = arith.addf %148, %152 : vector<16x1024xf32>
    %154 = vector.broadcast %1 : vector<1x1024xf32> to vector<16x1024xf32>
    %155 = arith.addf %153, %154 : vector<16x1024xf32>
    %cst_107 = arith.constant 0.000000e+00 : f32
    %156 = vector.broadcast %cst_107 : f32 to vector<16x1024xf32>
    %157 = arith.maximumf %155, %156 : vector<16x1024xf32>
    %158 = vector.extract_strided_slice %157 {offsets = [0, 0], sizes = [16, 256], strides = [1, 1]} : vector<16x1024xf32> to vector<16x256xf32>
    %cst_108 = arith.constant dense<0.000000e+00> : vector<16x128xf32>
    %159 = tpu.matmul %158, %0, %cst_108 {dimension_numbers = #tpu.dot_dimension_numbers<[1], [0], [0], [1], [0, 0, 1, 1], [], []>} : vector<16x256xf32>, vector<256x128xf32>, vector<16x128xf32> -> vector<16x128xf32>
    %160 = vector.broadcast %2 : vector<1x128xf32> to vector<16x128xf32>
    %161 = arith.addf %159, %160 : vector<16x128xf32>
    %cst_109 = arith.constant 0.000000e+00 : f32
    %162 = vector.broadcast %cst_109 : f32 to vector<16x128xf32>
    %163 = arith.maximumf %161, %162 : vector<16x128xf32>
    %164 = vector.extract_strided_slice %157 {offsets = [0, 256], sizes = [16, 256], strides = [1, 1]} : vector<16x1024xf32> to vector<16x256xf32>
    %cst_110 = arith.constant dense<0.000000e+00> : vector<16x128xf32>
    %165 = tpu.matmul %164, %0, %cst_110 {dimension_numbers = #tpu.dot_dimension_numbers<[1], [0], [0], [1], [0, 0, 1, 1], [], []>} : vector<16x256xf32>, vector<256x128xf32>, vector<16x128xf32> -> vector<16x128xf32>
    %166 = vector.broadcast %2 : vector<1x128xf32> to vector<16x128xf32>
    %167 = arith.addf %165, %166 : vector<16x128xf32>
    %cst_111 = arith.constant 0.000000e+00 : f32
    %168 = vector.broadcast %cst_111 : f32 to vector<16x128xf32>
    %169 = arith.maximumf %167, %168 : vector<16x128xf32>
    %170 = vector.extract_strided_slice %157 {offsets = [0, 512], sizes = [16, 256], strides = [1, 1]} : vector<16x1024xf32> to vector<16x256xf32>
    %cst_112 = arith.constant dense<0.000000e+00> : vector<16x128xf32>
    %171 = tpu.matmul %170, %0, %cst_112 {dimension_numbers = #tpu.dot_dimension_numbers<[1], [0], [0], [1], [0, 0, 1, 1], [], []>} : vector<16x256xf32>, vector<256x128xf32>, vector<16x128xf32> -> vector<16x128xf32>
    %172 = vector.broadcast %2 : vector<1x128xf32> to vector<16x128xf32>
    %173 = arith.addf %171, %172 : vector<16x128xf32>
    %cst_113 = arith.constant 0.000000e+00 : f32
    %174 = vector.broadcast %cst_113 : f32 to vector<16x128xf32>
    %175 = arith.maximumf %173, %174 : vector<16x128xf32>
    %176 = vector.extract_strided_slice %157 {offsets = [0, 768], sizes = [16, 256], strides = [1, 1]} : vector<16x1024xf32> to vector<16x256xf32>
    %cst_114 = arith.constant dense<0.000000e+00> : vector<16x128xf32>
    %177 = tpu.matmul %176, %0, %cst_114 {dimension_numbers = #tpu.dot_dimension_numbers<[1], [0], [0], [1], [0, 0, 1, 1], [], []>} : vector<16x256xf32>, vector<256x128xf32>, vector<16x128xf32> -> vector<16x128xf32>
    %178 = vector.broadcast %2 : vector<1x128xf32> to vector<16x128xf32>
    %179 = arith.addf %177, %178 : vector<16x128xf32>
    %cst_115 = arith.constant 0.000000e+00 : f32
    %180 = vector.broadcast %cst_115 : f32 to vector<16x128xf32>
    %181 = arith.maximumf %179, %180 : vector<16x128xf32>
    %182 = tpu.concatenate %163, %169, %175, %181 in 1 : vector<16x128xf32>, vector<16x128xf32>, vector<16x128xf32>, vector<16x128xf32> -> vector<16x512xf32>
    %183 = vector.extract_strided_slice %182 {offsets = [0, 0], sizes = [12, 512], strides = [1, 1]} : vector<16x512xf32> to vector<12x512xf32>
    %c0_116 = arith.constant 0 : index
    %c0_117 = arith.constant 0 : index
    %c0_118 = arith.constant 0 : index
    %184 = vector.load %arg6[%c0_116, %c0_117, %c0_118] : memref<5x512x12xf32, #tpu.memory_space<vmem>>, vector<1x512x12xf32>
    %185 = vector.shape_cast %184 : vector<1x512x12xf32> to vector<512x12xf32>
    %cst_119 = arith.constant dense<0.000000e+00> : vector<12x12xf32>
    %186 = tpu.matmul %183, %185, %cst_119 {dimension_numbers = #tpu.dot_dimension_numbers<[1], [0], [0], [1], [0, 0, 1, 1], [], []>} : vector<12x512xf32>, vector<512x12xf32>, vector<12x12xf32> -> vector<12x12xf32>
    %187 = vector.extract_strided_slice %182 {offsets = [1, 0], sizes = [12, 512], strides = [1, 1]} : vector<16x512xf32> to vector<12x512xf32>
    %c1_120 = arith.constant 1 : index
    %c0_121 = arith.constant 0 : index
    %c0_122 = arith.constant 0 : index
    %188 = vector.load %arg6[%c1_120, %c0_121, %c0_122] : memref<5x512x12xf32, #tpu.memory_space<vmem>>, vector<1x512x12xf32>
    %189 = vector.shape_cast %188 : vector<1x512x12xf32> to vector<512x12xf32>
    %cst_123 = arith.constant dense<0.000000e+00> : vector<12x12xf32>
    %190 = tpu.matmul %187, %189, %cst_123 {dimension_numbers = #tpu.dot_dimension_numbers<[1], [0], [0], [1], [0, 0, 1, 1], [], []>} : vector<12x512xf32>, vector<512x12xf32>, vector<12x12xf32> -> vector<12x12xf32>
    %191 = arith.addf %186, %190 : vector<12x12xf32>
    %192 = vector.extract_strided_slice %182 {offsets = [2, 0], sizes = [12, 512], strides = [1, 1]} : vector<16x512xf32> to vector<12x512xf32>
    %c2_124 = arith.constant 2 : index
    %c0_125 = arith.constant 0 : index
    %c0_126 = arith.constant 0 : index
    %193 = vector.load %arg6[%c2_124, %c0_125, %c0_126] : memref<5x512x12xf32, #tpu.memory_space<vmem>>, vector<1x512x12xf32>
    %194 = vector.shape_cast %193 : vector<1x512x12xf32> to vector<512x12xf32>
    %cst_127 = arith.constant dense<0.000000e+00> : vector<12x12xf32>
    %195 = tpu.matmul %192, %194, %cst_127 {dimension_numbers = #tpu.dot_dimension_numbers<[1], [0], [0], [1], [0, 0, 1, 1], [], []>} : vector<12x512xf32>, vector<512x12xf32>, vector<12x12xf32> -> vector<12x12xf32>
    %196 = arith.addf %191, %195 : vector<12x12xf32>
    %197 = vector.extract_strided_slice %182 {offsets = [3, 0], sizes = [12, 512], strides = [1, 1]} : vector<16x512xf32> to vector<12x512xf32>
    %c3_128 = arith.constant 3 : index
    %c0_129 = arith.constant 0 : index
    %c0_130 = arith.constant 0 : index
    %198 = vector.load %arg6[%c3_128, %c0_129, %c0_130] : memref<5x512x12xf32, #tpu.memory_space<vmem>>, vector<1x512x12xf32>
    %199 = vector.shape_cast %198 : vector<1x512x12xf32> to vector<512x12xf32>
    %cst_131 = arith.constant dense<0.000000e+00> : vector<12x12xf32>
    %200 = tpu.matmul %197, %199, %cst_131 {dimension_numbers = #tpu.dot_dimension_numbers<[1], [0], [0], [1], [0, 0, 1, 1], [], []>} : vector<12x512xf32>, vector<512x12xf32>, vector<12x12xf32> -> vector<12x12xf32>
    %201 = arith.addf %196, %200 : vector<12x12xf32>
    %202 = vector.extract_strided_slice %182 {offsets = [4, 0], sizes = [12, 512], strides = [1, 1]} : vector<16x512xf32> to vector<12x512xf32>
    %c4_132 = arith.constant 4 : index
    %c0_133 = arith.constant 0 : index
    %c0_134 = arith.constant 0 : index
    %203 = vector.load %arg6[%c4_132, %c0_133, %c0_134] : memref<5x512x12xf32, #tpu.memory_space<vmem>>, vector<1x512x12xf32>
    %204 = vector.shape_cast %203 : vector<1x512x12xf32> to vector<512x12xf32>
    %cst_135 = arith.constant dense<0.000000e+00> : vector<12x12xf32>
    %205 = tpu.matmul %202, %204, %cst_135 {dimension_numbers = #tpu.dot_dimension_numbers<[1], [0], [0], [1], [0, 0, 1, 1], [], []>} : vector<12x512xf32>, vector<512x12xf32>, vector<12x12xf32> -> vector<12x12xf32>
    %206 = arith.addf %201, %205 : vector<12x12xf32>
    %207 = vector.broadcast %3 : f32 to vector<12x12xf32>
    %208 = arith.addf %206, %207 : vector<12x12xf32>
    %c1_136 = arith.constant 1 : index
    %c0_137 = arith.constant 0 : index
    %c0_138 = arith.constant 0 : index
    %209 = vector.load %arg8[%c1_136, %c0_137, %c0_138] : memref<2x12x12xf32, #tpu.memory_space<vmem>>, vector<1x12x12xf32>
    %210 = vector.shape_cast %209 : vector<1x12x12xf32> to vector<12x12xf32>
    %211 = vector.shape_cast %208 : vector<12x12xf32> to vector<1x12x12xf32>
    tpu.vector_store %arg8[%c1_136, %c0_137, %c0_138], %211 {strides = array<i32>} : memref<2x12x12xf32, #tpu.memory_space<vmem>>, vector<1x12x12xf32>,
    return
  }
  func.func @transform_0(%arg0: i32) -> (i32, i32, i32) {
    %c0_i32 = arith.constant 0 : i32
    %c0_i32_0 = arith.constant 0 : i32
    %c0_i32_1 = arith.constant 0 : i32
    %c0_i32_2 = arith.constant 0 : i32
    return %c0_i32, %c0_i32_0, %c0_i32_1 : i32, i32, i32
  }
  func.func @transform_1(%arg0: i32) -> (i32, i32, i32) {
    %c0_i32 = arith.constant 0 : i32
    %c0_i32_0 = arith.constant 0 : i32
    %c0_i32_1 = arith.constant 0 : i32
    %c0_i32_2 = arith.constant 0 : i32
    return %c0_i32, %c0_i32_0, %c0_i32_1 : i32, i32, i32
  }
  func.func @transform_2(%arg0: i32) -> (i32, i32) {
    %c0_i32 = arith.constant 0 : i32
    %c0_i32_0 = arith.constant 0 : i32
    %c0_i32_1 = arith.constant 0 : i32
    return %c0_i32, %c0_i32_0 : i32, i32
  }
  func.func @transform_3(%arg0: i32) -> (i32, i32) {
    %c0_i32 = arith.constant 0 : i32
    %c0_i32_0 = arith.constant 0 : i32
    %c0_i32_1 = arith.constant 0 : i32
    return %c0_i32, %c0_i32_0 : i32, i32
  }
  func.func @transform_4(%arg0: i32) -> (i32, i32) {
    %c0_i32 = arith.constant 0 : i32
    %c0_i32_0 = arith.constant 0 : i32
    %c0_i32_1 = arith.constant 0 : i32
    return %c0_i32, %c0_i32_0 : i32, i32
  }
  func.func @transform_5(%arg0: i32) -> (i32, i32, i32) {
    %c0_i32 = arith.constant 0 : i32
    %c0_i32_0 = arith.constant 0 : i32
    %c0_i32_1 = arith.constant 0 : i32
    %c0_i32_2 = arith.constant 0 : i32
    return %c0_i32, %c0_i32_0, %c0_i32_1 : i32, i32, i32
  }
  func.func @transform_6(%arg0: i32) -> i32 {
    %c0_i32 = arith.constant 0 : i32
    %c0_i32_0 = arith.constant 0 : i32
    return %c0_i32 : i32
  }
  func.func @transform_7(%arg0: i32) -> (i32, i32, i32) {
    %c0_i32 = arith.constant 0 : i32
    %c0_i32_0 = arith.constant 0 : i32
    %c0_i32_1 = arith.constant 0 : i32
    %c0_i32_2 = arith.constant 0 : i32
    return %c0_i32, %c0_i32_0, %c0_i32_1 : i32, i32, i32
  }
}

</mosaic_0001>

<llo_original>
// kernel: ndvi_model_net.1
$region0: #{ndvi_model_net.1}
  #allocation0 [shape = 'u32[]', space=smem, size = 0x4, offset = 0x4, fixed_abs, tag = 'smem constant byte address 0x4 - core index']
  #allocation1 [shape = 'u32[72,128]{1,0:T(1,128)}', space=vmem, size = 0x9000, scoped, tag = 'internal scratch']
  #allocation2 [shape = 'f32[1]{0:T(128)S(6)}', space=smem, size = 0x200, scoped, tag = 'scoped memory for ndvi_model_net.1']
  %s0 = inlined_call_operand.vmem [shape: f32[2,24,96], index: 0, kind: input, shape index: {}]
  %s1 = inlined_call_operand.hbm [shape: f32[9,96,1024], index: 1, kind: input, shape index: {}]
  %s2 = inlined_call_operand.hbm [shape: f32[1,1024], index: 2, kind: input, shape index: {}]
  %s3 = inlined_call_operand.hbm [shape: f32[256,128], index: 3, kind: input, shape index: {}]
  %s4 = inlined_call_operand.hbm [shape: f32[1,128], index: 4, kind: input, shape index: {}]
  %s5 = inlined_call_operand.vmem [shape: f32[5,512,12], index: 5, kind: input, shape index: {}]
  %s6 = inlined_call_operand.<no memory space> [shape: f32[1], index: 6, kind: input, shape index: {}]
  %s7 = inlined_call_operand.vmem [shape: f32[2,12,12], index: 7, kind: output, shape index: {}]
  %s8 = sld [smem:[#allocation0]]
  $region54: #{ndvi_model_net.1} parent=0
    _
  %s10 = ssub.s32 1, %s8
  %s11 = scalar_select 0, %s10, %s8
  %12 = sst [smem:[#allocation2]] %s6
  $region1: #{ndvi_model_net.1} parent=0
    #allocation3 [shape = 'u8[3538944]{0}', space=vmem, size = 0x360000, scoped, tag = 'input window, operand 1, single buffered']
    #allocation4 [shape = 's32[1]{0}', space=sflag, size = 0x4, scoped, tag = 'scoped memory for ndvi_model_net.1']
    #allocation5 [shape = 'u8[4096]{0}', space=vmem, size = 0x1000, scoped, tag = 'input window, operand 2, single buffered']
    #allocation6 [shape = 's32[1]{0}', space=sflag, size = 0x4, scoped, tag = 'scoped memory for ndvi_model_net.1']
    #allocation7 [shape = 'u8[131072]{0}', space=vmem, size = 0x20000, scoped, tag = 'input window, operand 3, single buffered']
    #allocation8 [shape = 'u8[512]{0}', space=vmem, size = 0x400, scoped, tag = 'input window, operand 4, single buffered']
    #allocation9 [shape = 's32[1]{0}', space=sflag, size = 0x4, scoped, tag = 'scoped memory for ndvi_model_net.1']
    %13 = vsyncpa [#allocation4], 0
    %14 = vsyncpa [#allocation6], 0
    %15 = vsyncpa [#allocation9], 0
    // Predicated region
    $region2: #{ndvi_model_net.1} parent=1 // pred_check
      _
    $region3: #{ndvi_model_net.1} parent=1 // pred_check_branch
      %17 = sbr.rel (0) target = $region5
    $region4: #{ndvi_model_net.1} parent=1 // pred_region
      _
    $region5: #{ndvi_model_net.1} parent=1 // pred_fallthru
      _
    // Predicated region
    $region6: #{ndvi_model_net.1} parent=1 // pred_check
      _
    $region7: #{ndvi_model_net.1} parent=1 // pred_check_branch
      %19 = sbr.rel (0) target = $region9
    $region8: #{ndvi_model_net.1} parent=1 // pred_region
      %21 = vsyncadd [#allocation4], 0
      %s22 = sshll.u32 %s1, 4
      %s23 = int_to_ptr.hbm [resolvable:$true] %s22
      %s24 = sshll.u32 [#allocation3], 4
      %s25 = int_to_ptr.vmem [resolvable:$true] %s24
      %30 = dma.hbm_to_vmem [thread:$0]  %s23, 110592, %s25, [#allocation4], 1024, 1024, 64
    $region9: #{ndvi_model_net.1} parent=1 // pred_fallthru
      _
    // Predicated region
    $region10: #{ndvi_model_net.1} parent=1 // pred_check
      _
    $region11: #{ndvi_model_net.1} parent=1 // pred_check_branch
      %32 = sbr.rel (0) target = $region13
    $region12: #{ndvi_model_net.1} parent=1 // pred_region
      %34 = vsyncadd [#allocation6], 0
      %s36 = sshll.u32 %s2, 4
      %s37 = int_to_ptr.hbm [resolvable:$true] %s36
      %s38 = sshll.u32 [#allocation5], 4
      %s39 = int_to_ptr.vmem [resolvable:$true] %s38
      %41 = dma.hbm_to_vmem [thread:$0]  %s37, 128, %s39, [#allocation6]
    $region13: #{ndvi_model_net.1} parent=1 // pred_fallthru
      _
    // Predicated region
    $region14: #{ndvi_model_net.1} parent=1 // pred_check
      _
    $region15: #{ndvi_model_net.1} parent=1 // pred_check_branch
      %43 = sbr.rel (0) target = $region17
    $region16: #{ndvi_model_net.1} parent=1 // pred_region
      %45 = vsyncadd [#allocation6], 0
      %s46 = sshll.u32 %s3, 4
      %s47 = int_to_ptr.hbm [resolvable:$true] %s46
      %s48 = sshll.u32 [#allocation7], 4
      %s49 = int_to_ptr.vmem [resolvable:$true] %s48
      %54 = dma.hbm_to_vmem [thread:$0]  %s47, 4096, %s49, [#allocation6], 128, 128, 8
    $region17: #{ndvi_model_net.1} parent=1 // pred_fallthru
      _
    // Predicated region
    $region18: #{ndvi_model_net.1} parent=1 // pred_check
      _
    $region19: #{ndvi_model_net.1} parent=1 // pred_check_branch
      %56 = sbr.rel (0) target = $region21
    $region20: #{ndvi_model_net.1} parent=1 // pred_region
      %58 = vsyncadd [#allocation9], 0
      %s60 = sshll.u32 %s4, 4
      %s61 = int_to_ptr.hbm [resolvable:$true] %s60
      %s62 = sshll.u32 [#allocation8], 4
      %s63 = int_to_ptr.vmem [resolvable:$true] %s62
      %65 = dma.hbm_to_vmem [thread:$0]  %s61, 16, %s63, [#allocation9]
    $region21: #{ndvi_model_net.1} parent=1 // pred_fallthru
      _
    // Predicated region
    $region22: #{ndvi_model_net.1} parent=1 // pred_check
      _
    $region23: #{ndvi_model_net.1} parent=1 // pred_check_branch
      %67 = sbr.rel (0) target = $region25
    $region24: #{ndvi_model_net.1} parent=1 // pred_region
      _
    $region25: #{ndvi_model_net.1} parent=1 // pred_fallthru
      _
    // Predicated region
    $region26: #{ndvi_model_net.1} parent=1 // pred_check
      _
    $region27: #{ndvi_model_net.1} parent=1 // pred_check_branch
      %69 = sbr.rel (0) target = $region29
    $region28: #{ndvi_model_net.1} parent=1 // pred_region
      _
    $region29: #{ndvi_model_net.1} parent=1 // pred_fallthru
      _
    // Predicated region
    $region30: #{ndvi_model_net.1} parent=1 // pred_check
      _
    $region31: #{ndvi_model_net.1} parent=1 // pred_check_branch
      %71 = sbr.rel (0) target = $region33
    $region32: #{ndvi_model_net.1} parent=1 // pred_region
      %73 = dma.done [#allocation4], 110592
    $region33: #{ndvi_model_net.1} parent=1 // pred_fallthru
      _
    // Predicated region
    $region34: #{ndvi_model_net.1} parent=1 // pred_check
      _
    $region35: #{ndvi_model_net.1} parent=1 // pred_check_branch
      %75 = sbr.rel (0) target = $region37
    $region36: #{ndvi_model_net.1} parent=1 // pred_region
      %77 = dma.done [#allocation6], 128
    $region37: #{ndvi_model_net.1} parent=1 // pred_fallthru
      _
    // Predicated region
    $region38: #{ndvi_model_net.1} parent=1 // pred_check
      _
    $region39: #{ndvi_model_net.1} parent=1 // pred_check_branch
      %79 = sbr.rel (0) target = $region41
    $region40: #{ndvi_model_net.1} parent=1 // pred_region
      %81 = dma.done [#allocation6], 4096
    $region41: #{ndvi_model_net.1} parent=1 // pred_fallthru
      _
    // Predicated region
    $region42: #{ndvi_model_net.1} parent=1 // pred_check
      _
    $region43: #{ndvi_model_net.1} parent=1 // pred_check_branch
      %83 = sbr.rel (0) target = $region45
    $region44: #{ndvi_model_net.1} parent=1 // pred_region
      %85 = dma.done [#allocation9], 16
    $region45: #{ndvi_model_net.1} parent=1 // pred_fallthru
      _
    %v86 = vld [vmem:[#allocation7] sm:$0xff]
    %v87 = vld [vmem:[#allocation7 + $0x8] sm:$0xff]
    %v88 = vld [vmem:[#allocation7 + $0x10] sm:$0xff]
    %v89 = vld [vmem:[#allocation7 + $0x18] sm:$0xff]
    %v90 = vld [vmem:[#allocation7 + $0x20] sm:$0xff]
    %v91 = vld [vmem:[#allocation7 + $0x28] sm:$0xff]
    %v92 = vld [vmem:[#allocation7 + $0x30] sm:$0xff]
    %v93 = vld [vmem:[#allocation7 + $0x38] sm:$0xff]
    %v94 = vld [vmem:[#allocation7 + $0x40] sm:$0xff]
    %v95 = vld [vmem:[#allocation7 + $0x48] sm:$0xff]
    %v96 = vld [vmem:[#allocation7 + $0x50] sm:$0xff]
    %v97 = vld [vmem:[#allocation7 + $0x58] sm:$0xff]
    %v98 = vld [vmem:[#allocation7 + $0x60] sm:$0xff]
    %v99 = vld [vmem:[#allocation7 + $0x68] sm:$0xff]
    %v100 = vld [vmem:[#allocation7 + $0x70] sm:$0xff]
    %v101 = vld [vmem:[#allocation7 + $0x78] sm:$0xff]
    %v102 = vld [vmem:[#allocation7 + $0x80] sm:$0xff]
    %v103 = vld [vmem:[#allocation7 + $0x88] sm:$0xff]
    %v104 = vld [vmem:[#allocation7 + $0x90] sm:$0xff]
    %v105 = vld [vmem:[#allocation7 + $0x98] sm:$0xff]
    %v106 = vld [vmem:[#allocation7 + $0xa0] sm:$0xff]
    %v107 = vld [vmem:[#allocation7 + $0xa8] sm:$0xff]
    %v108 = vld [vmem:[#allocation7 + $0xb0] sm:$0xff]
    %v109 = vld [vmem:[#allocation7 + $0xb8] sm:$0xff]
    %v110 = vld [vmem:[#allocation7 + $0xc0] sm:$0xff]
    %v111 = vld [vmem:[#allocation7 + $0xc8] sm:$0xff]
    %v112 = vld [vmem:[#allocation7 + $0xd0] sm:$0xff]
    %v113 = vld [vmem:[#allocation7 + $0xd8] sm:$0xff]
    %v114 = vld [vmem:[#allocation7 + $0xe0] sm:$0xff]
    %v115 = vld [vmem:[#allocation7 + $0xe8] sm:$0xff]
    %v116 = vld [vmem:[#allocation7 + $0xf0] sm:$0xff]
    %v117 = vld [vmem:[#allocation7 + $0xf8] sm:$0xff]
    %v118 = vld [vmem:[#allocation5] sm:$0xff]
    %v119 = vld [vmem:[#allocation8] sm:$0x1]
    %s120 = sld [smem:[#allocation2]]
    %v121 = vld [vmem:[%s0] sm:$0xff]
    %v122 = vld [vmem:[%s0 + $0x8] sm:$0xff]
    %v123 = vld [vmem:[%s0 + $0x10] sm:$0xff]
    %v124 = vld [vmem:[#allocation3] sm:$0xff]
    %v125 = vld [vmem:[#allocation3 + $0x8] sm:$0xff]
    %v126 = vld [vmem:[#allocation3 + $0x10] sm:$0xff]
    %v127 = vld [vmem:[#allocation3 + $0x18] sm:$0xff]
    %v128 = vld [vmem:[#allocation3 + $0x20] sm:$0xff]
    %v129 = vld [vmem:[#allocation3 + $0x28] sm:$0xff]
    %v130 = vld [vmem:[#allocation3 + $0x30] sm:$0xff]
    %v131 = vld [vmem:[#allocation3 + $0x38] sm:$0xff]
    %v132 = vld [vmem:[#allocation3 + $0x40] sm:$0xff]
    %v133 = vld [vmem:[#allocation3 + $0x48] sm:$0xff]
    %v134 = vld [vmem:[#allocation3 + $0x50] sm:$0xff]
    %v135 = vld [vmem:[#allocation3 + $0x58] sm:$0xff]
    %v136 = vld [vmem:[#allocation3 + $0x60] sm:$0xff]
    %v137 = vld [vmem:[#allocation3 + $0x68] sm:$0xff]
    %v138 = vld [vmem:[#allocation3 + $0x70] sm:$0xff]
    %v139 = vld [vmem:[#allocation3 + $0x78] sm:$0xff]
    %v140 = vld [vmem:[#allocation3 + $0x80] sm:$0xff]
    %v141 = vld [vmem:[#allocation3 + $0x88] sm:$0xff]
    %v142 = vld [vmem:[#allocation3 + $0x90] sm:$0xff]
    %v143 = vld [vmem:[#allocation3 + $0x98] sm:$0xff]
    %v144 = vld [vmem:[#allocation3 + $0xa0] sm:$0xff]
    %v145 = vld [vmem:[#allocation3 + $0xa8] sm:$0xff]
    %v146 = vld [vmem:[#allocation3 + $0xb0] sm:$0xff]
    %v147 = vld [vmem:[#allocation3 + $0xb8] sm:$0xff]
    %v148 = vld [vmem:[#allocation3 + $0xc0] sm:$0xff]
    %v149 = vld [vmem:[#allocation3 + $0xc8] sm:$0xff]
    %v150 = vld [vmem:[#allocation3 + $0xd0] sm:$0xff]
    %v151 = vld [vmem:[#allocation3 + $0xd8] sm:$0xff]
    %v152 = vld [vmem:[#allocation3 + $0xe0] sm:$0xff]
    %v153 = vld [vmem:[#allocation3 + $0xe8] sm:$0xff]
    %v154 = vld [vmem:[#allocation3 + $0xf0] sm:$0xff]
    %v155 = vld [vmem:[#allocation3 + $0xf8] sm:$0xff]
    %v156 = vld [vmem:[#allocation3 + $0x100] sm:$0xff]
    %v157 = vld [vmem:[#allocation3 + $0x108] sm:$0xff]
    %v158 = vld [vmem:[#allocation3 + $0x110] sm:$0xff]
    %v159 = vld [vmem:[#allocation3 + $0x118] sm:$0xff]
    %v160 = vld [vmem:[#allocation3 + $0x120] sm:$0xff]
    %v161 = vld [vmem:[#allocation3 + $0x128] sm:$0xff]
    %v162 = vld [vmem:[#allocation3 + $0x130] sm:$0xff]
    %v163 = vld [vmem:[#allocation3 + $0x138] sm:$0xff]
    %v164 = vld [vmem:[#allocation3 + $0x140] sm:$0xff]
    %v165 = vld [vmem:[#allocation3 + $0x148] sm:$0xff]
    %v166 = vld [vmem:[#allocation3 + $0x150] sm:$0xff]
    %v167 = vld [vmem:[#allocation3 + $0x158] sm:$0xff]
    %v168 = vld [vmem:[#allocation3 + $0x160] sm:$0xff]
    %v169 = vld [vmem:[#allocation3 + $0x168] sm:$0xff]
    %v170 = vld [vmem:[#allocation3 + $0x170] sm:$0xff]
    %v171 = vld [vmem:[#allocation3 + $0x178] sm:$0xff]
    %v172 = vld [vmem:[#allocation3 + $0x180] sm:$0xff]
    %v173 = vld [vmem:[#allocation3 + $0x188] sm:$0xff]
    %v174 = vld [vmem:[#allocation3 + $0x190] sm:$0xff]
    %v175 = vld [vmem:[#allocation3 + $0x198] sm:$0xff]
    %v176 = vld [vmem:[#allocation3 + $0x1a0] sm:$0xff]
    %v177 = vld [vmem:[#allocation3 + $0x1a8] sm:$0xff]
    %v178 = vld [vmem:[#allocation3 + $0x1b0] sm:$0xff]
    %v179 = vld [vmem:[#allocation3 + $0x1b8] sm:$0xff]
    %v180 = vld [vmem:[#allocation3 + $0x1c0] sm:$0xff]
    %v181 = vld [vmem:[#allocation3 + $0x1c8] sm:$0xff]
    %v182 = vld [vmem:[#allocation3 + $0x1d0] sm:$0xff]
    %v183 = vld [vmem:[#allocation3 + $0x1d8] sm:$0xff]
    %v184 = vld [vmem:[#allocation3 + $0x1e0] sm:$0xff]
    %v185 = vld [vmem:[#allocation3 + $0x1e8] sm:$0xff]
    %v186 = vld [vmem:[#allocation3 + $0x1f0] sm:$0xff]
    %v187 = vld [vmem:[#allocation3 + $0x1f8] sm:$0xff]
    %v188 = vld [vmem:[#allocation3 + $0x200] sm:$0xff]
    %v189 = vld [vmem:[#allocation3 + $0x208] sm:$0xff]
    %v190 = vld [vmem:[#allocation3 + $0x210] sm:$0xff]
    %v191 = vld [vmem:[#allocation3 + $0x218] sm:$0xff]
    %v192 = vld [vmem:[#allocation3 + $0x220] sm:$0xff]
    %v193 = vld [vmem:[#allocation3 + $0x228] sm:$0xff]
    %v194 = vld [vmem:[#allocation3 + $0x230] sm:$0xff]
    %v195 = vld [vmem:[#allocation3 + $0x238] sm:$0xff]
    %v196 = vld [vmem:[#allocation3 + $0x240] sm:$0xff]
    %v197 = vld [vmem:[#allocation3 + $0x248] sm:$0xff]
    %v198 = vld [vmem:[#allocation3 + $0x250] sm:$0xff]
    %v199 = vld [vmem:[#allocation3 + $0x258] sm:$0xff]
    %v200 = vld [vmem:[#allocation3 + $0x260] sm:$0xff]
    %v201 = vld [vmem:[#allocation3 + $0x268] sm:$0xff]
    %v202 = vld [vmem:[#allocation3 + $0x270] sm:$0xff]
    %v203 = vld [vmem:[#allocation3 + $0x278] sm:$0xff]
    %v204 = vld [vmem:[#allocation3 + $0x280] sm:$0xff]
    %v205 = vld [vmem:[#allocation3 + $0x288] sm:$0xff]
    %v206 = vld [vmem:[#allocation3 + $0x290] sm:$0xff]
    %v207 = vld [vmem:[#allocation3 + $0x298] sm:$0xff]
    %v208 = vld [vmem:[#allocation3 + $0x2a0] sm:$0xff]
    %v209 = vld [vmem:[#allocation3 + $0x2a8] sm:$0xff]
    %v210 = vld [vmem:[#allocation3 + $0x2b0] sm:$0xff]
    %v211 = vld [vmem:[#allocation3 + $0x2b8] sm:$0xff]
    %v212 = vld [vmem:[#allocation3 + $0x2c0] sm:$0xff]
    %v213 = vld [vmem:[#allocation3 + $0x2c8] sm:$0xff]
    %v214 = vld [vmem:[#allocation3 + $0x2d0] sm:$0xff]
    %v215 = vld [vmem:[#allocation3 + $0x2d8] sm:$0xff]
    %v216 = vld [vmem:[#allocation3 + $0x2e0] sm:$0xff]
    %v217 = vld [vmem:[#allocation3 + $0x2e8] sm:$0xff]
    %v218 = vld [vmem:[#allocation3 + $0x2f0] sm:$0xff]
    %v219 = vld [vmem:[#allocation3 + $0x2f8] sm:$0xff]
    %s220 = scalar_lea.vmem [#allocation3], 768
    %v221 = vld [vmem:[%s220] sm:$0xff]
    %v222 = vld [vmem:[%s220 + $0x8] sm:$0xff]
    %v223 = vld [vmem:[%s220 + $0x10] sm:$0xff]
    %v224 = vld [vmem:[%s220 + $0x18] sm:$0xff]
    %v225 = vld [vmem:[%s220 + $0x20] sm:$0xff]
    %v226 = vld [vmem:[%s220 + $0x28] sm:$0xff]
    %v227 = vld [vmem:[%s220 + $0x30] sm:$0xff]
    %v228 = vld [vmem:[%s220 + $0x38] sm:$0xff]
    %v229 = vld [vmem:[%s220 + $0x40] sm:$0xff]
    %v230 = vld [vmem:[%s220 + $0x48] sm:$0xff]
    %v231 = vld [vmem:[%s220 + $0x50] sm:$0xff]
    %v232 = vld [vmem:[%s220 + $0x58] sm:$0xff]
    %v233 = vld [vmem:[%s220 + $0x60] sm:$0xff]
    %v234 = vld [vmem:[%s220 + $0x68] sm:$0xff]
    %v235 = vld [vmem:[%s220 + $0x70] sm:$0xff]
    %v236 = vld [vmem:[%s220 + $0x78] sm:$0xff]
    %v237 = vld [vmem:[%s220 + $0x80] sm:$0xff]
    %v238 = vld [vmem:[%s220 + $0x88] sm:$0xff]
    %v239 = vld [vmem:[%s220 + $0x90] sm:$0xff]
    %v240 = vld [vmem:[%s220 + $0x98] sm:$0xff]
    %v241 = vld [vmem:[%s220 + $0xa0] sm:$0xff]
    %v242 = vld [vmem:[%s220 + $0xa8] sm:$0xff]
    %v243 = vld [vmem:[%s220 + $0xb0] sm:$0xff]
    %v244 = vld [vmem:[%s220 + $0xb8] sm:$0xff]
    %v245 = vld [vmem:[%s220 + $0xc0] sm:$0xff]
    %v246 = vld [vmem:[%s220 + $0xc8] sm:$0xff]
    %v247 = vld [vmem:[%s220 + $0xd0] sm:$0xff]
    %v248 = vld [vmem:[%s220 + $0xd8] sm:$0xff]
    %v249 = vld [vmem:[%s220 + $0xe0] sm:$0xff]
    %v250 = vld [vmem:[%s220 + $0xe8] sm:$0xff]
    %v251 = vld [vmem:[%s220 + $0xf0] sm:$0xff]
    %v252 = vld [vmem:[%s220 + $0xf8] sm:$0xff]
    %v253 = vld [vmem:[%s220 + $0x100] sm:$0xff]
    %v254 = vld [vmem:[%s220 + $0x108] sm:$0xff]
    %v255 = vld [vmem:[%s220 + $0x110] sm:$0xff]
    %v256 = vld [vmem:[%s220 + $0x118] sm:$0xff]
    %v257 = vld [vmem:[%s220 + $0x120] sm:$0xff]
    %v258 = vld [vmem:[%s220 + $0x128] sm:$0xff]
    %v259 = vld [vmem:[%s220 + $0x130] sm:$0xff]
    %v260 = vld [vmem:[%s220 + $0x138] sm:$0xff]
    %v261 = vld [vmem:[%s220 + $0x140] sm:$0xff]
    %v262 = vld [vmem:[%s220 + $0x148] sm:$0xff]
    %v263 = vld [vmem:[%s220 + $0x150] sm:$0xff]
    %v264 = vld [vmem:[%s220 + $0x158] sm:$0xff]
    %v265 = vld [vmem:[%s220 + $0x160] sm:$0xff]
    %v266 = vld [vmem:[%s220 + $0x168] sm:$0xff]
    %v267 = vld [vmem:[%s220 + $0x170] sm:$0xff]
    %v268 = vld [vmem:[%s220 + $0x178] sm:$0xff]
    %v269 = vld [vmem:[%s220 + $0x180] sm:$0xff]
    %v270 = vld [vmem:[%s220 + $0x188] sm:$0xff]
    %v271 = vld [vmem:[%s220 + $0x190] sm:$0xff]
    %v272 = vld [vmem:[%s220 + $0x198] sm:$0xff]
    %v273 = vld [vmem:[%s220 + $0x1a0] sm:$0xff]
    %v274 = vld [vmem:[%s220 + $0x1a8] sm:$0xff]
    %v275 = vld [vmem:[%s220 + $0x1b0] sm:$0xff]
    %v276 = vld [vmem:[%s220 + $0x1b8] sm:$0xff]
    %v277 = vld [vmem:[%s220 + $0x1c0] sm:$0xff]
    %v278 = vld [vmem:[%s220 + $0x1c8] sm:$0xff]
    %v279 = vld [vmem:[%s220 + $0x1d0] sm:$0xff]
    %v280 = vld [vmem:[%s220 + $0x1d8] sm:$0xff]
    %v281 = vld [vmem:[%s220 + $0x1e0] sm:$0xff]
    %v282 = vld [vmem:[%s220 + $0x1e8] sm:$0xff]
    %v283 = vld [vmem:[%s220 + $0x1f0] sm:$0xff]
    %v284 = vld [vmem:[%s220 + $0x1f8] sm:$0xff]
    %v285 = vld [vmem:[%s220 + $0x200] sm:$0xff]
    %v286 = vld [vmem:[%s220 + $0x208] sm:$0xff]
    %v287 = vld [vmem:[%s220 + $0x210] sm:$0xff]
    %v288 = vld [vmem:[%s220 + $0x218] sm:$0xff]
    %v289 = vld [vmem:[%s220 + $0x220] sm:$0xff]
    %v290 = vld [vmem:[%s220 + $0x228] sm:$0xff]
    %v291 = vld [vmem:[%s220 + $0x230] sm:$0xff]
    %v292 = vld [vmem:[%s220 + $0x238] sm:$0xff]
    %v293 = vld [vmem:[%s220 + $0x240] sm:$0xff]
    %v294 = vld [vmem:[%s220 + $0x248] sm:$0xff]
    %v295 = vld [vmem:[%s220 + $0x250] sm:$0xff]
    %v296 = vld [vmem:[%s220 + $0x258] sm:$0xff]
    %v297 = vld [vmem:[%s220 + $0x260] sm:$0xff]
    %v298 = vld [vmem:[%s220 + $0x268] sm:$0xff]
    %v299 = vld [vmem:[%s220 + $0x270] sm:$0xff]
    %v300 = vld [vmem:[%s220 + $0x278] sm:$0xff]
    %v301 = vld [vmem:[%s220 + $0x280] sm:$0xff]
    %v302 = vld [vmem:[%s220 + $0x288] sm:$0xff]
    %v303 = vld [vmem:[%s220 + $0x290] sm:$0xff]
    %v304 = vld [vmem:[%s220 + $0x298] sm:$0xff]
    %v305 = vld [vmem:[%s220 + $0x2a0] sm:$0xff]
    %v306 = vld [vmem:[%s220 + $0x2a8] sm:$0xff]
    %v307 = vld [vmem:[%s220 + $0x2b0] sm:$0xff]
    %v308 = vld [vmem:[%s220 + $0x2b8] sm:$0xff]
    %v309 = vld [vmem:[%s220 + $0x2c0] sm:$0xff]
    %v310 = vld [vmem:[%s220 + $0x2c8] sm:$0xff]
    %v311 = vld [vmem:[%s220 + $0x2d0] sm:$0xff]
    %v312 = vld [vmem:[%s220 + $0x2d8] sm:$0xff]
    %v313 = vld [vmem:[%s220 + $0x2e0] sm:$0xff]
    %v314 = vld [vmem:[%s220 + $0x2e8] sm:$0xff]
    %v315 = vld [vmem:[%s220 + $0x2f0] sm:$0xff]
    %v316 = vld [vmem:[%s220 + $0x2f8] sm:$0xff]
    %vm320 = vcmask 1046528
    %v321 = vrot.slane %v121, 1
    %v322 = vrot.slane %v122, 1
    %v323 = vsel %vm320, %v321, %v322
    %v324 = vrot.slane %v123, 1
    %v325 = vsel %vm320, %v322, %v324
    %vm326 = vcmask 785408
    %v327 = vsel %vm326, %v323, 0
    %v329 = vsel %vm326, %v325, 0
    %331 = vmatpush.msra.mxu0 0.0
    %332 = vmatpush.msra.mxu0 0.0
    %333 = vmatpush.msra.mxu0 0.0
    %334 = vmatpush.msra.mxu0 0.0
    %335 = vmatpush.msra.mxu0 %v309
    %336 = vmatpush.msra.mxu0 %v301
    %337 = vmatpush.msra.mxu0 %v293
    %338 = vmatpush.msra.mxu0 %v285
    %339 = vmatpush.msra.mxu0 %v277
    %340 = vmatpush.msra.mxu0 %v269
    %341 = vmatpush.msra.mxu0 %v261
    %342 = vmatpush.msra.mxu0 %v253
    %343 = vmatpush.msra.mxu0 %v245
    %344 = vmatpush.msra.mxu0 %v237
    %345 = vmatpush.msra.mxu0 %v229
    %346 = vmatpush.msra.mxu0 %v221
    %347 = vmatmul.f32.gmra.mxu0 %v327
    %v348 = vpop.f32.mrf.mxu0
    %v349 = vadd.f32 0.0, %v348
    %350 = vmatmul.f32.gmra.mxu0 %v329
    %v351 = vpop.f32.mrf.mxu0
    %v352 = vadd.f32 0.0, %v351
    %353 = vdwg.mxu0
    %354 = vmatpush.msra.mxu0 0.0
    %355 = vmatpush.msra.mxu0 0.0
    %356 = vmatpush.msra.mxu0 0.0
    %357 = vmatpush.msra.mxu0 0.0
    %358 = vmatpush.msra.mxu0 %v310
    %359 = vmatpush.msra.mxu0 %v302
    %360 = vmatpush.msra.mxu0 %v294
    %361 = vmatpush.msra.mxu0 %v286
    %362 = vmatpush.msra.mxu0 %v278
    %363 = vmatpush.msra.mxu0 %v270
    %364 = vmatpush.msra.mxu0 %v262
    %365 = vmatpush.msra.mxu0 %v254
    %366 = vmatpush.msra.mxu0 %v246
    %367 = vmatpush.msra.mxu0 %v238
    %368 = vmatpush.msra.mxu0 %v230
    %369 = vmatpush.msra.mxu0 %v222
    %370 = vmatmul.f32.gmra.mxu0 %v327
    %v371 = vpop.f32.mrf.mxu0
    %v372 = vadd.f32 0.0, %v371
    %373 = vmatmul.f32.gmra.mxu0 %v329
    %v374 = vpop.f32.mrf.mxu0
    %v375 = vadd.f32 0.0, %v374
    %376 = vdwg.mxu0
    %377 = vmatpush.msra.mxu0 0.0
    %378 = vmatpush.msra.mxu0 0.0
    %379 = vmatpush.msra.mxu0 0.0
    %380 = vmatpush.msra.mxu0 0.0
    %381 = vmatpush.msra.mxu0 %v311
    %382 = vmatpush.msra.mxu0 %v303
    %383 = vmatpush.msra.mxu0 %v295
    %384 = vmatpush.msra.mxu0 %v287
    %385 = vmatpush.msra.mxu0 %v279
    %386 = vmatpush.msra.mxu0 %v271
    %387 = vmatpush.msra.mxu0 %v263
    %388 = vmatpush.msra.mxu0 %v255
    %389 = vmatpush.msra.mxu0 %v247
    %390 = vmatpush.msra.mxu0 %v239
    %391 = vmatpush.msra.mxu0 %v231
    %392 = vmatpush.msra.mxu0 %v223
    %393 = vmatmul.f32.gmra.mxu0 %v327
    %v394 = vpop.f32.mrf.mxu0
    %v395 = vadd.f32 0.0, %v394
    %396 = vmatmul.f32.gmra.mxu0 %v329
    %v397 = vpop.f32.mrf.mxu0
    %v398 = vadd.f32 0.0, %v397
    %399 = vdwg.mxu0
    %400 = vmatpush.msra.mxu0 0.0
    %401 = vmatpush.msra.mxu0 0.0
    %402 = vmatpush.msra.mxu0 0.0
    %403 = vmatpush.msra.mxu0 0.0
    %404 = vmatpush.msra.mxu0 %v312
    %405 = vmatpush.msra.mxu0 %v304
    %406 = vmatpush.msra.mxu0 %v296
    %407 = vmatpush.msra.mxu0 %v288
    %408 = vmatpush.msra.mxu0 %v280
    %409 = vmatpush.msra.mxu0 %v272
    %410 = vmatpush.msra.mxu0 %v264
    %411 = vmatpush.msra.mxu0 %v256
    %412 = vmatpush.msra.mxu0 %v248
    %413 = vmatpush.msra.mxu0 %v240
    %414 = vmatpush.msra.mxu0 %v232
    %415 = vmatpush.msra.mxu0 %v224
    %416 = vmatmul.f32.gmra.mxu0 %v327
    %v417 = vpop.f32.mrf.mxu0
    %v418 = vadd.f32 0.0, %v417
    %419 = vmatmul.f32.gmra.mxu0 %v329
    %v420 = vpop.f32.mrf.mxu0
    %v421 = vadd.f32 0.0, %v420
    %422 = vdwg.mxu0
    %423 = vmatpush.msra.mxu0 0.0
    %424 = vmatpush.msra.mxu0 0.0
    %425 = vmatpush.msra.mxu0 0.0
    %426 = vmatpush.msra.mxu0 0.0
    %427 = vmatpush.msra.mxu0 %v313
    %428 = vmatpush.msra.mxu0 %v305
    %429 = vmatpush.msra.mxu0 %v297
    %430 = vmatpush.msra.mxu0 %v289
    %431 = vmatpush.msra.mxu0 %v281
    %432 = vmatpush.msra.mxu0 %v273
    %433 = vmatpush.msra.mxu0 %v265
    %434 = vmatpush.msra.mxu0 %v257
    %435 = vmatpush.msra.mxu0 %v249
    %436 = vmatpush.msra.mxu0 %v241
    %437 = vmatpush.msra.mxu0 %v233
    %438 = vmatpush.msra.mxu0 %v225
    %439 = vmatmul.f32.gmra.mxu0 %v327
    %v440 = vpop.f32.mrf.mxu0
    %v441 = vadd.f32 0.0, %v440
    %442 = vmatmul.f32.gmra.mxu0 %v329
    %v443 = vpop.f32.mrf.mxu0
    %v444 = vadd.f32 0.0, %v443
    %445 = vdwg.mxu0
    %446 = vmatpush.msra.mxu0 0.0
    %447 = vmatpush.msra.mxu0 0.0
    %448 = vmatpush.msra.mxu0 0.0
    %449 = vmatpush.msra.mxu0 0.0
    %450 = vmatpush.msra.mxu0 %v314
    %451 = vmatpush.msra.mxu0 %v306
    %452 = vmatpush.msra.mxu0 %v298
    %453 = vmatpush.msra.mxu0 %v290
    %454 = vmatpush.msra.mxu0 %v282
    %455 = vmatpush.msra.mxu0 %v274
    %456 = vmatpush.msra.mxu0 %v266
    %457 = vmatpush.msra.mxu0 %v258
    %458 = vmatpush.msra.mxu0 %v250
    %459 = vmatpush.msra.mxu0 %v242
    %460 = vmatpush.msra.mxu0 %v234
    %461 = vmatpush.msra.mxu0 %v226
    %462 = vmatmul.f32.gmra.mxu0 %v327
    %v463 = vpop.f32.mrf.mxu0
    %v464 = vadd.f32 0.0, %v463
    %465 = vmatmul.f32.gmra.mxu0 %v329
    %v466 = vpop.f32.mrf.mxu0
    %v467 = vadd.f32 0.0, %v466
    %468 = vdwg.mxu0
    %469 = vmatpush.msra.mxu0 0.0
    %470 = vmatpush.msra.mxu0 0.0
    %471 = vmatpush.msra.mxu0 0.0
    %472 = vmatpush.msra.mxu0 0.0
    %473 = vmatpush.msra.mxu0 %v315
    %474 = vmatpush.msra.mxu0 %v307
    %475 = vmatpush.msra.mxu0 %v299
    %476 = vmatpush.msra.mxu0 %v291
    %477 = vmatpush.msra.mxu0 %v283
    %478 = vmatpush.msra.mxu0 %v275
    %479 = vmatpush.msra.mxu0 %v267
    %480 = vmatpush.msra.mxu0 %v259
    %481 = vmatpush.msra.mxu0 %v251
    %482 = vmatpush.msra.mxu0 %v243
    %483 = vmatpush.msra.mxu0 %v235
    %484 = vmatpush.msra.mxu0 %v227
    %485 = vmatmul.f32.gmra.mxu0 %v327
    %v486 = vpop.f32.mrf.mxu0
    %v487 = vadd.f32 0.0, %v486
    %488 = vmatmul.f32.gmra.mxu0 %v329
    %v489 = vpop.f32.mrf.mxu0
    %v490 = vadd.f32 0.0, %v489
    %491 = vdwg.mxu0
    %492 = vmatpush.msra.mxu0 0.0
    %493 = vmatpush.msra.mxu0 0.0
    %494 = vmatpush.msra.mxu0 0.0
    %495 = vmatpush.msra.mxu0 0.0
    %496 = vmatpush.msra.mxu0 %v316
    %497 = vmatpush.msra.mxu0 %v308
    %498 = vmatpush.msra.mxu0 %v300
    %499 = vmatpush.msra.mxu0 %v292
    %500 = vmatpush.msra.mxu0 %v284
    %501 = vmatpush.msra.mxu0 %v276
    %502 = vmatpush.msra.mxu0 %v268
    %503 = vmatpush.msra.mxu0 %v260
    %504 = vmatpush.msra.mxu0 %v252
    %505 = vmatpush.msra.mxu0 %v244
    %506 = vmatpush.msra.mxu0 %v236
    %507 = vmatpush.msra.mxu0 %v228
    %508 = vmatmul.f32.gmra.mxu0 %v327
    %v509 = vpop.f32.mrf.mxu0
    %v510 = vadd.f32 0.0, %v509
    %511 = vmatmul.f32.gmra.mxu0 %v329
    %v512 = vpop.f32.mrf.mxu0
    %v513 = vadd.f32 0.0, %v512
    %514 = vdwg.mxu0
    %v515 = vsel %vm326, %v121, 0
    %v517 = vsel %vm326, %v122, 0
    %519 = vmatpush.msra.mxu0 0.0
    %520 = vmatpush.msra.mxu0 0.0
    %521 = vmatpush.msra.mxu0 0.0
    %522 = vmatpush.msra.mxu0 0.0
    %523 = vmatpush.msra.mxu0 %v212
    %524 = vmatpush.msra.mxu0 %v204
    %525 = vmatpush.msra.mxu0 %v196
    %526 = vmatpush.msra.mxu0 %v188
    %527 = vmatpush.msra.mxu0 %v180
    %528 = vmatpush.msra.mxu0 %v172
    %529 = vmatpush.msra.mxu0 %v164
    %530 = vmatpush.msra.mxu0 %v156
    %531 = vmatpush.msra.mxu0 %v148
    %532 = vmatpush.msra.mxu0 %v140
    %533 = vmatpush.msra.mxu0 %v132
    %534 = vmatpush.msra.mxu0 %v124
    %535 = vmatmul.f32.gmra.mxu0 %v515
    %v536 = vpop.f32.mrf.mxu0
    %v537 = vadd.f32 %v349, %v536
    %538 = vmatmul.f32.gmra.mxu0 %v517
    %v539 = vpop.f32.mrf.mxu0
    %v540 = vadd.f32 %v352, %v539
    %541 = vdwg.mxu0
    %542 = vmatpush.msra.mxu0 0.0
    %543 = vmatpush.msra.mxu0 0.0
    %544 = vmatpush.msra.mxu0 0.0
    %545 = vmatpush.msra.mxu0 0.0
    %546 = vmatpush.msra.mxu0 %v213
    %547 = vmatpush.msra.mxu0 %v205
    %548 = vmatpush.msra.mxu0 %v197
    %549 = vmatpush.msra.mxu0 %v189
    %550 = vmatpush.msra.mxu0 %v181
    %551 = vmatpush.msra.mxu0 %v173
    %552 = vmatpush.msra.mxu0 %v165
    %553 = vmatpush.msra.mxu0 %v157
    %554 = vmatpush.msra.mxu0 %v149
    %555 = vmatpush.msra.mxu0 %v141
    %556 = vmatpush.msra.mxu0 %v133
    %557 = vmatpush.msra.mxu0 %v125
    %558 = vmatmul.f32.gmra.mxu0 %v515
    %v559 = vpop.f32.mrf.mxu0
    %v560 = vadd.f32 %v372, %v559
    %561 = vmatmul.f32.gmra.mxu0 %v517
    %v562 = vpop.f32.mrf.mxu0
    %v563 = vadd.f32 %v375, %v562
    %564 = vdwg.mxu0
    %565 = vmatpush.msra.mxu0 0.0
    %566 = vmatpush.msra.mxu0 0.0
    %567 = vmatpush.msra.mxu0 0.0
    %568 = vmatpush.msra.mxu0 0.0
    %569 = vmatpush.msra.mxu0 %v214
    %570 = vmatpush.msra.mxu0 %v206
    %571 = vmatpush.msra.mxu0 %v198
    %572 = vmatpush.msra.mxu0 %v190
    %573 = vmatpush.msra.mxu0 %v182
    %574 = vmatpush.msra.mxu0 %v174
    %575 = vmatpush.msra.mxu0 %v166
    %576 = vmatpush.msra.mxu0 %v158
    %577 = vmatpush.msra.mxu0 %v150
    %578 = vmatpush.msra.mxu0 %v142
    %579 = vmatpush.msra.mxu0 %v134
    %580 = vmatpush.msra.mxu0 %v126
    %581 = vmatmul.f32.gmra.mxu0 %v515
    %v582 = vpop.f32.mrf.mxu0
    %v583 = vadd.f32 %v395, %v582
    %584 = vmatmul.f32.gmra.mxu0 %v517
    %v585 = vpop.f32.mrf.mxu0
    %v586 = vadd.f32 %v398, %v585
    %587 = vdwg.mxu0
    %588 = vmatpush.msra.mxu0 0.0
    %589 = vmatpush.msra.mxu0 0.0
    %590 = vmatpush.msra.mxu0 0.0
    %591 = vmatpush.msra.mxu0 0.0
    %592 = vmatpush.msra.mxu0 %v215
    %593 = vmatpush.msra.mxu0 %v207
    %594 = vmatpush.msra.mxu0 %v199
    %595 = vmatpush.msra.mxu0 %v191
    %596 = vmatpush.msra.mxu0 %v183
    %597 = vmatpush.msra.mxu0 %v175
    %598 = vmatpush.msra.mxu0 %v167
    %599 = vmatpush.msra.mxu0 %v159
    %600 = vmatpush.msra.mxu0 %v151
    %601 = vmatpush.msra.mxu0 %v143
    %602 = vmatpush.msra.mxu0 %v135
    %603 = vmatpush.msra.mxu0 %v127
    %604 = vmatmul.f32.gmra.mxu0 %v515
    %v605 = vpop.f32.mrf.mxu0
    %v606 = vadd.f32 %v418, %v605
    %607 = vmatmul.f32.gmra.mxu0 %v517
    %v608 = vpop.f32.mrf.mxu0
    %v609 = vadd.f32 %v421, %v608
    %610 = vdwg.mxu0
    %611 = vmatpush.msra.mxu0 0.0
    %612 = vmatpush.msra.mxu0 0.0
    %613 = vmatpush.msra.mxu0 0.0
    %614 = vmatpush.msra.mxu0 0.0
    %615 = vmatpush.msra.mxu0 %v216
    %616 = vmatpush.msra.mxu0 %v208
    %617 = vmatpush.msra.mxu0 %v200
    %618 = vmatpush.msra.mxu0 %v192
    %619 = vmatpush.msra.mxu0 %v184
    %620 = vmatpush.msra.mxu0 %v176
    %621 = vmatpush.msra.mxu0 %v168
    %622 = vmatpush.msra.mxu0 %v160
    %623 = vmatpush.msra.mxu0 %v152
    %624 = vmatpush.msra.mxu0 %v144
    %625 = vmatpush.msra.mxu0 %v136
    %626 = vmatpush.msra.mxu0 %v128
    %627 = vmatmul.f32.gmra.mxu0 %v515
    %v628 = vpop.f32.mrf.mxu0
    %v629 = vadd.f32 %v441, %v628
    %630 = vmatmul.f32.gmra.mxu0 %v517
    %v631 = vpop.f32.mrf.mxu0
    %v632 = vadd.f32 %v444, %v631
    %633 = vdwg.mxu0
    %634 = vmatpush.msra.mxu0 0.0
    %635 = vmatpush.msra.mxu0 0.0
    %636 = vmatpush.msra.mxu0 0.0
    %637 = vmatpush.msra.mxu0 0.0
    %638 = vmatpush.msra.mxu0 %v217
    %639 = vmatpush.msra.mxu0 %v209
    %640 = vmatpush.msra.mxu0 %v201
    %641 = vmatpush.msra.mxu0 %v193
    %642 = vmatpush.msra.mxu0 %v185
    %643 = vmatpush.msra.mxu0 %v177
    %644 = vmatpush.msra.mxu0 %v169
    %645 = vmatpush.msra.mxu0 %v161
    %646 = vmatpush.msra.mxu0 %v153
    %647 = vmatpush.msra.mxu0 %v145
    %648 = vmatpush.msra.mxu0 %v137
    %649 = vmatpush.msra.mxu0 %v129
    %650 = vmatmul.f32.gmra.mxu0 %v515
    %v651 = vpop.f32.mrf.mxu0
    %v652 = vadd.f32 %v464, %v651
    %653 = vmatmul.f32.gmra.mxu0 %v517
    %v654 = vpop.f32.mrf.mxu0
    %v655 = vadd.f32 %v467, %v654
    %656 = vdwg.mxu0
    %657 = vmatpush.msra.mxu0 0.0
    %658 = vmatpush.msra.mxu0 0.0
    %659 = vmatpush.msra.mxu0 0.0
    %660 = vmatpush.msra.mxu0 0.0
    %661 = vmatpush.msra.mxu0 %v218
    %662 = vmatpush.msra.mxu0 %v210
    %663 = vmatpush.msra.mxu0 %v202
    %664 = vmatpush.msra.mxu0 %v194
    %665 = vmatpush.msra.mxu0 %v186
    %666 = vmatpush.msra.mxu0 %v178
    %667 = vmatpush.msra.mxu0 %v170
    %668 = vmatpush.msra.mxu0 %v162
    %669 = vmatpush.msra.mxu0 %v154
    %670 = vmatpush.msra.mxu0 %v146
    %671 = vmatpush.msra.mxu0 %v138
    %672 = vmatpush.msra.mxu0 %v130
    %673 = vmatmul.f32.gmra.mxu0 %v515
    %v674 = vpop.f32.mrf.mxu0
    %v675 = vadd.f32 %v487, %v674
    %676 = vmatmul.f32.gmra.mxu0 %v517
    %v677 = vpop.f32.mrf.mxu0
    %v678 = vadd.f32 %v490, %v677
    %679 = vdwg.mxu0
    %680 = vmatpush.msra.mxu0 0.0
    %681 = vmatpush.msra.mxu0 0.0
    %682 = vmatpush.msra.mxu0 0.0
    %683 = vmatpush.msra.mxu0 0.0
    %684 = vmatpush.msra.mxu0 %v219
    %685 = vmatpush.msra.mxu0 %v211
    %686 = vmatpush.msra.mxu0 %v203
    %687 = vmatpush.msra.mxu0 %v195
    %688 = vmatpush.msra.mxu0 %v187
    %689 = vmatpush.msra.mxu0 %v179
    %690 = vmatpush.msra.mxu0 %v171
    %691 = vmatpush.msra.mxu0 %v163
    %692 = vmatpush.msra.mxu0 %v155
    %693 = vmatpush.msra.mxu0 %v147
    %694 = vmatpush.msra.mxu0 %v139
    %695 = vmatpush.msra.mxu0 %v131
    %696 = vmatmul.f32.gmra.mxu0 %v515
    %v697 = vpop.f32.mrf.mxu0
    %v698 = vadd.f32 %v510, %v697
    %699 = vmatmul.f32.gmra.mxu0 %v517
    %v700 = vpop.f32.mrf.mxu0
    %v701 = vadd.f32 %v513, %v700
    %702 = vdwg.mxu0
    %s703 = scalar_lea.vmem [#allocation3], 1536
    %v704 = vld [vmem:[%s703] sm:$0xff]
    %v705 = vld [vmem:[%s703 + $0x8] sm:$0xff]
    %v706 = vld [vmem:[%s703 + $0x10] sm:$0xff]
    %v707 = vld [vmem:[%s703 + $0x18] sm:$0xff]
    %v708 = vld [vmem:[%s703 + $0x20] sm:$0xff]
    %v709 = vld [vmem:[%s703 + $0x28] sm:$0xff]
    %v710 = vld [vmem:[%s703 + $0x30] sm:$0xff]
    %v711 = vld [vmem:[%s703 + $0x38] sm:$0xff]
    %v712 = vld [vmem:[%s703 + $0x40] sm:$0xff]
    %v713 = vld [vmem:[%s703 + $0x48] sm:$0xff]
    %v714 = vld [vmem:[%s703 + $0x50] sm:$0xff]
    %v715 = vld [vmem:[%s703 + $0x58] sm:$0xff]
    %v716 = vld [vmem:[%s703 + $0x60] sm:$0xff]
    %v717 = vld [vmem:[%s703 + $0x68] sm:$0xff]
    %v718 = vld [vmem:[%s703 + $0x70] sm:$0xff]
    %v719 = vld [vmem:[%s703 + $0x78] sm:$0xff]
    %v720 = vld [vmem:[%s703 + $0x80] sm:$0xff]
    %v721 = vld [vmem:[%s703 + $0x88] sm:$0xff]
    %v722 = vld [vmem:[%s703 + $0x90] sm:$0xff]
    %v723 = vld [vmem:[%s703 + $0x98] sm:$0xff]
    %v724 = vld [vmem:[%s703 + $0xa0] sm:$0xff]
    %v725 = vld [vmem:[%s703 + $0xa8] sm:$0xff]
    %v726 = vld [vmem:[%s703 + $0xb0] sm:$0xff]
    %v727 = vld [vmem:[%s703 + $0xb8] sm:$0xff]
    %v728 = vld [vmem:[%s703 + $0xc0] sm:$0xff]
    %v729 = vld [vmem:[%s703 + $0xc8] sm:$0xff]
    %v730 = vld [vmem:[%s703 + $0xd0] sm:$0xff]
    %v731 = vld [vmem:[%s703 + $0xd8] sm:$0xff]
    %v732 = vld [vmem:[%s703 + $0xe0] sm:$0xff]
    %v733 = vld [vmem:[%s703 + $0xe8] sm:$0xff]
    %v734 = vld [vmem:[%s703 + $0xf0] sm:$0xff]
    %v735 = vld [vmem:[%s703 + $0xf8] sm:$0xff]
    %v736 = vld [vmem:[%s703 + $0x100] sm:$0xff]
    %v737 = vld [vmem:[%s703 + $0x108] sm:$0xff]
    %v738 = vld [vmem:[%s703 + $0x110] sm:$0xff]
    %v739 = vld [vmem:[%s703 + $0x118] sm:$0xff]
    %v740 = vld [vmem:[%s703 + $0x120] sm:$0xff]
    %v741 = vld [vmem:[%s703 + $0x128] sm:$0xff]
    %v742 = vld [vmem:[%s703 + $0x130] sm:$0xff]
    %v743 = vld [vmem:[%s703 + $0x138] sm:$0xff]
    %v744 = vld [vmem:[%s703 + $0x140] sm:$0xff]
    %v745 = vld [vmem:[%s703 + $0x148] sm:$0xff]
    %v746 = vld [vmem:[%s703 + $0x150] sm:$0xff]
    %v747 = vld [vmem:[%s703 + $0x158] sm:$0xff]
    %v748 = vld [vmem:[%s703 + $0x160] sm:$0xff]
    %v749 = vld [vmem:[%s703 + $0x168] sm:$0xff]
    %v750 = vld [vmem:[%s703 + $0x170] sm:$0xff]
    %v751 = vld [vmem:[%s703 + $0x178] sm:$0xff]
    %v752 = vld [vmem:[%s703 + $0x180] sm:$0xff]
    %v753 = vld [vmem:[%s703 + $0x188] sm:$0xff]
    %v754 = vld [vmem:[%s703 + $0x190] sm:$0xff]
    %v755 = vld [vmem:[%s703 + $0x198] sm:$0xff]
    %v756 = vld [vmem:[%s703 + $0x1a0] sm:$0xff]
    %v757 = vld [vmem:[%s703 + $0x1a8] sm:$0xff]
    %v758 = vld [vmem:[%s703 + $0x1b0] sm:$0xff]
    %v759 = vld [vmem:[%s703 + $0x1b8] sm:$0xff]
    %v760 = vld [vmem:[%s703 + $0x1c0] sm:$0xff]
    %v761 = vld [vmem:[%s703 + $0x1c8] sm:$0xff]
    %v762 = vld [vmem:[%s703 + $0x1d0] sm:$0xff]
    %v763 = vld [vmem:[%s703 + $0x1d8] sm:$0xff]
    %v764 = vld [vmem:[%s703 + $0x1e0] sm:$0xff]
    %v765 = vld [vmem:[%s703 + $0x1e8] sm:$0xff]
    %v766 = vld [vmem:[%s703 + $0x1f0] sm:$0xff]
    %v767 = vld [vmem:[%s703 + $0x1f8] sm:$0xff]
    %v768 = vld [vmem:[%s703 + $0x200] sm:$0xff]
    %v769 = vld [vmem:[%s703 + $0x208] sm:$0xff]
    %v770 = vld [vmem:[%s703 + $0x210] sm:$0xff]
    %v771 = vld [vmem:[%s703 + $0x218] sm:$0xff]
    %v772 = vld [vmem:[%s703 + $0x220] sm:$0xff]
    %v773 = vld [vmem:[%s703 + $0x228] sm:$0xff]
    %v774 = vld [vmem:[%s703 + $0x230] sm:$0xff]
    %v775 = vld [vmem:[%s703 + $0x238] sm:$0xff]
    %v776 = vld [vmem:[%s703 + $0x240] sm:$0xff]
    %v777 = vld [vmem:[%s703 + $0x248] sm:$0xff]
    %v778 = vld [vmem:[%s703 + $0x250] sm:$0xff]
    %v779 = vld [vmem:[%s703 + $0x258] sm:$0xff]
    %v780 = vld [vmem:[%s703 + $0x260] sm:$0xff]
    %v781 = vld [vmem:[%s703 + $0x268] sm:$0xff]
    %v782 = vld [vmem:[%s703 + $0x270] sm:$0xff]
    %v783 = vld [vmem:[%s703 + $0x278] sm:$0xff]
    %v784 = vld [vmem:[%s703 + $0x280] sm:$0xff]
    %v785 = vld [vmem:[%s703 + $0x288] sm:$0xff]
    %v786 = vld [vmem:[%s703 + $0x290] sm:$0xff]
    %v787 = vld [vmem:[%s703 + $0x298] sm:$0xff]
    %v788 = vld [vmem:[%s703 + $0x2a0] sm:$0xff]
    %v789 = vld [vmem:[%s703 + $0x2a8] sm:$0xff]
    %v790 = vld [vmem:[%s703 + $0x2b0] sm:$0xff]
    %v791 = vld [vmem:[%s703 + $0x2b8] sm:$0xff]
    %v792 = vld [vmem:[%s703 + $0x2c0] sm:$0xff]
    %v793 = vld [vmem:[%s703 + $0x2c8] sm:$0xff]
    %v794 = vld [vmem:[%s703 + $0x2d0] sm:$0xff]
    %v795 = vld [vmem:[%s703 + $0x2d8] sm:$0xff]
    %v796 = vld [vmem:[%s703 + $0x2e0] sm:$0xff]
    %v797 = vld [vmem:[%s703 + $0x2e8] sm:$0xff]
    %v798 = vld [vmem:[%s703 + $0x2f0] sm:$0xff]
    %v799 = vld [vmem:[%s703 + $0x2f8] sm:$0xff]
    %vm800 = vcmask 1045504
    %v801 = vrot.slane %v121, 2
    %v802 = vrot.slane %v122, 2
    %v803 = vsel %vm800, %v801, %v802
    %v804 = vrot.slane %v123, 2
    %v805 = vsel %vm800, %v802, %v804
    %v806 = vsel %vm326, %v803, 0
    %v808 = vsel %vm326, %v805, 0
    %810 = vmatpush.msra.mxu0 0.0
    %811 = vmatpush.msra.mxu0 0.0
    %812 = vmatpush.msra.mxu0 0.0
    %813 = vmatpush.msra.mxu0 0.0
    %814 = vmatpush.msra.mxu0 %v792
    %815 = vmatpush.msra.mxu0 %v784
    %816 = vmatpush.msra.mxu0 %v776
    %817 = vmatpush.msra.mxu0 %v768
    %818 = vmatpush.msra.mxu0 %v760
    %819 = vmatpush.msra.mxu0 %v752
    %820 = vmatpush.msra.mxu0 %v744
    %821 = vmatpush.msra.mxu0 %v736
    %822 = vmatpush.msra.mxu0 %v728
    %823 = vmatpush.msra.mxu0 %v720
    %824 = vmatpush.msra.mxu0 %v712
    %825 = vmatpush.msra.mxu0 %v704
    %826 = vmatmul.f32.gmra.mxu0 %v806
    %v827 = vpop.f32.mrf.mxu0
    %v828 = vadd.f32 0.0, %v827
    %829 = vmatmul.f32.gmra.mxu0 %v808
    %v830 = vpop.f32.mrf.mxu0
    %v831 = vadd.f32 0.0, %v830
    %832 = vdwg.mxu0
    %833 = vmatpush.msra.mxu0 0.0
    %834 = vmatpush.msra.mxu0 0.0
    %835 = vmatpush.msra.mxu0 0.0
    %836 = vmatpush.msra.mxu0 0.0
    %837 = vmatpush.msra.mxu0 %v793
    %838 = vmatpush.msra.mxu0 %v785
    %839 = vmatpush.msra.mxu0 %v777
    %840 = vmatpush.msra.mxu0 %v769
    %841 = vmatpush.msra.mxu0 %v761
    %842 = vmatpush.msra.mxu0 %v753
    %843 = vmatpush.msra.mxu0 %v745
    %844 = vmatpush.msra.mxu0 %v737
    %845 = vmatpush.msra.mxu0 %v729
    %846 = vmatpush.msra.mxu0 %v721
    %847 = vmatpush.msra.mxu0 %v713
    %848 = vmatpush.msra.mxu0 %v705
    %849 = vmatmul.f32.gmra.mxu0 %v806
    %v850 = vpop.f32.mrf.mxu0
    %v851 = vadd.f32 0.0, %v850
    %852 = vmatmul.f32.gmra.mxu0 %v808
    %v853 = vpop.f32.mrf.mxu0
    %v854 = vadd.f32 0.0, %v853
    %855 = vdwg.mxu0
    %856 = vmatpush.msra.mxu0 0.0
    %857 = vmatpush.msra.mxu0 0.0
    %858 = vmatpush.msra.mxu0 0.0
    %859 = vmatpush.msra.mxu0 0.0
    %860 = vmatpush.msra.mxu0 %v794
    %861 = vmatpush.msra.mxu0 %v786
    %862 = vmatpush.msra.mxu0 %v778
    %863 = vmatpush.msra.mxu0 %v770
    %864 = vmatpush.msra.mxu0 %v762
    %865 = vmatpush.msra.mxu0 %v754
    %866 = vmatpush.msra.mxu0 %v746
    %867 = vmatpush.msra.mxu0 %v738
    %868 = vmatpush.msra.mxu0 %v730
    %869 = vmatpush.msra.mxu0 %v722
    %870 = vmatpush.msra.mxu0 %v714
    %871 = vmatpush.msra.mxu0 %v706
    %872 = vmatmul.f32.gmra.mxu0 %v806
    %v873 = vpop.f32.mrf.mxu0
    %v874 = vadd.f32 0.0, %v873
    %875 = vmatmul.f32.gmra.mxu0 %v808
    %v876 = vpop.f32.mrf.mxu0
    %v877 = vadd.f32 0.0, %v876
    %878 = vdwg.mxu0
    %879 = vmatpush.msra.mxu0 0.0
    %880 = vmatpush.msra.mxu0 0.0
    %881 = vmatpush.msra.mxu0 0.0
    %882 = vmatpush.msra.mxu0 0.0
    %883 = vmatpush.msra.mxu0 %v795
    %884 = vmatpush.msra.mxu0 %v787
    %885 = vmatpush.msra.mxu0 %v779
    %886 = vmatpush.msra.mxu0 %v771
    %887 = vmatpush.msra.mxu0 %v763
    %888 = vmatpush.msra.mxu0 %v755
    %889 = vmatpush.msra.mxu0 %v747
    %890 = vmatpush.msra.mxu0 %v739
    %891 = vmatpush.msra.mxu0 %v731
    %892 = vmatpush.msra.mxu0 %v723
    %893 = vmatpush.msra.mxu0 %v715
    %894 = vmatpush.msra.mxu0 %v707
    %895 = vmatmul.f32.gmra.mxu0 %v806
    %v896 = vpop.f32.mrf.mxu0
    %v897 = vadd.f32 0.0, %v896
    %898 = vmatmul.f32.gmra.mxu0 %v808
    %v899 = vpop.f32.mrf.mxu0
    %v900 = vadd.f32 0.0, %v899
    %901 = vdwg.mxu0
    %902 = vmatpush.msra.mxu0 0.0
    %903 = vmatpush.msra.mxu0 0.0
    %904 = vmatpush.msra.mxu0 0.0
    %905 = vmatpush.msra.mxu0 0.0
    %906 = vmatpush.msra.mxu0 %v796
    %907 = vmatpush.msra.mxu0 %v788
    %908 = vmatpush.msra.mxu0 %v780
    %909 = vmatpush.msra.mxu0 %v772
    %910 = vmatpush.msra.mxu0 %v764
    %911 = vmatpush.msra.mxu0 %v756
    %912 = vmatpush.msra.mxu0 %v748
    %913 = vmatpush.msra.mxu0 %v740
    %914 = vmatpush.msra.mxu0 %v732
    %915 = vmatpush.msra.mxu0 %v724
    %916 = vmatpush.msra.mxu0 %v716
    %917 = vmatpush.msra.mxu0 %v708
    %918 = vmatmul.f32.gmra.mxu0 %v806
    %v919 = vpop.f32.mrf.mxu0
    %v920 = vadd.f32 0.0, %v919
    %921 = vmatmul.f32.gmra.mxu0 %v808
    %v922 = vpop.f32.mrf.mxu0
    %v923 = vadd.f32 0.0, %v922
    %924 = vdwg.mxu0
    %925 = vmatpush.msra.mxu0 0.0
    %926 = vmatpush.msra.mxu0 0.0
    %927 = vmatpush.msra.mxu0 0.0
    %928 = vmatpush.msra.mxu0 0.0
    %929 = vmatpush.msra.mxu0 %v797
    %930 = vmatpush.msra.mxu0 %v789
    %931 = vmatpush.msra.mxu0 %v781
    %932 = vmatpush.msra.mxu0 %v773
    %933 = vmatpush.msra.mxu0 %v765
    %934 = vmatpush.msra.mxu0 %v757
    %935 = vmatpush.msra.mxu0 %v749
    %936 = vmatpush.msra.mxu0 %v741
    %937 = vmatpush.msra.mxu0 %v733
    %938 = vmatpush.msra.mxu0 %v725
    %939 = vmatpush.msra.mxu0 %v717
    %940 = vmatpush.msra.mxu0 %v709
    %941 = vmatmul.f32.gmra.mxu0 %v806
    %v942 = vpop.f32.mrf.mxu0
    %v943 = vadd.f32 0.0, %v942
    %944 = vmatmul.f32.gmra.mxu0 %v808
    %v945 = vpop.f32.mrf.mxu0
    %v946 = vadd.f32 0.0, %v945
    %947 = vdwg.mxu0
    %948 = vmatpush.msra.mxu0 0.0
    %949 = vmatpush.msra.mxu0 0.0
    %950 = vmatpush.msra.mxu0 0.0
    %951 = vmatpush.msra.mxu0 0.0
    %952 = vmatpush.msra.mxu0 %v798
    %953 = vmatpush.msra.mxu0 %v790
    %954 = vmatpush.msra.mxu0 %v782
    %955 = vmatpush.msra.mxu0 %v774
    %956 = vmatpush.msra.mxu0 %v766
    %957 = vmatpush.msra.mxu0 %v758
    %958 = vmatpush.msra.mxu0 %v750
    %959 = vmatpush.msra.mxu0 %v742
    %960 = vmatpush.msra.mxu0 %v734
    %961 = vmatpush.msra.mxu0 %v726
    %962 = vmatpush.msra.mxu0 %v718
    %963 = vmatpush.msra.mxu0 %v710
    %964 = vmatmul.f32.gmra.mxu0 %v806
    %v965 = vpop.f32.mrf.mxu0
    %v966 = vadd.f32 0.0, %v965
    %967 = vmatmul.f32.gmra.mxu0 %v808
    %v968 = vpop.f32.mrf.mxu0
    %v969 = vadd.f32 0.0, %v968
    %970 = vdwg.mxu0
    %971 = vmatpush.msra.mxu0 0.0
    %972 = vmatpush.msra.mxu0 0.0
    %973 = vmatpush.msra.mxu0 0.0
    %974 = vmatpush.msra.mxu0 0.0
    %975 = vmatpush.msra.mxu0 %v799
    %976 = vmatpush.msra.mxu0 %v791
    %977 = vmatpush.msra.mxu0 %v783
    %978 = vmatpush.msra.mxu0 %v775
    %979 = vmatpush.msra.mxu0 %v767
    %980 = vmatpush.msra.mxu0 %v759
    %981 = vmatpush.msra.mxu0 %v751
    %982 = vmatpush.msra.mxu0 %v743
    %983 = vmatpush.msra.mxu0 %v735
    %984 = vmatpush.msra.mxu0 %v727
    %985 = vmatpush.msra.mxu0 %v719
    %986 = vmatpush.msra.mxu0 %v711
    %987 = vmatmul.f32.gmra.mxu0 %v806
    %v988 = vpop.f32.mrf.mxu0
    %v989 = vadd.f32 0.0, %v988
    %990 = vmatmul.f32.gmra.mxu0 %v808
    %v991 = vpop.f32.mrf.mxu0
    %v992 = vadd.f32 0.0, %v991
    %993 = vdwg.mxu0
    %v994 = vadd.f32 %v537, %v828
    %v995 = vadd.f32 %v560, %v851
    %v996 = vadd.f32 %v583, %v874
    %v997 = vadd.f32 %v606, %v897
    %v998 = vadd.f32 %v629, %v920
    %v999 = vadd.f32 %v652, %v943
    %v1000 = vadd.f32 %v675, %v966
    %v1001 = vadd.f32 %v698, %v989
    %v1002 = vadd.f32 %v540, %v831
    %v1003 = vadd.f32 %v563, %v854
    %v1004 = vadd.f32 %v586, %v877
    %v1005 = vadd.f32 %v609, %v900
    %v1006 = vadd.f32 %v632, %v923
    %v1007 = vadd.f32 %v655, %v946
    %v1008 = vadd.f32 %v678, %v969
    %v1009 = vadd.f32 %v701, %v992
    %s1010 = scalar_lea.vmem [#allocation3], 2304
    %v1011 = vld [vmem:[%s1010] sm:$0xff]
    %v1012 = vld [vmem:[%s1010 + $0x8] sm:$0xff]
    %v1013 = vld [vmem:[%s1010 + $0x10] sm:$0xff]
    %v1014 = vld [vmem:[%s1010 + $0x18] sm:$0xff]
    %v1015 = vld [vmem:[%s1010 + $0x20] sm:$0xff]
    %v1016 = vld [vmem:[%s1010 + $0x28] sm:$0xff]
    %v1017 = vld [vmem:[%s1010 + $0x30] sm:$0xff]
    %v1018 = vld [vmem:[%s1010 + $0x38] sm:$0xff]
    %v1019 = vld [vmem:[%s1010 + $0x40] sm:$0xff]
    %v1020 = vld [vmem:[%s1010 + $0x48] sm:$0xff]
    %v1021 = vld [vmem:[%s1010 + $0x50] sm:$0xff]
    %v1022 = vld [vmem:[%s1010 + $0x58] sm:$0xff]
    %v1023 = vld [vmem:[%s1010 + $0x60] sm:$0xff]
    %v1024 = vld [vmem:[%s1010 + $0x68] sm:$0xff]
    %v1025 = vld [vmem:[%s1010 + $0x70] sm:$0xff]
    %v1026 = vld [vmem:[%s1010 + $0x78] sm:$0xff]
    %v1027 = vld [vmem:[%s1010 + $0x80] sm:$0xff]
    %v1028 = vld [vmem:[%s1010 + $0x88] sm:$0xff]
    %v1029 = vld [vmem:[%s1010 + $0x90] sm:$0xff]
    %v1030 = vld [vmem:[%s1010 + $0x98] sm:$0xff]
    %v1031 = vld [vmem:[%s1010 + $0xa0] sm:$0xff]
    %v1032 = vld [vmem:[%s1010 + $0xa8] sm:$0xff]
    %v1033 = vld [vmem:[%s1010 + $0xb0] sm:$0xff]
    %v1034 = vld [vmem:[%s1010 + $0xb8] sm:$0xff]
    %v1035 = vld [vmem:[%s1010 + $0xc0] sm:$0xff]
    %v1036 = vld [vmem:[%s1010 + $0xc8] sm:$0xff]
    %v1037 = vld [vmem:[%s1010 + $0xd0] sm:$0xff]
    %v1038 = vld [vmem:[%s1010 + $0xd8] sm:$0xff]
    %v1039 = vld [vmem:[%s1010 + $0xe0] sm:$0xff]
    %v1040 = vld [vmem:[%s1010 + $0xe8] sm:$0xff]
    %v1041 = vld [vmem:[%s1010 + $0xf0] sm:$0xff]
    %v1042 = vld [vmem:[%s1010 + $0xf8] sm:$0xff]
    %v1043 = vld [vmem:[%s1010 + $0x100] sm:$0xff]
    %v1044 = vld [vmem:[%s1010 + $0x108] sm:$0xff]
    %v1045 = vld [vmem:[%s1010 + $0x110] sm:$0xff]
    %v1046 = vld [vmem:[%s1010 + $0x118] sm:$0xff]
    %v1047 = vld [vmem:[%s1010 + $0x120] sm:$0xff]
    %v1048 = vld [vmem:[%s1010 + $0x128] sm:$0xff]
    %v1049 = vld [vmem:[%s1010 + $0x130] sm:$0xff]
    %v1050 = vld [vmem:[%s1010 + $0x138] sm:$0xff]
    %v1051 = vld [vmem:[%s1010 + $0x140] sm:$0xff]
    %v1052 = vld [vmem:[%s1010 + $0x148] sm:$0xff]
    %v1053 = vld [vmem:[%s1010 + $0x150] sm:$0xff]
    %v1054 = vld [vmem:[%s1010 + $0x158] sm:$0xff]
    %v1055 = vld [vmem:[%s1010 + $0x160] sm:$0xff]
    %v1056 = vld [vmem:[%s1010 + $0x168] sm:$0xff]
    %v1057 = vld [vmem:[%s1010 + $0x170] sm:$0xff]
    %v1058 = vld [vmem:[%s1010 + $0x178] sm:$0xff]
    %v1059 = vld [vmem:[%s1010 + $0x180] sm:$0xff]
    %v1060 = vld [vmem:[%s1010 + $0x188] sm:$0xff]
    %v1061 = vld [vmem:[%s1010 + $0x190] sm:$0xff]
    %v1062 = vld [vmem:[%s1010 + $0x198] sm:$0xff]
    %v1063 = vld [vmem:[%s1010 + $0x1a0] sm:$0xff]
    %v1064 = vld [vmem:[%s1010 + $0x1a8] sm:$0xff]
    %v1065 = vld [vmem:[%s1010 + $0x1b0] sm:$0xff]
    %v1066 = vld [vmem:[%s1010 + $0x1b8] sm:$0xff]
    %v1067 = vld [vmem:[%s1010 + $0x1c0] sm:$0xff]
    %v1068 = vld [vmem:[%s1010 + $0x1c8] sm:$0xff]
    %v1069 = vld [vmem:[%s1010 + $0x1d0] sm:$0xff]
    %v1070 = vld [vmem:[%s1010 + $0x1d8] sm:$0xff]
    %v1071 = vld [vmem:[%s1010 + $0x1e0] sm:$0xff]
    %v1072 = vld [vmem:[%s1010 + $0x1e8] sm:$0xff]
    %v1073 = vld [vmem:[%s1010 + $0x1f0] sm:$0xff]
    %v1074 = vld [vmem:[%s1010 + $0x1f8] sm:$0xff]
    %v1075 = vld [vmem:[%s1010 + $0x200] sm:$0xff]
    %v1076 = vld [vmem:[%s1010 + $0x208] sm:$0xff]
    %v1077 = vld [vmem:[%s1010 + $0x210] sm:$0xff]
    %v1078 = vld [vmem:[%s1010 + $0x218] sm:$0xff]
    %v1079 = vld [vmem:[%s1010 + $0x220] sm:$0xff]
    %v1080 = vld [vmem:[%s1010 + $0x228] sm:$0xff]
    %v1081 = vld [vmem:[%s1010 + $0x230] sm:$0xff]
    %v1082 = vld [vmem:[%s1010 + $0x238] sm:$0xff]
    %v1083 = vld [vmem:[%s1010 + $0x240] sm:$0xff]
    %v1084 = vld [vmem:[%s1010 + $0x248] sm:$0xff]
    %v1085 = vld [vmem:[%s1010 + $0x250] sm:$0xff]
    %v1086 = vld [vmem:[%s1010 + $0x258] sm:$0xff]
    %v1087 = vld [vmem:[%s1010 + $0x260] sm:$0xff]
    %v1088 = vld [vmem:[%s1010 + $0x268] sm:$0xff]
    %v1089 = vld [vmem:[%s1010 + $0x270] sm:$0xff]
    %v1090 = vld [vmem:[%s1010 + $0x278] sm:$0xff]
    %v1091 = vld [vmem:[%s1010 + $0x280] sm:$0xff]
    %v1092 = vld [vmem:[%s1010 + $0x288] sm:$0xff]
    %v1093 = vld [vmem:[%s1010 + $0x290] sm:$0xff]
    %v1094 = vld [vmem:[%s1010 + $0x298] sm:$0xff]
    %v1095 = vld [vmem:[%s1010 + $0x2a0] sm:$0xff]
    %v1096 = vld [vmem:[%s1010 + $0x2a8] sm:$0xff]
    %v1097 = vld [vmem:[%s1010 + $0x2b0] sm:$0xff]
    %v1098 = vld [vmem:[%s1010 + $0x2b8] sm:$0xff]
    %v1099 = vld [vmem:[%s1010 + $0x2c0] sm:$0xff]
    %v1100 = vld [vmem:[%s1010 + $0x2c8] sm:$0xff]
    %v1101 = vld [vmem:[%s1010 + $0x2d0] sm:$0xff]
    %v1102 = vld [vmem:[%s1010 + $0x2d8] sm:$0xff]
    %v1103 = vld [vmem:[%s1010 + $0x2e0] sm:$0xff]
    %v1104 = vld [vmem:[%s1010 + $0x2e8] sm:$0xff]
    %v1105 = vld [vmem:[%s1010 + $0x2f0] sm:$0xff]
    %v1106 = vld [vmem:[%s1010 + $0x2f8] sm:$0xff]
    %vm1107 = vcmask 1044480
    %v1108 = vrot.slane %v121, 3
    %v1109 = vrot.slane %v122, 3
    %v1110 = vsel %vm1107, %v1108, %v1109
    %v1111 = vrot.slane %v123, 3
    %v1112 = vsel %vm1107, %v1109, %v1111
    %v1113 = vsel %vm326, %v1110, 0
    %v1115 = vsel %vm326, %v1112, 0
    %1117 = vmatpush.msra.mxu0 0.0
    %1118 = vmatpush.msra.mxu0 0.0
    %1119 = vmatpush.msra.mxu0 0.0
    %1120 = vmatpush.msra.mxu0 0.0
    %1121 = vmatpush.msra.mxu0 %v1099
    %1122 = vmatpush.msra.mxu0 %v1091
    %1123 = vmatpush.msra.mxu0 %v1083
    %1124 = vmatpush.msra.mxu0 %v1075
    %1125 = vmatpush.msra.mxu0 %v1067
    %1126 = vmatpush.msra.mxu0 %v1059
    %1127 = vmatpush.msra.mxu0 %v1051
    %1128 = vmatpush.msra.mxu0 %v1043
    %1129 = vmatpush.msra.mxu0 %v1035
    %1130 = vmatpush.msra.mxu0 %v1027
    %1131 = vmatpush.msra.mxu0 %v1019
    %1132 = vmatpush.msra.mxu0 %v1011
    %1133 = vmatmul.f32.gmra.mxu0 %v1113
    %v1134 = vpop.f32.mrf.mxu0
    %v1135 = vadd.f32 0.0, %v1134
    %1136 = vmatmul.f32.gmra.mxu0 %v1115
    %v1137 = vpop.f32.mrf.mxu0
    %v1138 = vadd.f32 0.0, %v1137
    %1139 = vdwg.mxu0
    %1140 = vmatpush.msra.mxu0 0.0
    %1141 = vmatpush.msra.mxu0 0.0
    %1142 = vmatpush.msra.mxu0 0.0
    %1143 = vmatpush.msra.mxu0 0.0
    %1144 = vmatpush.msra.mxu0 %v1100
    %1145 = vmatpush.msra.mxu0 %v1092
    %1146 = vmatpush.msra.mxu0 %v1084
    %1147 = vmatpush.msra.mxu0 %v1076
    %1148 = vmatpush.msra.mxu0 %v1068
    %1149 = vmatpush.msra.mxu0 %v1060
    %1150 = vmatpush.msra.mxu0 %v1052
    %1151 = vmatpush.msra.mxu0 %v1044
    %1152 = vmatpush.msra.mxu0 %v1036
    %1153 = vmatpush.msra.mxu0 %v1028
    %1154 = vmatpush.msra.mxu0 %v1020
    %1155 = vmatpush.msra.mxu0 %v1012
    %1156 = vmatmul.f32.gmra.mxu0 %v1113
    %v1157 = vpop.f32.mrf.mxu0
    %v1158 = vadd.f32 0.0, %v1157
    %1159 = vmatmul.f32.gmra.mxu0 %v1115
    %v1160 = vpop.f32.mrf.mxu0
    %v1161 = vadd.f32 0.0, %v1160
    %1162 = vdwg.mxu0
    %1163 = vmatpush.msra.mxu0 0.0
    %1164 = vmatpush.msra.mxu0 0.0
    %1165 = vmatpush.msra.mxu0 0.0
    %1166 = vmatpush.msra.mxu0 0.0
    %1167 = vmatpush.msra.mxu0 %v1101
    %1168 = vmatpush.msra.mxu0 %v1093
    %1169 = vmatpush.msra.mxu0 %v1085
    %1170 = vmatpush.msra.mxu0 %v1077
    %1171 = vmatpush.msra.mxu0 %v1069
    %1172 = vmatpush.msra.mxu0 %v1061
    %1173 = vmatpush.msra.mxu0 %v1053
    %1174 = vmatpush.msra.mxu0 %v1045
    %1175 = vmatpush.msra.mxu0 %v1037
    %1176 = vmatpush.msra.mxu0 %v1029
    %1177 = vmatpush.msra.mxu0 %v1021
    %1178 = vmatpush.msra.mxu0 %v1013
    %1179 = vmatmul.f32.gmra.mxu0 %v1113
    %v1180 = vpop.f32.mrf.mxu0
    %v1181 = vadd.f32 0.0, %v1180
    %1182 = vmatmul.f32.gmra.mxu0 %v1115
    %v1183 = vpop.f32.mrf.mxu0
    %v1184 = vadd.f32 0.0, %v1183
    %1185 = vdwg.mxu0
    %1186 = vmatpush.msra.mxu0 0.0
    %1187 = vmatpush.msra.mxu0 0.0
    %1188 = vmatpush.msra.mxu0 0.0
    %1189 = vmatpush.msra.mxu0 0.0
    %1190 = vmatpush.msra.mxu0 %v1102
    %1191 = vmatpush.msra.mxu0 %v1094
    %1192 = vmatpush.msra.mxu0 %v1086
    %1193 = vmatpush.msra.mxu0 %v1078
    %1194 = vmatpush.msra.mxu0 %v1070
    %1195 = vmatpush.msra.mxu0 %v1062
    %1196 = vmatpush.msra.mxu0 %v1054
    %1197 = vmatpush.msra.mxu0 %v1046
    %1198 = vmatpush.msra.mxu0 %v1038
    %1199 = vmatpush.msra.mxu0 %v1030
    %1200 = vmatpush.msra.mxu0 %v1022
    %1201 = vmatpush.msra.mxu0 %v1014
    %1202 = vmatmul.f32.gmra.mxu0 %v1113
    %v1203 = vpop.f32.mrf.mxu0
    %v1204 = vadd.f32 0.0, %v1203
    %1205 = vmatmul.f32.gmra.mxu0 %v1115
    %v1206 = vpop.f32.mrf.mxu0
    %v1207 = vadd.f32 0.0, %v1206
    %1208 = vdwg.mxu0
    %1209 = vmatpush.msra.mxu0 0.0
    %1210 = vmatpush.msra.mxu0 0.0
    %1211 = vmatpush.msra.mxu0 0.0
    %1212 = vmatpush.msra.mxu0 0.0
    %1213 = vmatpush.msra.mxu0 %v1103
    %1214 = vmatpush.msra.mxu0 %v1095
    %1215 = vmatpush.msra.mxu0 %v1087
    %1216 = vmatpush.msra.mxu0 %v1079
    %1217 = vmatpush.msra.mxu0 %v1071
    %1218 = vmatpush.msra.mxu0 %v1063
    %1219 = vmatpush.msra.mxu0 %v1055
    %1220 = vmatpush.msra.mxu0 %v1047
    %1221 = vmatpush.msra.mxu0 %v1039
    %1222 = vmatpush.msra.mxu0 %v1031
    %1223 = vmatpush.msra.mxu0 %v1023
    %1224 = vmatpush.msra.mxu0 %v1015
    %1225 = vmatmul.f32.gmra.mxu0 %v1113
    %v1226 = vpop.f32.mrf.mxu0
    %v1227 = vadd.f32 0.0, %v1226
    %1228 = vmatmul.f32.gmra.mxu0 %v1115
    %v1229 = vpop.f32.mrf.mxu0
    %v1230 = vadd.f32 0.0, %v1229
    %1231 = vdwg.mxu0
    %1232 = vmatpush.msra.mxu0 0.0
    %1233 = vmatpush.msra.mxu0 0.0
    %1234 = vmatpush.msra.mxu0 0.0
    %1235 = vmatpush.msra.mxu0 0.0
    %1236 = vmatpush.msra.mxu0 %v1104
    %1237 = vmatpush.msra.mxu0 %v1096
    %1238 = vmatpush.msra.mxu0 %v1088
    %1239 = vmatpush.msra.mxu0 %v1080
    %1240 = vmatpush.msra.mxu0 %v1072
    %1241 = vmatpush.msra.mxu0 %v1064
    %1242 = vmatpush.msra.mxu0 %v1056
    %1243 = vmatpush.msra.mxu0 %v1048
    %1244 = vmatpush.msra.mxu0 %v1040
    %1245 = vmatpush.msra.mxu0 %v1032
    %1246 = vmatpush.msra.mxu0 %v1024
    %1247 = vmatpush.msra.mxu0 %v1016
    %1248 = vmatmul.f32.gmra.mxu0 %v1113
    %v1249 = vpop.f32.mrf.mxu0
    %v1250 = vadd.f32 0.0, %v1249
    %1251 = vmatmul.f32.gmra.mxu0 %v1115
    %v1252 = vpop.f32.mrf.mxu0
    %v1253 = vadd.f32 0.0, %v1252
    %1254 = vdwg.mxu0
    %1255 = vmatpush.msra.mxu0 0.0
    %1256 = vmatpush.msra.mxu0 0.0
    %1257 = vmatpush.msra.mxu0 0.0
    %1258 = vmatpush.msra.mxu0 0.0
    %1259 = vmatpush.msra.mxu0 %v1105
    %1260 = vmatpush.msra.mxu0 %v1097
    %1261 = vmatpush.msra.mxu0 %v1089
    %1262 = vmatpush.msra.mxu0 %v1081
    %1263 = vmatpush.msra.mxu0 %v1073
    %1264 = vmatpush.msra.mxu0 %v1065
    %1265 = vmatpush.msra.mxu0 %v1057
    %1266 = vmatpush.msra.mxu0 %v1049
    %1267 = vmatpush.msra.mxu0 %v1041
    %1268 = vmatpush.msra.mxu0 %v1033
    %1269 = vmatpush.msra.mxu0 %v1025
    %1270 = vmatpush.msra.mxu0 %v1017
    %1271 = vmatmul.f32.gmra.mxu0 %v1113
    %v1272 = vpop.f32.mrf.mxu0
    %v1273 = vadd.f32 0.0, %v1272
    %1274 = vmatmul.f32.gmra.mxu0 %v1115
    %v1275 = vpop.f32.mrf.mxu0
    %v1276 = vadd.f32 0.0, %v1275
    %1277 = vdwg.mxu0
    %1278 = vmatpush.msra.mxu0 0.0
    %1279 = vmatpush.msra.mxu0 0.0
    %1280 = vmatpush.msra.mxu0 0.0
    %1281 = vmatpush.msra.mxu0 0.0
    %1282 = vmatpush.msra.mxu0 %v1106
    %1283 = vmatpush.msra.mxu0 %v1098
    %1284 = vmatpush.msra.mxu0 %v1090
    %1285 = vmatpush.msra.mxu0 %v1082
    %1286 = vmatpush.msra.mxu0 %v1074
    %1287 = vmatpush.msra.mxu0 %v1066
    %1288 = vmatpush.msra.mxu0 %v1058
    %1289 = vmatpush.msra.mxu0 %v1050
    %1290 = vmatpush.msra.mxu0 %v1042
    %1291 = vmatpush.msra.mxu0 %v1034
    %1292 = vmatpush.msra.mxu0 %v1026
    %1293 = vmatpush.msra.mxu0 %v1018
    %1294 = vmatmul.f32.gmra.mxu0 %v1113
    %v1295 = vpop.f32.mrf.mxu0
    %v1296 = vadd.f32 0.0, %v1295
    %1297 = vmatmul.f32.gmra.mxu0 %v1115
    %v1298 = vpop.f32.mrf.mxu0
    %v1299 = vadd.f32 0.0, %v1298
    %1300 = vdwg.mxu0
    %v1301 = vadd.f32 %v994, %v1135
    %v1302 = vadd.f32 %v995, %v1158
    %v1303 = vadd.f32 %v996, %v1181
    %v1304 = vadd.f32 %v997, %v1204
    %v1305 = vadd.f32 %v998, %v1227
    %v1306 = vadd.f32 %v999, %v1250
    %v1307 = vadd.f32 %v1000, %v1273
    %v1308 = vadd.f32 %v1001, %v1296
    %v1309 = vadd.f32 %v1002, %v1138
    %v1310 = vadd.f32 %v1003, %v1161
    %v1311 = vadd.f32 %v1004, %v1184
    %v1312 = vadd.f32 %v1005, %v1207
    %v1313 = vadd.f32 %v1006, %v1230
    %v1314 = vadd.f32 %v1007, %v1253
    %v1315 = vadd.f32 %v1008, %v1276
    %v1316 = vadd.f32 %v1009, %v1299
    %s1317 = scalar_lea.vmem [#allocation3], 3072
    %v1318 = vld [vmem:[%s1317] sm:$0xff]
    %v1319 = vld [vmem:[%s1317 + $0x8] sm:$0xff]
    %v1320 = vld [vmem:[%s1317 + $0x10] sm:$0xff]
    %v1321 = vld [vmem:[%s1317 + $0x18] sm:$0xff]
    %v1322 = vld [vmem:[%s1317 + $0x20] sm:$0xff]
    %v1323 = vld [vmem:[%s1317 + $0x28] sm:$0xff]
    %v1324 = vld [vmem:[%s1317 + $0x30] sm:$0xff]
    %v1325 = vld [vmem:[%s1317 + $0x38] sm:$0xff]
    %v1326 = vld [vmem:[%s1317 + $0x40] sm:$0xff]
    %v1327 = vld [vmem:[%s1317 + $0x48] sm:$0xff]
    %v1328 = vld [vmem:[%s1317 + $0x50] sm:$0xff]
    %v1329 = vld [vmem:[%s1317 + $0x58] sm:$0xff]
    %v1330 = vld [vmem:[%s1317 + $0x60] sm:$0xff]
    %v1331 = vld [vmem:[%s1317 + $0x68] sm:$0xff]
    %v1332 = vld [vmem:[%s1317 + $0x70] sm:$0xff]
    %v1333 = vld [vmem:[%s1317 + $0x78] sm:$0xff]
    %v1334 = vld [vmem:[%s1317 + $0x80] sm:$0xff]
    %v1335 = vld [vmem:[%s1317 + $0x88] sm:$0xff]
    %v1336 = vld [vmem:[%s1317 + $0x90] sm:$0xff]
    %v1337 = vld [vmem:[%s1317 + $0x98] sm:$0xff]
    %v1338 = vld [vmem:[%s1317 + $0xa0] sm:$0xff]
    %v1339 = vld [vmem:[%s1317 + $0xa8] sm:$0xff]
    %v1340 = vld [vmem:[%s1317 + $0xb0] sm:$0xff]
    %v1341 = vld [vmem:[%s1317 + $0xb8] sm:$0xff]
    %v1342 = vld [vmem:[%s1317 + $0xc0] sm:$0xff]
    %v1343 = vld [vmem:[%s1317 + $0xc8] sm:$0xff]
    %v1344 = vld [vmem:[%s1317 + $0xd0] sm:$0xff]
    %v1345 = vld [vmem:[%s1317 + $0xd8] sm:$0xff]
    %v1346 = vld [vmem:[%s1317 + $0xe0] sm:$0xff]
    %v1347 = vld [vmem:[%s1317 + $0xe8] sm:$0xff]
    %v1348 = vld [vmem:[%s1317 + $0xf0] sm:$0xff]
    %v1349 = vld [vmem:[%s1317 + $0xf8] sm:$0xff]
    %v1350 = vld [vmem:[%s1317 + $0x100] sm:$0xff]
    %v1351 = vld [vmem:[%s1317 + $0x108] sm:$0xff]
    %v1352 = vld [vmem:[%s1317 + $0x110] sm:$0xff]
    %v1353 = vld [vmem:[%s1317 + $0x118] sm:$0xff]
    %v1354 = vld [vmem:[%s1317 + $0x120] sm:$0xff]
    %v1355 = vld [vmem:[%s1317 + $0x128] sm:$0xff]
    %v1356 = vld [vmem:[%s1317 + $0x130] sm:$0xff]
    %v1357 = vld [vmem:[%s1317 + $0x138] sm:$0xff]
    %v1358 = vld [vmem:[%s1317 + $0x140] sm:$0xff]
    %v1359 = vld [vmem:[%s1317 + $0x148] sm:$0xff]
    %v1360 = vld [vmem:[%s1317 + $0x150] sm:$0xff]
    %v1361 = vld [vmem:[%s1317 + $0x158] sm:$0xff]
    %v1362 = vld [vmem:[%s1317 + $0x160] sm:$0xff]
    %v1363 = vld [vmem:[%s1317 + $0x168] sm:$0xff]
    %v1364 = vld [vmem:[%s1317 + $0x170] sm:$0xff]
    %v1365 = vld [vmem:[%s1317 + $0x178] sm:$0xff]
    %v1366 = vld [vmem:[%s1317 + $0x180] sm:$0xff]
    %v1367 = vld [vmem:[%s1317 + $0x188] sm:$0xff]
    %v1368 = vld [vmem:[%s1317 + $0x190] sm:$0xff]
    %v1369 = vld [vmem:[%s1317 + $0x198] sm:$0xff]
    %v1370 = vld [vmem:[%s1317 + $0x1a0] sm:$0xff]
    %v1371 = vld [vmem:[%s1317 + $0x1a8] sm:$0xff]
    %v1372 = vld [vmem:[%s1317 + $0x1b0] sm:$0xff]
    %v1373 = vld [vmem:[%s1317 + $0x1b8] sm:$0xff]
    %v1374 = vld [vmem:[%s1317 + $0x1c0] sm:$0xff]
    %v1375 = vld [vmem:[%s1317 + $0x1c8] sm:$0xff]
    %v1376 = vld [vmem:[%s1317 + $0x1d0] sm:$0xff]
    %v1377 = vld [vmem:[%s1317 + $0x1d8] sm:$0xff]
    %v1378 = vld [vmem:[%s1317 + $0x1e0] sm:$0xff]
    %v1379 = vld [vmem:[%s1317 + $0x1e8] sm:$0xff]
    %v1380 = vld [vmem:[%s1317 + $0x1f0] sm:$0xff]
    %v1381 = vld [vmem:[%s1317 + $0x1f8] sm:$0xff]
    %v1382 = vld [vmem:[%s1317 + $0x200] sm:$0xff]
    %v1383 = vld [vmem:[%s1317 + $0x208] sm:$0xff]
    %v1384 = vld [vmem:[%s1317 + $0x210] sm:$0xff]
    %v1385 = vld [vmem:[%s1317 + $0x218] sm:$0xff]
    %v1386 = vld [vmem:[%s1317 + $0x220] sm:$0xff]
    %v1387 = vld [vmem:[%s1317 + $0x228] sm:$0xff]
    %v1388 = vld [vmem:[%s1317 + $0x230] sm:$0xff]
    %v1389 = vld [vmem:[%s1317 + $0x238] sm:$0xff]
    %v1390 = vld [vmem:[%s1317 + $0x240] sm:$0xff]
    %v1391 = vld [vmem:[%s1317 + $0x248] sm:$0xff]
    %v1392 = vld [vmem:[%s1317 + $0x250] sm:$0xff]
    %v1393 = vld [vmem:[%s1317 + $0x258] sm:$0xff]
    %v1394 = vld [vmem:[%s1317 + $0x260] sm:$0xff]
    %v1395 = vld [vmem:[%s1317 + $0x268] sm:$0xff]
    %v1396 = vld [vmem:[%s1317 + $0x270] sm:$0xff]
    %v1397 = vld [vmem:[%s1317 + $0x278] sm:$0xff]
    %v1398 = vld [vmem:[%s1317 + $0x280] sm:$0xff]
    %v1399 = vld [vmem:[%s1317 + $0x288] sm:$0xff]
    %v1400 = vld [vmem:[%s1317 + $0x290] sm:$0xff]
    %v1401 = vld [vmem:[%s1317 + $0x298] sm:$0xff]
    %v1402 = vld [vmem:[%s1317 + $0x2a0] sm:$0xff]
    %v1403 = vld [vmem:[%s1317 + $0x2a8] sm:$0xff]
    %v1404 = vld [vmem:[%s1317 + $0x2b0] sm:$0xff]
    %v1405 = vld [vmem:[%s1317 + $0x2b8] sm:$0xff]
    %v1406 = vld [vmem:[%s1317 + $0x2c0] sm:$0xff]
    %v1407 = vld [vmem:[%s1317 + $0x2c8] sm:$0xff]
    %v1408 = vld [vmem:[%s1317 + $0x2d0] sm:$0xff]
    %v1409 = vld [vmem:[%s1317 + $0x2d8] sm:$0xff]
    %v1410 = vld [vmem:[%s1317 + $0x2e0] sm:$0xff]
    %v1411 = vld [vmem:[%s1317 + $0x2e8] sm:$0xff]
    %v1412 = vld [vmem:[%s1317 + $0x2f0] sm:$0xff]
    %v1413 = vld [vmem:[%s1317 + $0x2f8] sm:$0xff]
    %vm1414 = vcmask 1043456
    %v1415 = vrot.slane %v121, 4
    %v1416 = vrot.slane %v122, 4
    %v1417 = vsel %vm1414, %v1415, %v1416
    %v1418 = vrot.slane %v123, 4
    %v1419 = vsel %vm1414, %v1416, %v1418
    %v1420 = vsel %vm326, %v1417, 0
    %v1422 = vsel %vm326, %v1419, 0
    %1424 = vmatpush.msra.mxu0 0.0
    %1425 = vmatpush.msra.mxu0 0.0
    %1426 = vmatpush.msra.mxu0 0.0
    %1427 = vmatpush.msra.mxu0 0.0
    %1428 = vmatpush.msra.mxu0 %v1406
    %1429 = vmatpush.msra.mxu0 %v1398
    %1430 = vmatpush.msra.mxu0 %v1390
    %1431 = vmatpush.msra.mxu0 %v1382
    %1432 = vmatpush.msra.mxu0 %v1374
    %1433 = vmatpush.msra.mxu0 %v1366
    %1434 = vmatpush.msra.mxu0 %v1358
    %1435 = vmatpush.msra.mxu0 %v1350
    %1436 = vmatpush.msra.mxu0 %v1342
    %1437 = vmatpush.msra.mxu0 %v1334
    %1438 = vmatpush.msra.mxu0 %v1326
    %1439 = vmatpush.msra.mxu0 %v1318
    %1440 = vmatmul.f32.gmra.mxu0 %v1420
    %v1441 = vpop.f32.mrf.mxu0
    %v1442 = vadd.f32 0.0, %v1441
    %1443 = vmatmul.f32.gmra.mxu0 %v1422
    %v1444 = vpop.f32.mrf.mxu0
    %v1445 = vadd.f32 0.0, %v1444
    %1446 = vdwg.mxu0
    %1447 = vmatpush.msra.mxu0 0.0
    %1448 = vmatpush.msra.mxu0 0.0
    %1449 = vmatpush.msra.mxu0 0.0
    %1450 = vmatpush.msra.mxu0 0.0
    %1451 = vmatpush.msra.mxu0 %v1407
    %1452 = vmatpush.msra.mxu0 %v1399
    %1453 = vmatpush.msra.mxu0 %v1391
    %1454 = vmatpush.msra.mxu0 %v1383
    %1455 = vmatpush.msra.mxu0 %v1375
    %1456 = vmatpush.msra.mxu0 %v1367
    %1457 = vmatpush.msra.mxu0 %v1359
    %1458 = vmatpush.msra.mxu0 %v1351
    %1459 = vmatpush.msra.mxu0 %v1343
    %1460 = vmatpush.msra.mxu0 %v1335
    %1461 = vmatpush.msra.mxu0 %v1327
    %1462 = vmatpush.msra.mxu0 %v1319
    %1463 = vmatmul.f32.gmra.mxu0 %v1420
    %v1464 = vpop.f32.mrf.mxu0
    %v1465 = vadd.f32 0.0, %v1464
    %1466 = vmatmul.f32.gmra.mxu0 %v1422
    %v1467 = vpop.f32.mrf.mxu0
    %v1468 = vadd.f32 0.0, %v1467
    %1469 = vdwg.mxu0
    %1470 = vmatpush.msra.mxu0 0.0
    %1471 = vmatpush.msra.mxu0 0.0
    %1472 = vmatpush.msra.mxu0 0.0
    %1473 = vmatpush.msra.mxu0 0.0
    %1474 = vmatpush.msra.mxu0 %v1408
    %1475 = vmatpush.msra.mxu0 %v1400
    %1476 = vmatpush.msra.mxu0 %v1392
    %1477 = vmatpush.msra.mxu0 %v1384
    %1478 = vmatpush.msra.mxu0 %v1376
    %1479 = vmatpush.msra.mxu0 %v1368
    %1480 = vmatpush.msra.mxu0 %v1360
    %1481 = vmatpush.msra.mxu0 %v1352
    %1482 = vmatpush.msra.mxu0 %v1344
    %1483 = vmatpush.msra.mxu0 %v1336
    %1484 = vmatpush.msra.mxu0 %v1328
    %1485 = vmatpush.msra.mxu0 %v1320
    %1486 = vmatmul.f32.gmra.mxu0 %v1420
    %v1487 = vpop.f32.mrf.mxu0
    %v1488 = vadd.f32 0.0, %v1487
    %1489 = vmatmul.f32.gmra.mxu0 %v1422
    %v1490 = vpop.f32.mrf.mxu0
    %v1491 = vadd.f32 0.0, %v1490
    %1492 = vdwg.mxu0
    %1493 = vmatpush.msra.mxu0 0.0
    %1494 = vmatpush.msra.mxu0 0.0
    %1495 = vmatpush.msra.mxu0 0.0
    %1496 = vmatpush.msra.mxu0 0.0
    %1497 = vmatpush.msra.mxu0 %v1409
    %1498 = vmatpush.msra.mxu0 %v1401
    %1499 = vmatpush.msra.mxu0 %v1393
    %1500 = vmatpush.msra.mxu0 %v1385
    %1501 = vmatpush.msra.mxu0 %v1377
    %1502 = vmatpush.msra.mxu0 %v1369
    %1503 = vmatpush.msra.mxu0 %v1361
    %1504 = vmatpush.msra.mxu0 %v1353
    %1505 = vmatpush.msra.mxu0 %v1345
    %1506 = vmatpush.msra.mxu0 %v1337
    %1507 = vmatpush.msra.mxu0 %v1329
    %1508 = vmatpush.msra.mxu0 %v1321
    %1509 = vmatmul.f32.gmra.mxu0 %v1420
    %v1510 = vpop.f32.mrf.mxu0
    %v1511 = vadd.f32 0.0, %v1510
    %1512 = vmatmul.f32.gmra.mxu0 %v1422
    %v1513 = vpop.f32.mrf.mxu0
    %v1514 = vadd.f32 0.0, %v1513
    %1515 = vdwg.mxu0
    %1516 = vmatpush.msra.mxu0 0.0
    %1517 = vmatpush.msra.mxu0 0.0
    %1518 = vmatpush.msra.mxu0 0.0
    %1519 = vmatpush.msra.mxu0 0.0
    %1520 = vmatpush.msra.mxu0 %v1410
    %1521 = vmatpush.msra.mxu0 %v1402
    %1522 = vmatpush.msra.mxu0 %v1394
    %1523 = vmatpush.msra.mxu0 %v1386
    %1524 = vmatpush.msra.mxu0 %v1378
    %1525 = vmatpush.msra.mxu0 %v1370
    %1526 = vmatpush.msra.mxu0 %v1362
    %1527 = vmatpush.msra.mxu0 %v1354
    %1528 = vmatpush.msra.mxu0 %v1346
    %1529 = vmatpush.msra.mxu0 %v1338
    %1530 = vmatpush.msra.mxu0 %v1330
    %1531 = vmatpush.msra.mxu0 %v1322
    %1532 = vmatmul.f32.gmra.mxu0 %v1420
    %v1533 = vpop.f32.mrf.mxu0
    %v1534 = vadd.f32 0.0, %v1533
    %1535 = vmatmul.f32.gmra.mxu0 %v1422
    %v1536 = vpop.f32.mrf.mxu0
    %v1537 = vadd.f32 0.0, %v1536
    %1538 = vdwg.mxu0
    %1539 = vmatpush.msra.mxu0 0.0
    %1540 = vmatpush.msra.mxu0 0.0
    %1541 = vmatpush.msra.mxu0 0.0
    %1542 = vmatpush.msra.mxu0 0.0
    %1543 = vmatpush.msra.mxu0 %v1411
    %1544 = vmatpush.msra.mxu0 %v1403
    %1545 = vmatpush.msra.mxu0 %v1395
    %1546 = vmatpush.msra.mxu0 %v1387
    %1547 = vmatpush.msra.mxu0 %v1379
    %1548 = vmatpush.msra.mxu0 %v1371
    %1549 = vmatpush.msra.mxu0 %v1363
    %1550 = vmatpush.msra.mxu0 %v1355
    %1551 = vmatpush.msra.mxu0 %v1347
    %1552 = vmatpush.msra.mxu0 %v1339
    %1553 = vmatpush.msra.mxu0 %v1331
    %1554 = vmatpush.msra.mxu0 %v1323
    %1555 = vmatmul.f32.gmra.mxu0 %v1420
    %v1556 = vpop.f32.mrf.mxu0
    %v1557 = vadd.f32 0.0, %v1556
    %1558 = vmatmul.f32.gmra.mxu0 %v1422
    %v1559 = vpop.f32.mrf.mxu0
    %v1560 = vadd.f32 0.0, %v1559
    %1561 = vdwg.mxu0
    %1562 = vmatpush.msra.mxu0 0.0
    %1563 = vmatpush.msra.mxu0 0.0
    %1564 = vmatpush.msra.mxu0 0.0
    %1565 = vmatpush.msra.mxu0 0.0
    %1566 = vmatpush.msra.mxu0 %v1412
    %1567 = vmatpush.msra.mxu0 %v1404
    %1568 = vmatpush.msra.mxu0 %v1396
    %1569 = vmatpush.msra.mxu0 %v1388
    %1570 = vmatpush.msra.mxu0 %v1380
    %1571 = vmatpush.msra.mxu0 %v1372
    %1572 = vmatpush.msra.mxu0 %v1364
    %1573 = vmatpush.msra.mxu0 %v1356
    %1574 = vmatpush.msra.mxu0 %v1348
    %1575 = vmatpush.msra.mxu0 %v1340
    %1576 = vmatpush.msra.mxu0 %v1332
    %1577 = vmatpush.msra.mxu0 %v1324
    %1578 = vmatmul.f32.gmra.mxu0 %v1420
    %v1579 = vpop.f32.mrf.mxu0
    %v1580 = vadd.f32 0.0, %v1579
    %1581 = vmatmul.f32.gmra.mxu0 %v1422
    %v1582 = vpop.f32.mrf.mxu0
    %v1583 = vadd.f32 0.0, %v1582
    %1584 = vdwg.mxu0
    %1585 = vmatpush.msra.mxu0 0.0
    %1586 = vmatpush.msra.mxu0 0.0
    %1587 = vmatpush.msra.mxu0 0.0
    %1588 = vmatpush.msra.mxu0 0.0
    %1589 = vmatpush.msra.mxu0 %v1413
    %1590 = vmatpush.msra.mxu0 %v1405
    %1591 = vmatpush.msra.mxu0 %v1397
    %1592 = vmatpush.msra.mxu0 %v1389
    %1593 = vmatpush.msra.mxu0 %v1381
    %1594 = vmatpush.msra.mxu0 %v1373
    %1595 = vmatpush.msra.mxu0 %v1365
    %1596 = vmatpush.msra.mxu0 %v1357
    %1597 = vmatpush.msra.mxu0 %v1349
    %1598 = vmatpush.msra.mxu0 %v1341
    %1599 = vmatpush.msra.mxu0 %v1333
    %1600 = vmatpush.msra.mxu0 %v1325
    %1601 = vmatmul.f32.gmra.mxu0 %v1420
    %v1602 = vpop.f32.mrf.mxu0
    %v1603 = vadd.f32 0.0, %v1602
    %1604 = vmatmul.f32.gmra.mxu0 %v1422
    %v1605 = vpop.f32.mrf.mxu0
    %v1606 = vadd.f32 0.0, %v1605
    %1607 = vdwg.mxu0
    %v1608 = vadd.f32 %v1301, %v1442
    %v1609 = vadd.f32 %v1302, %v1465
    %v1610 = vadd.f32 %v1303, %v1488
    %v1611 = vadd.f32 %v1304, %v1511
    %v1612 = vadd.f32 %v1305, %v1534
    %v1613 = vadd.f32 %v1306, %v1557
    %v1614 = vadd.f32 %v1307, %v1580
    %v1615 = vadd.f32 %v1308, %v1603
    %v1616 = vadd.f32 %v1309, %v1445
    %v1617 = vadd.f32 %v1310, %v1468
    %v1618 = vadd.f32 %v1311, %v1491
    %v1619 = vadd.f32 %v1312, %v1514
    %v1620 = vadd.f32 %v1313, %v1537
    %v1621 = vadd.f32 %v1314, %v1560
    %v1622 = vadd.f32 %v1315, %v1583
    %v1623 = vadd.f32 %v1316, %v1606
    %s1624 = scalar_lea.vmem [#allocation3], 3840
    %v1625 = vld [vmem:[%s1624] sm:$0xff]
    %v1626 = vld [vmem:[%s1624 + $0x8] sm:$0xff]
    %v1627 = vld [vmem:[%s1624 + $0x10] sm:$0xff]
    %v1628 = vld [vmem:[%s1624 + $0x18] sm:$0xff]
    %v1629 = vld [vmem:[%s1624 + $0x20] sm:$0xff]
    %v1630 = vld [vmem:[%s1624 + $0x28] sm:$0xff]
    %v1631 = vld [vmem:[%s1624 + $0x30] sm:$0xff]
    %v1632 = vld [vmem:[%s1624 + $0x38] sm:$0xff]
    %v1633 = vld [vmem:[%s1624 + $0x40] sm:$0xff]
    %v1634 = vld [vmem:[%s1624 + $0x48] sm:$0xff]
    %v1635 = vld [vmem:[%s1624 + $0x50] sm:$0xff]
    %v1636 = vld [vmem:[%s1624 + $0x58] sm:$0xff]
    %v1637 = vld [vmem:[%s1624 + $0x60] sm:$0xff]
    %v1638 = vld [vmem:[%s1624 + $0x68] sm:$0xff]
    %v1639 = vld [vmem:[%s1624 + $0x70] sm:$0xff]
    %v1640 = vld [vmem:[%s1624 + $0x78] sm:$0xff]
    %v1641 = vld [vmem:[%s1624 + $0x80] sm:$0xff]
    %v1642 = vld [vmem:[%s1624 + $0x88] sm:$0xff]
    %v1643 = vld [vmem:[%s1624 + $0x90] sm:$0xff]
    %v1644 = vld [vmem:[%s1624 + $0x98] sm:$0xff]
    %v1645 = vld [vmem:[%s1624 + $0xa0] sm:$0xff]
    %v1646 = vld [vmem:[%s1624 + $0xa8] sm:$0xff]
    %v1647 = vld [vmem:[%s1624 + $0xb0] sm:$0xff]
    %v1648 = vld [vmem:[%s1624 + $0xb8] sm:$0xff]
    %v1649 = vld [vmem:[%s1624 + $0xc0] sm:$0xff]
    %v1650 = vld [vmem:[%s1624 + $0xc8] sm:$0xff]
    %v1651 = vld [vmem:[%s1624 + $0xd0] sm:$0xff]
    %v1652 = vld [vmem:[%s1624 + $0xd8] sm:$0xff]
    %v1653 = vld [vmem:[%s1624 + $0xe0] sm:$0xff]
    %v1654 = vld [vmem:[%s1624 + $0xe8] sm:$0xff]
    %v1655 = vld [vmem:[%s1624 + $0xf0] sm:$0xff]
    %v1656 = vld [vmem:[%s1624 + $0xf8] sm:$0xff]
    %v1657 = vld [vmem:[%s1624 + $0x100] sm:$0xff]
    %v1658 = vld [vmem:[%s1624 + $0x108] sm:$0xff]
    %v1659 = vld [vmem:[%s1624 + $0x110] sm:$0xff]
    %v1660 = vld [vmem:[%s1624 + $0x118] sm:$0xff]
    %v1661 = vld [vmem:[%s1624 + $0x120] sm:$0xff]
    %v1662 = vld [vmem:[%s1624 + $0x128] sm:$0xff]
    %v1663 = vld [vmem:[%s1624 + $0x130] sm:$0xff]
    %v1664 = vld [vmem:[%s1624 + $0x138] sm:$0xff]
    %v1665 = vld [vmem:[%s1624 + $0x140] sm:$0xff]
    %v1666 = vld [vmem:[%s1624 + $0x148] sm:$0xff]
    %v1667 = vld [vmem:[%s1624 + $0x150] sm:$0xff]
    %v1668 = vld [vmem:[%s1624 + $0x158] sm:$0xff]
    %v1669 = vld [vmem:[%s1624 + $0x160] sm:$0xff]
    %v1670 = vld [vmem:[%s1624 + $0x168] sm:$0xff]
    %v1671 = vld [vmem:[%s1624 + $0x170] sm:$0xff]
    %v1672 = vld [vmem:[%s1624 + $0x178] sm:$0xff]
    %v1673 = vld [vmem:[%s1624 + $0x180] sm:$0xff]
    %v1674 = vld [vmem:[%s1624 + $0x188] sm:$0xff]
    %v1675 = vld [vmem:[%s1624 + $0x190] sm:$0xff]
    %v1676 = vld [vmem:[%s1624 + $0x198] sm:$0xff]
    %v1677 = vld [vmem:[%s1624 + $0x1a0] sm:$0xff]
    %v1678 = vld [vmem:[%s1624 + $0x1a8] sm:$0xff]
    %v1679 = vld [vmem:[%s1624 + $0x1b0] sm:$0xff]
    %v1680 = vld [vmem:[%s1624 + $0x1b8] sm:$0xff]
    %v1681 = vld [vmem:[%s1624 + $0x1c0] sm:$0xff]
    %v1682 = vld [vmem:[%s1624 + $0x1c8] sm:$0xff]
    %v1683 = vld [vmem:[%s1624 + $0x1d0] sm:$0xff]
    %v1684 = vld [vmem:[%s1624 + $0x1d8] sm:$0xff]
    %v1685 = vld [vmem:[%s1624 + $0x1e0] sm:$0xff]
    %v1686 = vld [vmem:[%s1624 + $0x1e8] sm:$0xff]
    %v1687 = vld [vmem:[%s1624 + $0x1f0] sm:$0xff]
    %v1688 = vld [vmem:[%s1624 + $0x1f8] sm:$0xff]
    %v1689 = vld [vmem:[%s1624 + $0x200] sm:$0xff]
    %v1690 = vld [vmem:[%s1624 + $0x208] sm:$0xff]
    %v1691 = vld [vmem:[%s1624 + $0x210] sm:$0xff]
    %v1692 = vld [vmem:[%s1624 + $0x218] sm:$0xff]
    %v1693 = vld [vmem:[%s1624 + $0x220] sm:$0xff]
    %v1694 = vld [vmem:[%s1624 + $0x228] sm:$0xff]
    %v1695 = vld [vmem:[%s1624 + $0x230] sm:$0xff]
    %v1696 = vld [vmem:[%s1624 + $0x238] sm:$0xff]
    %v1697 = vld [vmem:[%s1624 + $0x240] sm:$0xff]
    %v1698 = vld [vmem:[%s1624 + $0x248] sm:$0xff]
    %v1699 = vld [vmem:[%s1624 + $0x250] sm:$0xff]
    %v1700 = vld [vmem:[%s1624 + $0x258] sm:$0xff]
    %v1701 = vld [vmem:[%s1624 + $0x260] sm:$0xff]
    %v1702 = vld [vmem:[%s1624 + $0x268] sm:$0xff]
    %v1703 = vld [vmem:[%s1624 + $0x270] sm:$0xff]
    %v1704 = vld [vmem:[%s1624 + $0x278] sm:$0xff]
    %v1705 = vld [vmem:[%s1624 + $0x280] sm:$0xff]
    %v1706 = vld [vmem:[%s1624 + $0x288] sm:$0xff]
    %v1707 = vld [vmem:[%s1624 + $0x290] sm:$0xff]
    %v1708 = vld [vmem:[%s1624 + $0x298] sm:$0xff]
    %v1709 = vld [vmem:[%s1624 + $0x2a0] sm:$0xff]
    %v1710 = vld [vmem:[%s1624 + $0x2a8] sm:$0xff]
    %v1711 = vld [vmem:[%s1624 + $0x2b0] sm:$0xff]
    %v1712 = vld [vmem:[%s1624 + $0x2b8] sm:$0xff]
    %v1713 = vld [vmem:[%s1624 + $0x2c0] sm:$0xff]
    %v1714 = vld [vmem:[%s1624 + $0x2c8] sm:$0xff]
    %v1715 = vld [vmem:[%s1624 + $0x2d0] sm:$0xff]
    %v1716 = vld [vmem:[%s1624 + $0x2d8] sm:$0xff]
    %v1717 = vld [vmem:[%s1624 + $0x2e0] sm:$0xff]
    %v1718 = vld [vmem:[%s1624 + $0x2e8] sm:$0xff]
    %v1719 = vld [vmem:[%s1624 + $0x2f0] sm:$0xff]
    %v1720 = vld [vmem:[%s1624 + $0x2f8] sm:$0xff]
    %vm1721 = vcmask 1042432
    %v1722 = vrot.slane %v121, 5
    %v1723 = vrot.slane %v122, 5
    %v1724 = vsel %vm1721, %v1722, %v1723
    %v1725 = vrot.slane %v123, 5
    %v1726 = vsel %vm1721, %v1723, %v1725
    %v1727 = vsel %vm326, %v1724, 0
    %v1729 = vsel %vm326, %v1726, 0
    %1731 = vmatpush.msra.mxu0 0.0
    %1732 = vmatpush.msra.mxu0 0.0
    %1733 = vmatpush.msra.mxu0 0.0
    %1734 = vmatpush.msra.mxu0 0.0
    %1735 = vmatpush.msra.mxu0 %v1713
    %1736 = vmatpush.msra.mxu0 %v1705
    %1737 = vmatpush.msra.mxu0 %v1697
    %1738 = vmatpush.msra.mxu0 %v1689
    %1739 = vmatpush.msra.mxu0 %v1681
    %1740 = vmatpush.msra.mxu0 %v1673
    %1741 = vmatpush.msra.mxu0 %v1665
    %1742 = vmatpush.msra.mxu0 %v1657
    %1743 = vmatpush.msra.mxu0 %v1649
    %1744 = vmatpush.msra.mxu0 %v1641
    %1745 = vmatpush.msra.mxu0 %v1633
    %1746 = vmatpush.msra.mxu0 %v1625
    %1747 = vmatmul.f32.gmra.mxu0 %v1727
    %v1748 = vpop.f32.mrf.mxu0
    %v1749 = vadd.f32 0.0, %v1748
    %1750 = vmatmul.f32.gmra.mxu0 %v1729
    %v1751 = vpop.f32.mrf.mxu0
    %v1752 = vadd.f32 0.0, %v1751
    %1753 = vdwg.mxu0
    %1754 = vmatpush.msra.mxu0 0.0
    %1755 = vmatpush.msra.mxu0 0.0
    %1756 = vmatpush.msra.mxu0 0.0
    %1757 = vmatpush.msra.mxu0 0.0
    %1758 = vmatpush.msra.mxu0 %v1714
    %1759 = vmatpush.msra.mxu0 %v1706
    %1760 = vmatpush.msra.mxu0 %v1698
    %1761 = vmatpush.msra.mxu0 %v1690
    %1762 = vmatpush.msra.mxu0 %v1682
    %1763 = vmatpush.msra.mxu0 %v1674
    %1764 = vmatpush.msra.mxu0 %v1666
    %1765 = vmatpush.msra.mxu0 %v1658
    %1766 = vmatpush.msra.mxu0 %v1650
    %1767 = vmatpush.msra.mxu0 %v1642
    %1768 = vmatpush.msra.mxu0 %v1634
    %1769 = vmatpush.msra.mxu0 %v1626
    %1770 = vmatmul.f32.gmra.mxu0 %v1727
    %v1771 = vpop.f32.mrf.mxu0
    %v1772 = vadd.f32 0.0, %v1771
    %1773 = vmatmul.f32.gmra.mxu0 %v1729
    %v1774 = vpop.f32.mrf.mxu0
    %v1775 = vadd.f32 0.0, %v1774
    %1776 = vdwg.mxu0
    %1777 = vmatpush.msra.mxu0 0.0
    %1778 = vmatpush.msra.mxu0 0.0
    %1779 = vmatpush.msra.mxu0 0.0
    %1780 = vmatpush.msra.mxu0 0.0
    %1781 = vmatpush.msra.mxu0 %v1715
    %1782 = vmatpush.msra.mxu0 %v1707
    %1783 = vmatpush.msra.mxu0 %v1699
    %1784 = vmatpush.msra.mxu0 %v1691
    %1785 = vmatpush.msra.mxu0 %v1683
    %1786 = vmatpush.msra.mxu0 %v1675
    %1787 = vmatpush.msra.mxu0 %v1667
    %1788 = vmatpush.msra.mxu0 %v1659
    %1789 = vmatpush.msra.mxu0 %v1651
    %1790 = vmatpush.msra.mxu0 %v1643
    %1791 = vmatpush.msra.mxu0 %v1635
    %1792 = vmatpush.msra.mxu0 %v1627
    %1793 = vmatmul.f32.gmra.mxu0 %v1727
    %v1794 = vpop.f32.mrf.mxu0
    %v1795 = vadd.f32 0.0, %v1794
    %1796 = vmatmul.f32.gmra.mxu0 %v1729
    %v1797 = vpop.f32.mrf.mxu0
    %v1798 = vadd.f32 0.0, %v1797
    %1799 = vdwg.mxu0
    %1800 = vmatpush.msra.mxu0 0.0
    %1801 = vmatpush.msra.mxu0 0.0
    %1802 = vmatpush.msra.mxu0 0.0
    %1803 = vmatpush.msra.mxu0 0.0
    %1804 = vmatpush.msra.mxu0 %v1716
    %1805 = vmatpush.msra.mxu0 %v1708
    %1806 = vmatpush.msra.mxu0 %v1700
    %1807 = vmatpush.msra.mxu0 %v1692
    %1808 = vmatpush.msra.mxu0 %v1684
    %1809 = vmatpush.msra.mxu0 %v1676
    %1810 = vmatpush.msra.mxu0 %v1668
    %1811 = vmatpush.msra.mxu0 %v1660
    %1812 = vmatpush.msra.mxu0 %v1652
    %1813 = vmatpush.msra.mxu0 %v1644
    %1814 = vmatpush.msra.mxu0 %v1636
    %1815 = vmatpush.msra.mxu0 %v1628
    %1816 = vmatmul.f32.gmra.mxu0 %v1727
    %v1817 = vpop.f32.mrf.mxu0
    %v1818 = vadd.f32 0.0, %v1817
    %1819 = vmatmul.f32.gmra.mxu0 %v1729
    %v1820 = vpop.f32.mrf.mxu0
    %v1821 = vadd.f32 0.0, %v1820
    %1822 = vdwg.mxu0
    %1823 = vmatpush.msra.mxu0 0.0
    %1824 = vmatpush.msra.mxu0 0.0
    %1825 = vmatpush.msra.mxu0 0.0
    %1826 = vmatpush.msra.mxu0 0.0
    %1827 = vmatpush.msra.mxu0 %v1717
    %1828 = vmatpush.msra.mxu0 %v1709
    %1829 = vmatpush.msra.mxu0 %v1701
    %1830 = vmatpush.msra.mxu0 %v1693
    %1831 = vmatpush.msra.mxu0 %v1685
    %1832 = vmatpush.msra.mxu0 %v1677
    %1833 = vmatpush.msra.mxu0 %v1669
    %1834 = vmatpush.msra.mxu0 %v1661
    %1835 = vmatpush.msra.mxu0 %v1653
    %1836 = vmatpush.msra.mxu0 %v1645
    %1837 = vmatpush.msra.mxu0 %v1637
    %1838 = vmatpush.msra.mxu0 %v1629
    %1839 = vmatmul.f32.gmra.mxu0 %v1727
    %v1840 = vpop.f32.mrf.mxu0
    %v1841 = vadd.f32 0.0, %v1840
    %1842 = vmatmul.f32.gmra.mxu0 %v1729
    %v1843 = vpop.f32.mrf.mxu0
    %v1844 = vadd.f32 0.0, %v1843
    %1845 = vdwg.mxu0
    %1846 = vmatpush.msra.mxu0 0.0
    %1847 = vmatpush.msra.mxu0 0.0
    %1848 = vmatpush.msra.mxu0 0.0
    %1849 = vmatpush.msra.mxu0 0.0
    %1850 = vmatpush.msra.mxu0 %v1718
    %1851 = vmatpush.msra.mxu0 %v1710
    %1852 = vmatpush.msra.mxu0 %v1702
    %1853 = vmatpush.msra.mxu0 %v1694
    %1854 = vmatpush.msra.mxu0 %v1686
    %1855 = vmatpush.msra.mxu0 %v1678
    %1856 = vmatpush.msra.mxu0 %v1670
    %1857 = vmatpush.msra.mxu0 %v1662
    %1858 = vmatpush.msra.mxu0 %v1654
    %1859 = vmatpush.msra.mxu0 %v1646
    %1860 = vmatpush.msra.mxu0 %v1638
    %1861 = vmatpush.msra.mxu0 %v1630
    %1862 = vmatmul.f32.gmra.mxu0 %v1727
    %v1863 = vpop.f32.mrf.mxu0
    %v1864 = vadd.f32 0.0, %v1863
    %1865 = vmatmul.f32.gmra.mxu0 %v1729
    %v1866 = vpop.f32.mrf.mxu0
    %v1867 = vadd.f32 0.0, %v1866
    %1868 = vdwg.mxu0
    %1869 = vmatpush.msra.mxu0 0.0
    %1870 = vmatpush.msra.mxu0 0.0
    %1871 = vmatpush.msra.mxu0 0.0
    %1872 = vmatpush.msra.mxu0 0.0
    %1873 = vmatpush.msra.mxu0 %v1719
    %1874 = vmatpush.msra.mxu0 %v1711
    %1875 = vmatpush.msra.mxu0 %v1703
    %1876 = vmatpush.msra.mxu0 %v1695
    %1877 = vmatpush.msra.mxu0 %v1687
    %1878 = vmatpush.msra.mxu0 %v1679
    %1879 = vmatpush.msra.mxu0 %v1671
    %1880 = vmatpush.msra.mxu0 %v1663
    %1881 = vmatpush.msra.mxu0 %v1655
    %1882 = vmatpush.msra.mxu0 %v1647
    %1883 = vmatpush.msra.mxu0 %v1639
    %1884 = vmatpush.msra.mxu0 %v1631
    %1885 = vmatmul.f32.gmra.mxu0 %v1727
    %v1886 = vpop.f32.mrf.mxu0
    %v1887 = vadd.f32 0.0, %v1886
    %1888 = vmatmul.f32.gmra.mxu0 %v1729
    %v1889 = vpop.f32.mrf.mxu0
    %v1890 = vadd.f32 0.0, %v1889
    %1891 = vdwg.mxu0
    %1892 = vmatpush.msra.mxu0 0.0
    %1893 = vmatpush.msra.mxu0 0.0
    %1894 = vmatpush.msra.mxu0 0.0
    %1895 = vmatpush.msra.mxu0 0.0
    %1896 = vmatpush.msra.mxu0 %v1720
    %1897 = vmatpush.msra.mxu0 %v1712
    %1898 = vmatpush.msra.mxu0 %v1704
    %1899 = vmatpush.msra.mxu0 %v1696
    %1900 = vmatpush.msra.mxu0 %v1688
    %1901 = vmatpush.msra.mxu0 %v1680
    %1902 = vmatpush.msra.mxu0 %v1672
    %1903 = vmatpush.msra.mxu0 %v1664
    %1904 = vmatpush.msra.mxu0 %v1656
    %1905 = vmatpush.msra.mxu0 %v1648
    %1906 = vmatpush.msra.mxu0 %v1640
    %1907 = vmatpush.msra.mxu0 %v1632
    %1908 = vmatmul.f32.gmra.mxu0 %v1727
    %v1909 = vpop.f32.mrf.mxu0
    %v1910 = vadd.f32 0.0, %v1909
    %1911 = vmatmul.f32.gmra.mxu0 %v1729
    %v1912 = vpop.f32.mrf.mxu0
    %v1913 = vadd.f32 0.0, %v1912
    %1914 = vdwg.mxu0
    %v1915 = vadd.f32 %v1608, %v1749
    %v1916 = vadd.f32 %v1609, %v1772
    %v1917 = vadd.f32 %v1610, %v1795
    %v1918 = vadd.f32 %v1611, %v1818
    %v1919 = vadd.f32 %v1612, %v1841
    %v1920 = vadd.f32 %v1613, %v1864
    %v1921 = vadd.f32 %v1614, %v1887
    %v1922 = vadd.f32 %v1615, %v1910
    %v1923 = vadd.f32 %v1616, %v1752
    %v1924 = vadd.f32 %v1617, %v1775
    %v1925 = vadd.f32 %v1618, %v1798
    %v1926 = vadd.f32 %v1619, %v1821
    %v1927 = vadd.f32 %v1620, %v1844
    %v1928 = vadd.f32 %v1621, %v1867
    %v1929 = vadd.f32 %v1622, %v1890
    %v1930 = vadd.f32 %v1623, %v1913
    %s1931 = scalar_lea.vmem [#allocation3], 4608
    %v1932 = vld [vmem:[%s1931] sm:$0xff]
    %v1933 = vld [vmem:[%s1931 + $0x8] sm:$0xff]
    %v1934 = vld [vmem:[%s1931 + $0x10] sm:$0xff]
    %v1935 = vld [vmem:[%s1931 + $0x18] sm:$0xff]
    %v1936 = vld [vmem:[%s1931 + $0x20] sm:$0xff]
    %v1937 = vld [vmem:[%s1931 + $0x28] sm:$0xff]
    %v1938 = vld [vmem:[%s1931 + $0x30] sm:$0xff]
    %v1939 = vld [vmem:[%s1931 + $0x38] sm:$0xff]
    %v1940 = vld [vmem:[%s1931 + $0x40] sm:$0xff]
    %v1941 = vld [vmem:[%s1931 + $0x48] sm:$0xff]
    %v1942 = vld [vmem:[%s1931 + $0x50] sm:$0xff]
    %v1943 = vld [vmem:[%s1931 + $0x58] sm:$0xff]
    %v1944 = vld [vmem:[%s1931 + $0x60] sm:$0xff]
    %v1945 = vld [vmem:[%s1931 + $0x68] sm:$0xff]
    %v1946 = vld [vmem:[%s1931 + $0x70] sm:$0xff]
    %v1947 = vld [vmem:[%s1931 + $0x78] sm:$0xff]
    %v1948 = vld [vmem:[%s1931 + $0x80] sm:$0xff]
    %v1949 = vld [vmem:[%s1931 + $0x88] sm:$0xff]
    %v1950 = vld [vmem:[%s1931 + $0x90] sm:$0xff]
    %v1951 = vld [vmem:[%s1931 + $0x98] sm:$0xff]
    %v1952 = vld [vmem:[%s1931 + $0xa0] sm:$0xff]
    %v1953 = vld [vmem:[%s1931 + $0xa8] sm:$0xff]
    %v1954 = vld [vmem:[%s1931 + $0xb0] sm:$0xff]
    %v1955 = vld [vmem:[%s1931 + $0xb8] sm:$0xff]
    %v1956 = vld [vmem:[%s1931 + $0xc0] sm:$0xff]
    %v1957 = vld [vmem:[%s1931 + $0xc8] sm:$0xff]
    %v1958 = vld [vmem:[%s1931 + $0xd0] sm:$0xff]
    %v1959 = vld [vmem:[%s1931 + $0xd8] sm:$0xff]
    %v1960 = vld [vmem:[%s1931 + $0xe0] sm:$0xff]
    %v1961 = vld [vmem:[%s1931 + $0xe8] sm:$0xff]
    %v1962 = vld [vmem:[%s1931 + $0xf0] sm:$0xff]
    %v1963 = vld [vmem:[%s1931 + $0xf8] sm:$0xff]
    %v1964 = vld [vmem:[%s1931 + $0x100] sm:$0xff]
    %v1965 = vld [vmem:[%s1931 + $0x108] sm:$0xff]
    %v1966 = vld [vmem:[%s1931 + $0x110] sm:$0xff]
    %v1967 = vld [vmem:[%s1931 + $0x118] sm:$0xff]
    %v1968 = vld [vmem:[%s1931 + $0x120] sm:$0xff]
    %v1969 = vld [vmem:[%s1931 + $0x128] sm:$0xff]
    %v1970 = vld [vmem:[%s1931 + $0x130] sm:$0xff]
    %v1971 = vld [vmem:[%s1931 + $0x138] sm:$0xff]
    %v1972 = vld [vmem:[%s1931 + $0x140] sm:$0xff]
    %v1973 = vld [vmem:[%s1931 + $0x148] sm:$0xff]
    %v1974 = vld [vmem:[%s1931 + $0x150] sm:$0xff]
    %v1975 = vld [vmem:[%s1931 + $0x158] sm:$0xff]
    %v1976 = vld [vmem:[%s1931 + $0x160] sm:$0xff]
    %v1977 = vld [vmem:[%s1931 + $0x168] sm:$0xff]
    %v1978 = vld [vmem:[%s1931 + $0x170] sm:$0xff]
    %v1979 = vld [vmem:[%s1931 + $0x178] sm:$0xff]
    %v1980 = vld [vmem:[%s1931 + $0x180] sm:$0xff]
    %v1981 = vld [vmem:[%s1931 + $0x188] sm:$0xff]
    %v1982 = vld [vmem:[%s1931 + $0x190] sm:$0xff]
    %v1983 = vld [vmem:[%s1931 + $0x198] sm:$0xff]
    %v1984 = vld [vmem:[%s1931 + $0x1a0] sm:$0xff]
    %v1985 = vld [vmem:[%s1931 + $0x1a8] sm:$0xff]
    %v1986 = vld [vmem:[%s1931 + $0x1b0] sm:$0xff]
    %v1987 = vld [vmem:[%s1931 + $0x1b8] sm:$0xff]
    %v1988 = vld [vmem:[%s1931 + $0x1c0] sm:$0xff]
    %v1989 = vld [vmem:[%s1931 + $0x1c8] sm:$0xff]
    %v1990 = vld [vmem:[%s1931 + $0x1d0] sm:$0xff]
    %v1991 = vld [vmem:[%s1931 + $0x1d8] sm:$0xff]
    %v1992 = vld [vmem:[%s1931 + $0x1e0] sm:$0xff]
    %v1993 = vld [vmem:[%s1931 + $0x1e8] sm:$0xff]
    %v1994 = vld [vmem:[%s1931 + $0x1f0] sm:$0xff]
    %v1995 = vld [vmem:[%s1931 + $0x1f8] sm:$0xff]
    %v1996 = vld [vmem:[%s1931 + $0x200] sm:$0xff]
    %v1997 = vld [vmem:[%s1931 + $0x208] sm:$0xff]
    %v1998 = vld [vmem:[%s1931 + $0x210] sm:$0xff]
    %v1999 = vld [vmem:[%s1931 + $0x218] sm:$0xff]
    %v2000 = vld [vmem:[%s1931 + $0x220] sm:$0xff]
    %v2001 = vld [vmem:[%s1931 + $0x228] sm:$0xff]
    %v2002 = vld [vmem:[%s1931 + $0x230] sm:$0xff]
    %v2003 = vld [vmem:[%s1931 + $0x238] sm:$0xff]
    %v2004 = vld [vmem:[%s1931 + $0x240] sm:$0xff]
    %v2005 = vld [vmem:[%s1931 + $0x248] sm:$0xff]
    %v2006 = vld [vmem:[%s1931 + $0x250] sm:$0xff]
    %v2007 = vld [vmem:[%s1931 + $0x258] sm:$0xff]
    %v2008 = vld [vmem:[%s1931 + $0x260] sm:$0xff]
    %v2009 = vld [vmem:[%s1931 + $0x268] sm:$0xff]
    %v2010 = vld [vmem:[%s1931 + $0x270] sm:$0xff]
    %v2011 = vld [vmem:[%s1931 + $0x278] sm:$0xff]
    %v2012 = vld [vmem:[%s1931 + $0x280] sm:$0xff]
    %v2013 = vld [vmem:[%s1931 + $0x288] sm:$0xff]
    %v2014 = vld [vmem:[%s1931 + $0x290] sm:$0xff]
    %v2015 = vld [vmem:[%s1931 + $0x298] sm:$0xff]
    %v2016 = vld [vmem:[%s1931 + $0x2a0] sm:$0xff]
    %v2017 = vld [vmem:[%s1931 + $0x2a8] sm:$0xff]
    %v2018 = vld [vmem:[%s1931 + $0x2b0] sm:$0xff]
    %v2019 = vld [vmem:[%s1931 + $0x2b8] sm:$0xff]
    %v2020 = vld [vmem:[%s1931 + $0x2c0] sm:$0xff]
    %v2021 = vld [vmem:[%s1931 + $0x2c8] sm:$0xff]
    %v2022 = vld [vmem:[%s1931 + $0x2d0] sm:$0xff]
    %v2023 = vld [vmem:[%s1931 + $0x2d8] sm:$0xff]
    %v2024 = vld [vmem:[%s1931 + $0x2e0] sm:$0xff]
    %v2025 = vld [vmem:[%s1931 + $0x2e8] sm:$0xff]
    %v2026 = vld [vmem:[%s1931 + $0x2f0] sm:$0xff]
    %v2027 = vld [vmem:[%s1931 + $0x2f8] sm:$0xff]
    %vm2028 = vcmask 1041408
    %v2029 = vrot.slane %v121, 6
    %v2030 = vrot.slane %v122, 6
    %v2031 = vsel %vm2028, %v2029, %v2030
    %v2032 = vrot.slane %v123, 6
    %v2033 = vsel %vm2028, %v2030, %v2032
    %v2034 = vsel %vm326, %v2031, 0
    %v2036 = vsel %vm326, %v2033, 0
    %2038 = vmatpush.msra.mxu0 0.0
    %2039 = vmatpush.msra.mxu0 0.0
    %2040 = vmatpush.msra.mxu0 0.0
    %2041 = vmatpush.msra.mxu0 0.0
    %2042 = vmatpush.msra.mxu0 %v2020
    %2043 = vmatpush.msra.mxu0 %v2012
    %2044 = vmatpush.msra.mxu0 %v2004
    %2045 = vmatpush.msra.mxu0 %v1996
    %2046 = vmatpush.msra.mxu0 %v1988
    %2047 = vmatpush.msra.mxu0 %v1980
    %2048 = vmatpush.msra.mxu0 %v1972
    %2049 = vmatpush.msra.mxu0 %v1964
    %2050 = vmatpush.msra.mxu0 %v1956
    %2051 = vmatpush.msra.mxu0 %v1948
    %2052 = vmatpush.msra.mxu0 %v1940
    %2053 = vmatpush.msra.mxu0 %v1932
    %2054 = vmatmul.f32.gmra.mxu0 %v2034
    %v2055 = vpop.f32.mrf.mxu0
    %v2056 = vadd.f32 0.0, %v2055
    %2057 = vmatmul.f32.gmra.mxu0 %v2036
    %v2058 = vpop.f32.mrf.mxu0
    %v2059 = vadd.f32 0.0, %v2058
    %2060 = vdwg.mxu0
    %2061 = vmatpush.msra.mxu0 0.0
    %2062 = vmatpush.msra.mxu0 0.0
    %2063 = vmatpush.msra.mxu0 0.0
    %2064 = vmatpush.msra.mxu0 0.0
    %2065 = vmatpush.msra.mxu0 %v2021
    %2066 = vmatpush.msra.mxu0 %v2013
    %2067 = vmatpush.msra.mxu0 %v2005
    %2068 = vmatpush.msra.mxu0 %v1997
    %2069 = vmatpush.msra.mxu0 %v1989
    %2070 = vmatpush.msra.mxu0 %v1981
    %2071 = vmatpush.msra.mxu0 %v1973
    %2072 = vmatpush.msra.mxu0 %v1965
    %2073 = vmatpush.msra.mxu0 %v1957
    %2074 = vmatpush.msra.mxu0 %v1949
    %2075 = vmatpush.msra.mxu0 %v1941
    %2076 = vmatpush.msra.mxu0 %v1933
    %2077 = vmatmul.f32.gmra.mxu0 %v2034
    %v2078 = vpop.f32.mrf.mxu0
    %v2079 = vadd.f32 0.0, %v2078
    %2080 = vmatmul.f32.gmra.mxu0 %v2036
    %v2081 = vpop.f32.mrf.mxu0
    %v2082 = vadd.f32 0.0, %v2081
    %2083 = vdwg.mxu0
    %2084 = vmatpush.msra.mxu0 0.0
    %2085 = vmatpush.msra.mxu0 0.0
    %2086 = vmatpush.msra.mxu0 0.0
    %2087 = vmatpush.msra.mxu0 0.0
    %2088 = vmatpush.msra.mxu0 %v2022
    %2089 = vmatpush.msra.mxu0 %v2014
    %2090 = vmatpush.msra.mxu0 %v2006
    %2091 = vmatpush.msra.mxu0 %v1998
    %2092 = vmatpush.msra.mxu0 %v1990
    %2093 = vmatpush.msra.mxu0 %v1982
    %2094 = vmatpush.msra.mxu0 %v1974
    %2095 = vmatpush.msra.mxu0 %v1966
    %2096 = vmatpush.msra.mxu0 %v1958
    %2097 = vmatpush.msra.mxu0 %v1950
    %2098 = vmatpush.msra.mxu0 %v1942
    %2099 = vmatpush.msra.mxu0 %v1934
    %2100 = vmatmul.f32.gmra.mxu0 %v2034
    %v2101 = vpop.f32.mrf.mxu0
    %v2102 = vadd.f32 0.0, %v2101
    %2103 = vmatmul.f32.gmra.mxu0 %v2036
    %v2104 = vpop.f32.mrf.mxu0
    %v2105 = vadd.f32 0.0, %v2104
    %2106 = vdwg.mxu0
    %2107 = vmatpush.msra.mxu0 0.0
    %2108 = vmatpush.msra.mxu0 0.0
    %2109 = vmatpush.msra.mxu0 0.0
    %2110 = vmatpush.msra.mxu0 0.0
    %2111 = vmatpush.msra.mxu0 %v2023
    %2112 = vmatpush.msra.mxu0 %v2015
    %2113 = vmatpush.msra.mxu0 %v2007
    %2114 = vmatpush.msra.mxu0 %v1999
    %2115 = vmatpush.msra.mxu0 %v1991
    %2116 = vmatpush.msra.mxu0 %v1983
    %2117 = vmatpush.msra.mxu0 %v1975
    %2118 = vmatpush.msra.mxu0 %v1967
    %2119 = vmatpush.msra.mxu0 %v1959
    %2120 = vmatpush.msra.mxu0 %v1951
    %2121 = vmatpush.msra.mxu0 %v1943
    %2122 = vmatpush.msra.mxu0 %v1935
    %2123 = vmatmul.f32.gmra.mxu0 %v2034
    %v2124 = vpop.f32.mrf.mxu0
    %v2125 = vadd.f32 0.0, %v2124
    %2126 = vmatmul.f32.gmra.mxu0 %v2036
    %v2127 = vpop.f32.mrf.mxu0
    %v2128 = vadd.f32 0.0, %v2127
    %2129 = vdwg.mxu0
    %2130 = vmatpush.msra.mxu0 0.0
    %2131 = vmatpush.msra.mxu0 0.0
    %2132 = vmatpush.msra.mxu0 0.0
    %2133 = vmatpush.msra.mxu0 0.0
    %2134 = vmatpush.msra.mxu0 %v2024
    %2135 = vmatpush.msra.mxu0 %v2016
    %2136 = vmatpush.msra.mxu0 %v2008
    %2137 = vmatpush.msra.mxu0 %v2000
    %2138 = vmatpush.msra.mxu0 %v1992
    %2139 = vmatpush.msra.mxu0 %v1984
    %2140 = vmatpush.msra.mxu0 %v1976
    %2141 = vmatpush.msra.mxu0 %v1968
    %2142 = vmatpush.msra.mxu0 %v1960
    %2143 = vmatpush.msra.mxu0 %v1952
    %2144 = vmatpush.msra.mxu0 %v1944
    %2145 = vmatpush.msra.mxu0 %v1936
    %2146 = vmatmul.f32.gmra.mxu0 %v2034
    %v2147 = vpop.f32.mrf.mxu0
    %v2148 = vadd.f32 0.0, %v2147
    %2149 = vmatmul.f32.gmra.mxu0 %v2036
    %v2150 = vpop.f32.mrf.mxu0
    %v2151 = vadd.f32 0.0, %v2150
    %2152 = vdwg.mxu0
    %2153 = vmatpush.msra.mxu0 0.0
    %2154 = vmatpush.msra.mxu0 0.0
    %2155 = vmatpush.msra.mxu0 0.0
    %2156 = vmatpush.msra.mxu0 0.0
    %2157 = vmatpush.msra.mxu0 %v2025
    %2158 = vmatpush.msra.mxu0 %v2017
    %2159 = vmatpush.msra.mxu0 %v2009
    %2160 = vmatpush.msra.mxu0 %v2001
    %2161 = vmatpush.msra.mxu0 %v1993
    %2162 = vmatpush.msra.mxu0 %v1985
    %2163 = vmatpush.msra.mxu0 %v1977
    %2164 = vmatpush.msra.mxu0 %v1969
    %2165 = vmatpush.msra.mxu0 %v1961
    %2166 = vmatpush.msra.mxu0 %v1953
    %2167 = vmatpush.msra.mxu0 %v1945
    %2168 = vmatpush.msra.mxu0 %v1937
    %2169 = vmatmul.f32.gmra.mxu0 %v2034
    %v2170 = vpop.f32.mrf.mxu0
    %v2171 = vadd.f32 0.0, %v2170
    %2172 = vmatmul.f32.gmra.mxu0 %v2036
    %v2173 = vpop.f32.mrf.mxu0
    %v2174 = vadd.f32 0.0, %v2173
    %2175 = vdwg.mxu0
    %2176 = vmatpush.msra.mxu0 0.0
    %2177 = vmatpush.msra.mxu0 0.0
    %2178 = vmatpush.msra.mxu0 0.0
    %2179 = vmatpush.msra.mxu0 0.0
    %2180 = vmatpush.msra.mxu0 %v2026
    %2181 = vmatpush.msra.mxu0 %v2018
    %2182 = vmatpush.msra.mxu0 %v2010
    %2183 = vmatpush.msra.mxu0 %v2002
    %2184 = vmatpush.msra.mxu0 %v1994
    %2185 = vmatpush.msra.mxu0 %v1986
    %2186 = vmatpush.msra.mxu0 %v1978
    %2187 = vmatpush.msra.mxu0 %v1970
    %2188 = vmatpush.msra.mxu0 %v1962
    %2189 = vmatpush.msra.mxu0 %v1954
    %2190 = vmatpush.msra.mxu0 %v1946
    %2191 = vmatpush.msra.mxu0 %v1938
    %2192 = vmatmul.f32.gmra.mxu0 %v2034
    %v2193 = vpop.f32.mrf.mxu0
    %v2194 = vadd.f32 0.0, %v2193
    %2195 = vmatmul.f32.gmra.mxu0 %v2036
    %v2196 = vpop.f32.mrf.mxu0
    %v2197 = vadd.f32 0.0, %v2196
    %2198 = vdwg.mxu0
    %2199 = vmatpush.msra.mxu0 0.0
    %2200 = vmatpush.msra.mxu0 0.0
    %2201 = vmatpush.msra.mxu0 0.0
    %2202 = vmatpush.msra.mxu0 0.0
    %2203 = vmatpush.msra.mxu0 %v2027
    %2204 = vmatpush.msra.mxu0 %v2019
    %2205 = vmatpush.msra.mxu0 %v2011
    %2206 = vmatpush.msra.mxu0 %v2003
    %2207 = vmatpush.msra.mxu0 %v1995
    %2208 = vmatpush.msra.mxu0 %v1987
    %2209 = vmatpush.msra.mxu0 %v1979
    %2210 = vmatpush.msra.mxu0 %v1971
    %2211 = vmatpush.msra.mxu0 %v1963
    %2212 = vmatpush.msra.mxu0 %v1955
    %2213 = vmatpush.msra.mxu0 %v1947
    %2214 = vmatpush.msra.mxu0 %v1939
    %2215 = vmatmul.f32.gmra.mxu0 %v2034
    %v2216 = vpop.f32.mrf.mxu0
    %v2217 = vadd.f32 0.0, %v2216
    %2218 = vmatmul.f32.gmra.mxu0 %v2036
    %v2219 = vpop.f32.mrf.mxu0
    %v2220 = vadd.f32 0.0, %v2219
    %2221 = vdwg.mxu0
    %v2222 = vadd.f32 %v1915, %v2056
    %v2223 = vadd.f32 %v1916, %v2079
    %v2224 = vadd.f32 %v1917, %v2102
    %v2225 = vadd.f32 %v1918, %v2125
    %v2226 = vadd.f32 %v1919, %v2148
    %v2227 = vadd.f32 %v1920, %v2171
    %v2228 = vadd.f32 %v1921, %v2194
    %v2229 = vadd.f32 %v1922, %v2217
    %v2230 = vadd.f32 %v1923, %v2059
    %v2231 = vadd.f32 %v1924, %v2082
    %v2232 = vadd.f32 %v1925, %v2105
    %v2233 = vadd.f32 %v1926, %v2128
    %v2234 = vadd.f32 %v1927, %v2151
    %v2235 = vadd.f32 %v1928, %v2174
    %v2236 = vadd.f32 %v1929, %v2197
    %v2237 = vadd.f32 %v1930, %v2220
    %s2238 = scalar_lea.vmem [#allocation3], 5376
    %v2239 = vld [vmem:[%s2238] sm:$0xff]
    %v2240 = vld [vmem:[%s2238 + $0x8] sm:$0xff]
    %v2241 = vld [vmem:[%s2238 + $0x10] sm:$0xff]
    %v2242 = vld [vmem:[%s2238 + $0x18] sm:$0xff]
    %v2243 = vld [vmem:[%s2238 + $0x20] sm:$0xff]
    %v2244 = vld [vmem:[%s2238 + $0x28] sm:$0xff]
    %v2245 = vld [vmem:[%s2238 + $0x30] sm:$0xff]
    %v2246 = vld [vmem:[%s2238 + $0x38] sm:$0xff]
    %v2247 = vld [vmem:[%s2238 + $0x40] sm:$0xff]
    %v2248 = vld [vmem:[%s2238 + $0x48] sm:$0xff]
    %v2249 = vld [vmem:[%s2238 + $0x50] sm:$0xff]
    %v2250 = vld [vmem:[%s2238 + $0x58] sm:$0xff]
    %v2251 = vld [vmem:[%s2238 + $0x60] sm:$0xff]
    %v2252 = vld [vmem:[%s2238 + $0x68] sm:$0xff]
    %v2253 = vld [vmem:[%s2238 + $0x70] sm:$0xff]
    %v2254 = vld [vmem:[%s2238 + $0x78] sm:$0xff]
    %v2255 = vld [vmem:[%s2238 + $0x80] sm:$0xff]
    %v2256 = vld [vmem:[%s2238 + $0x88] sm:$0xff]
    %v2257 = vld [vmem:[%s2238 + $0x90] sm:$0xff]
    %v2258 = vld [vmem:[%s2238 + $0x98] sm:$0xff]
    %v2259 = vld [vmem:[%s2238 + $0xa0] sm:$0xff]
    %v2260 = vld [vmem:[%s2238 + $0xa8] sm:$0xff]
    %v2261 = vld [vmem:[%s2238 + $0xb0] sm:$0xff]
    %v2262 = vld [vmem:[%s2238 + $0xb8] sm:$0xff]
    %v2263 = vld [vmem:[%s2238 + $0xc0] sm:$0xff]
    %v2264 = vld [vmem:[%s2238 + $0xc8] sm:$0xff]
    %v2265 = vld [vmem:[%s2238 + $0xd0] sm:$0xff]
    %v2266 = vld [vmem:[%s2238 + $0xd8] sm:$0xff]
    %v2267 = vld [vmem:[%s2238 + $0xe0] sm:$0xff]
    %v2268 = vld [vmem:[%s2238 + $0xe8] sm:$0xff]
    %v2269 = vld [vmem:[%s2238 + $0xf0] sm:$0xff]
    %v2270 = vld [vmem:[%s2238 + $0xf8] sm:$0xff]
    %v2271 = vld [vmem:[%s2238 + $0x100] sm:$0xff]
    %v2272 = vld [vmem:[%s2238 + $0x108] sm:$0xff]
    %v2273 = vld [vmem:[%s2238 + $0x110] sm:$0xff]
    %v2274 = vld [vmem:[%s2238 + $0x118] sm:$0xff]
    %v2275 = vld [vmem:[%s2238 + $0x120] sm:$0xff]
    %v2276 = vld [vmem:[%s2238 + $0x128] sm:$0xff]
    %v2277 = vld [vmem:[%s2238 + $0x130] sm:$0xff]
    %v2278 = vld [vmem:[%s2238 + $0x138] sm:$0xff]
    %v2279 = vld [vmem:[%s2238 + $0x140] sm:$0xff]
    %v2280 = vld [vmem:[%s2238 + $0x148] sm:$0xff]
    %v2281 = vld [vmem:[%s2238 + $0x150] sm:$0xff]
    %v2282 = vld [vmem:[%s2238 + $0x158] sm:$0xff]
    %v2283 = vld [vmem:[%s2238 + $0x160] sm:$0xff]
    %v2284 = vld [vmem:[%s2238 + $0x168] sm:$0xff]
    %v2285 = vld [vmem:[%s2238 + $0x170] sm:$0xff]
    %v2286 = vld [vmem:[%s2238 + $0x178] sm:$0xff]
    %v2287 = vld [vmem:[%s2238 + $0x180] sm:$0xff]
    %v2288 = vld [vmem:[%s2238 + $0x188] sm:$0xff]
    %v2289 = vld [vmem:[%s2238 + $0x190] sm:$0xff]
    %v2290 = vld [vmem:[%s2238 + $0x198] sm:$0xff]
    %v2291 = vld [vmem:[%s2238 + $0x1a0] sm:$0xff]
    %v2292 = vld [vmem:[%s2238 + $0x1a8] sm:$0xff]
    %v2293 = vld [vmem:[%s2238 + $0x1b0] sm:$0xff]
    %v2294 = vld [vmem:[%s2238 + $0x1b8] sm:$0xff]
    %v2295 = vld [vmem:[%s2238 + $0x1c0] sm:$0xff]
    %v2296 = vld [vmem:[%s2238 + $0x1c8] sm:$0xff]
    %v2297 = vld [vmem:[%s2238 + $0x1d0] sm:$0xff]
    %v2298 = vld [vmem:[%s2238 + $0x1d8] sm:$0xff]
    %v2299 = vld [vmem:[%s2238 + $0x1e0] sm:$0xff]
    %v2300 = vld [vmem:[%s2238 + $0x1e8] sm:$0xff]
    %v2301 = vld [vmem:[%s2238 + $0x1f0] sm:$0xff]
    %v2302 = vld [vmem:[%s2238 + $0x1f8] sm:$0xff]
    %v2303 = vld [vmem:[%s2238 + $0x200] sm:$0xff]
    %v2304 = vld [vmem:[%s2238 + $0x208] sm:$0xff]
    %v2305 = vld [vmem:[%s2238 + $0x210] sm:$0xff]
    %v2306 = vld [vmem:[%s2238 + $0x218] sm:$0xff]
    %v2307 = vld [vmem:[%s2238 + $0x220] sm:$0xff]
    %v2308 = vld [vmem:[%s2238 + $0x228] sm:$0xff]
    %v2309 = vld [vmem:[%s2238 + $0x230] sm:$0xff]
    %v2310 = vld [vmem:[%s2238 + $0x238] sm:$0xff]
    %v2311 = vld [vmem:[%s2238 + $0x240] sm:$0xff]
    %v2312 = vld [vmem:[%s2238 + $0x248] sm:$0xff]
    %v2313 = vld [vmem:[%s2238 + $0x250] sm:$0xff]
    %v2314 = vld [vmem:[%s2238 + $0x258] sm:$0xff]
    %v2315 = vld [vmem:[%s2238 + $0x260] sm:$0xff]
    %v2316 = vld [vmem:[%s2238 + $0x268] sm:$0xff]
    %v2317 = vld [vmem:[%s2238 + $0x270] sm:$0xff]
    %v2318 = vld [vmem:[%s2238 + $0x278] sm:$0xff]
    %v2319 = vld [vmem:[%s2238 + $0x280] sm:$0xff]
    %v2320 = vld [vmem:[%s2238 + $0x288] sm:$0xff]
    %v2321 = vld [vmem:[%s2238 + $0x290] sm:$0xff]
    %v2322 = vld [vmem:[%s2238 + $0x298] sm:$0xff]
    %v2323 = vld [vmem:[%s2238 + $0x2a0] sm:$0xff]
    %v2324 = vld [vmem:[%s2238 + $0x2a8] sm:$0xff]
    %v2325 = vld [vmem:[%s2238 + $0x2b0] sm:$0xff]
    %v2326 = vld [vmem:[%s2238 + $0x2b8] sm:$0xff]
    %v2327 = vld [vmem:[%s2238 + $0x2c0] sm:$0xff]
    %v2328 = vld [vmem:[%s2238 + $0x2c8] sm:$0xff]
    %v2329 = vld [vmem:[%s2238 + $0x2d0] sm:$0xff]
    %v2330 = vld [vmem:[%s2238 + $0x2d8] sm:$0xff]
    %v2331 = vld [vmem:[%s2238 + $0x2e0] sm:$0xff]
    %v2332 = vld [vmem:[%s2238 + $0x2e8] sm:$0xff]
    %v2333 = vld [vmem:[%s2238 + $0x2f0] sm:$0xff]
    %v2334 = vld [vmem:[%s2238 + $0x2f8] sm:$0xff]
    %vm2335 = vcmask 1040384
    %v2336 = vrot.slane %v121, 7
    %v2337 = vrot.slane %v122, 7
    %v2338 = vsel %vm2335, %v2336, %v2337
    %v2339 = vrot.slane %v123, 7
    %v2340 = vsel %vm2335, %v2337, %v2339
    %v2341 = vsel %vm326, %v2338, 0
    %v2343 = vsel %vm326, %v2340, 0
    %2345 = vmatpush.msra.mxu0 0.0
    %2346 = vmatpush.msra.mxu0 0.0
    %2347 = vmatpush.msra.mxu0 0.0
    %2348 = vmatpush.msra.mxu0 0.0
    %2349 = vmatpush.msra.mxu0 %v2327
    %2350 = vmatpush.msra.mxu0 %v2319
    %2351 = vmatpush.msra.mxu0 %v2311
    %2352 = vmatpush.msra.mxu0 %v2303
    %2353 = vmatpush.msra.mxu0 %v2295
    %2354 = vmatpush.msra.mxu0 %v2287
    %2355 = vmatpush.msra.mxu0 %v2279
    %2356 = vmatpush.msra.mxu0 %v2271
    %2357 = vmatpush.msra.mxu0 %v2263
    %2358 = vmatpush.msra.mxu0 %v2255
    %2359 = vmatpush.msra.mxu0 %v2247
    %2360 = vmatpush.msra.mxu0 %v2239
    %2361 = vmatmul.f32.gmra.mxu0 %v2341
    %v2362 = vpop.f32.mrf.mxu0
    %v2363 = vadd.f32 0.0, %v2362
    %2364 = vmatmul.f32.gmra.mxu0 %v2343
    %v2365 = vpop.f32.mrf.mxu0
    %v2366 = vadd.f32 0.0, %v2365
    %2367 = vdwg.mxu0
    %2368 = vmatpush.msra.mxu0 0.0
    %2369 = vmatpush.msra.mxu0 0.0
    %2370 = vmatpush.msra.mxu0 0.0
    %2371 = vmatpush.msra.mxu0 0.0
    %2372 = vmatpush.msra.mxu0 %v2328
    %2373 = vmatpush.msra.mxu0 %v2320
    %2374 = vmatpush.msra.mxu0 %v2312
    %2375 = vmatpush.msra.mxu0 %v2304
    %2376 = vmatpush.msra.mxu0 %v2296
    %2377 = vmatpush.msra.mxu0 %v2288
    %2378 = vmatpush.msra.mxu0 %v2280
    %2379 = vmatpush.msra.mxu0 %v2272
    %2380 = vmatpush.msra.mxu0 %v2264
    %2381 = vmatpush.msra.mxu0 %v2256
    %2382 = vmatpush.msra.mxu0 %v2248
    %2383 = vmatpush.msra.mxu0 %v2240
    %2384 = vmatmul.f32.gmra.mxu0 %v2341
    %v2385 = vpop.f32.mrf.mxu0
    %v2386 = vadd.f32 0.0, %v2385
    %2387 = vmatmul.f32.gmra.mxu0 %v2343
    %v2388 = vpop.f32.mrf.mxu0
    %v2389 = vadd.f32 0.0, %v2388
    %2390 = vdwg.mxu0
    %2391 = vmatpush.msra.mxu0 0.0
    %2392 = vmatpush.msra.mxu0 0.0
    %2393 = vmatpush.msra.mxu0 0.0
    %2394 = vmatpush.msra.mxu0 0.0
    %2395 = vmatpush.msra.mxu0 %v2329
    %2396 = vmatpush.msra.mxu0 %v2321
    %2397 = vmatpush.msra.mxu0 %v2313
    %2398 = vmatpush.msra.mxu0 %v2305
    %2399 = vmatpush.msra.mxu0 %v2297
    %2400 = vmatpush.msra.mxu0 %v2289
    %2401 = vmatpush.msra.mxu0 %v2281
    %2402 = vmatpush.msra.mxu0 %v2273
    %2403 = vmatpush.msra.mxu0 %v2265
    %2404 = vmatpush.msra.mxu0 %v2257
    %2405 = vmatpush.msra.mxu0 %v2249
    %2406 = vmatpush.msra.mxu0 %v2241
    %2407 = vmatmul.f32.gmra.mxu0 %v2341
    %v2408 = vpop.f32.mrf.mxu0
    %v2409 = vadd.f32 0.0, %v2408
    %2410 = vmatmul.f32.gmra.mxu0 %v2343
    %v2411 = vpop.f32.mrf.mxu0
    %v2412 = vadd.f32 0.0, %v2411
    %2413 = vdwg.mxu0
    %2414 = vmatpush.msra.mxu0 0.0
    %2415 = vmatpush.msra.mxu0 0.0
    %2416 = vmatpush.msra.mxu0 0.0
    %2417 = vmatpush.msra.mxu0 0.0
    %2418 = vmatpush.msra.mxu0 %v2330
    %2419 = vmatpush.msra.mxu0 %v2322
    %2420 = vmatpush.msra.mxu0 %v2314
    %2421 = vmatpush.msra.mxu0 %v2306
    %2422 = vmatpush.msra.mxu0 %v2298
    %2423 = vmatpush.msra.mxu0 %v2290
    %2424 = vmatpush.msra.mxu0 %v2282
    %2425 = vmatpush.msra.mxu0 %v2274
    %2426 = vmatpush.msra.mxu0 %v2266
    %2427 = vmatpush.msra.mxu0 %v2258
    %2428 = vmatpush.msra.mxu0 %v2250
    %2429 = vmatpush.msra.mxu0 %v2242
    %2430 = vmatmul.f32.gmra.mxu0 %v2341
    %v2431 = vpop.f32.mrf.mxu0
    %v2432 = vadd.f32 0.0, %v2431
    %2433 = vmatmul.f32.gmra.mxu0 %v2343
    %v2434 = vpop.f32.mrf.mxu0
    %v2435 = vadd.f32 0.0, %v2434
    %2436 = vdwg.mxu0
    %2437 = vmatpush.msra.mxu0 0.0
    %2438 = vmatpush.msra.mxu0 0.0
    %2439 = vmatpush.msra.mxu0 0.0
    %2440 = vmatpush.msra.mxu0 0.0
    %2441 = vmatpush.msra.mxu0 %v2331
    %2442 = vmatpush.msra.mxu0 %v2323
    %2443 = vmatpush.msra.mxu0 %v2315
    %2444 = vmatpush.msra.mxu0 %v2307
    %2445 = vmatpush.msra.mxu0 %v2299
    %2446 = vmatpush.msra.mxu0 %v2291
    %2447 = vmatpush.msra.mxu0 %v2283
    %2448 = vmatpush.msra.mxu0 %v2275
    %2449 = vmatpush.msra.mxu0 %v2267
    %2450 = vmatpush.msra.mxu0 %v2259
    %2451 = vmatpush.msra.mxu0 %v2251
    %2452 = vmatpush.msra.mxu0 %v2243
    %2453 = vmatmul.f32.gmra.mxu0 %v2341
    %v2454 = vpop.f32.mrf.mxu0
    %v2455 = vadd.f32 0.0, %v2454
    %2456 = vmatmul.f32.gmra.mxu0 %v2343
    %v2457 = vpop.f32.mrf.mxu0
    %v2458 = vadd.f32 0.0, %v2457
    %2459 = vdwg.mxu0
    %2460 = vmatpush.msra.mxu0 0.0
    %2461 = vmatpush.msra.mxu0 0.0
    %2462 = vmatpush.msra.mxu0 0.0
    %2463 = vmatpush.msra.mxu0 0.0
    %2464 = vmatpush.msra.mxu0 %v2332
    %2465 = vmatpush.msra.mxu0 %v2324
    %2466 = vmatpush.msra.mxu0 %v2316
    %2467 = vmatpush.msra.mxu0 %v2308
    %2468 = vmatpush.msra.mxu0 %v2300
    %2469 = vmatpush.msra.mxu0 %v2292
    %2470 = vmatpush.msra.mxu0 %v2284
    %2471 = vmatpush.msra.mxu0 %v2276
    %2472 = vmatpush.msra.mxu0 %v2268
    %2473 = vmatpush.msra.mxu0 %v2260
    %2474 = vmatpush.msra.mxu0 %v2252
    %2475 = vmatpush.msra.mxu0 %v2244
    %2476 = vmatmul.f32.gmra.mxu0 %v2341
    %v2477 = vpop.f32.mrf.mxu0
    %v2478 = vadd.f32 0.0, %v2477
    %2479 = vmatmul.f32.gmra.mxu0 %v2343
    %v2480 = vpop.f32.mrf.mxu0
    %v2481 = vadd.f32 0.0, %v2480
    %2482 = vdwg.mxu0
    %2483 = vmatpush.msra.mxu0 0.0
    %2484 = vmatpush.msra.mxu0 0.0
    %2485 = vmatpush.msra.mxu0 0.0
    %2486 = vmatpush.msra.mxu0 0.0
    %2487 = vmatpush.msra.mxu0 %v2333
    %2488 = vmatpush.msra.mxu0 %v2325
    %2489 = vmatpush.msra.mxu0 %v2317
    %2490 = vmatpush.msra.mxu0 %v2309
    %2491 = vmatpush.msra.mxu0 %v2301
    %2492 = vmatpush.msra.mxu0 %v2293
    %2493 = vmatpush.msra.mxu0 %v2285
    %2494 = vmatpush.msra.mxu0 %v2277
    %2495 = vmatpush.msra.mxu0 %v2269
    %2496 = vmatpush.msra.mxu0 %v2261
    %2497 = vmatpush.msra.mxu0 %v2253
    %2498 = vmatpush.msra.mxu0 %v2245
    %2499 = vmatmul.f32.gmra.mxu0 %v2341
    %v2500 = vpop.f32.mrf.mxu0
    %v2501 = vadd.f32 0.0, %v2500
    %2502 = vmatmul.f32.gmra.mxu0 %v2343
    %v2503 = vpop.f32.mrf.mxu0
    %v2504 = vadd.f32 0.0, %v2503
    %2505 = vdwg.mxu0
    %2506 = vmatpush.msra.mxu0 0.0
    %2507 = vmatpush.msra.mxu0 0.0
    %2508 = vmatpush.msra.mxu0 0.0
    %2509 = vmatpush.msra.mxu0 0.0
    %2510 = vmatpush.msra.mxu0 %v2334
    %2511 = vmatpush.msra.mxu0 %v2326
    %2512 = vmatpush.msra.mxu0 %v2318
    %2513 = vmatpush.msra.mxu0 %v2310
    %2514 = vmatpush.msra.mxu0 %v2302
    %2515 = vmatpush.msra.mxu0 %v2294
    %2516 = vmatpush.msra.mxu0 %v2286
    %2517 = vmatpush.msra.mxu0 %v2278
    %2518 = vmatpush.msra.mxu0 %v2270
    %2519 = vmatpush.msra.mxu0 %v2262
    %2520 = vmatpush.msra.mxu0 %v2254
    %2521 = vmatpush.msra.mxu0 %v2246
    %2522 = vmatmul.f32.gmra.mxu0 %v2341
    %v2523 = vpop.f32.mrf.mxu0
    %v2524 = vadd.f32 0.0, %v2523
    %2525 = vmatmul.f32.gmra.mxu0 %v2343
    %v2526 = vpop.f32.mrf.mxu0
    %v2527 = vadd.f32 0.0, %v2526
    %2528 = vdwg.mxu0
    %v2529 = vadd.f32 %v2222, %v2363
    %v2530 = vadd.f32 %v2223, %v2386
    %v2531 = vadd.f32 %v2224, %v2409
    %v2532 = vadd.f32 %v2225, %v2432
    %v2533 = vadd.f32 %v2226, %v2455
    %v2534 = vadd.f32 %v2227, %v2478
    %v2535 = vadd.f32 %v2228, %v2501
    %v2536 = vadd.f32 %v2229, %v2524
    %v2537 = vadd.f32 %v2230, %v2366
    %v2538 = vadd.f32 %v2231, %v2389
    %v2539 = vadd.f32 %v2232, %v2412
    %v2540 = vadd.f32 %v2233, %v2435
    %v2541 = vadd.f32 %v2234, %v2458
    %v2542 = vadd.f32 %v2235, %v2481
    %v2543 = vadd.f32 %v2236, %v2504
    %v2544 = vadd.f32 %v2237, %v2527
    %s2545 = scalar_lea.vmem [#allocation3], 6144
    %v2546 = vld [vmem:[%s2545] sm:$0xff]
    %v2547 = vld [vmem:[%s2545 + $0x8] sm:$0xff]
    %v2548 = vld [vmem:[%s2545 + $0x10] sm:$0xff]
    %v2549 = vld [vmem:[%s2545 + $0x18] sm:$0xff]
    %v2550 = vld [vmem:[%s2545 + $0x20] sm:$0xff]
    %v2551 = vld [vmem:[%s2545 + $0x28] sm:$0xff]
    %v2552 = vld [vmem:[%s2545 + $0x30] sm:$0xff]
    %v2553 = vld [vmem:[%s2545 + $0x38] sm:$0xff]
    %v2554 = vld [vmem:[%s2545 + $0x40] sm:$0xff]
    %v2555 = vld [vmem:[%s2545 + $0x48] sm:$0xff]
    %v2556 = vld [vmem:[%s2545 + $0x50] sm:$0xff]
    %v2557 = vld [vmem:[%s2545 + $0x58] sm:$0xff]
    %v2558 = vld [vmem:[%s2545 + $0x60] sm:$0xff]
    %v2559 = vld [vmem:[%s2545 + $0x68] sm:$0xff]
    %v2560 = vld [vmem:[%s2545 + $0x70] sm:$0xff]
    %v2561 = vld [vmem:[%s2545 + $0x78] sm:$0xff]
    %v2562 = vld [vmem:[%s2545 + $0x80] sm:$0xff]
    %v2563 = vld [vmem:[%s2545 + $0x88] sm:$0xff]
    %v2564 = vld [vmem:[%s2545 + $0x90] sm:$0xff]
    %v2565 = vld [vmem:[%s2545 + $0x98] sm:$0xff]
    %v2566 = vld [vmem:[%s2545 + $0xa0] sm:$0xff]
    %v2567 = vld [vmem:[%s2545 + $0xa8] sm:$0xff]
    %v2568 = vld [vmem:[%s2545 + $0xb0] sm:$0xff]
    %v2569 = vld [vmem:[%s2545 + $0xb8] sm:$0xff]
    %v2570 = vld [vmem:[%s2545 + $0xc0] sm:$0xff]
    %v2571 = vld [vmem:[%s2545 + $0xc8] sm:$0xff]
    %v2572 = vld [vmem:[%s2545 + $0xd0] sm:$0xff]
    %v2573 = vld [vmem:[%s2545 + $0xd8] sm:$0xff]
    %v2574 = vld [vmem:[%s2545 + $0xe0] sm:$0xff]
    %v2575 = vld [vmem:[%s2545 + $0xe8] sm:$0xff]
    %v2576 = vld [vmem:[%s2545 + $0xf0] sm:$0xff]
    %v2577 = vld [vmem:[%s2545 + $0xf8] sm:$0xff]
    %v2578 = vld [vmem:[%s2545 + $0x100] sm:$0xff]
    %v2579 = vld [vmem:[%s2545 + $0x108] sm:$0xff]
    %v2580 = vld [vmem:[%s2545 + $0x110] sm:$0xff]
    %v2581 = vld [vmem:[%s2545 + $0x118] sm:$0xff]
    %v2582 = vld [vmem:[%s2545 + $0x120] sm:$0xff]
    %v2583 = vld [vmem:[%s2545 + $0x128] sm:$0xff]
    %v2584 = vld [vmem:[%s2545 + $0x130] sm:$0xff]
    %v2585 = vld [vmem:[%s2545 + $0x138] sm:$0xff]
    %v2586 = vld [vmem:[%s2545 + $0x140] sm:$0xff]
    %v2587 = vld [vmem:[%s2545 + $0x148] sm:$0xff]
    %v2588 = vld [vmem:[%s2545 + $0x150] sm:$0xff]
    %v2589 = vld [vmem:[%s2545 + $0x158] sm:$0xff]
    %v2590 = vld [vmem:[%s2545 + $0x160] sm:$0xff]
    %v2591 = vld [vmem:[%s2545 + $0x168] sm:$0xff]
    %v2592 = vld [vmem:[%s2545 + $0x170] sm:$0xff]
    %v2593 = vld [vmem:[%s2545 + $0x178] sm:$0xff]
    %v2594 = vld [vmem:[%s2545 + $0x180] sm:$0xff]
    %v2595 = vld [vmem:[%s2545 + $0x188] sm:$0xff]
    %v2596 = vld [vmem:[%s2545 + $0x190] sm:$0xff]
    %v2597 = vld [vmem:[%s2545 + $0x198] sm:$0xff]
    %v2598 = vld [vmem:[%s2545 + $0x1a0] sm:$0xff]
    %v2599 = vld [vmem:[%s2545 + $0x1a8] sm:$0xff]
    %v2600 = vld [vmem:[%s2545 + $0x1b0] sm:$0xff]
    %v2601 = vld [vmem:[%s2545 + $0x1b8] sm:$0xff]
    %v2602 = vld [vmem:[%s2545 + $0x1c0] sm:$0xff]
    %v2603 = vld [vmem:[%s2545 + $0x1c8] sm:$0xff]
    %v2604 = vld [vmem:[%s2545 + $0x1d0] sm:$0xff]
    %v2605 = vld [vmem:[%s2545 + $0x1d8] sm:$0xff]
    %v2606 = vld [vmem:[%s2545 + $0x1e0] sm:$0xff]
    %v2607 = vld [vmem:[%s2545 + $0x1e8] sm:$0xff]
    %v2608 = vld [vmem:[%s2545 + $0x1f0] sm:$0xff]
    %v2609 = vld [vmem:[%s2545 + $0x1f8] sm:$0xff]
    %v2610 = vld [vmem:[%s2545 + $0x200] sm:$0xff]
    %v2611 = vld [vmem:[%s2545 + $0x208] sm:$0xff]
    %v2612 = vld [vmem:[%s2545 + $0x210] sm:$0xff]
    %v2613 = vld [vmem:[%s2545 + $0x218] sm:$0xff]
    %v2614 = vld [vmem:[%s2545 + $0x220] sm:$0xff]
    %v2615 = vld [vmem:[%s2545 + $0x228] sm:$0xff]
    %v2616 = vld [vmem:[%s2545 + $0x230] sm:$0xff]
    %v2617 = vld [vmem:[%s2545 + $0x238] sm:$0xff]
    %v2618 = vld [vmem:[%s2545 + $0x240] sm:$0xff]
    %v2619 = vld [vmem:[%s2545 + $0x248] sm:$0xff]
    %v2620 = vld [vmem:[%s2545 + $0x250] sm:$0xff]
    %v2621 = vld [vmem:[%s2545 + $0x258] sm:$0xff]
    %v2622 = vld [vmem:[%s2545 + $0x260] sm:$0xff]
    %v2623 = vld [vmem:[%s2545 + $0x268] sm:$0xff]
    %v2624 = vld [vmem:[%s2545 + $0x270] sm:$0xff]
    %v2625 = vld [vmem:[%s2545 + $0x278] sm:$0xff]
    %v2626 = vld [vmem:[%s2545 + $0x280] sm:$0xff]
    %v2627 = vld [vmem:[%s2545 + $0x288] sm:$0xff]
    %v2628 = vld [vmem:[%s2545 + $0x290] sm:$0xff]
    %v2629 = vld [vmem:[%s2545 + $0x298] sm:$0xff]
    %v2630 = vld [vmem:[%s2545 + $0x2a0] sm:$0xff]
    %v2631 = vld [vmem:[%s2545 + $0x2a8] sm:$0xff]
    %v2632 = vld [vmem:[%s2545 + $0x2b0] sm:$0xff]
    %v2633 = vld [vmem:[%s2545 + $0x2b8] sm:$0xff]
    %v2634 = vld [vmem:[%s2545 + $0x2c0] sm:$0xff]
    %v2635 = vld [vmem:[%s2545 + $0x2c8] sm:$0xff]
    %v2636 = vld [vmem:[%s2545 + $0x2d0] sm:$0xff]
    %v2637 = vld [vmem:[%s2545 + $0x2d8] sm:$0xff]
    %v2638 = vld [vmem:[%s2545 + $0x2e0] sm:$0xff]
    %v2639 = vld [vmem:[%s2545 + $0x2e8] sm:$0xff]
    %v2640 = vld [vmem:[%s2545 + $0x2f0] sm:$0xff]
    %v2641 = vld [vmem:[%s2545 + $0x2f8] sm:$0xff]
    %v2642 = vsel %vm326, %v123, 0
    %2644 = vmatpush.msra.mxu0 0.0
    %2645 = vmatpush.msra.mxu0 0.0
    %2646 = vmatpush.msra.mxu0 0.0
    %2647 = vmatpush.msra.mxu0 0.0
    %2648 = vmatpush.msra.mxu0 %v2634
    %2649 = vmatpush.msra.mxu0 %v2626
    %2650 = vmatpush.msra.mxu0 %v2618
    %2651 = vmatpush.msra.mxu0 %v2610
    %2652 = vmatpush.msra.mxu0 %v2602
    %2653 = vmatpush.msra.mxu0 %v2594
    %2654 = vmatpush.msra.mxu0 %v2586
    %2655 = vmatpush.msra.mxu0 %v2578
    %2656 = vmatpush.msra.mxu0 %v2570
    %2657 = vmatpush.msra.mxu0 %v2562
    %2658 = vmatpush.msra.mxu0 %v2554
    %2659 = vmatpush.msra.mxu0 %v2546
    %2660 = vmatmul.f32.gmra.mxu0 %v517
    %v2661 = vpop.f32.mrf.mxu0
    %v2662 = vadd.f32 0.0, %v2661
    %2663 = vmatmul.f32.gmra.mxu0 %v2642
    %v2664 = vpop.f32.mrf.mxu0
    %v2665 = vadd.f32 0.0, %v2664
    %2666 = vdwg.mxu0
    %2667 = vmatpush.msra.mxu0 0.0
    %2668 = vmatpush.msra.mxu0 0.0
    %2669 = vmatpush.msra.mxu0 0.0
    %2670 = vmatpush.msra.mxu0 0.0
    %2671 = vmatpush.msra.mxu0 %v2635
    %2672 = vmatpush.msra.mxu0 %v2627
    %2673 = vmatpush.msra.mxu0 %v2619
    %2674 = vmatpush.msra.mxu0 %v2611
    %2675 = vmatpush.msra.mxu0 %v2603
    %2676 = vmatpush.msra.mxu0 %v2595
    %2677 = vmatpush.msra.mxu0 %v2587
    %2678 = vmatpush.msra.mxu0 %v2579
    %2679 = vmatpush.msra.mxu0 %v2571
    %2680 = vmatpush.msra.mxu0 %v2563
    %2681 = vmatpush.msra.mxu0 %v2555
    %2682 = vmatpush.msra.mxu0 %v2547
    %2683 = vmatmul.f32.gmra.mxu0 %v517
    %v2684 = vpop.f32.mrf.mxu0
    %v2685 = vadd.f32 0.0, %v2684
    %2686 = vmatmul.f32.gmra.mxu0 %v2642
    %v2687 = vpop.f32.mrf.mxu0
    %v2688 = vadd.f32 0.0, %v2687
    %2689 = vdwg.mxu0
    %2690 = vmatpush.msra.mxu0 0.0
    %2691 = vmatpush.msra.mxu0 0.0
    %2692 = vmatpush.msra.mxu0 0.0
    %2693 = vmatpush.msra.mxu0 0.0
    %2694 = vmatpush.msra.mxu0 %v2636
    %2695 = vmatpush.msra.mxu0 %v2628
    %2696 = vmatpush.msra.mxu0 %v2620
    %2697 = vmatpush.msra.mxu0 %v2612
    %2698 = vmatpush.msra.mxu0 %v2604
    %2699 = vmatpush.msra.mxu0 %v2596
    %2700 = vmatpush.msra.mxu0 %v2588
    %2701 = vmatpush.msra.mxu0 %v2580
    %2702 = vmatpush.msra.mxu0 %v2572
    %2703 = vmatpush.msra.mxu0 %v2564
    %2704 = vmatpush.msra.mxu0 %v2556
    %2705 = vmatpush.msra.mxu0 %v2548
    %2706 = vmatmul.f32.gmra.mxu0 %v517
    %v2707 = vpop.f32.mrf.mxu0
    %v2708 = vadd.f32 0.0, %v2707
    %2709 = vmatmul.f32.gmra.mxu0 %v2642
    %v2710 = vpop.f32.mrf.mxu0
    %v2711 = vadd.f32 0.0, %v2710
    %2712 = vdwg.mxu0
    %2713 = vmatpush.msra.mxu0 0.0
    %2714 = vmatpush.msra.mxu0 0.0
    %2715 = vmatpush.msra.mxu0 0.0
    %2716 = vmatpush.msra.mxu0 0.0
    %2717 = vmatpush.msra.mxu0 %v2637
    %2718 = vmatpush.msra.mxu0 %v2629
    %2719 = vmatpush.msra.mxu0 %v2621
    %2720 = vmatpush.msra.mxu0 %v2613
    %2721 = vmatpush.msra.mxu0 %v2605
    %2722 = vmatpush.msra.mxu0 %v2597
    %2723 = vmatpush.msra.mxu0 %v2589
    %2724 = vmatpush.msra.mxu0 %v2581
    %2725 = vmatpush.msra.mxu0 %v2573
    %2726 = vmatpush.msra.mxu0 %v2565
    %2727 = vmatpush.msra.mxu0 %v2557
    %2728 = vmatpush.msra.mxu0 %v2549
    %2729 = vmatmul.f32.gmra.mxu0 %v517
    %v2730 = vpop.f32.mrf.mxu0
    %v2731 = vadd.f32 0.0, %v2730
    %2732 = vmatmul.f32.gmra.mxu0 %v2642
    %v2733 = vpop.f32.mrf.mxu0
    %v2734 = vadd.f32 0.0, %v2733
    %2735 = vdwg.mxu0
    %2736 = vmatpush.msra.mxu0 0.0
    %2737 = vmatpush.msra.mxu0 0.0
    %2738 = vmatpush.msra.mxu0 0.0
    %2739 = vmatpush.msra.mxu0 0.0
    %2740 = vmatpush.msra.mxu0 %v2638
    %2741 = vmatpush.msra.mxu0 %v2630
    %2742 = vmatpush.msra.mxu0 %v2622
    %2743 = vmatpush.msra.mxu0 %v2614
    %2744 = vmatpush.msra.mxu0 %v2606
    %2745 = vmatpush.msra.mxu0 %v2598
    %2746 = vmatpush.msra.mxu0 %v2590
    %2747 = vmatpush.msra.mxu0 %v2582
    %2748 = vmatpush.msra.mxu0 %v2574
    %2749 = vmatpush.msra.mxu0 %v2566
    %2750 = vmatpush.msra.mxu0 %v2558
    %2751 = vmatpush.msra.mxu0 %v2550
    %2752 = vmatmul.f32.gmra.mxu0 %v517
    %v2753 = vpop.f32.mrf.mxu0
    %v2754 = vadd.f32 0.0, %v2753
    %2755 = vmatmul.f32.gmra.mxu0 %v2642
    %v2756 = vpop.f32.mrf.mxu0
    %v2757 = vadd.f32 0.0, %v2756
    %2758 = vdwg.mxu0
    %2759 = vmatpush.msra.mxu0 0.0
    %2760 = vmatpush.msra.mxu0 0.0
    %2761 = vmatpush.msra.mxu0 0.0
    %2762 = vmatpush.msra.mxu0 0.0
    %2763 = vmatpush.msra.mxu0 %v2639
    %2764 = vmatpush.msra.mxu0 %v2631
    %2765 = vmatpush.msra.mxu0 %v2623
    %2766 = vmatpush.msra.mxu0 %v2615
    %2767 = vmatpush.msra.mxu0 %v2607
    %2768 = vmatpush.msra.mxu0 %v2599
    %2769 = vmatpush.msra.mxu0 %v2591
    %2770 = vmatpush.msra.mxu0 %v2583
    %2771 = vmatpush.msra.mxu0 %v2575
    %2772 = vmatpush.msra.mxu0 %v2567
    %2773 = vmatpush.msra.mxu0 %v2559
    %2774 = vmatpush.msra.mxu0 %v2551
    %2775 = vmatmul.f32.gmra.mxu0 %v517
    %v2776 = vpop.f32.mrf.mxu0
    %v2777 = vadd.f32 0.0, %v2776
    %2778 = vmatmul.f32.gmra.mxu0 %v2642
    %v2779 = vpop.f32.mrf.mxu0
    %v2780 = vadd.f32 0.0, %v2779
    %2781 = vdwg.mxu0
    %2782 = vmatpush.msra.mxu0 0.0
    %2783 = vmatpush.msra.mxu0 0.0
    %2784 = vmatpush.msra.mxu0 0.0
    %2785 = vmatpush.msra.mxu0 0.0
    %2786 = vmatpush.msra.mxu0 %v2640
    %2787 = vmatpush.msra.mxu0 %v2632
    %2788 = vmatpush.msra.mxu0 %v2624
    %2789 = vmatpush.msra.mxu0 %v2616
    %2790 = vmatpush.msra.mxu0 %v2608
    %2791 = vmatpush.msra.mxu0 %v2600
    %2792 = vmatpush.msra.mxu0 %v2592
    %2793 = vmatpush.msra.mxu0 %v2584
    %2794 = vmatpush.msra.mxu0 %v2576
    %2795 = vmatpush.msra.mxu0 %v2568
    %2796 = vmatpush.msra.mxu0 %v2560
    %2797 = vmatpush.msra.mxu0 %v2552
    %2798 = vmatmul.f32.gmra.mxu0 %v517
    %v2799 = vpop.f32.mrf.mxu0
    %v2800 = vadd.f32 0.0, %v2799
    %2801 = vmatmul.f32.gmra.mxu0 %v2642
    %v2802 = vpop.f32.mrf.mxu0
    %v2803 = vadd.f32 0.0, %v2802
    %2804 = vdwg.mxu0
    %2805 = vmatpush.msra.mxu0 0.0
    %2806 = vmatpush.msra.mxu0 0.0
    %2807 = vmatpush.msra.mxu0 0.0
    %2808 = vmatpush.msra.mxu0 0.0
    %2809 = vmatpush.msra.mxu0 %v2641
    %2810 = vmatpush.msra.mxu0 %v2633
    %2811 = vmatpush.msra.mxu0 %v2625
    %2812 = vmatpush.msra.mxu0 %v2617
    %2813 = vmatpush.msra.mxu0 %v2609
    %2814 = vmatpush.msra.mxu0 %v2601
    %2815 = vmatpush.msra.mxu0 %v2593
    %2816 = vmatpush.msra.mxu0 %v2585
    %2817 = vmatpush.msra.mxu0 %v2577
    %2818 = vmatpush.msra.mxu0 %v2569
    %2819 = vmatpush.msra.mxu0 %v2561
    %2820 = vmatpush.msra.mxu0 %v2553
    %2821 = vmatmul.f32.gmra.mxu0 %v517
    %v2822 = vpop.f32.mrf.mxu0
    %v2823 = vadd.f32 0.0, %v2822
    %2824 = vmatmul.f32.gmra.mxu0 %v2642
    %v2825 = vpop.f32.mrf.mxu0
    %v2826 = vadd.f32 0.0, %v2825
    %2827 = vdwg.mxu0
    %v2828 = vadd.f32 %v2529, %v2662
    %v2829 = vadd.f32 %v2530, %v2685
    %v2830 = vadd.f32 %v2531, %v2708
    %v2831 = vadd.f32 %v2532, %v2731
    %v2832 = vadd.f32 %v2533, %v2754
    %v2833 = vadd.f32 %v2534, %v2777
    %v2834 = vadd.f32 %v2535, %v2800
    %v2835 = vadd.f32 %v2536, %v2823
    %v2836 = vadd.f32 %v2537, %v2665
    %v2837 = vadd.f32 %v2538, %v2688
    %v2838 = vadd.f32 %v2539, %v2711
    %v2839 = vadd.f32 %v2540, %v2734
    %v2840 = vadd.f32 %v2541, %v2757
    %v2841 = vadd.f32 %v2542, %v2780
    %v2842 = vadd.f32 %v2543, %v2803
    %v2843 = vadd.f32 %v2544, %v2826
    %v2845 = vperm.slane %v118, 0
    %v2846 = vperm.slane %v118, 1
    %v2847 = vperm.slane %v118, 2
    %v2848 = vperm.slane %v118, 3
    %v2849 = vperm.slane %v118, 4
    %v2850 = vperm.slane %v118, 5
    %v2851 = vperm.slane %v118, 6
    %v2852 = vperm.slane %v118, 7
    %v2861 = vadd.f32 %v2828, %v2845
    %v2862 = vadd.f32 %v2829, %v2846
    %v2863 = vadd.f32 %v2830, %v2847
    %v2864 = vadd.f32 %v2831, %v2848
    %v2865 = vadd.f32 %v2832, %v2849
    %v2866 = vadd.f32 %v2833, %v2850
    %v2867 = vadd.f32 %v2834, %v2851
    %v2868 = vadd.f32 %v2835, %v2852
    %v2869 = vadd.f32 %v2836, %v2845
    %v2870 = vadd.f32 %v2837, %v2846
    %v2871 = vadd.f32 %v2838, %v2847
    %v2872 = vadd.f32 %v2839, %v2848
    %v2873 = vadd.f32 %v2840, %v2849
    %v2874 = vadd.f32 %v2841, %v2850
    %v2875 = vadd.f32 %v2842, %v2851
    %v2876 = vadd.f32 %v2843, %v2852
    %v2877 = vmax.f32 %v2861, 0.0
    %v2878 = vmax.f32 %v2862, 0.0
    %v2879 = vmax.f32 %v2863, 0.0
    %v2880 = vmax.f32 %v2864, 0.0
    %v2881 = vmax.f32 %v2865, 0.0
    %v2882 = vmax.f32 %v2866, 0.0
    %v2883 = vmax.f32 %v2867, 0.0
    %v2884 = vmax.f32 %v2868, 0.0
    %v2885 = vmax.f32 %v2869, 0.0
    %v2886 = vmax.f32 %v2870, 0.0
    %v2887 = vmax.f32 %v2871, 0.0
    %v2888 = vmax.f32 %v2872, 0.0
    %v2889 = vmax.f32 %v2873, 0.0
    %v2890 = vmax.f32 %v2874, 0.0
    %v2891 = vmax.f32 %v2875, 0.0
    %v2892 = vmax.f32 %v2876, 0.0
    %v2894 = vperm.slane %v119, 0
    %2896 = vmatpush.msra.mxu0 %v101
    %2897 = vmatpush.msra.mxu0 %v100
    %2898 = vmatpush.msra.mxu0 %v99
    %2899 = vmatpush.msra.mxu0 %v98
    %2900 = vmatpush.msra.mxu0 %v97
    %2901 = vmatpush.msra.mxu0 %v96
    %2902 = vmatpush.msra.mxu0 %v95
    %2903 = vmatpush.msra.mxu0 %v94
    %2904 = vmatpush.msra.mxu0 %v93
    %2905 = vmatpush.msra.mxu0 %v92
    %2906 = vmatpush.msra.mxu0 %v91
    %2907 = vmatpush.msra.mxu0 %v90
    %2908 = vmatpush.msra.mxu0 %v89
    %2909 = vmatpush.msra.mxu0 %v88
    %2910 = vmatpush.msra.mxu0 %v87
    %2911 = vmatpush.msra.mxu0 %v86
    %2912 = vmatmul.f32.gmra.mxu0 %v2877
    %v2913 = vpop.f32.mrf.mxu0
    %v2914 = vadd.f32 %v2894, %v2913
    %2915 = vmatmul.f32.gmra.mxu0 %v2885
    %v2916 = vpop.f32.mrf.mxu0
    %v2917 = vadd.f32 %v2894, %v2916
    %2918 = vdwg.mxu0
    %2919 = vmatpush.msra.mxu0 %v117
    %2920 = vmatpush.msra.mxu0 %v116
    %2921 = vmatpush.msra.mxu0 %v115
    %2922 = vmatpush.msra.mxu0 %v114
    %2923 = vmatpush.msra.mxu0 %v113
    %2924 = vmatpush.msra.mxu0 %v112
    %2925 = vmatpush.msra.mxu0 %v111
    %2926 = vmatpush.msra.mxu0 %v110
    %2927 = vmatpush.msra.mxu0 %v109
    %2928 = vmatpush.msra.mxu0 %v108
    %2929 = vmatpush.msra.mxu0 %v107
    %2930 = vmatpush.msra.mxu0 %v106
    %2931 = vmatpush.msra.mxu0 %v105
    %2932 = vmatpush.msra.mxu0 %v104
    %2933 = vmatpush.msra.mxu0 %v103
    %2934 = vmatpush.msra.mxu0 %v102
    %2935 = vmatmul.f32.gmra.mxu0 %v2878
    %v2936 = vpop.f32.mrf.mxu0
    %v2937 = vadd.f32 %v2914, %v2936
    %2938 = vmatmul.f32.gmra.mxu0 %v2886
    %v2939 = vpop.f32.mrf.mxu0
    %v2940 = vadd.f32 %v2917, %v2939
    %2941 = vdwg.mxu0
    %v2942 = vmax.f32 %v2937, 0.0
    %v2943 = vmax.f32 %v2940, 0.0
    %2944 = vmatpush.msra.mxu0 %v101
    %2945 = vmatpush.msra.mxu0 %v100
    %2946 = vmatpush.msra.mxu0 %v99
    %2947 = vmatpush.msra.mxu0 %v98
    %2948 = vmatpush.msra.mxu0 %v97
    %2949 = vmatpush.msra.mxu0 %v96
    %2950 = vmatpush.msra.mxu0 %v95
    %2951 = vmatpush.msra.mxu0 %v94
    %2952 = vmatpush.msra.mxu0 %v93
    %2953 = vmatpush.msra.mxu0 %v92
    %2954 = vmatpush.msra.mxu0 %v91
    %2955 = vmatpush.msra.mxu0 %v90
    %2956 = vmatpush.msra.mxu0 %v89
    %2957 = vmatpush.msra.mxu0 %v88
    %2958 = vmatpush.msra.mxu0 %v87
    %2959 = vmatpush.msra.mxu0 %v86
    %2960 = vmatmul.f32.gmra.mxu0 %v2879
    %v2961 = vpop.f32.mrf.mxu0
    %v2962 = vadd.f32 %v2894, %v2961
    %2963 = vmatmul.f32.gmra.mxu0 %v2887
    %v2964 = vpop.f32.mrf.mxu0
    %v2965 = vadd.f32 %v2894, %v2964
    %2966 = vdwg.mxu0
    %2967 = vmatpush.msra.mxu0 %v117
    %2968 = vmatpush.msra.mxu0 %v116
    %2969 = vmatpush.msra.mxu0 %v115
    %2970 = vmatpush.msra.mxu0 %v114
    %2971 = vmatpush.msra.mxu0 %v113
    %2972 = vmatpush.msra.mxu0 %v112
    %2973 = vmatpush.msra.mxu0 %v111
    %2974 = vmatpush.msra.mxu0 %v110
    %2975 = vmatpush.msra.mxu0 %v109
    %2976 = vmatpush.msra.mxu0 %v108
    %2977 = vmatpush.msra.mxu0 %v107
    %2978 = vmatpush.msra.mxu0 %v106
    %2979 = vmatpush.msra.mxu0 %v105
    %2980 = vmatpush.msra.mxu0 %v104
    %2981 = vmatpush.msra.mxu0 %v103
    %2982 = vmatpush.msra.mxu0 %v102
    %2983 = vmatmul.f32.gmra.mxu0 %v2880
    %v2984 = vpop.f32.mrf.mxu0
    %v2985 = vadd.f32 %v2962, %v2984
    %2986 = vmatmul.f32.gmra.mxu0 %v2888
    %v2987 = vpop.f32.mrf.mxu0
    %v2988 = vadd.f32 %v2965, %v2987
    %2989 = vdwg.mxu0
    %v2990 = vmax.f32 %v2985, 0.0
    %v2991 = vmax.f32 %v2988, 0.0
    %2992 = vmatpush.msra.mxu0 %v101
    %2993 = vmatpush.msra.mxu0 %v100
    %2994 = vmatpush.msra.mxu0 %v99
    %2995 = vmatpush.msra.mxu0 %v98
    %2996 = vmatpush.msra.mxu0 %v97
    %2997 = vmatpush.msra.mxu0 %v96
    %2998 = vmatpush.msra.mxu0 %v95
    %2999 = vmatpush.msra.mxu0 %v94
    %3000 = vmatpush.msra.mxu0 %v93
    %3001 = vmatpush.msra.mxu0 %v92
    %3002 = vmatpush.msra.mxu0 %v91
    %3003 = vmatpush.msra.mxu0 %v90
    %3004 = vmatpush.msra.mxu0 %v89
    %3005 = vmatpush.msra.mxu0 %v88
    %3006 = vmatpush.msra.mxu0 %v87
    %3007 = vmatpush.msra.mxu0 %v86
    %3008 = vmatmul.f32.gmra.mxu0 %v2881
    %v3009 = vpop.f32.mrf.mxu0
    %v3010 = vadd.f32 %v2894, %v3009
    %3011 = vmatmul.f32.gmra.mxu0 %v2889
    %v3012 = vpop.f32.mrf.mxu0
    %v3013 = vadd.f32 %v2894, %v3012
    %3014 = vdwg.mxu0
    %3015 = vmatpush.msra.mxu0 %v117
    %3016 = vmatpush.msra.mxu0 %v116
    %3017 = vmatpush.msra.mxu0 %v115
    %3018 = vmatpush.msra.mxu0 %v114
    %3019 = vmatpush.msra.mxu0 %v113
    %3020 = vmatpush.msra.mxu0 %v112
    %3021 = vmatpush.msra.mxu0 %v111
    %3022 = vmatpush.msra.mxu0 %v110
    %3023 = vmatpush.msra.mxu0 %v109
    %3024 = vmatpush.msra.mxu0 %v108
    %3025 = vmatpush.msra.mxu0 %v107
    %3026 = vmatpush.msra.mxu0 %v106
    %3027 = vmatpush.msra.mxu0 %v105
    %3028 = vmatpush.msra.mxu0 %v104
    %3029 = vmatpush.msra.mxu0 %v103
    %3030 = vmatpush.msra.mxu0 %v102
    %3031 = vmatmul.f32.gmra.mxu0 %v2882
    %v3032 = vpop.f32.mrf.mxu0
    %v3033 = vadd.f32 %v3010, %v3032
    %3034 = vmatmul.f32.gmra.mxu0 %v2890
    %v3035 = vpop.f32.mrf.mxu0
    %v3036 = vadd.f32 %v3013, %v3035
    %3037 = vdwg.mxu0
    %v3038 = vmax.f32 %v3033, 0.0
    %v3039 = vmax.f32 %v3036, 0.0
    %3040 = vmatpush.msra.mxu0 %v101
    %3041 = vmatpush.msra.mxu0 %v100
    %3042 = vmatpush.msra.mxu0 %v99
    %3043 = vmatpush.msra.mxu0 %v98
    %3044 = vmatpush.msra.mxu0 %v97
    %3045 = vmatpush.msra.mxu0 %v96
    %3046 = vmatpush.msra.mxu0 %v95
    %3047 = vmatpush.msra.mxu0 %v94
    %3048 = vmatpush.msra.mxu0 %v93
    %3049 = vmatpush.msra.mxu0 %v92
    %3050 = vmatpush.msra.mxu0 %v91
    %3051 = vmatpush.msra.mxu0 %v90
    %3052 = vmatpush.msra.mxu0 %v89
    %3053 = vmatpush.msra.mxu0 %v88
    %3054 = vmatpush.msra.mxu0 %v87
    %3055 = vmatpush.msra.mxu0 %v86
    %3056 = vmatmul.f32.gmra.mxu0 %v2883
    %v3057 = vpop.f32.mrf.mxu0
    %v3058 = vadd.f32 %v2894, %v3057
    %3059 = vmatmul.f32.gmra.mxu0 %v2891
    %v3060 = vpop.f32.mrf.mxu0
    %v3061 = vadd.f32 %v2894, %v3060
    %3062 = vdwg.mxu0
    %3063 = vmatpush.msra.mxu0 %v117
    %3064 = vmatpush.msra.mxu0 %v116
    %3065 = vmatpush.msra.mxu0 %v115
    %3066 = vmatpush.msra.mxu0 %v114
    %3067 = vmatpush.msra.mxu0 %v113
    %3068 = vmatpush.msra.mxu0 %v112
    %3069 = vmatpush.msra.mxu0 %v111
    %3070 = vmatpush.msra.mxu0 %v110
    %3071 = vmatpush.msra.mxu0 %v109
    %3072 = vmatpush.msra.mxu0 %v108
    %3073 = vmatpush.msra.mxu0 %v107
    %3074 = vmatpush.msra.mxu0 %v106
    %3075 = vmatpush.msra.mxu0 %v105
    %3076 = vmatpush.msra.mxu0 %v104
    %3077 = vmatpush.msra.mxu0 %v103
    %3078 = vmatpush.msra.mxu0 %v102
    %3079 = vmatmul.f32.gmra.mxu0 %v2884
    %v3080 = vpop.f32.mrf.mxu0
    %v3081 = vadd.f32 %v3058, %v3080
    %3082 = vmatmul.f32.gmra.mxu0 %v2892
    %v3083 = vpop.f32.mrf.mxu0
    %v3084 = vadd.f32 %v3061, %v3083
    %3085 = vdwg.mxu0
    %v3086 = vmax.f32 %v3081, 0.0
    %v3087 = vmax.f32 %v3084, 0.0
    %v3088 = vld [vmem:[%s5] sm:$0xff]
    %v3089 = vld [vmem:[%s5 + $0x8] sm:$0xff]
    %v3090 = vld [vmem:[%s5 + $0x10] sm:$0xff]
    %v3091 = vld [vmem:[%s5 + $0x18] sm:$0xff]
    %v3092 = vld [vmem:[%s5 + $0x20] sm:$0xff]
    %v3093 = vld [vmem:[%s5 + $0x28] sm:$0xff]
    %v3094 = vld [vmem:[%s5 + $0x30] sm:$0xff]
    %v3095 = vld [vmem:[%s5 + $0x38] sm:$0xff]
    %v3096 = vld [vmem:[%s5 + $0x40] sm:$0xff]
    %v3097 = vld [vmem:[%s5 + $0x48] sm:$0xff]
    %v3098 = vld [vmem:[%s5 + $0x50] sm:$0xff]
    %v3099 = vld [vmem:[%s5 + $0x58] sm:$0xff]
    %v3100 = vld [vmem:[%s5 + $0x60] sm:$0xff]
    %v3101 = vld [vmem:[%s5 + $0x68] sm:$0xff]
    %v3102 = vld [vmem:[%s5 + $0x70] sm:$0xff]
    %v3103 = vld [vmem:[%s5 + $0x78] sm:$0xff]
    %v3104 = vld [vmem:[%s5 + $0x80] sm:$0xff]
    %v3105 = vld [vmem:[%s5 + $0x88] sm:$0xff]
    %v3106 = vld [vmem:[%s5 + $0x90] sm:$0xff]
    %v3107 = vld [vmem:[%s5 + $0x98] sm:$0xff]
    %v3108 = vld [vmem:[%s5 + $0xa0] sm:$0xff]
    %v3109 = vld [vmem:[%s5 + $0xa8] sm:$0xff]
    %v3110 = vld [vmem:[%s5 + $0xb0] sm:$0xff]
    %v3111 = vld [vmem:[%s5 + $0xb8] sm:$0xff]
    %v3112 = vld [vmem:[%s5 + $0xc0] sm:$0xff]
    %v3113 = vld [vmem:[%s5 + $0xc8] sm:$0xff]
    %v3114 = vld [vmem:[%s5 + $0xd0] sm:$0xff]
    %v3115 = vld [vmem:[%s5 + $0xd8] sm:$0xff]
    %v3116 = vld [vmem:[%s5 + $0xe0] sm:$0xff]
    %v3117 = vld [vmem:[%s5 + $0xe8] sm:$0xff]
    %v3118 = vld [vmem:[%s5 + $0xf0] sm:$0xff]
    %v3119 = vld [vmem:[%s5 + $0xf8] sm:$0xff]
    %v3120 = vld [vmem:[%s5 + $0x100] sm:$0xff]
    %v3121 = vld [vmem:[%s5 + $0x108] sm:$0xff]
    %v3122 = vld [vmem:[%s5 + $0x110] sm:$0xff]
    %v3123 = vld [vmem:[%s5 + $0x118] sm:$0xff]
    %v3124 = vld [vmem:[%s5 + $0x120] sm:$0xff]
    %v3125 = vld [vmem:[%s5 + $0x128] sm:$0xff]
    %v3126 = vld [vmem:[%s5 + $0x130] sm:$0xff]
    %v3127 = vld [vmem:[%s5 + $0x138] sm:$0xff]
    %v3128 = vld [vmem:[%s5 + $0x140] sm:$0xff]
    %v3129 = vld [vmem:[%s5 + $0x148] sm:$0xff]
    %v3130 = vld [vmem:[%s5 + $0x150] sm:$0xff]
    %v3131 = vld [vmem:[%s5 + $0x158] sm:$0xff]
    %v3132 = vld [vmem:[%s5 + $0x160] sm:$0xff]
    %v3133 = vld [vmem:[%s5 + $0x168] sm:$0xff]
    %v3134 = vld [vmem:[%s5 + $0x170] sm:$0xff]
    %v3135 = vld [vmem:[%s5 + $0x178] sm:$0xff]
    %v3136 = vld [vmem:[%s5 + $0x180] sm:$0xff]
    %v3137 = vld [vmem:[%s5 + $0x188] sm:$0xff]
    %v3138 = vld [vmem:[%s5 + $0x190] sm:$0xff]
    %v3139 = vld [vmem:[%s5 + $0x198] sm:$0xff]
    %v3140 = vld [vmem:[%s5 + $0x1a0] sm:$0xff]
    %v3141 = vld [vmem:[%s5 + $0x1a8] sm:$0xff]
    %v3142 = vld [vmem:[%s5 + $0x1b0] sm:$0xff]
    %v3143 = vld [vmem:[%s5 + $0x1b8] sm:$0xff]
    %v3144 = vld [vmem:[%s5 + $0x1c0] sm:$0xff]
    %v3145 = vld [vmem:[%s5 + $0x1c8] sm:$0xff]
    %v3146 = vld [vmem:[%s5 + $0x1d0] sm:$0xff]
    %v3147 = vld [vmem:[%s5 + $0x1d8] sm:$0xff]
    %v3148 = vld [vmem:[%s5 + $0x1e0] sm:$0xff]
    %v3149 = vld [vmem:[%s5 + $0x1e8] sm:$0xff]
    %v3150 = vld [vmem:[%s5 + $0x1f0] sm:$0xff]
    %v3151 = vld [vmem:[%s5 + $0x1f8] sm:$0xff]
    %s3152 = scalar_lea.vmem %s5, 512
    %v3153 = vld [vmem:[%s3152] sm:$0xff]
    %v3154 = vld [vmem:[%s3152 + $0x8] sm:$0xff]
    %v3155 = vld [vmem:[%s3152 + $0x10] sm:$0xff]
    %v3156 = vld [vmem:[%s3152 + $0x18] sm:$0xff]
    %v3157 = vld [vmem:[%s3152 + $0x20] sm:$0xff]
    %v3158 = vld [vmem:[%s3152 + $0x28] sm:$0xff]
    %v3159 = vld [vmem:[%s3152 + $0x30] sm:$0xff]
    %v3160 = vld [vmem:[%s3152 + $0x38] sm:$0xff]
    %v3161 = vld [vmem:[%s3152 + $0x40] sm:$0xff]
    %v3162 = vld [vmem:[%s3152 + $0x48] sm:$0xff]
    %v3163 = vld [vmem:[%s3152 + $0x50] sm:$0xff]
    %v3164 = vld [vmem:[%s3152 + $0x58] sm:$0xff]
    %v3165 = vld [vmem:[%s3152 + $0x60] sm:$0xff]
    %v3166 = vld [vmem:[%s3152 + $0x68] sm:$0xff]
    %v3167 = vld [vmem:[%s3152 + $0x70] sm:$0xff]
    %v3168 = vld [vmem:[%s3152 + $0x78] sm:$0xff]
    %v3169 = vld [vmem:[%s3152 + $0x80] sm:$0xff]
    %v3170 = vld [vmem:[%s3152 + $0x88] sm:$0xff]
    %v3171 = vld [vmem:[%s3152 + $0x90] sm:$0xff]
    %v3172 = vld [vmem:[%s3152 + $0x98] sm:$0xff]
    %v3173 = vld [vmem:[%s3152 + $0xa0] sm:$0xff]
    %v3174 = vld [vmem:[%s3152 + $0xa8] sm:$0xff]
    %v3175 = vld [vmem:[%s3152 + $0xb0] sm:$0xff]
    %v3176 = vld [vmem:[%s3152 + $0xb8] sm:$0xff]
    %v3177 = vld [vmem:[%s3152 + $0xc0] sm:$0xff]
    %v3178 = vld [vmem:[%s3152 + $0xc8] sm:$0xff]
    %v3179 = vld [vmem:[%s3152 + $0xd0] sm:$0xff]
    %v3180 = vld [vmem:[%s3152 + $0xd8] sm:$0xff]
    %v3181 = vld [vmem:[%s3152 + $0xe0] sm:$0xff]
    %v3182 = vld [vmem:[%s3152 + $0xe8] sm:$0xff]
    %v3183 = vld [vmem:[%s3152 + $0xf0] sm:$0xff]
    %v3184 = vld [vmem:[%s3152 + $0xf8] sm:$0xff]
    %v3185 = vld [vmem:[%s3152 + $0x100] sm:$0xff]
    %v3186 = vld [vmem:[%s3152 + $0x108] sm:$0xff]
    %v3187 = vld [vmem:[%s3152 + $0x110] sm:$0xff]
    %v3188 = vld [vmem:[%s3152 + $0x118] sm:$0xff]
    %v3189 = vld [vmem:[%s3152 + $0x120] sm:$0xff]
    %v3190 = vld [vmem:[%s3152 + $0x128] sm:$0xff]
    %v3191 = vld [vmem:[%s3152 + $0x130] sm:$0xff]
    %v3192 = vld [vmem:[%s3152 + $0x138] sm:$0xff]
    %v3193 = vld [vmem:[%s3152 + $0x140] sm:$0xff]
    %v3194 = vld [vmem:[%s3152 + $0x148] sm:$0xff]
    %v3195 = vld [vmem:[%s3152 + $0x150] sm:$0xff]
    %v3196 = vld [vmem:[%s3152 + $0x158] sm:$0xff]
    %v3197 = vld [vmem:[%s3152 + $0x160] sm:$0xff]
    %v3198 = vld [vmem:[%s3152 + $0x168] sm:$0xff]
    %v3199 = vld [vmem:[%s3152 + $0x170] sm:$0xff]
    %v3200 = vld [vmem:[%s3152 + $0x178] sm:$0xff]
    %v3201 = vld [vmem:[%s3152 + $0x180] sm:$0xff]
    %v3202 = vld [vmem:[%s3152 + $0x188] sm:$0xff]
    %v3203 = vld [vmem:[%s3152 + $0x190] sm:$0xff]
    %v3204 = vld [vmem:[%s3152 + $0x198] sm:$0xff]
    %v3205 = vld [vmem:[%s3152 + $0x1a0] sm:$0xff]
    %v3206 = vld [vmem:[%s3152 + $0x1a8] sm:$0xff]
    %v3207 = vld [vmem:[%s3152 + $0x1b0] sm:$0xff]
    %v3208 = vld [vmem:[%s3152 + $0x1b8] sm:$0xff]
    %v3209 = vld [vmem:[%s3152 + $0x1c0] sm:$0xff]
    %v3210 = vld [vmem:[%s3152 + $0x1c8] sm:$0xff]
    %v3211 = vld [vmem:[%s3152 + $0x1d0] sm:$0xff]
    %v3212 = vld [vmem:[%s3152 + $0x1d8] sm:$0xff]
    %v3213 = vld [vmem:[%s3152 + $0x1e0] sm:$0xff]
    %v3214 = vld [vmem:[%s3152 + $0x1e8] sm:$0xff]
    %v3215 = vld [vmem:[%s3152 + $0x1f0] sm:$0xff]
    %v3216 = vld [vmem:[%s3152 + $0x1f8] sm:$0xff]
    %v3225 = vrot.slane %v2942, 1
    %v3226 = vrot.slane %v2943, 1
    %v3227 = vsel %vm320, %v3225, %v3226
    %v3228 = vrot.slane %v2990, 1
    %v3229 = vrot.slane %v2991, 1
    %v3230 = vsel %vm320, %v3228, %v3229
    %v3231 = vrot.slane %v3038, 1
    %v3232 = vrot.slane %v3039, 1
    %v3233 = vsel %vm320, %v3231, %v3232
    %v3234 = vrot.slane %v3086, 1
    %v3235 = vrot.slane %v3087, 1
    %v3236 = vsel %vm320, %v3234, %v3235
    %3245 = vmatpush.msra.mxu0 %v3168
    %3246 = vmatpush.msra.mxu0 %v3167
    %3247 = vmatpush.msra.mxu0 %v3166
    %3248 = vmatpush.msra.mxu0 %v3165
    %3249 = vmatpush.msra.mxu0 %v3164
    %3250 = vmatpush.msra.mxu0 %v3163
    %3251 = vmatpush.msra.mxu0 %v3162
    %3252 = vmatpush.msra.mxu0 %v3161
    %3253 = vmatpush.msra.mxu0 %v3160
    %3254 = vmatpush.msra.mxu0 %v3159
    %3255 = vmatpush.msra.mxu0 %v3158
    %3256 = vmatpush.msra.mxu0 %v3157
    %3257 = vmatpush.msra.mxu0 %v3156
    %3258 = vmatpush.msra.mxu0 %v3155
    %3259 = vmatpush.msra.mxu0 %v3154
    %3260 = vmatpush.msra.mxu0 %v3153
    %3261 = vmatmul.f32.gmra.mxu0 %v3227
    %v3262 = vpop.f32.mrf.mxu0
    %v3263 = vadd.f32 0.0, %v3262
    %3264 = vmatmul.f32.gmra.mxu0 %v3226
    %v3265 = vpop.f32.mrf.mxu0
    %v3266 = vadd.f32 0.0, %v3265
    %3267 = vdwg.mxu0
    %3268 = vmatpush.msra.mxu0 %v3184
    %3269 = vmatpush.msra.mxu0 %v3183
    %3270 = vmatpush.msra.mxu0 %v3182
    %3271 = vmatpush.msra.mxu0 %v3181
    %3272 = vmatpush.msra.mxu0 %v3180
    %3273 = vmatpush.msra.mxu0 %v3179
    %3274 = vmatpush.msra.mxu0 %v3178
    %3275 = vmatpush.msra.mxu0 %v3177
    %3276 = vmatpush.msra.mxu0 %v3176
    %3277 = vmatpush.msra.mxu0 %v3175
    %3278 = vmatpush.msra.mxu0 %v3174
    %3279 = vmatpush.msra.mxu0 %v3173
    %3280 = vmatpush.msra.mxu0 %v3172
    %3281 = vmatpush.msra.mxu0 %v3171
    %3282 = vmatpush.msra.mxu0 %v3170
    %3283 = vmatpush.msra.mxu0 %v3169
    %3284 = vmatmul.f32.gmra.mxu0 %v3230
    %v3285 = vpop.f32.mrf.mxu0
    %v3286 = vadd.f32 %v3263, %v3285
    %3287 = vmatmul.f32.gmra.mxu0 %v3229
    %v3288 = vpop.f32.mrf.mxu0
    %v3289 = vadd.f32 %v3266, %v3288
    %3290 = vdwg.mxu0
    %3291 = vmatpush.msra.mxu0 %v3200
    %3292 = vmatpush.msra.mxu0 %v3199
    %3293 = vmatpush.msra.mxu0 %v3198
    %3294 = vmatpush.msra.mxu0 %v3197
    %3295 = vmatpush.msra.mxu0 %v3196
    %3296 = vmatpush.msra.mxu0 %v3195
    %3297 = vmatpush.msra.mxu0 %v3194
    %3298 = vmatpush.msra.mxu0 %v3193
    %3299 = vmatpush.msra.mxu0 %v3192
    %3300 = vmatpush.msra.mxu0 %v3191
    %3301 = vmatpush.msra.mxu0 %v3190
    %3302 = vmatpush.msra.mxu0 %v3189
    %3303 = vmatpush.msra.mxu0 %v3188
    %3304 = vmatpush.msra.mxu0 %v3187
    %3305 = vmatpush.msra.mxu0 %v3186
    %3306 = vmatpush.msra.mxu0 %v3185
    %3307 = vmatmul.f32.gmra.mxu0 %v3233
    %v3308 = vpop.f32.mrf.mxu0
    %v3309 = vadd.f32 %v3286, %v3308
    %3310 = vmatmul.f32.gmra.mxu0 %v3232
    %v3311 = vpop.f32.mrf.mxu0
    %v3312 = vadd.f32 %v3289, %v3311
    %3313 = vdwg.mxu0
    %3314 = vmatpush.msra.mxu0 %v3216
    %3315 = vmatpush.msra.mxu0 %v3215
    %3316 = vmatpush.msra.mxu0 %v3214
    %3317 = vmatpush.msra.mxu0 %v3213
    %3318 = vmatpush.msra.mxu0 %v3212
    %3319 = vmatpush.msra.mxu0 %v3211
    %3320 = vmatpush.msra.mxu0 %v3210
    %3321 = vmatpush.msra.mxu0 %v3209
    %3322 = vmatpush.msra.mxu0 %v3208
    %3323 = vmatpush.msra.mxu0 %v3207
    %3324 = vmatpush.msra.mxu0 %v3206
    %3325 = vmatpush.msra.mxu0 %v3205
    %3326 = vmatpush.msra.mxu0 %v3204
    %3327 = vmatpush.msra.mxu0 %v3203
    %3328 = vmatpush.msra.mxu0 %v3202
    %3329 = vmatpush.msra.mxu0 %v3201
    %3330 = vmatmul.f32.gmra.mxu0 %v3236
    %v3331 = vpop.f32.mrf.mxu0
    %v3332 = vadd.f32 %v3309, %v3331
    %3333 = vmatmul.f32.gmra.mxu0 %v3235
    %v3334 = vpop.f32.mrf.mxu0
    %v3335 = vadd.f32 %v3312, %v3334
    %3336 = vdwg.mxu0
    %3337 = vmatpush.msra.mxu0 %v3103
    %3338 = vmatpush.msra.mxu0 %v3102
    %3339 = vmatpush.msra.mxu0 %v3101
    %3340 = vmatpush.msra.mxu0 %v3100
    %3341 = vmatpush.msra.mxu0 %v3099
    %3342 = vmatpush.msra.mxu0 %v3098
    %3343 = vmatpush.msra.mxu0 %v3097
    %3344 = vmatpush.msra.mxu0 %v3096
    %3345 = vmatpush.msra.mxu0 %v3095
    %3346 = vmatpush.msra.mxu0 %v3094
    %3347 = vmatpush.msra.mxu0 %v3093
    %3348 = vmatpush.msra.mxu0 %v3092
    %3349 = vmatpush.msra.mxu0 %v3091
    %3350 = vmatpush.msra.mxu0 %v3090
    %3351 = vmatpush.msra.mxu0 %v3089
    %3352 = vmatpush.msra.mxu0 %v3088
    %3353 = vmatmul.f32.gmra.mxu0 %v2942
    %v3354 = vpop.f32.mrf.mxu0
    %v3355 = vadd.f32 %v3332, %v3354
    %3356 = vmatmul.f32.gmra.mxu0 %v2943
    %v3357 = vpop.f32.mrf.mxu0
    %v3358 = vadd.f32 %v3335, %v3357
    %3359 = vdwg.mxu0
    %3360 = vmatpush.msra.mxu0 %v3119
    %3361 = vmatpush.msra.mxu0 %v3118
    %3362 = vmatpush.msra.mxu0 %v3117
    %3363 = vmatpush.msra.mxu0 %v3116
    %3364 = vmatpush.msra.mxu0 %v3115
    %3365 = vmatpush.msra.mxu0 %v3114
    %3366 = vmatpush.msra.mxu0 %v3113
    %3367 = vmatpush.msra.mxu0 %v3112
    %3368 = vmatpush.msra.mxu0 %v3111
    %3369 = vmatpush.msra.mxu0 %v3110
    %3370 = vmatpush.msra.mxu0 %v3109
    %3371 = vmatpush.msra.mxu0 %v3108
    %3372 = vmatpush.msra.mxu0 %v3107
    %3373 = vmatpush.msra.mxu0 %v3106
    %3374 = vmatpush.msra.mxu0 %v3105
    %3375 = vmatpush.msra.mxu0 %v3104
    %3376 = vmatmul.f32.gmra.mxu0 %v2990
    %v3377 = vpop.f32.mrf.mxu0
    %v3378 = vadd.f32 %v3355, %v3377
    %3379 = vmatmul.f32.gmra.mxu0 %v2991
    %v3380 = vpop.f32.mrf.mxu0
    %v3381 = vadd.f32 %v3358, %v3380
    %3382 = vdwg.mxu0
    %3383 = vmatpush.msra.mxu0 %v3135
    %3384 = vmatpush.msra.mxu0 %v3134
    %3385 = vmatpush.msra.mxu0 %v3133
    %3386 = vmatpush.msra.mxu0 %v3132
    %3387 = vmatpush.msra.mxu0 %v3131
    %3388 = vmatpush.msra.mxu0 %v3130
    %3389 = vmatpush.msra.mxu0 %v3129
    %3390 = vmatpush.msra.mxu0 %v3128
    %3391 = vmatpush.msra.mxu0 %v3127
    %3392 = vmatpush.msra.mxu0 %v3126
    %3393 = vmatpush.msra.mxu0 %v3125
    %3394 = vmatpush.msra.mxu0 %v3124
    %3395 = vmatpush.msra.mxu0 %v3123
    %3396 = vmatpush.msra.mxu0 %v3122
    %3397 = vmatpush.msra.mxu0 %v3121
    %3398 = vmatpush.msra.mxu0 %v3120
    %3399 = vmatmul.f32.gmra.mxu0 %v3038
    %v3400 = vpop.f32.mrf.mxu0
    %v3401 = vadd.f32 %v3378, %v3400
    %3402 = vmatmul.f32.gmra.mxu0 %v3039
    %v3403 = vpop.f32.mrf.mxu0
    %v3404 = vadd.f32 %v3381, %v3403
    %3405 = vdwg.mxu0
    %3406 = vmatpush.msra.mxu0 %v3151
    %3407 = vmatpush.msra.mxu0 %v3150
    %3408 = vmatpush.msra.mxu0 %v3149
    %3409 = vmatpush.msra.mxu0 %v3148
    %3410 = vmatpush.msra.mxu0 %v3147
    %3411 = vmatpush.msra.mxu0 %v3146
    %3412 = vmatpush.msra.mxu0 %v3145
    %3413 = vmatpush.msra.mxu0 %v3144
    %3414 = vmatpush.msra.mxu0 %v3143
    %3415 = vmatpush.msra.mxu0 %v3142
    %3416 = vmatpush.msra.mxu0 %v3141
    %3417 = vmatpush.msra.mxu0 %v3140
    %3418 = vmatpush.msra.mxu0 %v3139
    %3419 = vmatpush.msra.mxu0 %v3138
    %3420 = vmatpush.msra.mxu0 %v3137
    %3421 = vmatpush.msra.mxu0 %v3136
    %3422 = vmatmul.f32.gmra.mxu0 %v3086
    %v3423 = vpop.f32.mrf.mxu0
    %v3424 = vadd.f32 %v3401, %v3423
    %3425 = vmatmul.f32.gmra.mxu0 %v3087
    %v3426 = vpop.f32.mrf.mxu0
    %v3427 = vadd.f32 %v3404, %v3426
    %3428 = vdwg.mxu0
    %s3429 = scalar_lea.vmem %s5, 1024
    %v3430 = vld [vmem:[%s3429] sm:$0xff]
    %v3431 = vld [vmem:[%s3429 + $0x8] sm:$0xff]
    %v3432 = vld [vmem:[%s3429 + $0x10] sm:$0xff]
    %v3433 = vld [vmem:[%s3429 + $0x18] sm:$0xff]
    %v3434 = vld [vmem:[%s3429 + $0x20] sm:$0xff]
    %v3435 = vld [vmem:[%s3429 + $0x28] sm:$0xff]
    %v3436 = vld [vmem:[%s3429 + $0x30] sm:$0xff]
    %v3437 = vld [vmem:[%s3429 + $0x38] sm:$0xff]
    %v3438 = vld [vmem:[%s3429 + $0x40] sm:$0xff]
    %v3439 = vld [vmem:[%s3429 + $0x48] sm:$0xff]
    %v3440 = vld [vmem:[%s3429 + $0x50] sm:$0xff]
    %v3441 = vld [vmem:[%s3429 + $0x58] sm:$0xff]
    %v3442 = vld [vmem:[%s3429 + $0x60] sm:$0xff]
    %v3443 = vld [vmem:[%s3429 + $0x68] sm:$0xff]
    %v3444 = vld [vmem:[%s3429 + $0x70] sm:$0xff]
    %v3445 = vld [vmem:[%s3429 + $0x78] sm:$0xff]
    %v3446 = vld [vmem:[%s3429 + $0x80] sm:$0xff]
    %v3447 = vld [vmem:[%s3429 + $0x88] sm:$0xff]
    %v3448 = vld [vmem:[%s3429 + $0x90] sm:$0xff]
    %v3449 = vld [vmem:[%s3429 + $0x98] sm:$0xff]
    %v3450 = vld [vmem:[%s3429 + $0xa0] sm:$0xff]
    %v3451 = vld [vmem:[%s3429 + $0xa8] sm:$0xff]
    %v3452 = vld [vmem:[%s3429 + $0xb0] sm:$0xff]
    %v3453 = vld [vmem:[%s3429 + $0xb8] sm:$0xff]
    %v3454 = vld [vmem:[%s3429 + $0xc0] sm:$0xff]
    %v3455 = vld [vmem:[%s3429 + $0xc8] sm:$0xff]
    %v3456 = vld [vmem:[%s3429 + $0xd0] sm:$0xff]
    %v3457 = vld [vmem:[%s3429 + $0xd8] sm:$0xff]
    %v3458 = vld [vmem:[%s3429 + $0xe0] sm:$0xff]
    %v3459 = vld [vmem:[%s3429 + $0xe8] sm:$0xff]
    %v3460 = vld [vmem:[%s3429 + $0xf0] sm:$0xff]
    %v3461 = vld [vmem:[%s3429 + $0xf8] sm:$0xff]
    %v3462 = vld [vmem:[%s3429 + $0x100] sm:$0xff]
    %v3463 = vld [vmem:[%s3429 + $0x108] sm:$0xff]
    %v3464 = vld [vmem:[%s3429 + $0x110] sm:$0xff]
    %v3465 = vld [vmem:[%s3429 + $0x118] sm:$0xff]
    %v3466 = vld [vmem:[%s3429 + $0x120] sm:$0xff]
    %v3467 = vld [vmem:[%s3429 + $0x128] sm:$0xff]
    %v3468 = vld [vmem:[%s3429 + $0x130] sm:$0xff]
    %v3469 = vld [vmem:[%s3429 + $0x138] sm:$0xff]
    %v3470 = vld [vmem:[%s3429 + $0x140] sm:$0xff]
    %v3471 = vld [vmem:[%s3429 + $0x148] sm:$0xff]
    %v3472 = vld [vmem:[%s3429 + $0x150] sm:$0xff]
    %v3473 = vld [vmem:[%s3429 + $0x158] sm:$0xff]
    %v3474 = vld [vmem:[%s3429 + $0x160] sm:$0xff]
    %v3475 = vld [vmem:[%s3429 + $0x168] sm:$0xff]
    %v3476 = vld [vmem:[%s3429 + $0x170] sm:$0xff]
    %v3477 = vld [vmem:[%s3429 + $0x178] sm:$0xff]
    %v3478 = vld [vmem:[%s3429 + $0x180] sm:$0xff]
    %v3479 = vld [vmem:[%s3429 + $0x188] sm:$0xff]
    %v3480 = vld [vmem:[%s3429 + $0x190] sm:$0xff]
    %v3481 = vld [vmem:[%s3429 + $0x198] sm:$0xff]
    %v3482 = vld [vmem:[%s3429 + $0x1a0] sm:$0xff]
    %v3483 = vld [vmem:[%s3429 + $0x1a8] sm:$0xff]
    %v3484 = vld [vmem:[%s3429 + $0x1b0] sm:$0xff]
    %v3485 = vld [vmem:[%s3429 + $0x1b8] sm:$0xff]
    %v3486 = vld [vmem:[%s3429 + $0x1c0] sm:$0xff]
    %v3487 = vld [vmem:[%s3429 + $0x1c8] sm:$0xff]
    %v3488 = vld [vmem:[%s3429 + $0x1d0] sm:$0xff]
    %v3489 = vld [vmem:[%s3429 + $0x1d8] sm:$0xff]
    %v3490 = vld [vmem:[%s3429 + $0x1e0] sm:$0xff]
    %v3491 = vld [vmem:[%s3429 + $0x1e8] sm:$0xff]
    %v3492 = vld [vmem:[%s3429 + $0x1f0] sm:$0xff]
    %v3493 = vld [vmem:[%s3429 + $0x1f8] sm:$0xff]
    %v3494 = vrot.slane %v2942, 2
    %v3495 = vrot.slane %v2943, 2
    %v3496 = vsel %vm800, %v3494, %v3495
    %v3497 = vrot.slane %v2990, 2
    %v3498 = vrot.slane %v2991, 2
    %v3499 = vsel %vm800, %v3497, %v3498
    %v3500 = vrot.slane %v3038, 2
    %v3501 = vrot.slane %v3039, 2
    %v3502 = vsel %vm800, %v3500, %v3501
    %v3503 = vrot.slane %v3086, 2
    %v3504 = vrot.slane %v3087, 2
    %v3505 = vsel %vm800, %v3503, %v3504
    %3514 = vmatpush.msra.mxu0 %v3445
    %3515 = vmatpush.msra.mxu0 %v3444
    %3516 = vmatpush.msra.mxu0 %v3443
    %3517 = vmatpush.msra.mxu0 %v3442
    %3518 = vmatpush.msra.mxu0 %v3441
    %3519 = vmatpush.msra.mxu0 %v3440
    %3520 = vmatpush.msra.mxu0 %v3439
    %3521 = vmatpush.msra.mxu0 %v3438
    %3522 = vmatpush.msra.mxu0 %v3437
    %3523 = vmatpush.msra.mxu0 %v3436
    %3524 = vmatpush.msra.mxu0 %v3435
    %3525 = vmatpush.msra.mxu0 %v3434
    %3526 = vmatpush.msra.mxu0 %v3433
    %3527 = vmatpush.msra.mxu0 %v3432
    %3528 = vmatpush.msra.mxu0 %v3431
    %3529 = vmatpush.msra.mxu0 %v3430
    %3530 = vmatmul.f32.gmra.mxu0 %v3496
    %v3531 = vpop.f32.mrf.mxu0
    %v3532 = vadd.f32 0.0, %v3531
    %3533 = vmatmul.f32.gmra.mxu0 %v3495
    %v3534 = vpop.f32.mrf.mxu0
    %v3535 = vadd.f32 0.0, %v3534
    %3536 = vdwg.mxu0
    %3537 = vmatpush.msra.mxu0 %v3461
    %3538 = vmatpush.msra.mxu0 %v3460
    %3539 = vmatpush.msra.mxu0 %v3459
    %3540 = vmatpush.msra.mxu0 %v3458
    %3541 = vmatpush.msra.mxu0 %v3457
    %3542 = vmatpush.msra.mxu0 %v3456
    %3543 = vmatpush.msra.mxu0 %v3455
    %3544 = vmatpush.msra.mxu0 %v3454
    %3545 = vmatpush.msra.mxu0 %v3453
    %3546 = vmatpush.msra.mxu0 %v3452
    %3547 = vmatpush.msra.mxu0 %v3451
    %3548 = vmatpush.msra.mxu0 %v3450
    %3549 = vmatpush.msra.mxu0 %v3449
    %3550 = vmatpush.msra.mxu0 %v3448
    %3551 = vmatpush.msra.mxu0 %v3447
    %3552 = vmatpush.msra.mxu0 %v3446
    %3553 = vmatmul.f32.gmra.mxu0 %v3499
    %v3554 = vpop.f32.mrf.mxu0
    %v3555 = vadd.f32 %v3532, %v3554
    %3556 = vmatmul.f32.gmra.mxu0 %v3498
    %v3557 = vpop.f32.mrf.mxu0
    %v3558 = vadd.f32 %v3535, %v3557
    %3559 = vdwg.mxu0
    %3560 = vmatpush.msra.mxu0 %v3477
    %3561 = vmatpush.msra.mxu0 %v3476
    %3562 = vmatpush.msra.mxu0 %v3475
    %3563 = vmatpush.msra.mxu0 %v3474
    %3564 = vmatpush.msra.mxu0 %v3473
    %3565 = vmatpush.msra.mxu0 %v3472
    %3566 = vmatpush.msra.mxu0 %v3471
    %3567 = vmatpush.msra.mxu0 %v3470
    %3568 = vmatpush.msra.mxu0 %v3469
    %3569 = vmatpush.msra.mxu0 %v3468
    %3570 = vmatpush.msra.mxu0 %v3467
    %3571 = vmatpush.msra.mxu0 %v3466
    %3572 = vmatpush.msra.mxu0 %v3465
    %3573 = vmatpush.msra.mxu0 %v3464
    %3574 = vmatpush.msra.mxu0 %v3463
    %3575 = vmatpush.msra.mxu0 %v3462
    %3576 = vmatmul.f32.gmra.mxu0 %v3502
    %v3577 = vpop.f32.mrf.mxu0
    %v3578 = vadd.f32 %v3555, %v3577
    %3579 = vmatmul.f32.gmra.mxu0 %v3501
    %v3580 = vpop.f32.mrf.mxu0
    %v3581 = vadd.f32 %v3558, %v3580
    %3582 = vdwg.mxu0
    %3583 = vmatpush.msra.mxu0 %v3493
    %3584 = vmatpush.msra.mxu0 %v3492
    %3585 = vmatpush.msra.mxu0 %v3491
    %3586 = vmatpush.msra.mxu0 %v3490
    %3587 = vmatpush.msra.mxu0 %v3489
    %3588 = vmatpush.msra.mxu0 %v3488
    %3589 = vmatpush.msra.mxu0 %v3487
    %3590 = vmatpush.msra.mxu0 %v3486
    %3591 = vmatpush.msra.mxu0 %v3485
    %3592 = vmatpush.msra.mxu0 %v3484
    %3593 = vmatpush.msra.mxu0 %v3483
    %3594 = vmatpush.msra.mxu0 %v3482
    %3595 = vmatpush.msra.mxu0 %v3481
    %3596 = vmatpush.msra.mxu0 %v3480
    %3597 = vmatpush.msra.mxu0 %v3479
    %3598 = vmatpush.msra.mxu0 %v3478
    %3599 = vmatmul.f32.gmra.mxu0 %v3505
    %v3600 = vpop.f32.mrf.mxu0
    %v3601 = vadd.f32 %v3578, %v3600
    %3602 = vmatmul.f32.gmra.mxu0 %v3504
    %v3603 = vpop.f32.mrf.mxu0
    %v3604 = vadd.f32 %v3581, %v3603
    %3605 = vdwg.mxu0
    %v3606 = vadd.f32 %v3424, %v3601
    %v3607 = vadd.f32 %v3427, %v3604
    %s3608 = scalar_lea.vmem %s5, 1536
    %v3609 = vld [vmem:[%s3608] sm:$0xff]
    %v3610 = vld [vmem:[%s3608 + $0x8] sm:$0xff]
    %v3611 = vld [vmem:[%s3608 + $0x10] sm:$0xff]
    %v3612 = vld [vmem:[%s3608 + $0x18] sm:$0xff]
    %v3613 = vld [vmem:[%s3608 + $0x20] sm:$0xff]
    %v3614 = vld [vmem:[%s3608 + $0x28] sm:$0xff]
    %v3615 = vld [vmem:[%s3608 + $0x30] sm:$0xff]
    %v3616 = vld [vmem:[%s3608 + $0x38] sm:$0xff]
    %v3617 = vld [vmem:[%s3608 + $0x40] sm:$0xff]
    %v3618 = vld [vmem:[%s3608 + $0x48] sm:$0xff]
    %v3619 = vld [vmem:[%s3608 + $0x50] sm:$0xff]
    %v3620 = vld [vmem:[%s3608 + $0x58] sm:$0xff]
    %v3621 = vld [vmem:[%s3608 + $0x60] sm:$0xff]
    %v3622 = vld [vmem:[%s3608 + $0x68] sm:$0xff]
    %v3623 = vld [vmem:[%s3608 + $0x70] sm:$0xff]
    %v3624 = vld [vmem:[%s3608 + $0x78] sm:$0xff]
    %v3625 = vld [vmem:[%s3608 + $0x80] sm:$0xff]
    %v3626 = vld [vmem:[%s3608 + $0x88] sm:$0xff]
    %v3627 = vld [vmem:[%s3608 + $0x90] sm:$0xff]
    %v3628 = vld [vmem:[%s3608 + $0x98] sm:$0xff]
    %v3629 = vld [vmem:[%s3608 + $0xa0] sm:$0xff]
    %v3630 = vld [vmem:[%s3608 + $0xa8] sm:$0xff]
    %v3631 = vld [vmem:[%s3608 + $0xb0] sm:$0xff]
    %v3632 = vld [vmem:[%s3608 + $0xb8] sm:$0xff]
    %v3633 = vld [vmem:[%s3608 + $0xc0] sm:$0xff]
    %v3634 = vld [vmem:[%s3608 + $0xc8] sm:$0xff]
    %v3635 = vld [vmem:[%s3608 + $0xd0] sm:$0xff]
    %v3636 = vld [vmem:[%s3608 + $0xd8] sm:$0xff]
    %v3637 = vld [vmem:[%s3608 + $0xe0] sm:$0xff]
    %v3638 = vld [vmem:[%s3608 + $0xe8] sm:$0xff]
    %v3639 = vld [vmem:[%s3608 + $0xf0] sm:$0xff]
    %v3640 = vld [vmem:[%s3608 + $0xf8] sm:$0xff]
    %v3641 = vld [vmem:[%s3608 + $0x100] sm:$0xff]
    %v3642 = vld [vmem:[%s3608 + $0x108] sm:$0xff]
    %v3643 = vld [vmem:[%s3608 + $0x110] sm:$0xff]
    %v3644 = vld [vmem:[%s3608 + $0x118] sm:$0xff]
    %v3645 = vld [vmem:[%s3608 + $0x120] sm:$0xff]
    %v3646 = vld [vmem:[%s3608 + $0x128] sm:$0xff]
    %v3647 = vld [vmem:[%s3608 + $0x130] sm:$0xff]
    %v3648 = vld [vmem:[%s3608 + $0x138] sm:$0xff]
    %v3649 = vld [vmem:[%s3608 + $0x140] sm:$0xff]
    %v3650 = vld [vmem:[%s3608 + $0x148] sm:$0xff]
    %v3651 = vld [vmem:[%s3608 + $0x150] sm:$0xff]
    %v3652 = vld [vmem:[%s3608 + $0x158] sm:$0xff]
    %v3653 = vld [vmem:[%s3608 + $0x160] sm:$0xff]
    %v3654 = vld [vmem:[%s3608 + $0x168] sm:$0xff]
    %v3655 = vld [vmem:[%s3608 + $0x170] sm:$0xff]
    %v3656 = vld [vmem:[%s3608 + $0x178] sm:$0xff]
    %v3657 = vld [vmem:[%s3608 + $0x180] sm:$0xff]
    %v3658 = vld [vmem:[%s3608 + $0x188] sm:$0xff]
    %v3659 = vld [vmem:[%s3608 + $0x190] sm:$0xff]
    %v3660 = vld [vmem:[%s3608 + $0x198] sm:$0xff]
    %v3661 = vld [vmem:[%s3608 + $0x1a0] sm:$0xff]
    %v3662 = vld [vmem:[%s3608 + $0x1a8] sm:$0xff]
    %v3663 = vld [vmem:[%s3608 + $0x1b0] sm:$0xff]
    %v3664 = vld [vmem:[%s3608 + $0x1b8] sm:$0xff]
    %v3665 = vld [vmem:[%s3608 + $0x1c0] sm:$0xff]
    %v3666 = vld [vmem:[%s3608 + $0x1c8] sm:$0xff]
    %v3667 = vld [vmem:[%s3608 + $0x1d0] sm:$0xff]
    %v3668 = vld [vmem:[%s3608 + $0x1d8] sm:$0xff]
    %v3669 = vld [vmem:[%s3608 + $0x1e0] sm:$0xff]
    %v3670 = vld [vmem:[%s3608 + $0x1e8] sm:$0xff]
    %v3671 = vld [vmem:[%s3608 + $0x1f0] sm:$0xff]
    %v3672 = vld [vmem:[%s3608 + $0x1f8] sm:$0xff]
    %v3673 = vrot.slane %v2942, 3
    %v3674 = vrot.slane %v2943, 3
    %v3675 = vsel %vm1107, %v3673, %v3674
    %v3676 = vrot.slane %v2990, 3
    %v3677 = vrot.slane %v2991, 3
    %v3678 = vsel %vm1107, %v3676, %v3677
    %v3679 = vrot.slane %v3038, 3
    %v3680 = vrot.slane %v3039, 3
    %v3681 = vsel %vm1107, %v3679, %v3680
    %v3682 = vrot.slane %v3086, 3
    %v3683 = vrot.slane %v3087, 3
    %v3684 = vsel %vm1107, %v3682, %v3683
    %3693 = vmatpush.msra.mxu0 %v3624
    %3694 = vmatpush.msra.mxu0 %v3623
    %3695 = vmatpush.msra.mxu0 %v3622
    %3696 = vmatpush.msra.mxu0 %v3621
    %3697 = vmatpush.msra.mxu0 %v3620
    %3698 = vmatpush.msra.mxu0 %v3619
    %3699 = vmatpush.msra.mxu0 %v3618
    %3700 = vmatpush.msra.mxu0 %v3617
    %3701 = vmatpush.msra.mxu0 %v3616
    %3702 = vmatpush.msra.mxu0 %v3615
    %3703 = vmatpush.msra.mxu0 %v3614
    %3704 = vmatpush.msra.mxu0 %v3613
    %3705 = vmatpush.msra.mxu0 %v3612
    %3706 = vmatpush.msra.mxu0 %v3611
    %3707 = vmatpush.msra.mxu0 %v3610
    %3708 = vmatpush.msra.mxu0 %v3609
    %3709 = vmatmul.f32.gmra.mxu0 %v3675
    %v3710 = vpop.f32.mrf.mxu0
    %v3711 = vadd.f32 0.0, %v3710
    %3712 = vmatmul.f32.gmra.mxu0 %v3674
    %v3713 = vpop.f32.mrf.mxu0
    %v3714 = vadd.f32 0.0, %v3713
    %3715 = vdwg.mxu0
    %3716 = vmatpush.msra.mxu0 %v3640
    %3717 = vmatpush.msra.mxu0 %v3639
    %3718 = vmatpush.msra.mxu0 %v3638
    %3719 = vmatpush.msra.mxu0 %v3637
    %3720 = vmatpush.msra.mxu0 %v3636
    %3721 = vmatpush.msra.mxu0 %v3635
    %3722 = vmatpush.msra.mxu0 %v3634
    %3723 = vmatpush.msra.mxu0 %v3633
    %3724 = vmatpush.msra.mxu0 %v3632
    %3725 = vmatpush.msra.mxu0 %v3631
    %3726 = vmatpush.msra.mxu0 %v3630
    %3727 = vmatpush.msra.mxu0 %v3629
    %3728 = vmatpush.msra.mxu0 %v3628
    %3729 = vmatpush.msra.mxu0 %v3627
    %3730 = vmatpush.msra.mxu0 %v3626
    %3731 = vmatpush.msra.mxu0 %v3625
    %3732 = vmatmul.f32.gmra.mxu0 %v3678
    %v3733 = vpop.f32.mrf.mxu0
    %v3734 = vadd.f32 %v3711, %v3733
    %3735 = vmatmul.f32.gmra.mxu0 %v3677
    %v3736 = vpop.f32.mrf.mxu0
    %v3737 = vadd.f32 %v3714, %v3736
    %3738 = vdwg.mxu0
    %3739 = vmatpush.msra.mxu0 %v3656
    %3740 = vmatpush.msra.mxu0 %v3655
    %3741 = vmatpush.msra.mxu0 %v3654
    %3742 = vmatpush.msra.mxu0 %v3653
    %3743 = vmatpush.msra.mxu0 %v3652
    %3744 = vmatpush.msra.mxu0 %v3651
    %3745 = vmatpush.msra.mxu0 %v3650
    %3746 = vmatpush.msra.mxu0 %v3649
    %3747 = vmatpush.msra.mxu0 %v3648
    %3748 = vmatpush.msra.mxu0 %v3647
    %3749 = vmatpush.msra.mxu0 %v3646
    %3750 = vmatpush.msra.mxu0 %v3645
    %3751 = vmatpush.msra.mxu0 %v3644
    %3752 = vmatpush.msra.mxu0 %v3643
    %3753 = vmatpush.msra.mxu0 %v3642
    %3754 = vmatpush.msra.mxu0 %v3641
    %3755 = vmatmul.f32.gmra.mxu0 %v3681
    %v3756 = vpop.f32.mrf.mxu0
    %v3757 = vadd.f32 %v3734, %v3756
    %3758 = vmatmul.f32.gmra.mxu0 %v3680
    %v3759 = vpop.f32.mrf.mxu0
    %v3760 = vadd.f32 %v3737, %v3759
    %3761 = vdwg.mxu0
    %3762 = vmatpush.msra.mxu0 %v3672
    %3763 = vmatpush.msra.mxu0 %v3671
    %3764 = vmatpush.msra.mxu0 %v3670
    %3765 = vmatpush.msra.mxu0 %v3669
    %3766 = vmatpush.msra.mxu0 %v3668
    %3767 = vmatpush.msra.mxu0 %v3667
    %3768 = vmatpush.msra.mxu0 %v3666
    %3769 = vmatpush.msra.mxu0 %v3665
    %3770 = vmatpush.msra.mxu0 %v3664
    %3771 = vmatpush.msra.mxu0 %v3663
    %3772 = vmatpush.msra.mxu0 %v3662
    %3773 = vmatpush.msra.mxu0 %v3661
    %3774 = vmatpush.msra.mxu0 %v3660
    %3775 = vmatpush.msra.mxu0 %v3659
    %3776 = vmatpush.msra.mxu0 %v3658
    %3777 = vmatpush.msra.mxu0 %v3657
    %3778 = vmatmul.f32.gmra.mxu0 %v3684
    %v3779 = vpop.f32.mrf.mxu0
    %v3780 = vadd.f32 %v3757, %v3779
    %3781 = vmatmul.f32.gmra.mxu0 %v3683
    %v3782 = vpop.f32.mrf.mxu0
    %v3783 = vadd.f32 %v3760, %v3782
    %3784 = vdwg.mxu0
    %v3785 = vadd.f32 %v3606, %v3780
    %v3786 = vadd.f32 %v3607, %v3783
    %s3787 = scalar_lea.vmem %s5, 2048
    %v3788 = vld [vmem:[%s3787] sm:$0xff]
    %v3789 = vld [vmem:[%s3787 + $0x8] sm:$0xff]
    %v3790 = vld [vmem:[%s3787 + $0x10] sm:$0xff]
    %v3791 = vld [vmem:[%s3787 + $0x18] sm:$0xff]
    %v3792 = vld [vmem:[%s3787 + $0x20] sm:$0xff]
    %v3793 = vld [vmem:[%s3787 + $0x28] sm:$0xff]
    %v3794 = vld [vmem:[%s3787 + $0x30] sm:$0xff]
    %v3795 = vld [vmem:[%s3787 + $0x38] sm:$0xff]
    %v3796 = vld [vmem:[%s3787 + $0x40] sm:$0xff]
    %v3797 = vld [vmem:[%s3787 + $0x48] sm:$0xff]
    %v3798 = vld [vmem:[%s3787 + $0x50] sm:$0xff]
    %v3799 = vld [vmem:[%s3787 + $0x58] sm:$0xff]
    %v3800 = vld [vmem:[%s3787 + $0x60] sm:$0xff]
    %v3801 = vld [vmem:[%s3787 + $0x68] sm:$0xff]
    %v3802 = vld [vmem:[%s3787 + $0x70] sm:$0xff]
    %v3803 = vld [vmem:[%s3787 + $0x78] sm:$0xff]
    %v3804 = vld [vmem:[%s3787 + $0x80] sm:$0xff]
    %v3805 = vld [vmem:[%s3787 + $0x88] sm:$0xff]
    %v3806 = vld [vmem:[%s3787 + $0x90] sm:$0xff]
    %v3807 = vld [vmem:[%s3787 + $0x98] sm:$0xff]
    %v3808 = vld [vmem:[%s3787 + $0xa0] sm:$0xff]
    %v3809 = vld [vmem:[%s3787 + $0xa8] sm:$0xff]
    %v3810 = vld [vmem:[%s3787 + $0xb0] sm:$0xff]
    %v3811 = vld [vmem:[%s3787 + $0xb8] sm:$0xff]
    %v3812 = vld [vmem:[%s3787 + $0xc0] sm:$0xff]
    %v3813 = vld [vmem:[%s3787 + $0xc8] sm:$0xff]
    %v3814 = vld [vmem:[%s3787 + $0xd0] sm:$0xff]
    %v3815 = vld [vmem:[%s3787 + $0xd8] sm:$0xff]
    %v3816 = vld [vmem:[%s3787 + $0xe0] sm:$0xff]
    %v3817 = vld [vmem:[%s3787 + $0xe8] sm:$0xff]
    %v3818 = vld [vmem:[%s3787 + $0xf0] sm:$0xff]
    %v3819 = vld [vmem:[%s3787 + $0xf8] sm:$0xff]
    %v3820 = vld [vmem:[%s3787 + $0x100] sm:$0xff]
    %v3821 = vld [vmem:[%s3787 + $0x108] sm:$0xff]
    %v3822 = vld [vmem:[%s3787 + $0x110] sm:$0xff]
    %v3823 = vld [vmem:[%s3787 + $0x118] sm:$0xff]
    %v3824 = vld [vmem:[%s3787 + $0x120] sm:$0xff]
    %v3825 = vld [vmem:[%s3787 + $0x128] sm:$0xff]
    %v3826 = vld [vmem:[%s3787 + $0x130] sm:$0xff]
    %v3827 = vld [vmem:[%s3787 + $0x138] sm:$0xff]
    %v3828 = vld [vmem:[%s3787 + $0x140] sm:$0xff]
    %v3829 = vld [vmem:[%s3787 + $0x148] sm:$0xff]
    %v3830 = vld [vmem:[%s3787 + $0x150] sm:$0xff]
    %v3831 = vld [vmem:[%s3787 + $0x158] sm:$0xff]
    %v3832 = vld [vmem:[%s3787 + $0x160] sm:$0xff]
    %v3833 = vld [vmem:[%s3787 + $0x168] sm:$0xff]
    %v3834 = vld [vmem:[%s3787 + $0x170] sm:$0xff]
    %v3835 = vld [vmem:[%s3787 + $0x178] sm:$0xff]
    %v3836 = vld [vmem:[%s3787 + $0x180] sm:$0xff]
    %v3837 = vld [vmem:[%s3787 + $0x188] sm:$0xff]
    %v3838 = vld [vmem:[%s3787 + $0x190] sm:$0xff]
    %v3839 = vld [vmem:[%s3787 + $0x198] sm:$0xff]
    %v3840 = vld [vmem:[%s3787 + $0x1a0] sm:$0xff]
    %v3841 = vld [vmem:[%s3787 + $0x1a8] sm:$0xff]
    %v3842 = vld [vmem:[%s3787 + $0x1b0] sm:$0xff]
    %v3843 = vld [vmem:[%s3787 + $0x1b8] sm:$0xff]
    %v3844 = vld [vmem:[%s3787 + $0x1c0] sm:$0xff]
    %v3845 = vld [vmem:[%s3787 + $0x1c8] sm:$0xff]
    %v3846 = vld [vmem:[%s3787 + $0x1d0] sm:$0xff]
    %v3847 = vld [vmem:[%s3787 + $0x1d8] sm:$0xff]
    %v3848 = vld [vmem:[%s3787 + $0x1e0] sm:$0xff]
    %v3849 = vld [vmem:[%s3787 + $0x1e8] sm:$0xff]
    %v3850 = vld [vmem:[%s3787 + $0x1f0] sm:$0xff]
    %v3851 = vld [vmem:[%s3787 + $0x1f8] sm:$0xff]
    %v3852 = vrot.slane %v2942, 4
    %v3853 = vrot.slane %v2943, 4
    %v3854 = vsel %vm1414, %v3852, %v3853
    %v3855 = vrot.slane %v2990, 4
    %v3856 = vrot.slane %v2991, 4
    %v3857 = vsel %vm1414, %v3855, %v3856
    %v3858 = vrot.slane %v3038, 4
    %v3859 = vrot.slane %v3039, 4
    %v3860 = vsel %vm1414, %v3858, %v3859
    %v3861 = vrot.slane %v3086, 4
    %v3862 = vrot.slane %v3087, 4
    %v3863 = vsel %vm1414, %v3861, %v3862
    %3872 = vmatpush.msra.mxu0 %v3803
    %3873 = vmatpush.msra.mxu0 %v3802
    %3874 = vmatpush.msra.mxu0 %v3801
    %3875 = vmatpush.msra.mxu0 %v3800
    %3876 = vmatpush.msra.mxu0 %v3799
    %3877 = vmatpush.msra.mxu0 %v3798
    %3878 = vmatpush.msra.mxu0 %v3797
    %3879 = vmatpush.msra.mxu0 %v3796
    %3880 = vmatpush.msra.mxu0 %v3795
    %3881 = vmatpush.msra.mxu0 %v3794
    %3882 = vmatpush.msra.mxu0 %v3793
    %3883 = vmatpush.msra.mxu0 %v3792
    %3884 = vmatpush.msra.mxu0 %v3791
    %3885 = vmatpush.msra.mxu0 %v3790
    %3886 = vmatpush.msra.mxu0 %v3789
    %3887 = vmatpush.msra.mxu0 %v3788
    %3888 = vmatmul.f32.gmra.mxu0 %v3854
    %v3889 = vpop.f32.mrf.mxu0
    %v3890 = vadd.f32 0.0, %v3889
    %3891 = vmatmul.f32.gmra.mxu0 %v3853
    %v3892 = vpop.f32.mrf.mxu0
    %v3893 = vadd.f32 0.0, %v3892
    %3894 = vdwg.mxu0
    %3895 = vmatpush.msra.mxu0 %v3819
    %3896 = vmatpush.msra.mxu0 %v3818
    %3897 = vmatpush.msra.mxu0 %v3817
    %3898 = vmatpush.msra.mxu0 %v3816
    %3899 = vmatpush.msra.mxu0 %v3815
    %3900 = vmatpush.msra.mxu0 %v3814
    %3901 = vmatpush.msra.mxu0 %v3813
    %3902 = vmatpush.msra.mxu0 %v3812
    %3903 = vmatpush.msra.mxu0 %v3811
    %3904 = vmatpush.msra.mxu0 %v3810
    %3905 = vmatpush.msra.mxu0 %v3809
    %3906 = vmatpush.msra.mxu0 %v3808
    %3907 = vmatpush.msra.mxu0 %v3807
    %3908 = vmatpush.msra.mxu0 %v3806
    %3909 = vmatpush.msra.mxu0 %v3805
    %3910 = vmatpush.msra.mxu0 %v3804
    %3911 = vmatmul.f32.gmra.mxu0 %v3857
    %v3912 = vpop.f32.mrf.mxu0
    %v3913 = vadd.f32 %v3890, %v3912
    %3914 = vmatmul.f32.gmra.mxu0 %v3856
    %v3915 = vpop.f32.mrf.mxu0
    %v3916 = vadd.f32 %v3893, %v3915
    %3917 = vdwg.mxu0
    %3918 = vmatpush.msra.mxu0 %v3835
    %3919 = vmatpush.msra.mxu0 %v3834
    %3920 = vmatpush.msra.mxu0 %v3833
    %3921 = vmatpush.msra.mxu0 %v3832
    %3922 = vmatpush.msra.mxu0 %v3831
    %3923 = vmatpush.msra.mxu0 %v3830
    %3924 = vmatpush.msra.mxu0 %v3829
    %3925 = vmatpush.msra.mxu0 %v3828
    %3926 = vmatpush.msra.mxu0 %v3827
    %3927 = vmatpush.msra.mxu0 %v3826
    %3928 = vmatpush.msra.mxu0 %v3825
    %3929 = vmatpush.msra.mxu0 %v3824
    %3930 = vmatpush.msra.mxu0 %v3823
    %3931 = vmatpush.msra.mxu0 %v3822
    %3932 = vmatpush.msra.mxu0 %v3821
    %3933 = vmatpush.msra.mxu0 %v3820
    %3934 = vmatmul.f32.gmra.mxu0 %v3860
    %v3935 = vpop.f32.mrf.mxu0
    %v3936 = vadd.f32 %v3913, %v3935
    %3937 = vmatmul.f32.gmra.mxu0 %v3859
    %v3938 = vpop.f32.mrf.mxu0
    %v3939 = vadd.f32 %v3916, %v3938
    %3940 = vdwg.mxu0
    %3941 = vmatpush.msra.mxu0 %v3851
    %3942 = vmatpush.msra.mxu0 %v3850
    %3943 = vmatpush.msra.mxu0 %v3849
    %3944 = vmatpush.msra.mxu0 %v3848
    %3945 = vmatpush.msra.mxu0 %v3847
    %3946 = vmatpush.msra.mxu0 %v3846
    %3947 = vmatpush.msra.mxu0 %v3845
    %3948 = vmatpush.msra.mxu0 %v3844
    %3949 = vmatpush.msra.mxu0 %v3843
    %3950 = vmatpush.msra.mxu0 %v3842
    %3951 = vmatpush.msra.mxu0 %v3841
    %3952 = vmatpush.msra.mxu0 %v3840
    %3953 = vmatpush.msra.mxu0 %v3839
    %3954 = vmatpush.msra.mxu0 %v3838
    %3955 = vmatpush.msra.mxu0 %v3837
    %3956 = vmatpush.msra.mxu0 %v3836
    %3957 = vmatmul.f32.gmra.mxu0 %v3863
    %v3958 = vpop.f32.mrf.mxu0
    %v3959 = vadd.f32 %v3936, %v3958
    %3960 = vmatmul.f32.gmra.mxu0 %v3862
    %v3961 = vpop.f32.mrf.mxu0
    %v3962 = vadd.f32 %v3939, %v3961
    %3963 = vdwg.mxu0
    %v3964 = vadd.f32 %v3785, %v3959
    %v3965 = vadd.f32 %v3786, %v3962
    %v3966 = vstv %s120
    %v3967 = vadd.f32 %v3964, %v3966
    %v3968 = vadd.f32 %v3965, %v3966
    %vm3969 = vcmask 97280
    %3970 = vst.msk [vmem:[%s7] sm:$0xff] %vm3969, %v3967
    %vm3971 = vcmask 93184
    %3972 = vst.msk [vmem:[%s7 + $0x8] sm:$0xf] %vm3971, %v3968
    %s3973 = scalar_lea.vmem %s0, 24
    %v3974 = vld [vmem:[%s3973] sm:$0xff]
    %v3975 = vld [vmem:[%s3973 + $0x8] sm:$0xff]
    %v3976 = vld [vmem:[%s3973 + $0x10] sm:$0xff]
    %v3977 = vld [vmem:[#allocation3] sm:$0xff]
    %v3978 = vld [vmem:[#allocation3 + $0x8] sm:$0xff]
    %v3979 = vld [vmem:[#allocation3 + $0x10] sm:$0xff]
    %v3980 = vld [vmem:[#allocation3 + $0x18] sm:$0xff]
    %v3981 = vld [vmem:[#allocation3 + $0x20] sm:$0xff]
    %v3982 = vld [vmem:[#allocation3 + $0x28] sm:$0xff]
    %v3983 = vld [vmem:[#allocation3 + $0x30] sm:$0xff]
    %v3984 = vld [vmem:[#allocation3 + $0x38] sm:$0xff]
    %v3985 = vld [vmem:[#allocation3 + $0x40] sm:$0xff]
    %v3986 = vld [vmem:[#allocation3 + $0x48] sm:$0xff]
    %v3987 = vld [vmem:[#allocation3 + $0x50] sm:$0xff]
    %v3988 = vld [vmem:[#allocation3 + $0x58] sm:$0xff]
    %v3989 = vld [vmem:[#allocation3 + $0x60] sm:$0xff]
    %v3990 = vld [vmem:[#allocation3 + $0x68] sm:$0xff]
    %v3991 = vld [vmem:[#allocation3 + $0x70] sm:$0xff]
    %v3992 = vld [vmem:[#allocation3 + $0x78] sm:$0xff]
    %v3993 = vld [vmem:[#allocation3 + $0x80] sm:$0xff]
    %v3994 = vld [vmem:[#allocation3 + $0x88] sm:$0xff]
    %v3995 = vld [vmem:[#allocation3 + $0x90] sm:$0xff]
    %v3996 = vld [vmem:[#allocation3 + $0x98] sm:$0xff]
    %v3997 = vld [vmem:[#allocation3 + $0xa0] sm:$0xff]
    %v3998 = vld [vmem:[#allocation3 + $0xa8] sm:$0xff]
    %v3999 = vld [vmem:[#allocation3 + $0xb0] sm:$0xff]
    %v4000 = vld [vmem:[#allocation3 + $0xb8] sm:$0xff]
    %v4001 = vld [vmem:[#allocation3 + $0xc0] sm:$0xff]
    %v4002 = vld [vmem:[#allocation3 + $0xc8] sm:$0xff]
    %v4003 = vld [vmem:[#allocation3 + $0xd0] sm:$0xff]
    %v4004 = vld [vmem:[#allocation3 + $0xd8] sm:$0xff]
    %v4005 = vld [vmem:[#allocation3 + $0xe0] sm:$0xff]
    %v4006 = vld [vmem:[#allocation3 + $0xe8] sm:$0xff]
    %v4007 = vld [vmem:[#allocation3 + $0xf0] sm:$0xff]
    %v4008 = vld [vmem:[#allocation3 + $0xf8] sm:$0xff]
    %v4009 = vld [vmem:[#allocation3 + $0x100] sm:$0xff]
    %v4010 = vld [vmem:[#allocation3 + $0x108] sm:$0xff]
    %v4011 = vld [vmem:[#allocation3 + $0x110] sm:$0xff]
    %v4012 = vld [vmem:[#allocation3 + $0x118] sm:$0xff]
    %v4013 = vld [vmem:[#allocation3 + $0x120] sm:$0xff]
    %v4014 = vld [vmem:[#allocation3 + $0x128] sm:$0xff]
    %v4015 = vld [vmem:[#allocation3 + $0x130] sm:$0xff]
    %v4016 = vld [vmem:[#allocation3 + $0x138] sm:$0xff]
    %v4017 = vld [vmem:[#allocation3 + $0x140] sm:$0xff]
    %v4018 = vld [vmem:[#allocation3 + $0x148] sm:$0xff]
    %v4019 = vld [vmem:[#allocation3 + $0x150] sm:$0xff]
    %v4020 = vld [vmem:[#allocation3 + $0x158] sm:$0xff]
    %v4021 = vld [vmem:[#allocation3 + $0x160] sm:$0xff]
    %v4022 = vld [vmem:[#allocation3 + $0x168] sm:$0xff]
    %v4023 = vld [vmem:[#allocation3 + $0x170] sm:$0xff]
    %v4024 = vld [vmem:[#allocation3 + $0x178] sm:$0xff]
    %v4025 = vld [vmem:[#allocation3 + $0x180] sm:$0xff]
    %v4026 = vld [vmem:[#allocation3 + $0x188] sm:$0xff]
    %v4027 = vld [vmem:[#allocation3 + $0x190] sm:$0xff]
    %v4028 = vld [vmem:[#allocation3 + $0x198] sm:$0xff]
    %v4029 = vld [vmem:[#allocation3 + $0x1a0] sm:$0xff]
    %v4030 = vld [vmem:[#allocation3 + $0x1a8] sm:$0xff]
    %v4031 = vld [vmem:[#allocation3 + $0x1b0] sm:$0xff]
    %v4032 = vld [vmem:[#allocation3 + $0x1b8] sm:$0xff]
    %v4033 = vld [vmem:[#allocation3 + $0x1c0] sm:$0xff]
    %v4034 = vld [vmem:[#allocation3 + $0x1c8] sm:$0xff]
    %v4035 = vld [vmem:[#allocation3 + $0x1d0] sm:$0xff]
    %v4036 = vld [vmem:[#allocation3 + $0x1d8] sm:$0xff]
    %v4037 = vld [vmem:[#allocation3 + $0x1e0] sm:$0xff]
    %v4038 = vld [vmem:[#allocation3 + $0x1e8] sm:$0xff]
    %v4039 = vld [vmem:[#allocation3 + $0x1f0] sm:$0xff]
    %v4040 = vld [vmem:[#allocation3 + $0x1f8] sm:$0xff]
    %v4041 = vld [vmem:[#allocation3 + $0x200] sm:$0xff]
    %v4042 = vld [vmem:[#allocation3 + $0x208] sm:$0xff]
    %v4043 = vld [vmem:[#allocation3 + $0x210] sm:$0xff]
    %v4044 = vld [vmem:[#allocation3 + $0x218] sm:$0xff]
    %v4045 = vld [vmem:[#allocation3 + $0x220] sm:$0xff]
    %v4046 = vld [vmem:[#allocation3 + $0x228] sm:$0xff]
    %v4047 = vld [vmem:[#allocation3 + $0x230] sm:$0xff]
    %v4048 = vld [vmem:[#allocation3 + $0x238] sm:$0xff]
    %v4049 = vld [vmem:[#allocation3 + $0x240] sm:$0xff]
    %v4050 = vld [vmem:[#allocation3 + $0x248] sm:$0xff]
    %v4051 = vld [vmem:[#allocation3 + $0x250] sm:$0xff]
    %v4052 = vld [vmem:[#allocation3 + $0x258] sm:$0xff]
    %v4053 = vld [vmem:[#allocation3 + $0x260] sm:$0xff]
    %v4054 = vld [vmem:[#allocation3 + $0x268] sm:$0xff]
    %v4055 = vld [vmem:[#allocation3 + $0x270] sm:$0xff]
    %v4056 = vld [vmem:[#allocation3 + $0x278] sm:$0xff]
    %v4057 = vld [vmem:[#allocation3 + $0x280] sm:$0xff]
    %v4058 = vld [vmem:[#allocation3 + $0x288] sm:$0xff]
    %v4059 = vld [vmem:[#allocation3 + $0x290] sm:$0xff]
    %v4060 = vld [vmem:[#allocation3 + $0x298] sm:$0xff]
    %v4061 = vld [vmem:[#allocation3 + $0x2a0] sm:$0xff]
    %v4062 = vld [vmem:[#allocation3 + $0x2a8] sm:$0xff]
    %v4063 = vld [vmem:[#allocation3 + $0x2b0] sm:$0xff]
    %v4064 = vld [vmem:[#allocation3 + $0x2b8] sm:$0xff]
    %v4065 = vld [vmem:[#allocation3 + $0x2c0] sm:$0xff]
    %v4066 = vld [vmem:[#allocation3 + $0x2c8] sm:$0xff]
    %v4067 = vld [vmem:[#allocation3 + $0x2d0] sm:$0xff]
    %v4068 = vld [vmem:[#allocation3 + $0x2d8] sm:$0xff]
    %v4069 = vld [vmem:[#allocation3 + $0x2e0] sm:$0xff]
    %v4070 = vld [vmem:[#allocation3 + $0x2e8] sm:$0xff]
    %v4071 = vld [vmem:[#allocation3 + $0x2f0] sm:$0xff]
    %v4072 = vld [vmem:[#allocation3 + $0x2f8] sm:$0xff]
    %v4073 = vld [vmem:[%s220] sm:$0xff]
    %v4074 = vld [vmem:[%s220 + $0x8] sm:$0xff]
    %v4075 = vld [vmem:[%s220 + $0x10] sm:$0xff]
    %v4076 = vld [vmem:[%s220 + $0x18] sm:$0xff]
    %v4077 = vld [vmem:[%s220 + $0x20] sm:$0xff]
    %v4078 = vld [vmem:[%s220 + $0x28] sm:$0xff]
    %v4079 = vld [vmem:[%s220 + $0x30] sm:$0xff]
    %v4080 = vld [vmem:[%s220 + $0x38] sm:$0xff]
    %v4081 = vld [vmem:[%s220 + $0x40] sm:$0xff]
    %v4082 = vld [vmem:[%s220 + $0x48] sm:$0xff]
    %v4083 = vld [vmem:[%s220 + $0x50] sm:$0xff]
    %v4084 = vld [vmem:[%s220 + $0x58] sm:$0xff]
    %v4085 = vld [vmem:[%s220 + $0x60] sm:$0xff]
    %v4086 = vld [vmem:[%s220 + $0x68] sm:$0xff]
    %v4087 = vld [vmem:[%s220 + $0x70] sm:$0xff]
    %v4088 = vld [vmem:[%s220 + $0x78] sm:$0xff]
    %v4089 = vld [vmem:[%s220 + $0x80] sm:$0xff]
    %v4090 = vld [vmem:[%s220 + $0x88] sm:$0xff]
    %v4091 = vld [vmem:[%s220 + $0x90] sm:$0xff]
    %v4092 = vld [vmem:[%s220 + $0x98] sm:$0xff]
    %v4093 = vld [vmem:[%s220 + $0xa0] sm:$0xff]
    %v4094 = vld [vmem:[%s220 + $0xa8] sm:$0xff]
    %v4095 = vld [vmem:[%s220 + $0xb0] sm:$0xff]
    %v4096 = vld [vmem:[%s220 + $0xb8] sm:$0xff]
    %v4097 = vld [vmem:[%s220 + $0xc0] sm:$0xff]
    %v4098 = vld [vmem:[%s220 + $0xc8] sm:$0xff]
    %v4099 = vld [vmem:[%s220 + $0xd0] sm:$0xff]
    %v4100 = vld [vmem:[%s220 + $0xd8] sm:$0xff]
    %v4101 = vld [vmem:[%s220 + $0xe0] sm:$0xff]
    %v4102 = vld [vmem:[%s220 + $0xe8] sm:$0xff]
    %v4103 = vld [vmem:[%s220 + $0xf0] sm:$0xff]
    %v4104 = vld [vmem:[%s220 + $0xf8] sm:$0xff]
    %v4105 = vld [vmem:[%s220 + $0x100] sm:$0xff]
    %v4106 = vld [vmem:[%s220 + $0x108] sm:$0xff]
    %v4107 = vld [vmem:[%s220 + $0x110] sm:$0xff]
    %v4108 = vld [vmem:[%s220 + $0x118] sm:$0xff]
    %v4109 = vld [vmem:[%s220 + $0x120] sm:$0xff]
    %v4110 = vld [vmem:[%s220 + $0x128] sm:$0xff]
    %v4111 = vld [vmem:[%s220 + $0x130] sm:$0xff]
    %v4112 = vld [vmem:[%s220 + $0x138] sm:$0xff]
    %v4113 = vld [vmem:[%s220 + $0x140] sm:$0xff]
    %v4114 = vld [vmem:[%s220 + $0x148] sm:$0xff]
    %v4115 = vld [vmem:[%s220 + $0x150] sm:$0xff]
    %v4116 = vld [vmem:[%s220 + $0x158] sm:$0xff]
    %v4117 = vld [vmem:[%s220 + $0x160] sm:$0xff]
    %v4118 = vld [vmem:[%s220 + $0x168] sm:$0xff]
    %v4119 = vld [vmem:[%s220 + $0x170] sm:$0xff]
    %v4120 = vld [vmem:[%s220 + $0x178] sm:$0xff]
    %v4121 = vld [vmem:[%s220 + $0x180] sm:$0xff]
    %v4122 = vld [vmem:[%s220 + $0x188] sm:$0xff]
    %v4123 = vld [vmem:[%s220 + $0x190] sm:$0xff]
    %v4124 = vld [vmem:[%s220 + $0x198] sm:$0xff]
    %v4125 = vld [vmem:[%s220 + $0x1a0] sm:$0xff]
    %v4126 = vld [vmem:[%s220 + $0x1a8] sm:$0xff]
    %v4127 = vld [vmem:[%s220 + $0x1b0] sm:$0xff]
    %v4128 = vld [vmem:[%s220 + $0x1b8] sm:$0xff]
    %v4129 = vld [vmem:[%s220 + $0x1c0] sm:$0xff]
    %v4130 = vld [vmem:[%s220 + $0x1c8] sm:$0xff]
    %v4131 = vld [vmem:[%s220 + $0x1d0] sm:$0xff]
    %v4132 = vld [vmem:[%s220 + $0x1d8] sm:$0xff]
    %v4133 = vld [vmem:[%s220 + $0x1e0] sm:$0xff]
    %v4134 = vld [vmem:[%s220 + $0x1e8] sm:$0xff]
    %v4135 = vld [vmem:[%s220 + $0x1f0] sm:$0xff]
    %v4136 = vld [vmem:[%s220 + $0x1f8] sm:$0xff]
    %v4137 = vld [vmem:[%s220 + $0x200] sm:$0xff]
    %v4138 = vld [vmem:[%s220 + $0x208] sm:$0xff]
    %v4139 = vld [vmem:[%s220 + $0x210] sm:$0xff]
    %v4140 = vld [vmem:[%s220 + $0x218] sm:$0xff]
    %v4141 = vld [vmem:[%s220 + $0x220] sm:$0xff]
    %v4142 = vld [vmem:[%s220 + $0x228] sm:$0xff]
    %v4143 = vld [vmem:[%s220 + $0x230] sm:$0xff]
    %v4144 = vld [vmem:[%s220 + $0x238] sm:$0xff]
    %v4145 = vld [vmem:[%s220 + $0x240] sm:$0xff]
    %v4146 = vld [vmem:[%s220 + $0x248] sm:$0xff]
    %v4147 = vld [vmem:[%s220 + $0x250] sm:$0xff]
    %v4148 = vld [vmem:[%s220 + $0x258] sm:$0xff]
    %v4149 = vld [vmem:[%s220 + $0x260] sm:$0xff]
    %v4150 = vld [vmem:[%s220 + $0x268] sm:$0xff]
    %v4151 = vld [vmem:[%s220 + $0x270] sm:$0xff]
    %v4152 = vld [vmem:[%s220 + $0x278] sm:$0xff]
    %v4153 = vld [vmem:[%s220 + $0x280] sm:$0xff]
    %v4154 = vld [vmem:[%s220 + $0x288] sm:$0xff]
    %v4155 = vld [vmem:[%s220 + $0x290] sm:$0xff]
    %v4156 = vld [vmem:[%s220 + $0x298] sm:$0xff]
    %v4157 = vld [vmem:[%s220 + $0x2a0] sm:$0xff]
    %v4158 = vld [vmem:[%s220 + $0x2a8] sm:$0xff]
    %v4159 = vld [vmem:[%s220 + $0x2b0] sm:$0xff]
    %v4160 = vld [vmem:[%s220 + $0x2b8] sm:$0xff]
    %v4161 = vld [vmem:[%s220 + $0x2c0] sm:$0xff]
    %v4162 = vld [vmem:[%s220 + $0x2c8] sm:$0xff]
    %v4163 = vld [vmem:[%s220 + $0x2d0] sm:$0xff]
    %v4164 = vld [vmem:[%s220 + $0x2d8] sm:$0xff]
    %v4165 = vld [vmem:[%s220 + $0x2e0] sm:$0xff]
    %v4166 = vld [vmem:[%s220 + $0x2e8] sm:$0xff]
    %v4167 = vld [vmem:[%s220 + $0x2f0] sm:$0xff]
    %v4168 = vld [vmem:[%s220 + $0x2f8] sm:$0xff]
    %v4172 = vrot.slane %v3974, 1
    %v4173 = vrot.slane %v3975, 1
    %v4174 = vsel %vm320, %v4172, %v4173
    %v4175 = vrot.slane %v3976, 1
    %v4176 = vsel %vm320, %v4173, %v4175
    %v4177 = vsel %vm326, %v4174, 0
    %v4179 = vsel %vm326, %v4176, 0
    %4181 = vmatpush.msra.mxu0 0.0
    %4182 = vmatpush.msra.mxu0 0.0
    %4183 = vmatpush.msra.mxu0 0.0
    %4184 = vmatpush.msra.mxu0 0.0
    %4185 = vmatpush.msra.mxu0 %v4161
    %4186 = vmatpush.msra.mxu0 %v4153
    %4187 = vmatpush.msra.mxu0 %v4145
    %4188 = vmatpush.msra.mxu0 %v4137
    %4189 = vmatpush.msra.mxu0 %v4129
    %4190 = vmatpush.msra.mxu0 %v4121
    %4191 = vmatpush.msra.mxu0 %v4113
    %4192 = vmatpush.msra.mxu0 %v4105
    %4193 = vmatpush.msra.mxu0 %v4097
    %4194 = vmatpush.msra.mxu0 %v4089
    %4195 = vmatpush.msra.mxu0 %v4081
    %4196 = vmatpush.msra.mxu0 %v4073
    %4197 = vmatmul.f32.gmra.mxu0 %v4177
    %v4198 = vpop.f32.mrf.mxu0
    %v4199 = vadd.f32 0.0, %v4198
    %4200 = vmatmul.f32.gmra.mxu0 %v4179
    %v4201 = vpop.f32.mrf.mxu0
    %v4202 = vadd.f32 0.0, %v4201
    %4203 = vdwg.mxu0
    %4204 = vmatpush.msra.mxu0 0.0
    %4205 = vmatpush.msra.mxu0 0.0
    %4206 = vmatpush.msra.mxu0 0.0
    %4207 = vmatpush.msra.mxu0 0.0
    %4208 = vmatpush.msra.mxu0 %v4162
    %4209 = vmatpush.msra.mxu0 %v4154
    %4210 = vmatpush.msra.mxu0 %v4146
    %4211 = vmatpush.msra.mxu0 %v4138
    %4212 = vmatpush.msra.mxu0 %v4130
    %4213 = vmatpush.msra.mxu0 %v4122
    %4214 = vmatpush.msra.mxu0 %v4114
    %4215 = vmatpush.msra.mxu0 %v4106
    %4216 = vmatpush.msra.mxu0 %v4098
    %4217 = vmatpush.msra.mxu0 %v4090
    %4218 = vmatpush.msra.mxu0 %v4082
    %4219 = vmatpush.msra.mxu0 %v4074
    %4220 = vmatmul.f32.gmra.mxu0 %v4177
    %v4221 = vpop.f32.mrf.mxu0
    %v4222 = vadd.f32 0.0, %v4221
    %4223 = vmatmul.f32.gmra.mxu0 %v4179
    %v4224 = vpop.f32.mrf.mxu0
    %v4225 = vadd.f32 0.0, %v4224
    %4226 = vdwg.mxu0
    %4227 = vmatpush.msra.mxu0 0.0
    %4228 = vmatpush.msra.mxu0 0.0
    %4229 = vmatpush.msra.mxu0 0.0
    %4230 = vmatpush.msra.mxu0 0.0
    %4231 = vmatpush.msra.mxu0 %v4163
    %4232 = vmatpush.msra.mxu0 %v4155
    %4233 = vmatpush.msra.mxu0 %v4147
    %4234 = vmatpush.msra.mxu0 %v4139
    %4235 = vmatpush.msra.mxu0 %v4131
    %4236 = vmatpush.msra.mxu0 %v4123
    %4237 = vmatpush.msra.mxu0 %v4115
    %4238 = vmatpush.msra.mxu0 %v4107
    %4239 = vmatpush.msra.mxu0 %v4099
    %4240 = vmatpush.msra.mxu0 %v4091
    %4241 = vmatpush.msra.mxu0 %v4083
    %4242 = vmatpush.msra.mxu0 %v4075
    %4243 = vmatmul.f32.gmra.mxu0 %v4177
    %v4244 = vpop.f32.mrf.mxu0
    %v4245 = vadd.f32 0.0, %v4244
    %4246 = vmatmul.f32.gmra.mxu0 %v4179
    %v4247 = vpop.f32.mrf.mxu0
    %v4248 = vadd.f32 0.0, %v4247
    %4249 = vdwg.mxu0
    %4250 = vmatpush.msra.mxu0 0.0
    %4251 = vmatpush.msra.mxu0 0.0
    %4252 = vmatpush.msra.mxu0 0.0
    %4253 = vmatpush.msra.mxu0 0.0
    %4254 = vmatpush.msra.mxu0 %v4164
    %4255 = vmatpush.msra.mxu0 %v4156
    %4256 = vmatpush.msra.mxu0 %v4148
    %4257 = vmatpush.msra.mxu0 %v4140
    %4258 = vmatpush.msra.mxu0 %v4132
    %4259 = vmatpush.msra.mxu0 %v4124
    %4260 = vmatpush.msra.mxu0 %v4116
    %4261 = vmatpush.msra.mxu0 %v4108
    %4262 = vmatpush.msra.mxu0 %v4100
    %4263 = vmatpush.msra.mxu0 %v4092
    %4264 = vmatpush.msra.mxu0 %v4084
    %4265 = vmatpush.msra.mxu0 %v4076
    %4266 = vmatmul.f32.gmra.mxu0 %v4177
    %v4267 = vpop.f32.mrf.mxu0
    %v4268 = vadd.f32 0.0, %v4267
    %4269 = vmatmul.f32.gmra.mxu0 %v4179
    %v4270 = vpop.f32.mrf.mxu0
    %v4271 = vadd.f32 0.0, %v4270
    %4272 = vdwg.mxu0
    %4273 = vmatpush.msra.mxu0 0.0
    %4274 = vmatpush.msra.mxu0 0.0
    %4275 = vmatpush.msra.mxu0 0.0
    %4276 = vmatpush.msra.mxu0 0.0
    %4277 = vmatpush.msra.mxu0 %v4165
    %4278 = vmatpush.msra.mxu0 %v4157
    %4279 = vmatpush.msra.mxu0 %v4149
    %4280 = vmatpush.msra.mxu0 %v4141
    %4281 = vmatpush.msra.mxu0 %v4133
    %4282 = vmatpush.msra.mxu0 %v4125
    %4283 = vmatpush.msra.mxu0 %v4117
    %4284 = vmatpush.msra.mxu0 %v4109
    %4285 = vmatpush.msra.mxu0 %v4101
    %4286 = vmatpush.msra.mxu0 %v4093
    %4287 = vmatpush.msra.mxu0 %v4085
    %4288 = vmatpush.msra.mxu0 %v4077
    %4289 = vmatmul.f32.gmra.mxu0 %v4177
    %v4290 = vpop.f32.mrf.mxu0
    %v4291 = vadd.f32 0.0, %v4290
    %4292 = vmatmul.f32.gmra.mxu0 %v4179
    %v4293 = vpop.f32.mrf.mxu0
    %v4294 = vadd.f32 0.0, %v4293
    %4295 = vdwg.mxu0
    %4296 = vmatpush.msra.mxu0 0.0
    %4297 = vmatpush.msra.mxu0 0.0
    %4298 = vmatpush.msra.mxu0 0.0
    %4299 = vmatpush.msra.mxu0 0.0
    %4300 = vmatpush.msra.mxu0 %v4166
    %4301 = vmatpush.msra.mxu0 %v4158
    %4302 = vmatpush.msra.mxu0 %v4150
    %4303 = vmatpush.msra.mxu0 %v4142
    %4304 = vmatpush.msra.mxu0 %v4134
    %4305 = vmatpush.msra.mxu0 %v4126
    %4306 = vmatpush.msra.mxu0 %v4118
    %4307 = vmatpush.msra.mxu0 %v4110
    %4308 = vmatpush.msra.mxu0 %v4102
    %4309 = vmatpush.msra.mxu0 %v4094
    %4310 = vmatpush.msra.mxu0 %v4086
    %4311 = vmatpush.msra.mxu0 %v4078
    %4312 = vmatmul.f32.gmra.mxu0 %v4177
    %v4313 = vpop.f32.mrf.mxu0
    %v4314 = vadd.f32 0.0, %v4313
    %4315 = vmatmul.f32.gmra.mxu0 %v4179
    %v4316 = vpop.f32.mrf.mxu0
    %v4317 = vadd.f32 0.0, %v4316
    %4318 = vdwg.mxu0
    %4319 = vmatpush.msra.mxu0 0.0
    %4320 = vmatpush.msra.mxu0 0.0
    %4321 = vmatpush.msra.mxu0 0.0
    %4322 = vmatpush.msra.mxu0 0.0
    %4323 = vmatpush.msra.mxu0 %v4167
    %4324 = vmatpush.msra.mxu0 %v4159
    %4325 = vmatpush.msra.mxu0 %v4151
    %4326 = vmatpush.msra.mxu0 %v4143
    %4327 = vmatpush.msra.mxu0 %v4135
    %4328 = vmatpush.msra.mxu0 %v4127
    %4329 = vmatpush.msra.mxu0 %v4119
    %4330 = vmatpush.msra.mxu0 %v4111
    %4331 = vmatpush.msra.mxu0 %v4103
    %4332 = vmatpush.msra.mxu0 %v4095
    %4333 = vmatpush.msra.mxu0 %v4087
    %4334 = vmatpush.msra.mxu0 %v4079
    %4335 = vmatmul.f32.gmra.mxu0 %v4177
    %v4336 = vpop.f32.mrf.mxu0
    %v4337 = vadd.f32 0.0, %v4336
    %4338 = vmatmul.f32.gmra.mxu0 %v4179
    %v4339 = vpop.f32.mrf.mxu0
    %v4340 = vadd.f32 0.0, %v4339
    %4341 = vdwg.mxu0
    %4342 = vmatpush.msra.mxu0 0.0
    %4343 = vmatpush.msra.mxu0 0.0
    %4344 = vmatpush.msra.mxu0 0.0
    %4345 = vmatpush.msra.mxu0 0.0
    %4346 = vmatpush.msra.mxu0 %v4168
    %4347 = vmatpush.msra.mxu0 %v4160
    %4348 = vmatpush.msra.mxu0 %v4152
    %4349 = vmatpush.msra.mxu0 %v4144
    %4350 = vmatpush.msra.mxu0 %v4136
    %4351 = vmatpush.msra.mxu0 %v4128
    %4352 = vmatpush.msra.mxu0 %v4120
    %4353 = vmatpush.msra.mxu0 %v4112
    %4354 = vmatpush.msra.mxu0 %v4104
    %4355 = vmatpush.msra.mxu0 %v4096
    %4356 = vmatpush.msra.mxu0 %v4088
    %4357 = vmatpush.msra.mxu0 %v4080
    %4358 = vmatmul.f32.gmra.mxu0 %v4177
    %v4359 = vpop.f32.mrf.mxu0
    %v4360 = vadd.f32 0.0, %v4359
    %4361 = vmatmul.f32.gmra.mxu0 %v4179
    %v4362 = vpop.f32.mrf.mxu0
    %v4363 = vadd.f32 0.0, %v4362
    %4364 = vdwg.mxu0
    %v4365 = vsel %vm326, %v3974, 0
    %v4367 = vsel %vm326, %v3975, 0
    %4369 = vmatpush.msra.mxu0 0.0
    %4370 = vmatpush.msra.mxu0 0.0
    %4371 = vmatpush.msra.mxu0 0.0
    %4372 = vmatpush.msra.mxu0 0.0
    %4373 = vmatpush.msra.mxu0 %v4065
    %4374 = vmatpush.msra.mxu0 %v4057
    %4375 = vmatpush.msra.mxu0 %v4049
    %4376 = vmatpush.msra.mxu0 %v4041
    %4377 = vmatpush.msra.mxu0 %v4033
    %4378 = vmatpush.msra.mxu0 %v4025
    %4379 = vmatpush.msra.mxu0 %v4017
    %4380 = vmatpush.msra.mxu0 %v4009
    %4381 = vmatpush.msra.mxu0 %v4001
    %4382 = vmatpush.msra.mxu0 %v3993
    %4383 = vmatpush.msra.mxu0 %v3985
    %4384 = vmatpush.msra.mxu0 %v3977
    %4385 = vmatmul.f32.gmra.mxu0 %v4365
    %v4386 = vpop.f32.mrf.mxu0
    %v4387 = vadd.f32 %v4199, %v4386
    %4388 = vmatmul.f32.gmra.mxu0 %v4367
    %v4389 = vpop.f32.mrf.mxu0
    %v4390 = vadd.f32 %v4202, %v4389
    %4391 = vdwg.mxu0
    %4392 = vmatpush.msra.mxu0 0.0
    %4393 = vmatpush.msra.mxu0 0.0
    %4394 = vmatpush.msra.mxu0 0.0
    %4395 = vmatpush.msra.mxu0 0.0
    %4396 = vmatpush.msra.mxu0 %v4066
    %4397 = vmatpush.msra.mxu0 %v4058
    %4398 = vmatpush.msra.mxu0 %v4050
    %4399 = vmatpush.msra.mxu0 %v4042
    %4400 = vmatpush.msra.mxu0 %v4034
    %4401 = vmatpush.msra.mxu0 %v4026
    %4402 = vmatpush.msra.mxu0 %v4018
    %4403 = vmatpush.msra.mxu0 %v4010
    %4404 = vmatpush.msra.mxu0 %v4002
    %4405 = vmatpush.msra.mxu0 %v3994
    %4406 = vmatpush.msra.mxu0 %v3986
    %4407 = vmatpush.msra.mxu0 %v3978
    %4408 = vmatmul.f32.gmra.mxu0 %v4365
    %v4409 = vpop.f32.mrf.mxu0
    %v4410 = vadd.f32 %v4222, %v4409
    %4411 = vmatmul.f32.gmra.mxu0 %v4367
    %v4412 = vpop.f32.mrf.mxu0
    %v4413 = vadd.f32 %v4225, %v4412
    %4414 = vdwg.mxu0
    %4415 = vmatpush.msra.mxu0 0.0
    %4416 = vmatpush.msra.mxu0 0.0
    %4417 = vmatpush.msra.mxu0 0.0
    %4418 = vmatpush.msra.mxu0 0.0
    %4419 = vmatpush.msra.mxu0 %v4067
    %4420 = vmatpush.msra.mxu0 %v4059
    %4421 = vmatpush.msra.mxu0 %v4051
    %4422 = vmatpush.msra.mxu0 %v4043
    %4423 = vmatpush.msra.mxu0 %v4035
    %4424 = vmatpush.msra.mxu0 %v4027
    %4425 = vmatpush.msra.mxu0 %v4019
    %4426 = vmatpush.msra.mxu0 %v4011
    %4427 = vmatpush.msra.mxu0 %v4003
    %4428 = vmatpush.msra.mxu0 %v3995
    %4429 = vmatpush.msra.mxu0 %v3987
    %4430 = vmatpush.msra.mxu0 %v3979
    %4431 = vmatmul.f32.gmra.mxu0 %v4365
    %v4432 = vpop.f32.mrf.mxu0
    %v4433 = vadd.f32 %v4245, %v4432
    %4434 = vmatmul.f32.gmra.mxu0 %v4367
    %v4435 = vpop.f32.mrf.mxu0
    %v4436 = vadd.f32 %v4248, %v4435
    %4437 = vdwg.mxu0
    %4438 = vmatpush.msra.mxu0 0.0
    %4439 = vmatpush.msra.mxu0 0.0
    %4440 = vmatpush.msra.mxu0 0.0
    %4441 = vmatpush.msra.mxu0 0.0
    %4442 = vmatpush.msra.mxu0 %v4068
    %4443 = vmatpush.msra.mxu0 %v4060
    %4444 = vmatpush.msra.mxu0 %v4052
    %4445 = vmatpush.msra.mxu0 %v4044
    %4446 = vmatpush.msra.mxu0 %v4036
    %4447 = vmatpush.msra.mxu0 %v4028
    %4448 = vmatpush.msra.mxu0 %v4020
    %4449 = vmatpush.msra.mxu0 %v4012
    %4450 = vmatpush.msra.mxu0 %v4004
    %4451 = vmatpush.msra.mxu0 %v3996
    %4452 = vmatpush.msra.mxu0 %v3988
    %4453 = vmatpush.msra.mxu0 %v3980
    %4454 = vmatmul.f32.gmra.mxu0 %v4365
    %v4455 = vpop.f32.mrf.mxu0
    %v4456 = vadd.f32 %v4268, %v4455
    %4457 = vmatmul.f32.gmra.mxu0 %v4367
    %v4458 = vpop.f32.mrf.mxu0
    %v4459 = vadd.f32 %v4271, %v4458
    %4460 = vdwg.mxu0
    %4461 = vmatpush.msra.mxu0 0.0
    %4462 = vmatpush.msra.mxu0 0.0
    %4463 = vmatpush.msra.mxu0 0.0
    %4464 = vmatpush.msra.mxu0 0.0
    %4465 = vmatpush.msra.mxu0 %v4069
    %4466 = vmatpush.msra.mxu0 %v4061
    %4467 = vmatpush.msra.mxu0 %v4053
    %4468 = vmatpush.msra.mxu0 %v4045
    %4469 = vmatpush.msra.mxu0 %v4037
    %4470 = vmatpush.msra.mxu0 %v4029
    %4471 = vmatpush.msra.mxu0 %v4021
    %4472 = vmatpush.msra.mxu0 %v4013
    %4473 = vmatpush.msra.mxu0 %v4005
    %4474 = vmatpush.msra.mxu0 %v3997
    %4475 = vmatpush.msra.mxu0 %v3989
    %4476 = vmatpush.msra.mxu0 %v3981
    %4477 = vmatmul.f32.gmra.mxu0 %v4365
    %v4478 = vpop.f32.mrf.mxu0
    %v4479 = vadd.f32 %v4291, %v4478
    %4480 = vmatmul.f32.gmra.mxu0 %v4367
    %v4481 = vpop.f32.mrf.mxu0
    %v4482 = vadd.f32 %v4294, %v4481
    %4483 = vdwg.mxu0
    %4484 = vmatpush.msra.mxu0 0.0
    %4485 = vmatpush.msra.mxu0 0.0
    %4486 = vmatpush.msra.mxu0 0.0
    %4487 = vmatpush.msra.mxu0 0.0
    %4488 = vmatpush.msra.mxu0 %v4070
    %4489 = vmatpush.msra.mxu0 %v4062
    %4490 = vmatpush.msra.mxu0 %v4054
    %4491 = vmatpush.msra.mxu0 %v4046
    %4492 = vmatpush.msra.mxu0 %v4038
    %4493 = vmatpush.msra.mxu0 %v4030
    %4494 = vmatpush.msra.mxu0 %v4022
    %4495 = vmatpush.msra.mxu0 %v4014
    %4496 = vmatpush.msra.mxu0 %v4006
    %4497 = vmatpush.msra.mxu0 %v3998
    %4498 = vmatpush.msra.mxu0 %v3990
    %4499 = vmatpush.msra.mxu0 %v3982
    %4500 = vmatmul.f32.gmra.mxu0 %v4365
    %v4501 = vpop.f32.mrf.mxu0
    %v4502 = vadd.f32 %v4314, %v4501
    %4503 = vmatmul.f32.gmra.mxu0 %v4367
    %v4504 = vpop.f32.mrf.mxu0
    %v4505 = vadd.f32 %v4317, %v4504
    %4506 = vdwg.mxu0
    %4507 = vmatpush.msra.mxu0 0.0
    %4508 = vmatpush.msra.mxu0 0.0
    %4509 = vmatpush.msra.mxu0 0.0
    %4510 = vmatpush.msra.mxu0 0.0
    %4511 = vmatpush.msra.mxu0 %v4071
    %4512 = vmatpush.msra.mxu0 %v4063
    %4513 = vmatpush.msra.mxu0 %v4055
    %4514 = vmatpush.msra.mxu0 %v4047
    %4515 = vmatpush.msra.mxu0 %v4039
    %4516 = vmatpush.msra.mxu0 %v4031
    %4517 = vmatpush.msra.mxu0 %v4023
    %4518 = vmatpush.msra.mxu0 %v4015
    %4519 = vmatpush.msra.mxu0 %v4007
    %4520 = vmatpush.msra.mxu0 %v3999
    %4521 = vmatpush.msra.mxu0 %v3991
    %4522 = vmatpush.msra.mxu0 %v3983
    %4523 = vmatmul.f32.gmra.mxu0 %v4365
    %v4524 = vpop.f32.mrf.mxu0
    %v4525 = vadd.f32 %v4337, %v4524
    %4526 = vmatmul.f32.gmra.mxu0 %v4367
    %v4527 = vpop.f32.mrf.mxu0
    %v4528 = vadd.f32 %v4340, %v4527
    %4529 = vdwg.mxu0
    %4530 = vmatpush.msra.mxu0 0.0
    %4531 = vmatpush.msra.mxu0 0.0
    %4532 = vmatpush.msra.mxu0 0.0
    %4533 = vmatpush.msra.mxu0 0.0
    %4534 = vmatpush.msra.mxu0 %v4072
    %4535 = vmatpush.msra.mxu0 %v4064
    %4536 = vmatpush.msra.mxu0 %v4056
    %4537 = vmatpush.msra.mxu0 %v4048
    %4538 = vmatpush.msra.mxu0 %v4040
    %4539 = vmatpush.msra.mxu0 %v4032
    %4540 = vmatpush.msra.mxu0 %v4024
    %4541 = vmatpush.msra.mxu0 %v4016
    %4542 = vmatpush.msra.mxu0 %v4008
    %4543 = vmatpush.msra.mxu0 %v4000
    %4544 = vmatpush.msra.mxu0 %v3992
    %4545 = vmatpush.msra.mxu0 %v3984
    %4546 = vmatmul.f32.gmra.mxu0 %v4365
    %v4547 = vpop.f32.mrf.mxu0
    %v4548 = vadd.f32 %v4360, %v4547
    %4549 = vmatmul.f32.gmra.mxu0 %v4367
    %v4550 = vpop.f32.mrf.mxu0
    %v4551 = vadd.f32 %v4363, %v4550
    %4552 = vdwg.mxu0
    %v4553 = vld [vmem:[%s703] sm:$0xff]
    %v4554 = vld [vmem:[%s703 + $0x8] sm:$0xff]
    %v4555 = vld [vmem:[%s703 + $0x10] sm:$0xff]
    %v4556 = vld [vmem:[%s703 + $0x18] sm:$0xff]
    %v4557 = vld [vmem:[%s703 + $0x20] sm:$0xff]
    %v4558 = vld [vmem:[%s703 + $0x28] sm:$0xff]
    %v4559 = vld [vmem:[%s703 + $0x30] sm:$0xff]
    %v4560 = vld [vmem:[%s703 + $0x38] sm:$0xff]
    %v4561 = vld [vmem:[%s703 + $0x40] sm:$0xff]
    %v4562 = vld [vmem:[%s703 + $0x48] sm:$0xff]
    %v4563 = vld [vmem:[%s703 + $0x50] sm:$0xff]
    %v4564 = vld [vmem:[%s703 + $0x58] sm:$0xff]
    %v4565 = vld [vmem:[%s703 + $0x60] sm:$0xff]
    %v4566 = vld [vmem:[%s703 + $0x68] sm:$0xff]
    %v4567 = vld [vmem:[%s703 + $0x70] sm:$0xff]
    %v4568 = vld [vmem:[%s703 + $0x78] sm:$0xff]
    %v4569 = vld [vmem:[%s703 + $0x80] sm:$0xff]
    %v4570 = vld [vmem:[%s703 + $0x88] sm:$0xff]
    %v4571 = vld [vmem:[%s703 + $0x90] sm:$0xff]
    %v4572 = vld [vmem:[%s703 + $0x98] sm:$0xff]
    %v4573 = vld [vmem:[%s703 + $0xa0] sm:$0xff]
    %v4574 = vld [vmem:[%s703 + $0xa8] sm:$0xff]
    %v4575 = vld [vmem:[%s703 + $0xb0] sm:$0xff]
    %v4576 = vld [vmem:[%s703 + $0xb8] sm:$0xff]
    %v4577 = vld [vmem:[%s703 + $0xc0] sm:$0xff]
    %v4578 = vld [vmem:[%s703 + $0xc8] sm:$0xff]
    %v4579 = vld [vmem:[%s703 + $0xd0] sm:$0xff]
    %v4580 = vld [vmem:[%s703 + $0xd8] sm:$0xff]
    %v4581 = vld [vmem:[%s703 + $0xe0] sm:$0xff]
    %v4582 = vld [vmem:[%s703 + $0xe8] sm:$0xff]
    %v4583 = vld [vmem:[%s703 + $0xf0] sm:$0xff]
    %v4584 = vld [vmem:[%s703 + $0xf8] sm:$0xff]
    %v4585 = vld [vmem:[%s703 + $0x100] sm:$0xff]
    %v4586 = vld [vmem:[%s703 + $0x108] sm:$0xff]
    %v4587 = vld [vmem:[%s703 + $0x110] sm:$0xff]
    %v4588 = vld [vmem:[%s703 + $0x118] sm:$0xff]
    %v4589 = vld [vmem:[%s703 + $0x120] sm:$0xff]
    %v4590 = vld [vmem:[%s703 + $0x128] sm:$0xff]
    %v4591 = vld [vmem:[%s703 + $0x130] sm:$0xff]
    %v4592 = vld [vmem:[%s703 + $0x138] sm:$0xff]
    %v4593 = vld [vmem:[%s703 + $0x140] sm:$0xff]
    %v4594 = vld [vmem:[%s703 + $0x148] sm:$0xff]
    %v4595 = vld [vmem:[%s703 + $0x150] sm:$0xff]
    %v4596 = vld [vmem:[%s703 + $0x158] sm:$0xff]
    %v4597 = vld [vmem:[%s703 + $0x160] sm:$0xff]
    %v4598 = vld [vmem:[%s703 + $0x168] sm:$0xff]
    %v4599 = vld [vmem:[%s703 + $0x170] sm:$0xff]
    %v4600 = vld [vmem:[%s703 + $0x178] sm:$0xff]
    %v4601 = vld [vmem:[%s703 + $0x180] sm:$0xff]
    %v4602 = vld [vmem:[%s703 + $0x188] sm:$0xff]
    %v4603 = vld [vmem:[%s703 + $0x190] sm:$0xff]
    %v4604 = vld [vmem:[%s703 + $0x198] sm:$0xff]
    %v4605 = vld [vmem:[%s703 + $0x1a0] sm:$0xff]
    %v4606 = vld [vmem:[%s703 + $0x1a8] sm:$0xff]
    %v4607 = vld [vmem:[%s703 + $0x1b0] sm:$0xff]
    %v4608 = vld [vmem:[%s703 + $0x1b8] sm:$0xff]
    %v4609 = vld [vmem:[%s703 + $0x1c0] sm:$0xff]
    %v4610 = vld [vmem:[%s703 + $0x1c8] sm:$0xff]
    %v4611 = vld [vmem:[%s703 + $0x1d0] sm:$0xff]
    %v4612 = vld [vmem:[%s703 + $0x1d8] sm:$0xff]
    %v4613 = vld [vmem:[%s703 + $0x1e0] sm:$0xff]
    %v4614 = vld [vmem:[%s703 + $0x1e8] sm:$0xff]
    %v4615 = vld [vmem:[%s703 + $0x1f0] sm:$0xff]
    %v4616 = vld [vmem:[%s703 + $0x1f8] sm:$0xff]
    %v4617 = vld [vmem:[%s703 + $0x200] sm:$0xff]
    %v4618 = vld [vmem:[%s703 + $0x208] sm:$0xff]
    %v4619 = vld [vmem:[%s703 + $0x210] sm:$0xff]
    %v4620 = vld [vmem:[%s703 + $0x218] sm:$0xff]
    %v4621 = vld [vmem:[%s703 + $0x220] sm:$0xff]
    %v4622 = vld [vmem:[%s703 + $0x228] sm:$0xff]
    %v4623 = vld [vmem:[%s703 + $0x230] sm:$0xff]
    %v4624 = vld [vmem:[%s703 + $0x238] sm:$0xff]
    %v4625 = vld [vmem:[%s703 + $0x240] sm:$0xff]
    %v4626 = vld [vmem:[%s703 + $0x248] sm:$0xff]
    %v4627 = vld [vmem:[%s703 + $0x250] sm:$0xff]
    %v4628 = vld [vmem:[%s703 + $0x258] sm:$0xff]
    %v4629 = vld [vmem:[%s703 + $0x260] sm:$0xff]
    %v4630 = vld [vmem:[%s703 + $0x268] sm:$0xff]
    %v4631 = vld [vmem:[%s703 + $0x270] sm:$0xff]
    %v4632 = vld [vmem:[%s703 + $0x278] sm:$0xff]
    %v4633 = vld [vmem:[%s703 + $0x280] sm:$0xff]
    %v4634 = vld [vmem:[%s703 + $0x288] sm:$0xff]
    %v4635 = vld [vmem:[%s703 + $0x290] sm:$0xff]
    %v4636 = vld [vmem:[%s703 + $0x298] sm:$0xff]
    %v4637 = vld [vmem:[%s703 + $0x2a0] sm:$0xff]
    %v4638 = vld [vmem:[%s703 + $0x2a8] sm:$0xff]
    %v4639 = vld [vmem:[%s703 + $0x2b0] sm:$0xff]
    %v4640 = vld [vmem:[%s703 + $0x2b8] sm:$0xff]
    %v4641 = vld [vmem:[%s703 + $0x2c0] sm:$0xff]
    %v4642 = vld [vmem:[%s703 + $0x2c8] sm:$0xff]
    %v4643 = vld [vmem:[%s703 + $0x2d0] sm:$0xff]
    %v4644 = vld [vmem:[%s703 + $0x2d8] sm:$0xff]
    %v4645 = vld [vmem:[%s703 + $0x2e0] sm:$0xff]
    %v4646 = vld [vmem:[%s703 + $0x2e8] sm:$0xff]
    %v4647 = vld [vmem:[%s703 + $0x2f0] sm:$0xff]
    %v4648 = vld [vmem:[%s703 + $0x2f8] sm:$0xff]
    %v4649 = vrot.slane %v3974, 2
    %v4650 = vrot.slane %v3975, 2
    %v4651 = vsel %vm800, %v4649, %v4650
    %v4652 = vrot.slane %v3976, 2
    %v4653 = vsel %vm800, %v4650, %v4652
    %v4654 = vsel %vm326, %v4651, 0
    %v4656 = vsel %vm326, %v4653, 0
    %4658 = vmatpush.msra.mxu0 0.0
    %4659 = vmatpush.msra.mxu0 0.0
    %4660 = vmatpush.msra.mxu0 0.0
    %4661 = vmatpush.msra.mxu0 0.0
    %4662 = vmatpush.msra.mxu0 %v4641
    %4663 = vmatpush.msra.mxu0 %v4633
    %4664 = vmatpush.msra.mxu0 %v4625
    %4665 = vmatpush.msra.mxu0 %v4617
    %4666 = vmatpush.msra.mxu0 %v4609
    %4667 = vmatpush.msra.mxu0 %v4601
    %4668 = vmatpush.msra.mxu0 %v4593
    %4669 = vmatpush.msra.mxu0 %v4585
    %4670 = vmatpush.msra.mxu0 %v4577
    %4671 = vmatpush.msra.mxu0 %v4569
    %4672 = vmatpush.msra.mxu0 %v4561
    %4673 = vmatpush.msra.mxu0 %v4553
    %4674 = vmatmul.f32.gmra.mxu0 %v4654
    %v4675 = vpop.f32.mrf.mxu0
    %v4676 = vadd.f32 0.0, %v4675
    %4677 = vmatmul.f32.gmra.mxu0 %v4656
    %v4678 = vpop.f32.mrf.mxu0
    %v4679 = vadd.f32 0.0, %v4678
    %4680 = vdwg.mxu0
    %4681 = vmatpush.msra.mxu0 0.0
    %4682 = vmatpush.msra.mxu0 0.0
    %4683 = vmatpush.msra.mxu0 0.0
    %4684 = vmatpush.msra.mxu0 0.0
    %4685 = vmatpush.msra.mxu0 %v4642
    %4686 = vmatpush.msra.mxu0 %v4634
    %4687 = vmatpush.msra.mxu0 %v4626
    %4688 = vmatpush.msra.mxu0 %v4618
    %4689 = vmatpush.msra.mxu0 %v4610
    %4690 = vmatpush.msra.mxu0 %v4602
    %4691 = vmatpush.msra.mxu0 %v4594
    %4692 = vmatpush.msra.mxu0 %v4586
    %4693 = vmatpush.msra.mxu0 %v4578
    %4694 = vmatpush.msra.mxu0 %v4570
    %4695 = vmatpush.msra.mxu0 %v4562
    %4696 = vmatpush.msra.mxu0 %v4554
    %4697 = vmatmul.f32.gmra.mxu0 %v4654
    %v4698 = vpop.f32.mrf.mxu0
    %v4699 = vadd.f32 0.0, %v4698
    %4700 = vmatmul.f32.gmra.mxu0 %v4656
    %v4701 = vpop.f32.mrf.mxu0
    %v4702 = vadd.f32 0.0, %v4701
    %4703 = vdwg.mxu0
    %4704 = vmatpush.msra.mxu0 0.0
    %4705 = vmatpush.msra.mxu0 0.0
    %4706 = vmatpush.msra.mxu0 0.0
    %4707 = vmatpush.msra.mxu0 0.0
    %4708 = vmatpush.msra.mxu0 %v4643
    %4709 = vmatpush.msra.mxu0 %v4635
    %4710 = vmatpush.msra.mxu0 %v4627
    %4711 = vmatpush.msra.mxu0 %v4619
    %4712 = vmatpush.msra.mxu0 %v4611
    %4713 = vmatpush.msra.mxu0 %v4603
    %4714 = vmatpush.msra.mxu0 %v4595
    %4715 = vmatpush.msra.mxu0 %v4587
    %4716 = vmatpush.msra.mxu0 %v4579
    %4717 = vmatpush.msra.mxu0 %v4571
    %4718 = vmatpush.msra.mxu0 %v4563
    %4719 = vmatpush.msra.mxu0 %v4555
    %4720 = vmatmul.f32.gmra.mxu0 %v4654
    %v4721 = vpop.f32.mrf.mxu0
    %v4722 = vadd.f32 0.0, %v4721
    %4723 = vmatmul.f32.gmra.mxu0 %v4656
    %v4724 = vpop.f32.mrf.mxu0
    %v4725 = vadd.f32 0.0, %v4724
    %4726 = vdwg.mxu0
    %4727 = vmatpush.msra.mxu0 0.0
    %4728 = vmatpush.msra.mxu0 0.0
    %4729 = vmatpush.msra.mxu0 0.0
    %4730 = vmatpush.msra.mxu0 0.0
    %4731 = vmatpush.msra.mxu0 %v4644
    %4732 = vmatpush.msra.mxu0 %v4636
    %4733 = vmatpush.msra.mxu0 %v4628
    %4734 = vmatpush.msra.mxu0 %v4620
    %4735 = vmatpush.msra.mxu0 %v4612
    %4736 = vmatpush.msra.mxu0 %v4604
    %4737 = vmatpush.msra.mxu0 %v4596
    %4738 = vmatpush.msra.mxu0 %v4588
    %4739 = vmatpush.msra.mxu0 %v4580
    %4740 = vmatpush.msra.mxu0 %v4572
    %4741 = vmatpush.msra.mxu0 %v4564
    %4742 = vmatpush.msra.mxu0 %v4556
    %4743 = vmatmul.f32.gmra.mxu0 %v4654
    %v4744 = vpop.f32.mrf.mxu0
    %v4745 = vadd.f32 0.0, %v4744
    %4746 = vmatmul.f32.gmra.mxu0 %v4656
    %v4747 = vpop.f32.mrf.mxu0
    %v4748 = vadd.f32 0.0, %v4747
    %4749 = vdwg.mxu0
    %4750 = vmatpush.msra.mxu0 0.0
    %4751 = vmatpush.msra.mxu0 0.0
    %4752 = vmatpush.msra.mxu0 0.0
    %4753 = vmatpush.msra.mxu0 0.0
    %4754 = vmatpush.msra.mxu0 %v4645
    %4755 = vmatpush.msra.mxu0 %v4637
    %4756 = vmatpush.msra.mxu0 %v4629
    %4757 = vmatpush.msra.mxu0 %v4621
    %4758 = vmatpush.msra.mxu0 %v4613
    %4759 = vmatpush.msra.mxu0 %v4605
    %4760 = vmatpush.msra.mxu0 %v4597
    %4761 = vmatpush.msra.mxu0 %v4589
    %4762 = vmatpush.msra.mxu0 %v4581
    %4763 = vmatpush.msra.mxu0 %v4573
    %4764 = vmatpush.msra.mxu0 %v4565
    %4765 = vmatpush.msra.mxu0 %v4557
    %4766 = vmatmul.f32.gmra.mxu0 %v4654
    %v4767 = vpop.f32.mrf.mxu0
    %v4768 = vadd.f32 0.0, %v4767
    %4769 = vmatmul.f32.gmra.mxu0 %v4656
    %v4770 = vpop.f32.mrf.mxu0
    %v4771 = vadd.f32 0.0, %v4770
    %4772 = vdwg.mxu0
    %4773 = vmatpush.msra.mxu0 0.0
    %4774 = vmatpush.msra.mxu0 0.0
    %4775 = vmatpush.msra.mxu0 0.0
    %4776 = vmatpush.msra.mxu0 0.0
    %4777 = vmatpush.msra.mxu0 %v4646
    %4778 = vmatpush.msra.mxu0 %v4638
    %4779 = vmatpush.msra.mxu0 %v4630
    %4780 = vmatpush.msra.mxu0 %v4622
    %4781 = vmatpush.msra.mxu0 %v4614
    %4782 = vmatpush.msra.mxu0 %v4606
    %4783 = vmatpush.msra.mxu0 %v4598
    %4784 = vmatpush.msra.mxu0 %v4590
    %4785 = vmatpush.msra.mxu0 %v4582
    %4786 = vmatpush.msra.mxu0 %v4574
    %4787 = vmatpush.msra.mxu0 %v4566
    %4788 = vmatpush.msra.mxu0 %v4558
    %4789 = vmatmul.f32.gmra.mxu0 %v4654
    %v4790 = vpop.f32.mrf.mxu0
    %v4791 = vadd.f32 0.0, %v4790
    %4792 = vmatmul.f32.gmra.mxu0 %v4656
    %v4793 = vpop.f32.mrf.mxu0
    %v4794 = vadd.f32 0.0, %v4793
    %4795 = vdwg.mxu0
    %4796 = vmatpush.msra.mxu0 0.0
    %4797 = vmatpush.msra.mxu0 0.0
    %4798 = vmatpush.msra.mxu0 0.0
    %4799 = vmatpush.msra.mxu0 0.0
    %4800 = vmatpush.msra.mxu0 %v4647
    %4801 = vmatpush.msra.mxu0 %v4639
    %4802 = vmatpush.msra.mxu0 %v4631
    %4803 = vmatpush.msra.mxu0 %v4623
    %4804 = vmatpush.msra.mxu0 %v4615
    %4805 = vmatpush.msra.mxu0 %v4607
    %4806 = vmatpush.msra.mxu0 %v4599
    %4807 = vmatpush.msra.mxu0 %v4591
    %4808 = vmatpush.msra.mxu0 %v4583
    %4809 = vmatpush.msra.mxu0 %v4575
    %4810 = vmatpush.msra.mxu0 %v4567
    %4811 = vmatpush.msra.mxu0 %v4559
    %4812 = vmatmul.f32.gmra.mxu0 %v4654
    %v4813 = vpop.f32.mrf.mxu0
    %v4814 = vadd.f32 0.0, %v4813
    %4815 = vmatmul.f32.gmra.mxu0 %v4656
    %v4816 = vpop.f32.mrf.mxu0
    %v4817 = vadd.f32 0.0, %v4816
    %4818 = vdwg.mxu0
    %4819 = vmatpush.msra.mxu0 0.0
    %4820 = vmatpush.msra.mxu0 0.0
    %4821 = vmatpush.msra.mxu0 0.0
    %4822 = vmatpush.msra.mxu0 0.0
    %4823 = vmatpush.msra.mxu0 %v4648
    %4824 = vmatpush.msra.mxu0 %v4640
    %4825 = vmatpush.msra.mxu0 %v4632
    %4826 = vmatpush.msra.mxu0 %v4624
    %4827 = vmatpush.msra.mxu0 %v4616
    %4828 = vmatpush.msra.mxu0 %v4608
    %4829 = vmatpush.msra.mxu0 %v4600
    %4830 = vmatpush.msra.mxu0 %v4592
    %4831 = vmatpush.msra.mxu0 %v4584
    %4832 = vmatpush.msra.mxu0 %v4576
    %4833 = vmatpush.msra.mxu0 %v4568
    %4834 = vmatpush.msra.mxu0 %v4560
    %4835 = vmatmul.f32.gmra.mxu0 %v4654
    %v4836 = vpop.f32.mrf.mxu0
    %v4837 = vadd.f32 0.0, %v4836
    %4838 = vmatmul.f32.gmra.mxu0 %v4656
    %v4839 = vpop.f32.mrf.mxu0
    %v4840 = vadd.f32 0.0, %v4839
    %4841 = vdwg.mxu0
    %v4842 = vadd.f32 %v4387, %v4676
    %v4843 = vadd.f32 %v4410, %v4699
    %v4844 = vadd.f32 %v4433, %v4722
    %v4845 = vadd.f32 %v4456, %v4745
    %v4846 = vadd.f32 %v4479, %v4768
    %v4847 = vadd.f32 %v4502, %v4791
    %v4848 = vadd.f32 %v4525, %v4814
    %v4849 = vadd.f32 %v4548, %v4837
    %v4850 = vadd.f32 %v4390, %v4679
    %v4851 = vadd.f32 %v4413, %v4702
    %v4852 = vadd.f32 %v4436, %v4725
    %v4853 = vadd.f32 %v4459, %v4748
    %v4854 = vadd.f32 %v4482, %v4771
    %v4855 = vadd.f32 %v4505, %v4794
    %v4856 = vadd.f32 %v4528, %v4817
    %v4857 = vadd.f32 %v4551, %v4840
    %v4858 = vld [vmem:[%s1010] sm:$0xff]
    %v4859 = vld [vmem:[%s1010 + $0x8] sm:$0xff]
    %v4860 = vld [vmem:[%s1010 + $0x10] sm:$0xff]
    %v4861 = vld [vmem:[%s1010 + $0x18] sm:$0xff]
    %v4862 = vld [vmem:[%s1010 + $0x20] sm:$0xff]
    %v4863 = vld [vmem:[%s1010 + $0x28] sm:$0xff]
    %v4864 = vld [vmem:[%s1010 + $0x30] sm:$0xff]
    %v4865 = vld [vmem:[%s1010 + $0x38] sm:$0xff]
    %v4866 = vld [vmem:[%s1010 + $0x40] sm:$0xff]
    %v4867 = vld [vmem:[%s1010 + $0x48] sm:$0xff]
    %v4868 = vld [vmem:[%s1010 + $0x50] sm:$0xff]
    %v4869 = vld [vmem:[%s1010 + $0x58] sm:$0xff]
    %v4870 = vld [vmem:[%s1010 + $0x60] sm:$0xff]
    %v4871 = vld [vmem:[%s1010 + $0x68] sm:$0xff]
    %v4872 = vld [vmem:[%s1010 + $0x70] sm:$0xff]
    %v4873 = vld [vmem:[%s1010 + $0x78] sm:$0xff]
    %v4874 = vld [vmem:[%s1010 + $0x80] sm:$0xff]
    %v4875 = vld [vmem:[%s1010 + $0x88] sm:$0xff]
    %v4876 = vld [vmem:[%s1010 + $0x90] sm:$0xff]
    %v4877 = vld [vmem:[%s1010 + $0x98] sm:$0xff]
    %v4878 = vld [vmem:[%s1010 + $0xa0] sm:$0xff]
    %v4879 = vld [vmem:[%s1010 + $0xa8] sm:$0xff]
    %v4880 = vld [vmem:[%s1010 + $0xb0] sm:$0xff]
    %v4881 = vld [vmem:[%s1010 + $0xb8] sm:$0xff]
    %v4882 = vld [vmem:[%s1010 + $0xc0] sm:$0xff]
    %v4883 = vld [vmem:[%s1010 + $0xc8] sm:$0xff]
    %v4884 = vld [vmem:[%s1010 + $0xd0] sm:$0xff]
    %v4885 = vld [vmem:[%s1010 + $0xd8] sm:$0xff]
    %v4886 = vld [vmem:[%s1010 + $0xe0] sm:$0xff]
    %v4887 = vld [vmem:[%s1010 + $0xe8] sm:$0xff]
    %v4888 = vld [vmem:[%s1010 + $0xf0] sm:$0xff]
    %v4889 = vld [vmem:[%s1010 + $0xf8] sm:$0xff]
    %v4890 = vld [vmem:[%s1010 + $0x100] sm:$0xff]
    %v4891 = vld [vmem:[%s1010 + $0x108] sm:$0xff]
    %v4892 = vld [vmem:[%s1010 + $0x110] sm:$0xff]
    %v4893 = vld [vmem:[%s1010 + $0x118] sm:$0xff]
    %v4894 = vld [vmem:[%s1010 + $0x120] sm:$0xff]
    %v4895 = vld [vmem:[%s1010 + $0x128] sm:$0xff]
    %v4896 = vld [vmem:[%s1010 + $0x130] sm:$0xff]
    %v4897 = vld [vmem:[%s1010 + $0x138] sm:$0xff]
    %v4898 = vld [vmem:[%s1010 + $0x140] sm:$0xff]
    %v4899 = vld [vmem:[%s1010 + $0x148] sm:$0xff]
    %v4900 = vld [vmem:[%s1010 + $0x150] sm:$0xff]
    %v4901 = vld [vmem:[%s1010 + $0x158] sm:$0xff]
    %v4902 = vld [vmem:[%s1010 + $0x160] sm:$0xff]
    %v4903 = vld [vmem:[%s1010 + $0x168] sm:$0xff]
    %v4904 = vld [vmem:[%s1010 + $0x170] sm:$0xff]
    %v4905 = vld [vmem:[%s1010 + $0x178] sm:$0xff]
    %v4906 = vld [vmem:[%s1010 + $0x180] sm:$0xff]
    %v4907 = vld [vmem:[%s1010 + $0x188] sm:$0xff]
    %v4908 = vld [vmem:[%s1010 + $0x190] sm:$0xff]
    %v4909 = vld [vmem:[%s1010 + $0x198] sm:$0xff]
    %v4910 = vld [vmem:[%s1010 + $0x1a0] sm:$0xff]
    %v4911 = vld [vmem:[%s1010 + $0x1a8] sm:$0xff]
    %v4912 = vld [vmem:[%s1010 + $0x1b0] sm:$0xff]
    %v4913 = vld [vmem:[%s1010 + $0x1b8] sm:$0xff]
    %v4914 = vld [vmem:[%s1010 + $0x1c0] sm:$0xff]
    %v4915 = vld [vmem:[%s1010 + $0x1c8] sm:$0xff]
    %v4916 = vld [vmem:[%s1010 + $0x1d0] sm:$0xff]
    %v4917 = vld [vmem:[%s1010 + $0x1d8] sm:$0xff]
    %v4918 = vld [vmem:[%s1010 + $0x1e0] sm:$0xff]
    %v4919 = vld [vmem:[%s1010 + $0x1e8] sm:$0xff]
    %v4920 = vld [vmem:[%s1010 + $0x1f0] sm:$0xff]
    %v4921 = vld [vmem:[%s1010 + $0x1f8] sm:$0xff]
    %v4922 = vld [vmem:[%s1010 + $0x200] sm:$0xff]
    %v4923 = vld [vmem:[%s1010 + $0x208] sm:$0xff]
    %v4924 = vld [vmem:[%s1010 + $0x210] sm:$0xff]
    %v4925 = vld [vmem:[%s1010 + $0x218] sm:$0xff]
    %v4926 = vld [vmem:[%s1010 + $0x220] sm:$0xff]
    %v4927 = vld [vmem:[%s1010 + $0x228] sm:$0xff]
    %v4928 = vld [vmem:[%s1010 + $0x230] sm:$0xff]
    %v4929 = vld [vmem:[%s1010 + $0x238] sm:$0xff]
    %v4930 = vld [vmem:[%s1010 + $0x240] sm:$0xff]
    %v4931 = vld [vmem:[%s1010 + $0x248] sm:$0xff]
    %v4932 = vld [vmem:[%s1010 + $0x250] sm:$0xff]
    %v4933 = vld [vmem:[%s1010 + $0x258] sm:$0xff]
    %v4934 = vld [vmem:[%s1010 + $0x260] sm:$0xff]
    %v4935 = vld [vmem:[%s1010 + $0x268] sm:$0xff]
    %v4936 = vld [vmem:[%s1010 + $0x270] sm:$0xff]
    %v4937 = vld [vmem:[%s1010 + $0x278] sm:$0xff]
    %v4938 = vld [vmem:[%s1010 + $0x280] sm:$0xff]
    %v4939 = vld [vmem:[%s1010 + $0x288] sm:$0xff]
    %v4940 = vld [vmem:[%s1010 + $0x290] sm:$0xff]
    %v4941 = vld [vmem:[%s1010 + $0x298] sm:$0xff]
    %v4942 = vld [vmem:[%s1010 + $0x2a0] sm:$0xff]
    %v4943 = vld [vmem:[%s1010 + $0x2a8] sm:$0xff]
    %v4944 = vld [vmem:[%s1010 + $0x2b0] sm:$0xff]
    %v4945 = vld [vmem:[%s1010 + $0x2b8] sm:$0xff]
    %v4946 = vld [vmem:[%s1010 + $0x2c0] sm:$0xff]
    %v4947 = vld [vmem:[%s1010 + $0x2c8] sm:$0xff]
    %v4948 = vld [vmem:[%s1010 + $0x2d0] sm:$0xff]
    %v4949 = vld [vmem:[%s1010 + $0x2d8] sm:$0xff]
    %v4950 = vld [vmem:[%s1010 + $0x2e0] sm:$0xff]
    %v4951 = vld [vmem:[%s1010 + $0x2e8] sm:$0xff]
    %v4952 = vld [vmem:[%s1010 + $0x2f0] sm:$0xff]
    %v4953 = vld [vmem:[%s1010 + $0x2f8] sm:$0xff]
    %v4954 = vrot.slane %v3974, 3
    %v4955 = vrot.slane %v3975, 3
    %v4956 = vsel %vm1107, %v4954, %v4955
    %v4957 = vrot.slane %v3976, 3
    %v4958 = vsel %vm1107, %v4955, %v4957
    %v4959 = vsel %vm326, %v4956, 0
    %v4961 = vsel %vm326, %v4958, 0
    %4963 = vmatpush.msra.mxu0 0.0
    %4964 = vmatpush.msra.mxu0 0.0
    %4965 = vmatpush.msra.mxu0 0.0
    %4966 = vmatpush.msra.mxu0 0.0
    %4967 = vmatpush.msra.mxu0 %v4946
    %4968 = vmatpush.msra.mxu0 %v4938
    %4969 = vmatpush.msra.mxu0 %v4930
    %4970 = vmatpush.msra.mxu0 %v4922
    %4971 = vmatpush.msra.mxu0 %v4914
    %4972 = vmatpush.msra.mxu0 %v4906
    %4973 = vmatpush.msra.mxu0 %v4898
    %4974 = vmatpush.msra.mxu0 %v4890
    %4975 = vmatpush.msra.mxu0 %v4882
    %4976 = vmatpush.msra.mxu0 %v4874
    %4977 = vmatpush.msra.mxu0 %v4866
    %4978 = vmatpush.msra.mxu0 %v4858
    %4979 = vmatmul.f32.gmra.mxu0 %v4959
    %v4980 = vpop.f32.mrf.mxu0
    %v4981 = vadd.f32 0.0, %v4980
    %4982 = vmatmul.f32.gmra.mxu0 %v4961
    %v4983 = vpop.f32.mrf.mxu0
    %v4984 = vadd.f32 0.0, %v4983
    %4985 = vdwg.mxu0
    %4986 = vmatpush.msra.mxu0 0.0
    %4987 = vmatpush.msra.mxu0 0.0
    %4988 = vmatpush.msra.mxu0 0.0
    %4989 = vmatpush.msra.mxu0 0.0
    %4990 = vmatpush.msra.mxu0 %v4947
    %4991 = vmatpush.msra.mxu0 %v4939
    %4992 = vmatpush.msra.mxu0 %v4931
    %4993 = vmatpush.msra.mxu0 %v4923
    %4994 = vmatpush.msra.mxu0 %v4915
    %4995 = vmatpush.msra.mxu0 %v4907
    %4996 = vmatpush.msra.mxu0 %v4899
    %4997 = vmatpush.msra.mxu0 %v4891
    %4998 = vmatpush.msra.mxu0 %v4883
    %4999 = vmatpush.msra.mxu0 %v4875
    %5000 = vmatpush.msra.mxu0 %v4867
    %5001 = vmatpush.msra.mxu0 %v4859
    %5002 = vmatmul.f32.gmra.mxu0 %v4959
    %v5003 = vpop.f32.mrf.mxu0
    %v5004 = vadd.f32 0.0, %v5003
    %5005 = vmatmul.f32.gmra.mxu0 %v4961
    %v5006 = vpop.f32.mrf.mxu0
    %v5007 = vadd.f32 0.0, %v5006
    %5008 = vdwg.mxu0
    %5009 = vmatpush.msra.mxu0 0.0
    %5010 = vmatpush.msra.mxu0 0.0
    %5011 = vmatpush.msra.mxu0 0.0
    %5012 = vmatpush.msra.mxu0 0.0
    %5013 = vmatpush.msra.mxu0 %v4948
    %5014 = vmatpush.msra.mxu0 %v4940
    %5015 = vmatpush.msra.mxu0 %v4932
    %5016 = vmatpush.msra.mxu0 %v4924
    %5017 = vmatpush.msra.mxu0 %v4916
    %5018 = vmatpush.msra.mxu0 %v4908
    %5019 = vmatpush.msra.mxu0 %v4900
    %5020 = vmatpush.msra.mxu0 %v4892
    %5021 = vmatpush.msra.mxu0 %v4884
    %5022 = vmatpush.msra.mxu0 %v4876
    %5023 = vmatpush.msra.mxu0 %v4868
    %5024 = vmatpush.msra.mxu0 %v4860
    %5025 = vmatmul.f32.gmra.mxu0 %v4959
    %v5026 = vpop.f32.mrf.mxu0
    %v5027 = vadd.f32 0.0, %v5026
    %5028 = vmatmul.f32.gmra.mxu0 %v4961
    %v5029 = vpop.f32.mrf.mxu0
    %v5030 = vadd.f32 0.0, %v5029
    %5031 = vdwg.mxu0
    %5032 = vmatpush.msra.mxu0 0.0
    %5033 = vmatpush.msra.mxu0 0.0
    %5034 = vmatpush.msra.mxu0 0.0
    %5035 = vmatpush.msra.mxu0 0.0
    %5036 = vmatpush.msra.mxu0 %v4949
    %5037 = vmatpush.msra.mxu0 %v4941
    %5038 = vmatpush.msra.mxu0 %v4933
    %5039 = vmatpush.msra.mxu0 %v4925
    %5040 = vmatpush.msra.mxu0 %v4917
    %5041 = vmatpush.msra.mxu0 %v4909
    %5042 = vmatpush.msra.mxu0 %v4901
    %5043 = vmatpush.msra.mxu0 %v4893
    %5044 = vmatpush.msra.mxu0 %v4885
    %5045 = vmatpush.msra.mxu0 %v4877
    %5046 = vmatpush.msra.mxu0 %v4869
    %5047 = vmatpush.msra.mxu0 %v4861
    %5048 = vmatmul.f32.gmra.mxu0 %v4959
    %v5049 = vpop.f32.mrf.mxu0
    %v5050 = vadd.f32 0.0, %v5049
    %5051 = vmatmul.f32.gmra.mxu0 %v4961
    %v5052 = vpop.f32.mrf.mxu0
    %v5053 = vadd.f32 0.0, %v5052
    %5054 = vdwg.mxu0
    %5055 = vmatpush.msra.mxu0 0.0
    %5056 = vmatpush.msra.mxu0 0.0
    %5057 = vmatpush.msra.mxu0 0.0
    %5058 = vmatpush.msra.mxu0 0.0
    %5059 = vmatpush.msra.mxu0 %v4950
    %5060 = vmatpush.msra.mxu0 %v4942
    %5061 = vmatpush.msra.mxu0 %v4934
    %5062 = vmatpush.msra.mxu0 %v4926
    %5063 = vmatpush.msra.mxu0 %v4918
    %5064 = vmatpush.msra.mxu0 %v4910
    %5065 = vmatpush.msra.mxu0 %v4902
    %5066 = vmatpush.msra.mxu0 %v4894
    %5067 = vmatpush.msra.mxu0 %v4886
    %5068 = vmatpush.msra.mxu0 %v4878
    %5069 = vmatpush.msra.mxu0 %v4870
    %5070 = vmatpush.msra.mxu0 %v4862
    %5071 = vmatmul.f32.gmra.mxu0 %v4959
    %v5072 = vpop.f32.mrf.mxu0
    %v5073 = vadd.f32 0.0, %v5072
    %5074 = vmatmul.f32.gmra.mxu0 %v4961
    %v5075 = vpop.f32.mrf.mxu0
    %v5076 = vadd.f32 0.0, %v5075
    %5077 = vdwg.mxu0
    %5078 = vmatpush.msra.mxu0 0.0
    %5079 = vmatpush.msra.mxu0 0.0
    %5080 = vmatpush.msra.mxu0 0.0
    %5081 = vmatpush.msra.mxu0 0.0
    %5082 = vmatpush.msra.mxu0 %v4951
    %5083 = vmatpush.msra.mxu0 %v4943
    %5084 = vmatpush.msra.mxu0 %v4935
    %5085 = vmatpush.msra.mxu0 %v4927
    %5086 = vmatpush.msra.mxu0 %v4919
    %5087 = vmatpush.msra.mxu0 %v4911
    %5088 = vmatpush.msra.mxu0 %v4903
    %5089 = vmatpush.msra.mxu0 %v4895
    %5090 = vmatpush.msra.mxu0 %v4887
    %5091 = vmatpush.msra.mxu0 %v4879
    %5092 = vmatpush.msra.mxu0 %v4871
    %5093 = vmatpush.msra.mxu0 %v4863
    %5094 = vmatmul.f32.gmra.mxu0 %v4959
    %v5095 = vpop.f32.mrf.mxu0
    %v5096 = vadd.f32 0.0, %v5095
    %5097 = vmatmul.f32.gmra.mxu0 %v4961
    %v5098 = vpop.f32.mrf.mxu0
    %v5099 = vadd.f32 0.0, %v5098
    %5100 = vdwg.mxu0
    %5101 = vmatpush.msra.mxu0 0.0
    %5102 = vmatpush.msra.mxu0 0.0
    %5103 = vmatpush.msra.mxu0 0.0
    %5104 = vmatpush.msra.mxu0 0.0
    %5105 = vmatpush.msra.mxu0 %v4952
    %5106 = vmatpush.msra.mxu0 %v4944
    %5107 = vmatpush.msra.mxu0 %v4936
    %5108 = vmatpush.msra.mxu0 %v4928
    %5109 = vmatpush.msra.mxu0 %v4920
    %5110 = vmatpush.msra.mxu0 %v4912
    %5111 = vmatpush.msra.mxu0 %v4904
    %5112 = vmatpush.msra.mxu0 %v4896
    %5113 = vmatpush.msra.mxu0 %v4888
    %5114 = vmatpush.msra.mxu0 %v4880
    %5115 = vmatpush.msra.mxu0 %v4872
    %5116 = vmatpush.msra.mxu0 %v4864
    %5117 = vmatmul.f32.gmra.mxu0 %v4959
    %v5118 = vpop.f32.mrf.mxu0
    %v5119 = vadd.f32 0.0, %v5118
    %5120 = vmatmul.f32.gmra.mxu0 %v4961
    %v5121 = vpop.f32.mrf.mxu0
    %v5122 = vadd.f32 0.0, %v5121
    %5123 = vdwg.mxu0
    %5124 = vmatpush.msra.mxu0 0.0
    %5125 = vmatpush.msra.mxu0 0.0
    %5126 = vmatpush.msra.mxu0 0.0
    %5127 = vmatpush.msra.mxu0 0.0
    %5128 = vmatpush.msra.mxu0 %v4953
    %5129 = vmatpush.msra.mxu0 %v4945
    %5130 = vmatpush.msra.mxu0 %v4937
    %5131 = vmatpush.msra.mxu0 %v4929
    %5132 = vmatpush.msra.mxu0 %v4921
    %5133 = vmatpush.msra.mxu0 %v4913
    %5134 = vmatpush.msra.mxu0 %v4905
    %5135 = vmatpush.msra.mxu0 %v4897
    %5136 = vmatpush.msra.mxu0 %v4889
    %5137 = vmatpush.msra.mxu0 %v4881
    %5138 = vmatpush.msra.mxu0 %v4873
    %5139 = vmatpush.msra.mxu0 %v4865
    %5140 = vmatmul.f32.gmra.mxu0 %v4959
    %v5141 = vpop.f32.mrf.mxu0
    %v5142 = vadd.f32 0.0, %v5141
    %5143 = vmatmul.f32.gmra.mxu0 %v4961
    %v5144 = vpop.f32.mrf.mxu0
    %v5145 = vadd.f32 0.0, %v5144
    %5146 = vdwg.mxu0
    %v5147 = vadd.f32 %v4842, %v4981
    %v5148 = vadd.f32 %v4843, %v5004
    %v5149 = vadd.f32 %v4844, %v5027
    %v5150 = vadd.f32 %v4845, %v5050
    %v5151 = vadd.f32 %v4846, %v5073
    %v5152 = vadd.f32 %v4847, %v5096
    %v5153 = vadd.f32 %v4848, %v5119
    %v5154 = vadd.f32 %v4849, %v5142
    %v5155 = vadd.f32 %v4850, %v4984
    %v5156 = vadd.f32 %v4851, %v5007
    %v5157 = vadd.f32 %v4852, %v5030
    %v5158 = vadd.f32 %v4853, %v5053
    %v5159 = vadd.f32 %v4854, %v5076
    %v5160 = vadd.f32 %v4855, %v5099
    %v5161 = vadd.f32 %v4856, %v5122
    %v5162 = vadd.f32 %v4857, %v5145
    %v5163 = vld [vmem:[%s1317] sm:$0xff]
    %v5164 = vld [vmem:[%s1317 + $0x8] sm:$0xff]
    %v5165 = vld [vmem:[%s1317 + $0x10] sm:$0xff]
    %v5166 = vld [vmem:[%s1317 + $0x18] sm:$0xff]
    %v5167 = vld [vmem:[%s1317 + $0x20] sm:$0xff]
    %v5168 = vld [vmem:[%s1317 + $0x28] sm:$0xff]
    %v5169 = vld [vmem:[%s1317 + $0x30] sm:$0xff]
    %v5170 = vld [vmem:[%s1317 + $0x38] sm:$0xff]
    %v5171 = vld [vmem:[%s1317 + $0x40] sm:$0xff]
    %v5172 = vld [vmem:[%s1317 + $0x48] sm:$0xff]
    %v5173 = vld [vmem:[%s1317 + $0x50] sm:$0xff]
    %v5174 = vld [vmem:[%s1317 + $0x58] sm:$0xff]
    %v5175 = vld [vmem:[%s1317 + $0x60] sm:$0xff]
    %v5176 = vld [vmem:[%s1317 + $0x68] sm:$0xff]
    %v5177 = vld [vmem:[%s1317 + $0x70] sm:$0xff]
    %v5178 = vld [vmem:[%s1317 + $0x78] sm:$0xff]
    %v5179 = vld [vmem:[%s1317 + $0x80] sm:$0xff]
    %v5180 = vld [vmem:[%s1317 + $0x88] sm:$0xff]
    %v5181 = vld [vmem:[%s1317 + $0x90] sm:$0xff]
    %v5182 = vld [vmem:[%s1317 + $0x98] sm:$0xff]
    %v5183 = vld [vmem:[%s1317 + $0xa0] sm:$0xff]
    %v5184 = vld [vmem:[%s1317 + $0xa8] sm:$0xff]
    %v5185 = vld [vmem:[%s1317 + $0xb0] sm:$0xff]
    %v5186 = vld [vmem:[%s1317 + $0xb8] sm:$0xff]
    %v5187 = vld [vmem:[%s1317 + $0xc0] sm:$0xff]
    %v5188 = vld [vmem:[%s1317 + $0xc8] sm:$0xff]
    %v5189 = vld [vmem:[%s1317 + $0xd0] sm:$0xff]
    %v5190 = vld [vmem:[%s1317 + $0xd8] sm:$0xff]
    %v5191 = vld [vmem:[%s1317 + $0xe0] sm:$0xff]
    %v5192 = vld [vmem:[%s1317 + $0xe8] sm:$0xff]
    %v5193 = vld [vmem:[%s1317 + $0xf0] sm:$0xff]
    %v5194 = vld [vmem:[%s1317 + $0xf8] sm:$0xff]
    %v5195 = vld [vmem:[%s1317 + $0x100] sm:$0xff]
    %v5196 = vld [vmem:[%s1317 + $0x108] sm:$0xff]
    %v5197 = vld [vmem:[%s1317 + $0x110] sm:$0xff]
    %v5198 = vld [vmem:[%s1317 + $0x118] sm:$0xff]
    %v5199 = vld [vmem:[%s1317 + $0x120] sm:$0xff]
    %v5200 = vld [vmem:[%s1317 + $0x128] sm:$0xff]
    %v5201 = vld [vmem:[%s1317 + $0x130] sm:$0xff]
    %v5202 = vld [vmem:[%s1317 + $0x138] sm:$0xff]
    %v5203 = vld [vmem:[%s1317 + $0x140] sm:$0xff]
    %v5204 = vld [vmem:[%s1317 + $0x148] sm:$0xff]
    %v5205 = vld [vmem:[%s1317 + $0x150] sm:$0xff]
    %v5206 = vld [vmem:[%s1317 + $0x158] sm:$0xff]
    %v5207 = vld [vmem:[%s1317 + $0x160] sm:$0xff]
    %v5208 = vld [vmem:[%s1317 + $0x168] sm:$0xff]
    %v5209 = vld [vmem:[%s1317 + $0x170] sm:$0xff]
    %v5210 = vld [vmem:[%s1317 + $0x178] sm:$0xff]
    %v5211 = vld [vmem:[%s1317 + $0x180] sm:$0xff]
    %v5212 = vld [vmem:[%s1317 + $0x188] sm:$0xff]
    %v5213 = vld [vmem:[%s1317 + $0x190] sm:$0xff]
    %v5214 = vld [vmem:[%s1317 + $0x198] sm:$0xff]
    %v5215 = vld [vmem:[%s1317 + $0x1a0] sm:$0xff]
    %v5216 = vld [vmem:[%s1317 + $0x1a8] sm:$0xff]
    %v5217 = vld [vmem:[%s1317 + $0x1b0] sm:$0xff]
    %v5218 = vld [vmem:[%s1317 + $0x1b8] sm:$0xff]
    %v5219 = vld [vmem:[%s1317 + $0x1c0] sm:$0xff]
    %v5220 = vld [vmem:[%s1317 + $0x1c8] sm:$0xff]
    %v5221 = vld [vmem:[%s1317 + $0x1d0] sm:$0xff]
    %v5222 = vld [vmem:[%s1317 + $0x1d8] sm:$0xff]
    %v5223 = vld [vmem:[%s1317 + $0x1e0] sm:$0xff]
    %v5224 = vld [vmem:[%s1317 + $0x1e8] sm:$0xff]
    %v5225 = vld [vmem:[%s1317 + $0x1f0] sm:$0xff]
    %v5226 = vld [vmem:[%s1317 + $0x1f8] sm:$0xff]
    %v5227 = vld [vmem:[%s1317 + $0x200] sm:$0xff]
    %v5228 = vld [vmem:[%s1317 + $0x208] sm:$0xff]
    %v5229 = vld [vmem:[%s1317 + $0x210] sm:$0xff]
    %v5230 = vld [vmem:[%s1317 + $0x218] sm:$0xff]
    %v5231 = vld [vmem:[%s1317 + $0x220] sm:$0xff]
    %v5232 = vld [vmem:[%s1317 + $0x228] sm:$0xff]
    %v5233 = vld [vmem:[%s1317 + $0x230] sm:$0xff]
    %v5234 = vld [vmem:[%s1317 + $0x238] sm:$0xff]
    %v5235 = vld [vmem:[%s1317 + $0x240] sm:$0xff]
    %v5236 = vld [vmem:[%s1317 + $0x248] sm:$0xff]
    %v5237 = vld [vmem:[%s1317 + $0x250] sm:$0xff]
    %v5238 = vld [vmem:[%s1317 + $0x258] sm:$0xff]
    %v5239 = vld [vmem:[%s1317 + $0x260] sm:$0xff]
    %v5240 = vld [vmem:[%s1317 + $0x268] sm:$0xff]
    %v5241 = vld [vmem:[%s1317 + $0x270] sm:$0xff]
    %v5242 = vld [vmem:[%s1317 + $0x278] sm:$0xff]
    %v5243 = vld [vmem:[%s1317 + $0x280] sm:$0xff]
    %v5244 = vld [vmem:[%s1317 + $0x288] sm:$0xff]
    %v5245 = vld [vmem:[%s1317 + $0x290] sm:$0xff]
    %v5246 = vld [vmem:[%s1317 + $0x298] sm:$0xff]
    %v5247 = vld [vmem:[%s1317 + $0x2a0] sm:$0xff]
    %v5248 = vld [vmem:[%s1317 + $0x2a8] sm:$0xff]
    %v5249 = vld [vmem:[%s1317 + $0x2b0] sm:$0xff]
    %v5250 = vld [vmem:[%s1317 + $0x2b8] sm:$0xff]
    %v5251 = vld [vmem:[%s1317 + $0x2c0] sm:$0xff]
    %v5252 = vld [vmem:[%s1317 + $0x2c8] sm:$0xff]
    %v5253 = vld [vmem:[%s1317 + $0x2d0] sm:$0xff]
    %v5254 = vld [vmem:[%s1317 + $0x2d8] sm:$0xff]
    %v5255 = vld [vmem:[%s1317 + $0x2e0] sm:$0xff]
    %v5256 = vld [vmem:[%s1317 + $0x2e8] sm:$0xff]
    %v5257 = vld [vmem:[%s1317 + $0x2f0] sm:$0xff]
    %v5258 = vld [vmem:[%s1317 + $0x2f8] sm:$0xff]
    %v5259 = vrot.slane %v3974, 4
    %v5260 = vrot.slane %v3975, 4
    %v5261 = vsel %vm1414, %v5259, %v5260
    %v5262 = vrot.slane %v3976, 4
    %v5263 = vsel %vm1414, %v5260, %v5262
    %v5264 = vsel %vm326, %v5261, 0
    %v5266 = vsel %vm326, %v5263, 0
    %5268 = vmatpush.msra.mxu0 0.0
    %5269 = vmatpush.msra.mxu0 0.0
    %5270 = vmatpush.msra.mxu0 0.0
    %5271 = vmatpush.msra.mxu0 0.0
    %5272 = vmatpush.msra.mxu0 %v5251
    %5273 = vmatpush.msra.mxu0 %v5243
    %5274 = vmatpush.msra.mxu0 %v5235
    %5275 = vmatpush.msra.mxu0 %v5227
    %5276 = vmatpush.msra.mxu0 %v5219
    %5277 = vmatpush.msra.mxu0 %v5211
    %5278 = vmatpush.msra.mxu0 %v5203
    %5279 = vmatpush.msra.mxu0 %v5195
    %5280 = vmatpush.msra.mxu0 %v5187
    %5281 = vmatpush.msra.mxu0 %v5179
    %5282 = vmatpush.msra.mxu0 %v5171
    %5283 = vmatpush.msra.mxu0 %v5163
    %5284 = vmatmul.f32.gmra.mxu0 %v5264
    %v5285 = vpop.f32.mrf.mxu0
    %v5286 = vadd.f32 0.0, %v5285
    %5287 = vmatmul.f32.gmra.mxu0 %v5266
    %v5288 = vpop.f32.mrf.mxu0
    %v5289 = vadd.f32 0.0, %v5288
    %5290 = vdwg.mxu0
    %5291 = vmatpush.msra.mxu0 0.0
    %5292 = vmatpush.msra.mxu0 0.0
    %5293 = vmatpush.msra.mxu0 0.0
    %5294 = vmatpush.msra.mxu0 0.0
    %5295 = vmatpush.msra.mxu0 %v5252
    %5296 = vmatpush.msra.mxu0 %v5244
    %5297 = vmatpush.msra.mxu0 %v5236
    %5298 = vmatpush.msra.mxu0 %v5228
    %5299 = vmatpush.msra.mxu0 %v5220
    %5300 = vmatpush.msra.mxu0 %v5212
    %5301 = vmatpush.msra.mxu0 %v5204
    %5302 = vmatpush.msra.mxu0 %v5196
    %5303 = vmatpush.msra.mxu0 %v5188
    %5304 = vmatpush.msra.mxu0 %v5180
    %5305 = vmatpush.msra.mxu0 %v5172
    %5306 = vmatpush.msra.mxu0 %v5164
    %5307 = vmatmul.f32.gmra.mxu0 %v5264
    %v5308 = vpop.f32.mrf.mxu0
    %v5309 = vadd.f32 0.0, %v5308
    %5310 = vmatmul.f32.gmra.mxu0 %v5266
    %v5311 = vpop.f32.mrf.mxu0
    %v5312 = vadd.f32 0.0, %v5311
    %5313 = vdwg.mxu0
    %5314 = vmatpush.msra.mxu0 0.0
    %5315 = vmatpush.msra.mxu0 0.0
    %5316 = vmatpush.msra.mxu0 0.0
    %5317 = vmatpush.msra.mxu0 0.0
    %5318 = vmatpush.msra.mxu0 %v5253
    %5319 = vmatpush.msra.mxu0 %v5245
    %5320 = vmatpush.msra.mxu0 %v5237
    %5321 = vmatpush.msra.mxu0 %v5229
    %5322 = vmatpush.msra.mxu0 %v5221
    %5323 = vmatpush.msra.mxu0 %v5213
    %5324 = vmatpush.msra.mxu0 %v5205
    %5325 = vmatpush.msra.mxu0 %v5197
    %5326 = vmatpush.msra.mxu0 %v5189
    %5327 = vmatpush.msra.mxu0 %v5181
    %5328 = vmatpush.msra.mxu0 %v5173
    %5329 = vmatpush.msra.mxu0 %v5165
    %5330 = vmatmul.f32.gmra.mxu0 %v5264
    %v5331 = vpop.f32.mrf.mxu0
    %v5332 = vadd.f32 0.0, %v5331
    %5333 = vmatmul.f32.gmra.mxu0 %v5266
    %v5334 = vpop.f32.mrf.mxu0
    %v5335 = vadd.f32 0.0, %v5334
    %5336 = vdwg.mxu0
    %5337 = vmatpush.msra.mxu0 0.0
    %5338 = vmatpush.msra.mxu0 0.0
    %5339 = vmatpush.msra.mxu0 0.0
    %5340 = vmatpush.msra.mxu0 0.0
    %5341 = vmatpush.msra.mxu0 %v5254
    %5342 = vmatpush.msra.mxu0 %v5246
    %5343 = vmatpush.msra.mxu0 %v5238
    %5344 = vmatpush.msra.mxu0 %v5230
    %5345 = vmatpush.msra.mxu0 %v5222
    %5346 = vmatpush.msra.mxu0 %v5214
    %5347 = vmatpush.msra.mxu0 %v5206
    %5348 = vmatpush.msra.mxu0 %v5198
    %5349 = vmatpush.msra.mxu0 %v5190
    %5350 = vmatpush.msra.mxu0 %v5182
    %5351 = vmatpush.msra.mxu0 %v5174
    %5352 = vmatpush.msra.mxu0 %v5166
    %5353 = vmatmul.f32.gmra.mxu0 %v5264
    %v5354 = vpop.f32.mrf.mxu0
    %v5355 = vadd.f32 0.0, %v5354
    %5356 = vmatmul.f32.gmra.mxu0 %v5266
    %v5357 = vpop.f32.mrf.mxu0
    %v5358 = vadd.f32 0.0, %v5357
    %5359 = vdwg.mxu0
    %5360 = vmatpush.msra.mxu0 0.0
    %5361 = vmatpush.msra.mxu0 0.0
    %5362 = vmatpush.msra.mxu0 0.0
    %5363 = vmatpush.msra.mxu0 0.0
    %5364 = vmatpush.msra.mxu0 %v5255
    %5365 = vmatpush.msra.mxu0 %v5247
    %5366 = vmatpush.msra.mxu0 %v5239
    %5367 = vmatpush.msra.mxu0 %v5231
    %5368 = vmatpush.msra.mxu0 %v5223
    %5369 = vmatpush.msra.mxu0 %v5215
    %5370 = vmatpush.msra.mxu0 %v5207
    %5371 = vmatpush.msra.mxu0 %v5199
    %5372 = vmatpush.msra.mxu0 %v5191
    %5373 = vmatpush.msra.mxu0 %v5183
    %5374 = vmatpush.msra.mxu0 %v5175
    %5375 = vmatpush.msra.mxu0 %v5167
    %5376 = vmatmul.f32.gmra.mxu0 %v5264
    %v5377 = vpop.f32.mrf.mxu0
    %v5378 = vadd.f32 0.0, %v5377
    %5379 = vmatmul.f32.gmra.mxu0 %v5266
    %v5380 = vpop.f32.mrf.mxu0
    %v5381 = vadd.f32 0.0, %v5380
    %5382 = vdwg.mxu0
    %5383 = vmatpush.msra.mxu0 0.0
    %5384 = vmatpush.msra.mxu0 0.0
    %5385 = vmatpush.msra.mxu0 0.0
    %5386 = vmatpush.msra.mxu0 0.0
    %5387 = vmatpush.msra.mxu0 %v5256
    %5388 = vmatpush.msra.mxu0 %v5248
    %5389 = vmatpush.msra.mxu0 %v5240
    %5390 = vmatpush.msra.mxu0 %v5232
    %5391 = vmatpush.msra.mxu0 %v5224
    %5392 = vmatpush.msra.mxu0 %v5216
    %5393 = vmatpush.msra.mxu0 %v5208
    %5394 = vmatpush.msra.mxu0 %v5200
    %5395 = vmatpush.msra.mxu0 %v5192
    %5396 = vmatpush.msra.mxu0 %v5184
    %5397 = vmatpush.msra.mxu0 %v5176
    %5398 = vmatpush.msra.mxu0 %v5168
    %5399 = vmatmul.f32.gmra.mxu0 %v5264
    %v5400 = vpop.f32.mrf.mxu0
    %v5401 = vadd.f32 0.0, %v5400
    %5402 = vmatmul.f32.gmra.mxu0 %v5266
    %v5403 = vpop.f32.mrf.mxu0
    %v5404 = vadd.f32 0.0, %v5403
    %5405 = vdwg.mxu0
    %5406 = vmatpush.msra.mxu0 0.0
    %5407 = vmatpush.msra.mxu0 0.0
    %5408 = vmatpush.msra.mxu0 0.0
    %5409 = vmatpush.msra.mxu0 0.0
    %5410 = vmatpush.msra.mxu0 %v5257
    %5411 = vmatpush.msra.mxu0 %v5249
    %5412 = vmatpush.msra.mxu0 %v5241
    %5413 = vmatpush.msra.mxu0 %v5233
    %5414 = vmatpush.msra.mxu0 %v5225
    %5415 = vmatpush.msra.mxu0 %v5217
    %5416 = vmatpush.msra.mxu0 %v5209
    %5417 = vmatpush.msra.mxu0 %v5201
    %5418 = vmatpush.msra.mxu0 %v5193
    %5419 = vmatpush.msra.mxu0 %v5185
    %5420 = vmatpush.msra.mxu0 %v5177
    %5421 = vmatpush.msra.mxu0 %v5169
    %5422 = vmatmul.f32.gmra.mxu0 %v5264
    %v5423 = vpop.f32.mrf.mxu0
    %v5424 = vadd.f32 0.0, %v5423
    %5425 = vmatmul.f32.gmra.mxu0 %v5266
    %v5426 = vpop.f32.mrf.mxu0
    %v5427 = vadd.f32 0.0, %v5426
    %5428 = vdwg.mxu0
    %5429 = vmatpush.msra.mxu0 0.0
    %5430 = vmatpush.msra.mxu0 0.0
    %5431 = vmatpush.msra.mxu0 0.0
    %5432 = vmatpush.msra.mxu0 0.0
    %5433 = vmatpush.msra.mxu0 %v5258
    %5434 = vmatpush.msra.mxu0 %v5250
    %5435 = vmatpush.msra.mxu0 %v5242
    %5436 = vmatpush.msra.mxu0 %v5234
    %5437 = vmatpush.msra.mxu0 %v5226
    %5438 = vmatpush.msra.mxu0 %v5218
    %5439 = vmatpush.msra.mxu0 %v5210
    %5440 = vmatpush.msra.mxu0 %v5202
    %5441 = vmatpush.msra.mxu0 %v5194
    %5442 = vmatpush.msra.mxu0 %v5186
    %5443 = vmatpush.msra.mxu0 %v5178
    %5444 = vmatpush.msra.mxu0 %v5170
    %5445 = vmatmul.f32.gmra.mxu0 %v5264
    %v5446 = vpop.f32.mrf.mxu0
    %v5447 = vadd.f32 0.0, %v5446
    %5448 = vmatmul.f32.gmra.mxu0 %v5266
    %v5449 = vpop.f32.mrf.mxu0
    %v5450 = vadd.f32 0.0, %v5449
    %5451 = vdwg.mxu0
    %v5452 = vadd.f32 %v5147, %v5286
    %v5453 = vadd.f32 %v5148, %v5309
    %v5454 = vadd.f32 %v5149, %v5332
    %v5455 = vadd.f32 %v5150, %v5355
    %v5456 = vadd.f32 %v5151, %v5378
    %v5457 = vadd.f32 %v5152, %v5401
    %v5458 = vadd.f32 %v5153, %v5424
    %v5459 = vadd.f32 %v5154, %v5447
    %v5460 = vadd.f32 %v5155, %v5289
    %v5461 = vadd.f32 %v5156, %v5312
    %v5462 = vadd.f32 %v5157, %v5335
    %v5463 = vadd.f32 %v5158, %v5358
    %v5464 = vadd.f32 %v5159, %v5381
    %v5465 = vadd.f32 %v5160, %v5404
    %v5466 = vadd.f32 %v5161, %v5427
    %v5467 = vadd.f32 %v5162, %v5450
    %v5468 = vld [vmem:[%s1624] sm:$0xff]
    %v5469 = vld [vmem:[%s1624 + $0x8] sm:$0xff]
    %v5470 = vld [vmem:[%s1624 + $0x10] sm:$0xff]
    %v5471 = vld [vmem:[%s1624 + $0x18] sm:$0xff]
    %v5472 = vld [vmem:[%s1624 + $0x20] sm:$0xff]
    %v5473 = vld [vmem:[%s1624 + $0x28] sm:$0xff]
    %v5474 = vld [vmem:[%s1624 + $0x30] sm:$0xff]
    %v5475 = vld [vmem:[%s1624 + $0x38] sm:$0xff]
    %v5476 = vld [vmem:[%s1624 + $0x40] sm:$0xff]
    %v5477 = vld [vmem:[%s1624 + $0x48] sm:$0xff]
    %v5478 = vld [vmem:[%s1624 + $0x50] sm:$0xff]
    %v5479 = vld [vmem:[%s1624 + $0x58] sm:$0xff]
    %v5480 = vld [vmem:[%s1624 + $0x60] sm:$0xff]
    %v5481 = vld [vmem:[%s1624 + $0x68] sm:$0xff]
    %v5482 = vld [vmem:[%s1624 + $0x70] sm:$0xff]
    %v5483 = vld [vmem:[%s1624 + $0x78] sm:$0xff]
    %v5484 = vld [vmem:[%s1624 + $0x80] sm:$0xff]
    %v5485 = vld [vmem:[%s1624 + $0x88] sm:$0xff]
    %v5486 = vld [vmem:[%s1624 + $0x90] sm:$0xff]
    %v5487 = vld [vmem:[%s1624 + $0x98] sm:$0xff]
    %v5488 = vld [vmem:[%s1624 + $0xa0] sm:$0xff]
    %v5489 = vld [vmem:[%s1624 + $0xa8] sm:$0xff]
    %v5490 = vld [vmem:[%s1624 + $0xb0] sm:$0xff]
    %v5491 = vld [vmem:[%s1624 + $0xb8] sm:$0xff]
    %v5492 = vld [vmem:[%s1624 + $0xc0] sm:$0xff]
    %v5493 = vld [vmem:[%s1624 + $0xc8] sm:$0xff]
    %v5494 = vld [vmem:[%s1624 + $0xd0] sm:$0xff]
    %v5495 = vld [vmem:[%s1624 + $0xd8] sm:$0xff]
    %v5496 = vld [vmem:[%s1624 + $0xe0] sm:$0xff]
    %v5497 = vld [vmem:[%s1624 + $0xe8] sm:$0xff]
    %v5498 = vld [vmem:[%s1624 + $0xf0] sm:$0xff]
    %v5499 = vld [vmem:[%s1624 + $0xf8] sm:$0xff]
    %v5500 = vld [vmem:[%s1624 + $0x100] sm:$0xff]
    %v5501 = vld [vmem:[%s1624 + $0x108] sm:$0xff]
    %v5502 = vld [vmem:[%s1624 + $0x110] sm:$0xff]
    %v5503 = vld [vmem:[%s1624 + $0x118] sm:$0xff]
    %v5504 = vld [vmem:[%s1624 + $0x120] sm:$0xff]
    %v5505 = vld [vmem:[%s1624 + $0x128] sm:$0xff]
    %v5506 = vld [vmem:[%s1624 + $0x130] sm:$0xff]
    %v5507 = vld [vmem:[%s1624 + $0x138] sm:$0xff]
    %v5508 = vld [vmem:[%s1624 + $0x140] sm:$0xff]
    %v5509 = vld [vmem:[%s1624 + $0x148] sm:$0xff]
    %v5510 = vld [vmem:[%s1624 + $0x150] sm:$0xff]
    %v5511 = vld [vmem:[%s1624 + $0x158] sm:$0xff]
    %v5512 = vld [vmem:[%s1624 + $0x160] sm:$0xff]
    %v5513 = vld [vmem:[%s1624 + $0x168] sm:$0xff]
    %v5514 = vld [vmem:[%s1624 + $0x170] sm:$0xff]
    %v5515 = vld [vmem:[%s1624 + $0x178] sm:$0xff]
    %v5516 = vld [vmem:[%s1624 + $0x180] sm:$0xff]
    %v5517 = vld [vmem:[%s1624 + $0x188] sm:$0xff]
    %v5518 = vld [vmem:[%s1624 + $0x190] sm:$0xff]
    %v5519 = vld [vmem:[%s1624 + $0x198] sm:$0xff]
    %v5520 = vld [vmem:[%s1624 + $0x1a0] sm:$0xff]
    %v5521 = vld [vmem:[%s1624 + $0x1a8] sm:$0xff]
    %v5522 = vld [vmem:[%s1624 + $0x1b0] sm:$0xff]
    %v5523 = vld [vmem:[%s1624 + $0x1b8] sm:$0xff]
    %v5524 = vld [vmem:[%s1624 + $0x1c0] sm:$0xff]
    %v5525 = vld [vmem:[%s1624 + $0x1c8] sm:$0xff]
    %v5526 = vld [vmem:[%s1624 + $0x1d0] sm:$0xff]
    %v5527 = vld [vmem:[%s1624 + $0x1d8] sm:$0xff]
    %v5528 = vld [vmem:[%s1624 + $0x1e0] sm:$0xff]
    %v5529 = vld [vmem:[%s1624 + $0x1e8] sm:$0xff]
    %v5530 = vld [vmem:[%s1624 + $0x1f0] sm:$0xff]
    %v5531 = vld [vmem:[%s1624 + $0x1f8] sm:$0xff]
    %v5532 = vld [vmem:[%s1624 + $0x200] sm:$0xff]
    %v5533 = vld [vmem:[%s1624 + $0x208] sm:$0xff]
    %v5534 = vld [vmem:[%s1624 + $0x210] sm:$0xff]
    %v5535 = vld [vmem:[%s1624 + $0x218] sm:$0xff]
    %v5536 = vld [vmem:[%s1624 + $0x220] sm:$0xff]
    %v5537 = vld [vmem:[%s1624 + $0x228] sm:$0xff]
    %v5538 = vld [vmem:[%s1624 + $0x230] sm:$0xff]
    %v5539 = vld [vmem:[%s1624 + $0x238] sm:$0xff]
    %v5540 = vld [vmem:[%s1624 + $0x240] sm:$0xff]
    %v5541 = vld [vmem:[%s1624 + $0x248] sm:$0xff]
    %v5542 = vld [vmem:[%s1624 + $0x250] sm:$0xff]
    %v5543 = vld [vmem:[%s1624 + $0x258] sm:$0xff]
    %v5544 = vld [vmem:[%s1624 + $0x260] sm:$0xff]
    %v5545 = vld [vmem:[%s1624 + $0x268] sm:$0xff]
    %v5546 = vld [vmem:[%s1624 + $0x270] sm:$0xff]
    %v5547 = vld [vmem:[%s1624 + $0x278] sm:$0xff]
    %v5548 = vld [vmem:[%s1624 + $0x280] sm:$0xff]
    %v5549 = vld [vmem:[%s1624 + $0x288] sm:$0xff]
    %v5550 = vld [vmem:[%s1624 + $0x290] sm:$0xff]
    %v5551 = vld [vmem:[%s1624 + $0x298] sm:$0xff]
    %v5552 = vld [vmem:[%s1624 + $0x2a0] sm:$0xff]
    %v5553 = vld [vmem:[%s1624 + $0x2a8] sm:$0xff]
    %v5554 = vld [vmem:[%s1624 + $0x2b0] sm:$0xff]
    %v5555 = vld [vmem:[%s1624 + $0x2b8] sm:$0xff]
    %v5556 = vld [vmem:[%s1624 + $0x2c0] sm:$0xff]
    %v5557 = vld [vmem:[%s1624 + $0x2c8] sm:$0xff]
    %v5558 = vld [vmem:[%s1624 + $0x2d0] sm:$0xff]
    %v5559 = vld [vmem:[%s1624 + $0x2d8] sm:$0xff]
    %v5560 = vld [vmem:[%s1624 + $0x2e0] sm:$0xff]
    %v5561 = vld [vmem:[%s1624 + $0x2e8] sm:$0xff]
    %v5562 = vld [vmem:[%s1624 + $0x2f0] sm:$0xff]
    %v5563 = vld [vmem:[%s1624 + $0x2f8] sm:$0xff]
    %v5564 = vrot.slane %v3974, 5
    %v5565 = vrot.slane %v3975, 5
    %v5566 = vsel %vm1721, %v5564, %v5565
    %v5567 = vrot.slane %v3976, 5
    %v5568 = vsel %vm1721, %v5565, %v5567
    %v5569 = vsel %vm326, %v5566, 0
    %v5571 = vsel %vm326, %v5568, 0
    %5573 = vmatpush.msra.mxu0 0.0
    %5574 = vmatpush.msra.mxu0 0.0
    %5575 = vmatpush.msra.mxu0 0.0
    %5576 = vmatpush.msra.mxu0 0.0
    %5577 = vmatpush.msra.mxu0 %v5556
    %5578 = vmatpush.msra.mxu0 %v5548
    %5579 = vmatpush.msra.mxu0 %v5540
    %5580 = vmatpush.msra.mxu0 %v5532
    %5581 = vmatpush.msra.mxu0 %v5524
    %5582 = vmatpush.msra.mxu0 %v5516
    %5583 = vmatpush.msra.mxu0 %v5508
    %5584 = vmatpush.msra.mxu0 %v5500
    %5585 = vmatpush.msra.mxu0 %v5492
    %5586 = vmatpush.msra.mxu0 %v5484
    %5587 = vmatpush.msra.mxu0 %v5476
    %5588 = vmatpush.msra.mxu0 %v5468
    %5589 = vmatmul.f32.gmra.mxu0 %v5569
    %v5590 = vpop.f32.mrf.mxu0
    %v5591 = vadd.f32 0.0, %v5590
    %5592 = vmatmul.f32.gmra.mxu0 %v5571
    %v5593 = vpop.f32.mrf.mxu0
    %v5594 = vadd.f32 0.0, %v5593
    %5595 = vdwg.mxu0
    %5596 = vmatpush.msra.mxu0 0.0
    %5597 = vmatpush.msra.mxu0 0.0
    %5598 = vmatpush.msra.mxu0 0.0
    %5599 = vmatpush.msra.mxu0 0.0
    %5600 = vmatpush.msra.mxu0 %v5557
    %5601 = vmatpush.msra.mxu0 %v5549
    %5602 = vmatpush.msra.mxu0 %v5541
    %5603 = vmatpush.msra.mxu0 %v5533
    %5604 = vmatpush.msra.mxu0 %v5525
    %5605 = vmatpush.msra.mxu0 %v5517
    %5606 = vmatpush.msra.mxu0 %v5509
    %5607 = vmatpush.msra.mxu0 %v5501
    %5608 = vmatpush.msra.mxu0 %v5493
    %5609 = vmatpush.msra.mxu0 %v5485
    %5610 = vmatpush.msra.mxu0 %v5477
    %5611 = vmatpush.msra.mxu0 %v5469
    %5612 = vmatmul.f32.gmra.mxu0 %v5569
    %v5613 = vpop.f32.mrf.mxu0
    %v5614 = vadd.f32 0.0, %v5613
    %5615 = vmatmul.f32.gmra.mxu0 %v5571
    %v5616 = vpop.f32.mrf.mxu0
    %v5617 = vadd.f32 0.0, %v5616
    %5618 = vdwg.mxu0
    %5619 = vmatpush.msra.mxu0 0.0
    %5620 = vmatpush.msra.mxu0 0.0
    %5621 = vmatpush.msra.mxu0 0.0
    %5622 = vmatpush.msra.mxu0 0.0
    %5623 = vmatpush.msra.mxu0 %v5558
    %5624 = vmatpush.msra.mxu0 %v5550
    %5625 = vmatpush.msra.mxu0 %v5542
    %5626 = vmatpush.msra.mxu0 %v5534
    %5627 = vmatpush.msra.mxu0 %v5526
    %5628 = vmatpush.msra.mxu0 %v5518
    %5629 = vmatpush.msra.mxu0 %v5510
    %5630 = vmatpush.msra.mxu0 %v5502
    %5631 = vmatpush.msra.mxu0 %v5494
    %5632 = vmatpush.msra.mxu0 %v5486
    %5633 = vmatpush.msra.mxu0 %v5478
    %5634 = vmatpush.msra.mxu0 %v5470
    %5635 = vmatmul.f32.gmra.mxu0 %v5569
    %v5636 = vpop.f32.mrf.mxu0
    %v5637 = vadd.f32 0.0, %v5636
    %5638 = vmatmul.f32.gmra.mxu0 %v5571
    %v5639 = vpop.f32.mrf.mxu0
    %v5640 = vadd.f32 0.0, %v5639
    %5641 = vdwg.mxu0
    %5642 = vmatpush.msra.mxu0 0.0
    %5643 = vmatpush.msra.mxu0 0.0
    %5644 = vmatpush.msra.mxu0 0.0
    %5645 = vmatpush.msra.mxu0 0.0
    %5646 = vmatpush.msra.mxu0 %v5559
    %5647 = vmatpush.msra.mxu0 %v5551
    %5648 = vmatpush.msra.mxu0 %v5543
    %5649 = vmatpush.msra.mxu0 %v5535
    %5650 = vmatpush.msra.mxu0 %v5527
    %5651 = vmatpush.msra.mxu0 %v5519
    %5652 = vmatpush.msra.mxu0 %v5511
    %5653 = vmatpush.msra.mxu0 %v5503
    %5654 = vmatpush.msra.mxu0 %v5495
    %5655 = vmatpush.msra.mxu0 %v5487
    %5656 = vmatpush.msra.mxu0 %v5479
    %5657 = vmatpush.msra.mxu0 %v5471
    %5658 = vmatmul.f32.gmra.mxu0 %v5569
    %v5659 = vpop.f32.mrf.mxu0
    %v5660 = vadd.f32 0.0, %v5659
    %5661 = vmatmul.f32.gmra.mxu0 %v5571
    %v5662 = vpop.f32.mrf.mxu0
    %v5663 = vadd.f32 0.0, %v5662
    %5664 = vdwg.mxu0
    %5665 = vmatpush.msra.mxu0 0.0
    %5666 = vmatpush.msra.mxu0 0.0
    %5667 = vmatpush.msra.mxu0 0.0
    %5668 = vmatpush.msra.mxu0 0.0
    %5669 = vmatpush.msra.mxu0 %v5560
    %5670 = vmatpush.msra.mxu0 %v5552
    %5671 = vmatpush.msra.mxu0 %v5544
    %5672 = vmatpush.msra.mxu0 %v5536
    %5673 = vmatpush.msra.mxu0 %v5528
    %5674 = vmatpush.msra.mxu0 %v5520
    %5675 = vmatpush.msra.mxu0 %v5512
    %5676 = vmatpush.msra.mxu0 %v5504
    %5677 = vmatpush.msra.mxu0 %v5496
    %5678 = vmatpush.msra.mxu0 %v5488
    %5679 = vmatpush.msra.mxu0 %v5480
    %5680 = vmatpush.msra.mxu0 %v5472
    %5681 = vmatmul.f32.gmra.mxu0 %v5569
    %v5682 = vpop.f32.mrf.mxu0
    %v5683 = vadd.f32 0.0, %v5682
    %5684 = vmatmul.f32.gmra.mxu0 %v5571
    %v5685 = vpop.f32.mrf.mxu0
    %v5686 = vadd.f32 0.0, %v5685
    %5687 = vdwg.mxu0
    %5688 = vmatpush.msra.mxu0 0.0
    %5689 = vmatpush.msra.mxu0 0.0
    %5690 = vmatpush.msra.mxu0 0.0
    %5691 = vmatpush.msra.mxu0 0.0
    %5692 = vmatpush.msra.mxu0 %v5561
    %5693 = vmatpush.msra.mxu0 %v5553
    %5694 = vmatpush.msra.mxu0 %v5545
    %5695 = vmatpush.msra.mxu0 %v5537
    %5696 = vmatpush.msra.mxu0 %v5529
    %5697 = vmatpush.msra.mxu0 %v5521
    %5698 = vmatpush.msra.mxu0 %v5513
    %5699 = vmatpush.msra.mxu0 %v5505
    %5700 = vmatpush.msra.mxu0 %v5497
    %5701 = vmatpush.msra.mxu0 %v5489
    %5702 = vmatpush.msra.mxu0 %v5481
    %5703 = vmatpush.msra.mxu0 %v5473
    %5704 = vmatmul.f32.gmra.mxu0 %v5569
    %v5705 = vpop.f32.mrf.mxu0
    %v5706 = vadd.f32 0.0, %v5705
    %5707 = vmatmul.f32.gmra.mxu0 %v5571
    %v5708 = vpop.f32.mrf.mxu0
    %v5709 = vadd.f32 0.0, %v5708
    %5710 = vdwg.mxu0
    %5711 = vmatpush.msra.mxu0 0.0
    %5712 = vmatpush.msra.mxu0 0.0
    %5713 = vmatpush.msra.mxu0 0.0
    %5714 = vmatpush.msra.mxu0 0.0
    %5715 = vmatpush.msra.mxu0 %v5562
    %5716 = vmatpush.msra.mxu0 %v5554
    %5717 = vmatpush.msra.mxu0 %v5546
    %5718 = vmatpush.msra.mxu0 %v5538
    %5719 = vmatpush.msra.mxu0 %v5530
    %5720 = vmatpush.msra.mxu0 %v5522
    %5721 = vmatpush.msra.mxu0 %v5514
    %5722 = vmatpush.msra.mxu0 %v5506
    %5723 = vmatpush.msra.mxu0 %v5498
    %5724 = vmatpush.msra.mxu0 %v5490
    %5725 = vmatpush.msra.mxu0 %v5482
    %5726 = vmatpush.msra.mxu0 %v5474
    %5727 = vmatmul.f32.gmra.mxu0 %v5569
    %v5728 = vpop.f32.mrf.mxu0
    %v5729 = vadd.f32 0.0, %v5728
    %5730 = vmatmul.f32.gmra.mxu0 %v5571
    %v5731 = vpop.f32.mrf.mxu0
    %v5732 = vadd.f32 0.0, %v5731
    %5733 = vdwg.mxu0
    %5734 = vmatpush.msra.mxu0 0.0
    %5735 = vmatpush.msra.mxu0 0.0
    %5736 = vmatpush.msra.mxu0 0.0
    %5737 = vmatpush.msra.mxu0 0.0
    %5738 = vmatpush.msra.mxu0 %v5563
    %5739 = vmatpush.msra.mxu0 %v5555
    %5740 = vmatpush.msra.mxu0 %v5547
    %5741 = vmatpush.msra.mxu0 %v5539
    %5742 = vmatpush.msra.mxu0 %v5531
    %5743 = vmatpush.msra.mxu0 %v5523
    %5744 = vmatpush.msra.mxu0 %v5515
    %5745 = vmatpush.msra.mxu0 %v5507
    %5746 = vmatpush.msra.mxu0 %v5499
    %5747 = vmatpush.msra.mxu0 %v5491
    %5748 = vmatpush.msra.mxu0 %v5483
    %5749 = vmatpush.msra.mxu0 %v5475
    %5750 = vmatmul.f32.gmra.mxu0 %v5569
    %v5751 = vpop.f32.mrf.mxu0
    %v5752 = vadd.f32 0.0, %v5751
    %5753 = vmatmul.f32.gmra.mxu0 %v5571
    %v5754 = vpop.f32.mrf.mxu0
    %v5755 = vadd.f32 0.0, %v5754
    %5756 = vdwg.mxu0
    %v5757 = vadd.f32 %v5452, %v5591
    %v5758 = vadd.f32 %v5453, %v5614
    %v5759 = vadd.f32 %v5454, %v5637
    %v5760 = vadd.f32 %v5455, %v5660
    %v5761 = vadd.f32 %v5456, %v5683
    %v5762 = vadd.f32 %v5457, %v5706
    %v5763 = vadd.f32 %v5458, %v5729
    %v5764 = vadd.f32 %v5459, %v5752
    %v5765 = vadd.f32 %v5460, %v5594
    %v5766 = vadd.f32 %v5461, %v5617
    %v5767 = vadd.f32 %v5462, %v5640
    %v5768 = vadd.f32 %v5463, %v5663
    %v5769 = vadd.f32 %v5464, %v5686
    %v5770 = vadd.f32 %v5465, %v5709
    %v5771 = vadd.f32 %v5466, %v5732
    %v5772 = vadd.f32 %v5467, %v5755
    %v5773 = vld [vmem:[%s1931] sm:$0xff]
    %v5774 = vld [vmem:[%s1931 + $0x8] sm:$0xff]
    %v5775 = vld [vmem:[%s1931 + $0x10] sm:$0xff]
    %v5776 = vld [vmem:[%s1931 + $0x18] sm:$0xff]
    %v5777 = vld [vmem:[%s1931 + $0x20] sm:$0xff]
    %v5778 = vld [vmem:[%s1931 + $0x28] sm:$0xff]
    %v5779 = vld [vmem:[%s1931 + $0x30] sm:$0xff]
    %v5780 = vld [vmem:[%s1931 + $0x38] sm:$0xff]
    %v5781 = vld [vmem:[%s1931 + $0x40] sm:$0xff]
    %v5782 = vld [vmem:[%s1931 + $0x48] sm:$0xff]
    %v5783 = vld [vmem:[%s1931 + $0x50] sm:$0xff]
    %v5784 = vld [vmem:[%s1931 + $0x58] sm:$0xff]
    %v5785 = vld [vmem:[%s1931 + $0x60] sm:$0xff]
    %v5786 = vld [vmem:[%s1931 + $0x68] sm:$0xff]
    %v5787 = vld [vmem:[%s1931 + $0x70] sm:$0xff]
    %v5788 = vld [vmem:[%s1931 + $0x78] sm:$0xff]
    %v5789 = vld [vmem:[%s1931 + $0x80] sm:$0xff]
    %v5790 = vld [vmem:[%s1931 + $0x88] sm:$0xff]
    %v5791 = vld [vmem:[%s1931 + $0x90] sm:$0xff]
    %v5792 = vld [vmem:[%s1931 + $0x98] sm:$0xff]
    %v5793 = vld [vmem:[%s1931 + $0xa0] sm:$0xff]
    %v5794 = vld [vmem:[%s1931 + $0xa8] sm:$0xff]
    %v5795 = vld [vmem:[%s1931 + $0xb0] sm:$0xff]
    %v5796 = vld [vmem:[%s1931 + $0xb8] sm:$0xff]
    %v5797 = vld [vmem:[%s1931 + $0xc0] sm:$0xff]
    %v5798 = vld [vmem:[%s1931 + $0xc8] sm:$0xff]
    %v5799 = vld [vmem:[%s1931 + $0xd0] sm:$0xff]
    %v5800 = vld [vmem:[%s1931 + $0xd8] sm:$0xff]
    %v5801 = vld [vmem:[%s1931 + $0xe0] sm:$0xff]
    %v5802 = vld [vmem:[%s1931 + $0xe8] sm:$0xff]
    %v5803 = vld [vmem:[%s1931 + $0xf0] sm:$0xff]
    %v5804 = vld [vmem:[%s1931 + $0xf8] sm:$0xff]
    %v5805 = vld [vmem:[%s1931 + $0x100] sm:$0xff]
    %v5806 = vld [vmem:[%s1931 + $0x108] sm:$0xff]
    %v5807 = vld [vmem:[%s1931 + $0x110] sm:$0xff]
    %v5808 = vld [vmem:[%s1931 + $0x118] sm:$0xff]
    %v5809 = vld [vmem:[%s1931 + $0x120] sm:$0xff]
    %v5810 = vld [vmem:[%s1931 + $0x128] sm:$0xff]
    %v5811 = vld [vmem:[%s1931 + $0x130] sm:$0xff]
    %v5812 = vld [vmem:[%s1931 + $0x138] sm:$0xff]
    %v5813 = vld [vmem:[%s1931 + $0x140] sm:$0xff]
    %v5814 = vld [vmem:[%s1931 + $0x148] sm:$0xff]
    %v5815 = vld [vmem:[%s1931 + $0x150] sm:$0xff]
    %v5816 = vld [vmem:[%s1931 + $0x158] sm:$0xff]
    %v5817 = vld [vmem:[%s1931 + $0x160] sm:$0xff]
    %v5818 = vld [vmem:[%s1931 + $0x168] sm:$0xff]
    %v5819 = vld [vmem:[%s1931 + $0x170] sm:$0xff]
    %v5820 = vld [vmem:[%s1931 + $0x178] sm:$0xff]
    %v5821 = vld [vmem:[%s1931 + $0x180] sm:$0xff]
    %v5822 = vld [vmem:[%s1931 + $0x188] sm:$0xff]
    %v5823 = vld [vmem:[%s1931 + $0x190] sm:$0xff]
    %v5824 = vld [vmem:[%s1931 + $0x198] sm:$0xff]
    %v5825 = vld [vmem:[%s1931 + $0x1a0] sm:$0xff]
    %v5826 = vld [vmem:[%s1931 + $0x1a8] sm:$0xff]
    %v5827 = vld [vmem:[%s1931 + $0x1b0] sm:$0xff]
    %v5828 = vld [vmem:[%s1931 + $0x1b8] sm:$0xff]
    %v5829 = vld [vmem:[%s1931 + $0x1c0] sm:$0xff]
    %v5830 = vld [vmem:[%s1931 + $0x1c8] sm:$0xff]
    %v5831 = vld [vmem:[%s1931 + $0x1d0] sm:$0xff]
    %v5832 = vld [vmem:[%s1931 + $0x1d8] sm:$0xff]
    %v5833 = vld [vmem:[%s1931 + $0x1e0] sm:$0xff]
    %v5834 = vld [vmem:[%s1931 + $0x1e8] sm:$0xff]
    %v5835 = vld [vmem:[%s1931 + $0x1f0] sm:$0xff]
    %v5836 = vld [vmem:[%s1931 + $0x1f8] sm:$0xff]
    %v5837 = vld [vmem:[%s1931 + $0x200] sm:$0xff]
    %v5838 = vld [vmem:[%s1931 + $0x208] sm:$0xff]
    %v5839 = vld [vmem:[%s1931 + $0x210] sm:$0xff]
    %v5840 = vld [vmem:[%s1931 + $0x218] sm:$0xff]
    %v5841 = vld [vmem:[%s1931 + $0x220] sm:$0xff]
    %v5842 = vld [vmem:[%s1931 + $0x228] sm:$0xff]
    %v5843 = vld [vmem:[%s1931 + $0x230] sm:$0xff]
    %v5844 = vld [vmem:[%s1931 + $0x238] sm:$0xff]
    %v5845 = vld [vmem:[%s1931 + $0x240] sm:$0xff]
    %v5846 = vld [vmem:[%s1931 + $0x248] sm:$0xff]
    %v5847 = vld [vmem:[%s1931 + $0x250] sm:$0xff]
    %v5848 = vld [vmem:[%s1931 + $0x258] sm:$0xff]
    %v5849 = vld [vmem:[%s1931 + $0x260] sm:$0xff]
    %v5850 = vld [vmem:[%s1931 + $0x268] sm:$0xff]
    %v5851 = vld [vmem:[%s1931 + $0x270] sm:$0xff]
    %v5852 = vld [vmem:[%s1931 + $0x278] sm:$0xff]
    %v5853 = vld [vmem:[%s1931 + $0x280] sm:$0xff]
    %v5854 = vld [vmem:[%s1931 + $0x288] sm:$0xff]
    %v5855 = vld [vmem:[%s1931 + $0x290] sm:$0xff]
    %v5856 = vld [vmem:[%s1931 + $0x298] sm:$0xff]
    %v5857 = vld [vmem:[%s1931 + $0x2a0] sm:$0xff]
    %v5858 = vld [vmem:[%s1931 + $0x2a8] sm:$0xff]
    %v5859 = vld [vmem:[%s1931 + $0x2b0] sm:$0xff]
    %v5860 = vld [vmem:[%s1931 + $0x2b8] sm:$0xff]
    %v5861 = vld [vmem:[%s1931 + $0x2c0] sm:$0xff]
    %v5862 = vld [vmem:[%s1931 + $0x2c8] sm:$0xff]
    %v5863 = vld [vmem:[%s1931 + $0x2d0] sm:$0xff]
    %v5864 = vld [vmem:[%s1931 + $0x2d8] sm:$0xff]
    %v5865 = vld [vmem:[%s1931 + $0x2e0] sm:$0xff]
    %v5866 = vld [vmem:[%s1931 + $0x2e8] sm:$0xff]
    %v5867 = vld [vmem:[%s1931 + $0x2f0] sm:$0xff]
    %v5868 = vld [vmem:[%s1931 + $0x2f8] sm:$0xff]
    %v5869 = vrot.slane %v3974, 6
    %v5870 = vrot.slane %v3975, 6
    %v5871 = vsel %vm2028, %v5869, %v5870
    %v5872 = vrot.slane %v3976, 6
    %v5873 = vsel %vm2028, %v5870, %v5872
    %v5874 = vsel %vm326, %v5871, 0
    %v5876 = vsel %vm326, %v5873, 0
    %5878 = vmatpush.msra.mxu0 0.0
    %5879 = vmatpush.msra.mxu0 0.0
    %5880 = vmatpush.msra.mxu0 0.0
    %5881 = vmatpush.msra.mxu0 0.0
    %5882 = vmatpush.msra.mxu0 %v5861
    %5883 = vmatpush.msra.mxu0 %v5853
    %5884 = vmatpush.msra.mxu0 %v5845
    %5885 = vmatpush.msra.mxu0 %v5837
    %5886 = vmatpush.msra.mxu0 %v5829
    %5887 = vmatpush.msra.mxu0 %v5821
    %5888 = vmatpush.msra.mxu0 %v5813
    %5889 = vmatpush.msra.mxu0 %v5805
    %5890 = vmatpush.msra.mxu0 %v5797
    %5891 = vmatpush.msra.mxu0 %v5789
    %5892 = vmatpush.msra.mxu0 %v5781
    %5893 = vmatpush.msra.mxu0 %v5773
    %5894 = vmatmul.f32.gmra.mxu0 %v5874
    %v5895 = vpop.f32.mrf.mxu0
    %v5896 = vadd.f32 0.0, %v5895
    %5897 = vmatmul.f32.gmra.mxu0 %v5876
    %v5898 = vpop.f32.mrf.mxu0
    %v5899 = vadd.f32 0.0, %v5898
    %5900 = vdwg.mxu0
    %5901 = vmatpush.msra.mxu0 0.0
    %5902 = vmatpush.msra.mxu0 0.0
    %5903 = vmatpush.msra.mxu0 0.0
    %5904 = vmatpush.msra.mxu0 0.0
    %5905 = vmatpush.msra.mxu0 %v5862
    %5906 = vmatpush.msra.mxu0 %v5854
    %5907 = vmatpush.msra.mxu0 %v5846
    %5908 = vmatpush.msra.mxu0 %v5838
    %5909 = vmatpush.msra.mxu0 %v5830
    %5910 = vmatpush.msra.mxu0 %v5822
    %5911 = vmatpush.msra.mxu0 %v5814
    %5912 = vmatpush.msra.mxu0 %v5806
    %5913 = vmatpush.msra.mxu0 %v5798
    %5914 = vmatpush.msra.mxu0 %v5790
    %5915 = vmatpush.msra.mxu0 %v5782
    %5916 = vmatpush.msra.mxu0 %v5774
    %5917 = vmatmul.f32.gmra.mxu0 %v5874
    %v5918 = vpop.f32.mrf.mxu0
    %v5919 = vadd.f32 0.0, %v5918
    %5920 = vmatmul.f32.gmra.mxu0 %v5876
    %v5921 = vpop.f32.mrf.mxu0
    %v5922 = vadd.f32 0.0, %v5921
    %5923 = vdwg.mxu0
    %5924 = vmatpush.msra.mxu0 0.0
    %5925 = vmatpush.msra.mxu0 0.0
    %5926 = vmatpush.msra.mxu0 0.0
    %5927 = vmatpush.msra.mxu0 0.0
    %5928 = vmatpush.msra.mxu0 %v5863
    %5929 = vmatpush.msra.mxu0 %v5855
    %5930 = vmatpush.msra.mxu0 %v5847
    %5931 = vmatpush.msra.mxu0 %v5839
    %5932 = vmatpush.msra.mxu0 %v5831
    %5933 = vmatpush.msra.mxu0 %v5823
    %5934 = vmatpush.msra.mxu0 %v5815
    %5935 = vmatpush.msra.mxu0 %v5807
    %5936 = vmatpush.msra.mxu0 %v5799
    %5937 = vmatpush.msra.mxu0 %v5791
    %5938 = vmatpush.msra.mxu0 %v5783
    %5939 = vmatpush.msra.mxu0 %v5775
    %5940 = vmatmul.f32.gmra.mxu0 %v5874
    %v5941 = vpop.f32.mrf.mxu0
    %v5942 = vadd.f32 0.0, %v5941
    %5943 = vmatmul.f32.gmra.mxu0 %v5876
    %v5944 = vpop.f32.mrf.mxu0
    %v5945 = vadd.f32 0.0, %v5944
    %5946 = vdwg.mxu0
    %5947 = vmatpush.msra.mxu0 0.0
    %5948 = vmatpush.msra.mxu0 0.0
    %5949 = vmatpush.msra.mxu0 0.0
    %5950 = vmatpush.msra.mxu0 0.0
    %5951 = vmatpush.msra.mxu0 %v5864
    %5952 = vmatpush.msra.mxu0 %v5856
    %5953 = vmatpush.msra.mxu0 %v5848
    %5954 = vmatpush.msra.mxu0 %v5840
    %5955 = vmatpush.msra.mxu0 %v5832
    %5956 = vmatpush.msra.mxu0 %v5824
    %5957 = vmatpush.msra.mxu0 %v5816
    %5958 = vmatpush.msra.mxu0 %v5808
    %5959 = vmatpush.msra.mxu0 %v5800
    %5960 = vmatpush.msra.mxu0 %v5792
    %5961 = vmatpush.msra.mxu0 %v5784
    %5962 = vmatpush.msra.mxu0 %v5776
    %5963 = vmatmul.f32.gmra.mxu0 %v5874
    %v5964 = vpop.f32.mrf.mxu0
    %v5965 = vadd.f32 0.0, %v5964
    %5966 = vmatmul.f32.gmra.mxu0 %v5876
    %v5967 = vpop.f32.mrf.mxu0
    %v5968 = vadd.f32 0.0, %v5967
    %5969 = vdwg.mxu0
    %5970 = vmatpush.msra.mxu0 0.0
    %5971 = vmatpush.msra.mxu0 0.0
    %5972 = vmatpush.msra.mxu0 0.0
    %5973 = vmatpush.msra.mxu0 0.0
    %5974 = vmatpush.msra.mxu0 %v5865
    %5975 = vmatpush.msra.mxu0 %v5857
    %5976 = vmatpush.msra.mxu0 %v5849
    %5977 = vmatpush.msra.mxu0 %v5841
    %5978 = vmatpush.msra.mxu0 %v5833
    %5979 = vmatpush.msra.mxu0 %v5825
    %5980 = vmatpush.msra.mxu0 %v5817
    %5981 = vmatpush.msra.mxu0 %v5809
    %5982 = vmatpush.msra.mxu0 %v5801
    %5983 = vmatpush.msra.mxu0 %v5793
    %5984 = vmatpush.msra.mxu0 %v5785
    %5985 = vmatpush.msra.mxu0 %v5777
    %5986 = vmatmul.f32.gmra.mxu0 %v5874
    %v5987 = vpop.f32.mrf.mxu0
    %v5988 = vadd.f32 0.0, %v5987
    %5989 = vmatmul.f32.gmra.mxu0 %v5876
    %v5990 = vpop.f32.mrf.mxu0
    %v5991 = vadd.f32 0.0, %v5990
    %5992 = vdwg.mxu0
    %5993 = vmatpush.msra.mxu0 0.0
    %5994 = vmatpush.msra.mxu0 0.0
    %5995 = vmatpush.msra.mxu0 0.0
    %5996 = vmatpush.msra.mxu0 0.0
    %5997 = vmatpush.msra.mxu0 %v5866
    %5998 = vmatpush.msra.mxu0 %v5858
    %5999 = vmatpush.msra.mxu0 %v5850
    %6000 = vmatpush.msra.mxu0 %v5842
    %6001 = vmatpush.msra.mxu0 %v5834
    %6002 = vmatpush.msra.mxu0 %v5826
    %6003 = vmatpush.msra.mxu0 %v5818
    %6004 = vmatpush.msra.mxu0 %v5810
    %6005 = vmatpush.msra.mxu0 %v5802
    %6006 = vmatpush.msra.mxu0 %v5794
    %6007 = vmatpush.msra.mxu0 %v5786
    %6008 = vmatpush.msra.mxu0 %v5778
    %6009 = vmatmul.f32.gmra.mxu0 %v5874
    %v6010 = vpop.f32.mrf.mxu0
    %v6011 = vadd.f32 0.0, %v6010
    %6012 = vmatmul.f32.gmra.mxu0 %v5876
    %v6013 = vpop.f32.mrf.mxu0
    %v6014 = vadd.f32 0.0, %v6013
    %6015 = vdwg.mxu0
    %6016 = vmatpush.msra.mxu0 0.0
    %6017 = vmatpush.msra.mxu0 0.0
    %6018 = vmatpush.msra.mxu0 0.0
    %6019 = vmatpush.msra.mxu0 0.0
    %6020 = vmatpush.msra.mxu0 %v5867
    %6021 = vmatpush.msra.mxu0 %v5859
    %6022 = vmatpush.msra.mxu0 %v5851
    %6023 = vmatpush.msra.mxu0 %v5843
    %6024 = vmatpush.msra.mxu0 %v5835
    %6025 = vmatpush.msra.mxu0 %v5827
    %6026 = vmatpush.msra.mxu0 %v5819
    %6027 = vmatpush.msra.mxu0 %v5811
    %6028 = vmatpush.msra.mxu0 %v5803
    %6029 = vmatpush.msra.mxu0 %v5795
    %6030 = vmatpush.msra.mxu0 %v5787
    %6031 = vmatpush.msra.mxu0 %v5779
    %6032 = vmatmul.f32.gmra.mxu0 %v5874
    %v6033 = vpop.f32.mrf.mxu0
    %v6034 = vadd.f32 0.0, %v6033
    %6035 = vmatmul.f32.gmra.mxu0 %v5876
    %v6036 = vpop.f32.mrf.mxu0
    %v6037 = vadd.f32 0.0, %v6036
    %6038 = vdwg.mxu0
    %6039 = vmatpush.msra.mxu0 0.0
    %6040 = vmatpush.msra.mxu0 0.0
    %6041 = vmatpush.msra.mxu0 0.0
    %6042 = vmatpush.msra.mxu0 0.0
    %6043 = vmatpush.msra.mxu0 %v5868
    %6044 = vmatpush.msra.mxu0 %v5860
    %6045 = vmatpush.msra.mxu0 %v5852
    %6046 = vmatpush.msra.mxu0 %v5844
    %6047 = vmatpush.msra.mxu0 %v5836
    %6048 = vmatpush.msra.mxu0 %v5828
    %6049 = vmatpush.msra.mxu0 %v5820
    %6050 = vmatpush.msra.mxu0 %v5812
    %6051 = vmatpush.msra.mxu0 %v5804
    %6052 = vmatpush.msra.mxu0 %v5796
    %6053 = vmatpush.msra.mxu0 %v5788
    %6054 = vmatpush.msra.mxu0 %v5780
    %6055 = vmatmul.f32.gmra.mxu0 %v5874
    %v6056 = vpop.f32.mrf.mxu0
    %v6057 = vadd.f32 0.0, %v6056
    %6058 = vmatmul.f32.gmra.mxu0 %v5876
    %v6059 = vpop.f32.mrf.mxu0
    %v6060 = vadd.f32 0.0, %v6059
    %6061 = vdwg.mxu0
    %v6062 = vadd.f32 %v5757, %v5896
    %v6063 = vadd.f32 %v5758, %v5919
    %v6064 = vadd.f32 %v5759, %v5942
    %v6065 = vadd.f32 %v5760, %v5965
    %v6066 = vadd.f32 %v5761, %v5988
    %v6067 = vadd.f32 %v5762, %v6011
    %v6068 = vadd.f32 %v5763, %v6034
    %v6069 = vadd.f32 %v5764, %v6057
    %v6070 = vadd.f32 %v5765, %v5899
    %v6071 = vadd.f32 %v5766, %v5922
    %v6072 = vadd.f32 %v5767, %v5945
    %v6073 = vadd.f32 %v5768, %v5968
    %v6074 = vadd.f32 %v5769, %v5991
    %v6075 = vadd.f32 %v5770, %v6014
    %v6076 = vadd.f32 %v5771, %v6037
    %v6077 = vadd.f32 %v5772, %v6060
    %v6078 = vld [vmem:[%s2238] sm:$0xff]
    %v6079 = vld [vmem:[%s2238 + $0x8] sm:$0xff]
    %v6080 = vld [vmem:[%s2238 + $0x10] sm:$0xff]
    %v6081 = vld [vmem:[%s2238 + $0x18] sm:$0xff]
    %v6082 = vld [vmem:[%s2238 + $0x20] sm:$0xff]
    %v6083 = vld [vmem:[%s2238 + $0x28] sm:$0xff]
    %v6084 = vld [vmem:[%s2238 + $0x30] sm:$0xff]
    %v6085 = vld [vmem:[%s2238 + $0x38] sm:$0xff]
    %v6086 = vld [vmem:[%s2238 + $0x40] sm:$0xff]
    %v6087 = vld [vmem:[%s2238 + $0x48] sm:$0xff]
    %v6088 = vld [vmem:[%s2238 + $0x50] sm:$0xff]
    %v6089 = vld [vmem:[%s2238 + $0x58] sm:$0xff]
    %v6090 = vld [vmem:[%s2238 + $0x60] sm:$0xff]
    %v6091 = vld [vmem:[%s2238 + $0x68] sm:$0xff]
    %v6092 = vld [vmem:[%s2238 + $0x70] sm:$0xff]
    %v6093 = vld [vmem:[%s2238 + $0x78] sm:$0xff]
    %v6094 = vld [vmem:[%s2238 + $0x80] sm:$0xff]
    %v6095 = vld [vmem:[%s2238 + $0x88] sm:$0xff]
    %v6096 = vld [vmem:[%s2238 + $0x90] sm:$0xff]
    %v6097 = vld [vmem:[%s2238 + $0x98] sm:$0xff]
    %v6098 = vld [vmem:[%s2238 + $0xa0] sm:$0xff]
    %v6099 = vld [vmem:[%s2238 + $0xa8] sm:$0xff]
    %v6100 = vld [vmem:[%s2238 + $0xb0] sm:$0xff]
    %v6101 = vld [vmem:[%s2238 + $0xb8] sm:$0xff]
    %v6102 = vld [vmem:[%s2238 + $0xc0] sm:$0xff]
    %v6103 = vld [vmem:[%s2238 + $0xc8] sm:$0xff]
    %v6104 = vld [vmem:[%s2238 + $0xd0] sm:$0xff]
    %v6105 = vld [vmem:[%s2238 + $0xd8] sm:$0xff]
    %v6106 = vld [vmem:[%s2238 + $0xe0] sm:$0xff]
    %v6107 = vld [vmem:[%s2238 + $0xe8] sm:$0xff]
    %v6108 = vld [vmem:[%s2238 + $0xf0] sm:$0xff]
    %v6109 = vld [vmem:[%s2238 + $0xf8] sm:$0xff]
    %v6110 = vld [vmem:[%s2238 + $0x100] sm:$0xff]
    %v6111 = vld [vmem:[%s2238 + $0x108] sm:$0xff]
    %v6112 = vld [vmem:[%s2238 + $0x110] sm:$0xff]
    %v6113 = vld [vmem:[%s2238 + $0x118] sm:$0xff]
    %v6114 = vld [vmem:[%s2238 + $0x120] sm:$0xff]
    %v6115 = vld [vmem:[%s2238 + $0x128] sm:$0xff]
    %v6116 = vld [vmem:[%s2238 + $0x130] sm:$0xff]
    %v6117 = vld [vmem:[%s2238 + $0x138] sm:$0xff]
    %v6118 = vld [vmem:[%s2238 + $0x140] sm:$0xff]
    %v6119 = vld [vmem:[%s2238 + $0x148] sm:$0xff]
    %v6120 = vld [vmem:[%s2238 + $0x150] sm:$0xff]
    %v6121 = vld [vmem:[%s2238 + $0x158] sm:$0xff]
    %v6122 = vld [vmem:[%s2238 + $0x160] sm:$0xff]
    %v6123 = vld [vmem:[%s2238 + $0x168] sm:$0xff]
    %v6124 = vld [vmem:[%s2238 + $0x170] sm:$0xff]
    %v6125 = vld [vmem:[%s2238 + $0x178] sm:$0xff]
    %v6126 = vld [vmem:[%s2238 + $0x180] sm:$0xff]
    %v6127 = vld [vmem:[%s2238 + $0x188] sm:$0xff]
    %v6128 = vld [vmem:[%s2238 + $0x190] sm:$0xff]
    %v6129 = vld [vmem:[%s2238 + $0x198] sm:$0xff]
    %v6130 = vld [vmem:[%s2238 + $0x1a0] sm:$0xff]
    %v6131 = vld [vmem:[%s2238 + $0x1a8] sm:$0xff]
    %v6132 = vld [vmem:[%s2238 + $0x1b0] sm:$0xff]
    %v6133 = vld [vmem:[%s2238 + $0x1b8] sm:$0xff]
    %v6134 = vld [vmem:[%s2238 + $0x1c0] sm:$0xff]
    %v6135 = vld [vmem:[%s2238 + $0x1c8] sm:$0xff]
    %v6136 = vld [vmem:[%s2238 + $0x1d0] sm:$0xff]
    %v6137 = vld [vmem:[%s2238 + $0x1d8] sm:$0xff]
    %v6138 = vld [vmem:[%s2238 + $0x1e0] sm:$0xff]
    %v6139 = vld [vmem:[%s2238 + $0x1e8] sm:$0xff]
    %v6140 = vld [vmem:[%s2238 + $0x1f0] sm:$0xff]
    %v6141 = vld [vmem:[%s2238 + $0x1f8] sm:$0xff]
    %v6142 = vld [vmem:[%s2238 + $0x200] sm:$0xff]
    %v6143 = vld [vmem:[%s2238 + $0x208] sm:$0xff]
    %v6144 = vld [vmem:[%s2238 + $0x210] sm:$0xff]
    %v6145 = vld [vmem:[%s2238 + $0x218] sm:$0xff]
    %v6146 = vld [vmem:[%s2238 + $0x220] sm:$0xff]
    %v6147 = vld [vmem:[%s2238 + $0x228] sm:$0xff]
    %v6148 = vld [vmem:[%s2238 + $0x230] sm:$0xff]
    %v6149 = vld [vmem:[%s2238 + $0x238] sm:$0xff]
    %v6150 = vld [vmem:[%s2238 + $0x240] sm:$0xff]
    %v6151 = vld [vmem:[%s2238 + $0x248] sm:$0xff]
    %v6152 = vld [vmem:[%s2238 + $0x250] sm:$0xff]
    %v6153 = vld [vmem:[%s2238 + $0x258] sm:$0xff]
    %v6154 = vld [vmem:[%s2238 + $0x260] sm:$0xff]
    %v6155 = vld [vmem:[%s2238 + $0x268] sm:$0xff]
    %v6156 = vld [vmem:[%s2238 + $0x270] sm:$0xff]
    %v6157 = vld [vmem:[%s2238 + $0x278] sm:$0xff]
    %v6158 = vld [vmem:[%s2238 + $0x280] sm:$0xff]
    %v6159 = vld [vmem:[%s2238 + $0x288] sm:$0xff]
    %v6160 = vld [vmem:[%s2238 + $0x290] sm:$0xff]
    %v6161 = vld [vmem:[%s2238 + $0x298] sm:$0xff]
    %v6162 = vld [vmem:[%s2238 + $0x2a0] sm:$0xff]
    %v6163 = vld [vmem:[%s2238 + $0x2a8] sm:$0xff]
    %v6164 = vld [vmem:[%s2238 + $0x2b0] sm:$0xff]
    %v6165 = vld [vmem:[%s2238 + $0x2b8] sm:$0xff]
    %v6166 = vld [vmem:[%s2238 + $0x2c0] sm:$0xff]
    %v6167 = vld [vmem:[%s2238 + $0x2c8] sm:$0xff]
    %v6168 = vld [vmem:[%s2238 + $0x2d0] sm:$0xff]
    %v6169 = vld [vmem:[%s2238 + $0x2d8] sm:$0xff]
    %v6170 = vld [vmem:[%s2238 + $0x2e0] sm:$0xff]
    %v6171 = vld [vmem:[%s2238 + $0x2e8] sm:$0xff]
    %v6172 = vld [vmem:[%s2238 + $0x2f0] sm:$0xff]
    %v6173 = vld [vmem:[%s2238 + $0x2f8] sm:$0xff]
    %v6174 = vrot.slane %v3974, 7
    %v6175 = vrot.slane %v3975, 7
    %v6176 = vsel %vm2335, %v6174, %v6175
    %v6177 = vrot.slane %v3976, 7
    %v6178 = vsel %vm2335, %v6175, %v6177
    %v6179 = vsel %vm326, %v6176, 0
    %v6181 = vsel %vm326, %v6178, 0
    %6183 = vmatpush.msra.mxu0 0.0
    %6184 = vmatpush.msra.mxu0 0.0
    %6185 = vmatpush.msra.mxu0 0.0
    %6186 = vmatpush.msra.mxu0 0.0
    %6187 = vmatpush.msra.mxu0 %v6166
    %6188 = vmatpush.msra.mxu0 %v6158
    %6189 = vmatpush.msra.mxu0 %v6150
    %6190 = vmatpush.msra.mxu0 %v6142
    %6191 = vmatpush.msra.mxu0 %v6134
    %6192 = vmatpush.msra.mxu0 %v6126
    %6193 = vmatpush.msra.mxu0 %v6118
    %6194 = vmatpush.msra.mxu0 %v6110
    %6195 = vmatpush.msra.mxu0 %v6102
    %6196 = vmatpush.msra.mxu0 %v6094
    %6197 = vmatpush.msra.mxu0 %v6086
    %6198 = vmatpush.msra.mxu0 %v6078
    %6199 = vmatmul.f32.gmra.mxu0 %v6179
    %v6200 = vpop.f32.mrf.mxu0
    %v6201 = vadd.f32 0.0, %v6200
    %6202 = vmatmul.f32.gmra.mxu0 %v6181
    %v6203 = vpop.f32.mrf.mxu0
    %v6204 = vadd.f32 0.0, %v6203
    %6205 = vdwg.mxu0
    %6206 = vmatpush.msra.mxu0 0.0
    %6207 = vmatpush.msra.mxu0 0.0
    %6208 = vmatpush.msra.mxu0 0.0
    %6209 = vmatpush.msra.mxu0 0.0
    %6210 = vmatpush.msra.mxu0 %v6167
    %6211 = vmatpush.msra.mxu0 %v6159
    %6212 = vmatpush.msra.mxu0 %v6151
    %6213 = vmatpush.msra.mxu0 %v6143
    %6214 = vmatpush.msra.mxu0 %v6135
    %6215 = vmatpush.msra.mxu0 %v6127
    %6216 = vmatpush.msra.mxu0 %v6119
    %6217 = vmatpush.msra.mxu0 %v6111
    %6218 = vmatpush.msra.mxu0 %v6103
    %6219 = vmatpush.msra.mxu0 %v6095
    %6220 = vmatpush.msra.mxu0 %v6087
    %6221 = vmatpush.msra.mxu0 %v6079
    %6222 = vmatmul.f32.gmra.mxu0 %v6179
    %v6223 = vpop.f32.mrf.mxu0
    %v6224 = vadd.f32 0.0, %v6223
    %6225 = vmatmul.f32.gmra.mxu0 %v6181
    %v6226 = vpop.f32.mrf.mxu0
    %v6227 = vadd.f32 0.0, %v6226
    %6228 = vdwg.mxu0
    %6229 = vmatpush.msra.mxu0 0.0
    %6230 = vmatpush.msra.mxu0 0.0
    %6231 = vmatpush.msra.mxu0 0.0
    %6232 = vmatpush.msra.mxu0 0.0
    %6233 = vmatpush.msra.mxu0 %v6168
    %6234 = vmatpush.msra.mxu0 %v6160
    %6235 = vmatpush.msra.mxu0 %v6152
    %6236 = vmatpush.msra.mxu0 %v6144
    %6237 = vmatpush.msra.mxu0 %v6136
    %6238 = vmatpush.msra.mxu0 %v6128
    %6239 = vmatpush.msra.mxu0 %v6120
    %6240 = vmatpush.msra.mxu0 %v6112
    %6241 = vmatpush.msra.mxu0 %v6104
    %6242 = vmatpush.msra.mxu0 %v6096
    %6243 = vmatpush.msra.mxu0 %v6088
    %6244 = vmatpush.msra.mxu0 %v6080
    %6245 = vmatmul.f32.gmra.mxu0 %v6179
    %v6246 = vpop.f32.mrf.mxu0
    %v6247 = vadd.f32 0.0, %v6246
    %6248 = vmatmul.f32.gmra.mxu0 %v6181
    %v6249 = vpop.f32.mrf.mxu0
    %v6250 = vadd.f32 0.0, %v6249
    %6251 = vdwg.mxu0
    %6252 = vmatpush.msra.mxu0 0.0
    %6253 = vmatpush.msra.mxu0 0.0
    %6254 = vmatpush.msra.mxu0 0.0
    %6255 = vmatpush.msra.mxu0 0.0
    %6256 = vmatpush.msra.mxu0 %v6169
    %6257 = vmatpush.msra.mxu0 %v6161
    %6258 = vmatpush.msra.mxu0 %v6153
    %6259 = vmatpush.msra.mxu0 %v6145
    %6260 = vmatpush.msra.mxu0 %v6137
    %6261 = vmatpush.msra.mxu0 %v6129
    %6262 = vmatpush.msra.mxu0 %v6121
    %6263 = vmatpush.msra.mxu0 %v6113
    %6264 = vmatpush.msra.mxu0 %v6105
    %6265 = vmatpush.msra.mxu0 %v6097
    %6266 = vmatpush.msra.mxu0 %v6089
    %6267 = vmatpush.msra.mxu0 %v6081
    %6268 = vmatmul.f32.gmra.mxu0 %v6179
    %v6269 = vpop.f32.mrf.mxu0
    %v6270 = vadd.f32 0.0, %v6269
    %6271 = vmatmul.f32.gmra.mxu0 %v6181
    %v6272 = vpop.f32.mrf.mxu0
    %v6273 = vadd.f32 0.0, %v6272
    %6274 = vdwg.mxu0
    %6275 = vmatpush.msra.mxu0 0.0
    %6276 = vmatpush.msra.mxu0 0.0
    %6277 = vmatpush.msra.mxu0 0.0
    %6278 = vmatpush.msra.mxu0 0.0
    %6279 = vmatpush.msra.mxu0 %v6170
    %6280 = vmatpush.msra.mxu0 %v6162
    %6281 = vmatpush.msra.mxu0 %v6154
    %6282 = vmatpush.msra.mxu0 %v6146
    %6283 = vmatpush.msra.mxu0 %v6138
    %6284 = vmatpush.msra.mxu0 %v6130
    %6285 = vmatpush.msra.mxu0 %v6122
    %6286 = vmatpush.msra.mxu0 %v6114
    %6287 = vmatpush.msra.mxu0 %v6106
    %6288 = vmatpush.msra.mxu0 %v6098
    %6289 = vmatpush.msra.mxu0 %v6090
    %6290 = vmatpush.msra.mxu0 %v6082
    %6291 = vmatmul.f32.gmra.mxu0 %v6179
    %v6292 = vpop.f32.mrf.mxu0
    %v6293 = vadd.f32 0.0, %v6292
    %6294 = vmatmul.f32.gmra.mxu0 %v6181
    %v6295 = vpop.f32.mrf.mxu0
    %v6296 = vadd.f32 0.0, %v6295
    %6297 = vdwg.mxu0
    %6298 = vmatpush.msra.mxu0 0.0
    %6299 = vmatpush.msra.mxu0 0.0
    %6300 = vmatpush.msra.mxu0 0.0
    %6301 = vmatpush.msra.mxu0 0.0
    %6302 = vmatpush.msra.mxu0 %v6171
    %6303 = vmatpush.msra.mxu0 %v6163
    %6304 = vmatpush.msra.mxu0 %v6155
    %6305 = vmatpush.msra.mxu0 %v6147
    %6306 = vmatpush.msra.mxu0 %v6139
    %6307 = vmatpush.msra.mxu0 %v6131
    %6308 = vmatpush.msra.mxu0 %v6123
    %6309 = vmatpush.msra.mxu0 %v6115
    %6310 = vmatpush.msra.mxu0 %v6107
    %6311 = vmatpush.msra.mxu0 %v6099
    %6312 = vmatpush.msra.mxu0 %v6091
    %6313 = vmatpush.msra.mxu0 %v6083
    %6314 = vmatmul.f32.gmra.mxu0 %v6179
    %v6315 = vpop.f32.mrf.mxu0
    %v6316 = vadd.f32 0.0, %v6315
    %6317 = vmatmul.f32.gmra.mxu0 %v6181
    %v6318 = vpop.f32.mrf.mxu0
    %v6319 = vadd.f32 0.0, %v6318
    %6320 = vdwg.mxu0
    %6321 = vmatpush.msra.mxu0 0.0
    %6322 = vmatpush.msra.mxu0 0.0
    %6323 = vmatpush.msra.mxu0 0.0
    %6324 = vmatpush.msra.mxu0 0.0
    %6325 = vmatpush.msra.mxu0 %v6172
    %6326 = vmatpush.msra.mxu0 %v6164
    %6327 = vmatpush.msra.mxu0 %v6156
    %6328 = vmatpush.msra.mxu0 %v6148
    %6329 = vmatpush.msra.mxu0 %v6140
    %6330 = vmatpush.msra.mxu0 %v6132
    %6331 = vmatpush.msra.mxu0 %v6124
    %6332 = vmatpush.msra.mxu0 %v6116
    %6333 = vmatpush.msra.mxu0 %v6108
    %6334 = vmatpush.msra.mxu0 %v6100
    %6335 = vmatpush.msra.mxu0 %v6092
    %6336 = vmatpush.msra.mxu0 %v6084
    %6337 = vmatmul.f32.gmra.mxu0 %v6179
    %v6338 = vpop.f32.mrf.mxu0
    %v6339 = vadd.f32 0.0, %v6338
    %6340 = vmatmul.f32.gmra.mxu0 %v6181
    %v6341 = vpop.f32.mrf.mxu0
    %v6342 = vadd.f32 0.0, %v6341
    %6343 = vdwg.mxu0
    %6344 = vmatpush.msra.mxu0 0.0
    %6345 = vmatpush.msra.mxu0 0.0
    %6346 = vmatpush.msra.mxu0 0.0
    %6347 = vmatpush.msra.mxu0 0.0
    %6348 = vmatpush.msra.mxu0 %v6173
    %6349 = vmatpush.msra.mxu0 %v6165
    %6350 = vmatpush.msra.mxu0 %v6157
    %6351 = vmatpush.msra.mxu0 %v6149
    %6352 = vmatpush.msra.mxu0 %v6141
    %6353 = vmatpush.msra.mxu0 %v6133
    %6354 = vmatpush.msra.mxu0 %v6125
    %6355 = vmatpush.msra.mxu0 %v6117
    %6356 = vmatpush.msra.mxu0 %v6109
    %6357 = vmatpush.msra.mxu0 %v6101
    %6358 = vmatpush.msra.mxu0 %v6093
    %6359 = vmatpush.msra.mxu0 %v6085
    %6360 = vmatmul.f32.gmra.mxu0 %v6179
    %v6361 = vpop.f32.mrf.mxu0
    %v6362 = vadd.f32 0.0, %v6361
    %6363 = vmatmul.f32.gmra.mxu0 %v6181
    %v6364 = vpop.f32.mrf.mxu0
    %v6365 = vadd.f32 0.0, %v6364
    %6366 = vdwg.mxu0
    %v6367 = vadd.f32 %v6062, %v6201
    %v6368 = vadd.f32 %v6063, %v6224
    %v6369 = vadd.f32 %v6064, %v6247
    %v6370 = vadd.f32 %v6065, %v6270
    %v6371 = vadd.f32 %v6066, %v6293
    %v6372 = vadd.f32 %v6067, %v6316
    %v6373 = vadd.f32 %v6068, %v6339
    %v6374 = vadd.f32 %v6069, %v6362
    %v6375 = vadd.f32 %v6070, %v6204
    %v6376 = vadd.f32 %v6071, %v6227
    %v6377 = vadd.f32 %v6072, %v6250
    %v6378 = vadd.f32 %v6073, %v6273
    %v6379 = vadd.f32 %v6074, %v6296
    %v6380 = vadd.f32 %v6075, %v6319
    %v6381 = vadd.f32 %v6076, %v6342
    %v6382 = vadd.f32 %v6077, %v6365
    %v6383 = vld [vmem:[%s2545] sm:$0xff]
    %v6384 = vld [vmem:[%s2545 + $0x8] sm:$0xff]
    %v6385 = vld [vmem:[%s2545 + $0x10] sm:$0xff]
    %v6386 = vld [vmem:[%s2545 + $0x18] sm:$0xff]
    %v6387 = vld [vmem:[%s2545 + $0x20] sm:$0xff]
    %v6388 = vld [vmem:[%s2545 + $0x28] sm:$0xff]
    %v6389 = vld [vmem:[%s2545 + $0x30] sm:$0xff]
    %v6390 = vld [vmem:[%s2545 + $0x38] sm:$0xff]
    %v6391 = vld [vmem:[%s2545 + $0x40] sm:$0xff]
    %v6392 = vld [vmem:[%s2545 + $0x48] sm:$0xff]
    %v6393 = vld [vmem:[%s2545 + $0x50] sm:$0xff]
    %v6394 = vld [vmem:[%s2545 + $0x58] sm:$0xff]
    %v6395 = vld [vmem:[%s2545 + $0x60] sm:$0xff]
    %v6396 = vld [vmem:[%s2545 + $0x68] sm:$0xff]
    %v6397 = vld [vmem:[%s2545 + $0x70] sm:$0xff]
    %v6398 = vld [vmem:[%s2545 + $0x78] sm:$0xff]
    %v6399 = vld [vmem:[%s2545 + $0x80] sm:$0xff]
    %v6400 = vld [vmem:[%s2545 + $0x88] sm:$0xff]
    %v6401 = vld [vmem:[%s2545 + $0x90] sm:$0xff]
    %v6402 = vld [vmem:[%s2545 + $0x98] sm:$0xff]
    %v6403 = vld [vmem:[%s2545 + $0xa0] sm:$0xff]
    %v6404 = vld [vmem:[%s2545 + $0xa8] sm:$0xff]
    %v6405 = vld [vmem:[%s2545 + $0xb0] sm:$0xff]
    %v6406 = vld [vmem:[%s2545 + $0xb8] sm:$0xff]
    %v6407 = vld [vmem:[%s2545 + $0xc0] sm:$0xff]
    %v6408 = vld [vmem:[%s2545 + $0xc8] sm:$0xff]
    %v6409 = vld [vmem:[%s2545 + $0xd0] sm:$0xff]
    %v6410 = vld [vmem:[%s2545 + $0xd8] sm:$0xff]
    %v6411 = vld [vmem:[%s2545 + $0xe0] sm:$0xff]
    %v6412 = vld [vmem:[%s2545 + $0xe8] sm:$0xff]
    %v6413 = vld [vmem:[%s2545 + $0xf0] sm:$0xff]
    %v6414 = vld [vmem:[%s2545 + $0xf8] sm:$0xff]
    %v6415 = vld [vmem:[%s2545 + $0x100] sm:$0xff]
    %v6416 = vld [vmem:[%s2545 + $0x108] sm:$0xff]
    %v6417 = vld [vmem:[%s2545 + $0x110] sm:$0xff]
    %v6418 = vld [vmem:[%s2545 + $0x118] sm:$0xff]
    %v6419 = vld [vmem:[%s2545 + $0x120] sm:$0xff]
    %v6420 = vld [vmem:[%s2545 + $0x128] sm:$0xff]
    %v6421 = vld [vmem:[%s2545 + $0x130] sm:$0xff]
    %v6422 = vld [vmem:[%s2545 + $0x138] sm:$0xff]
    %v6423 = vld [vmem:[%s2545 + $0x140] sm:$0xff]
    %v6424 = vld [vmem:[%s2545 + $0x148] sm:$0xff]
    %v6425 = vld [vmem:[%s2545 + $0x150] sm:$0xff]
    %v6426 = vld [vmem:[%s2545 + $0x158] sm:$0xff]
    %v6427 = vld [vmem:[%s2545 + $0x160] sm:$0xff]
    %v6428 = vld [vmem:[%s2545 + $0x168] sm:$0xff]
    %v6429 = vld [vmem:[%s2545 + $0x170] sm:$0xff]
    %v6430 = vld [vmem:[%s2545 + $0x178] sm:$0xff]
    %v6431 = vld [vmem:[%s2545 + $0x180] sm:$0xff]
    %v6432 = vld [vmem:[%s2545 + $0x188] sm:$0xff]
    %v6433 = vld [vmem:[%s2545 + $0x190] sm:$0xff]
    %v6434 = vld [vmem:[%s2545 + $0x198] sm:$0xff]
    %v6435 = vld [vmem:[%s2545 + $0x1a0] sm:$0xff]
    %v6436 = vld [vmem:[%s2545 + $0x1a8] sm:$0xff]
    %v6437 = vld [vmem:[%s2545 + $0x1b0] sm:$0xff]
    %v6438 = vld [vmem:[%s2545 + $0x1b8] sm:$0xff]
    %v6439 = vld [vmem:[%s2545 + $0x1c0] sm:$0xff]
    %v6440 = vld [vmem:[%s2545 + $0x1c8] sm:$0xff]
    %v6441 = vld [vmem:[%s2545 + $0x1d0] sm:$0xff]
    %v6442 = vld [vmem:[%s2545 + $0x1d8] sm:$0xff]
    %v6443 = vld [vmem:[%s2545 + $0x1e0] sm:$0xff]
    %v6444 = vld [vmem:[%s2545 + $0x1e8] sm:$0xff]
    %v6445 = vld [vmem:[%s2545 + $0x1f0] sm:$0xff]
    %v6446 = vld [vmem:[%s2545 + $0x1f8] sm:$0xff]
    %v6447 = vld [vmem:[%s2545 + $0x200] sm:$0xff]
    %v6448 = vld [vmem:[%s2545 + $0x208] sm:$0xff]
    %v6449 = vld [vmem:[%s2545 + $0x210] sm:$0xff]
    %v6450 = vld [vmem:[%s2545 + $0x218] sm:$0xff]
    %v6451 = vld [vmem:[%s2545 + $0x220] sm:$0xff]
    %v6452 = vld [vmem:[%s2545 + $0x228] sm:$0xff]
    %v6453 = vld [vmem:[%s2545 + $0x230] sm:$0xff]
    %v6454 = vld [vmem:[%s2545 + $0x238] sm:$0xff]
    %v6455 = vld [vmem:[%s2545 + $0x240] sm:$0xff]
    %v6456 = vld [vmem:[%s2545 + $0x248] sm:$0xff]
    %v6457 = vld [vmem:[%s2545 + $0x250] sm:$0xff]
    %v6458 = vld [vmem:[%s2545 + $0x258] sm:$0xff]
    %v6459 = vld [vmem:[%s2545 + $0x260] sm:$0xff]
    %v6460 = vld [vmem:[%s2545 + $0x268] sm:$0xff]
    %v6461 = vld [vmem:[%s2545 + $0x270] sm:$0xff]
    %v6462 = vld [vmem:[%s2545 + $0x278] sm:$0xff]
    %v6463 = vld [vmem:[%s2545 + $0x280] sm:$0xff]
    %v6464 = vld [vmem:[%s2545 + $0x288] sm:$0xff]
    %v6465 = vld [vmem:[%s2545 + $0x290] sm:$0xff]
    %v6466 = vld [vmem:[%s2545 + $0x298] sm:$0xff]
    %v6467 = vld [vmem:[%s2545 + $0x2a0] sm:$0xff]
    %v6468 = vld [vmem:[%s2545 + $0x2a8] sm:$0xff]
    %v6469 = vld [vmem:[%s2545 + $0x2b0] sm:$0xff]
    %v6470 = vld [vmem:[%s2545 + $0x2b8] sm:$0xff]
    %v6471 = vld [vmem:[%s2545 + $0x2c0] sm:$0xff]
    %v6472 = vld [vmem:[%s2545 + $0x2c8] sm:$0xff]
    %v6473 = vld [vmem:[%s2545 + $0x2d0] sm:$0xff]
    %v6474 = vld [vmem:[%s2545 + $0x2d8] sm:$0xff]
    %v6475 = vld [vmem:[%s2545 + $0x2e0] sm:$0xff]
    %v6476 = vld [vmem:[%s2545 + $0x2e8] sm:$0xff]
    %v6477 = vld [vmem:[%s2545 + $0x2f0] sm:$0xff]
    %v6478 = vld [vmem:[%s2545 + $0x2f8] sm:$0xff]
    %v6479 = vsel %vm326, %v3976, 0
    %6481 = vmatpush.msra.mxu0 0.0
    %6482 = vmatpush.msra.mxu0 0.0
    %6483 = vmatpush.msra.mxu0 0.0
    %6484 = vmatpush.msra.mxu0 0.0
    %6485 = vmatpush.msra.mxu0 %v6471
    %6486 = vmatpush.msra.mxu0 %v6463
    %6487 = vmatpush.msra.mxu0 %v6455
    %6488 = vmatpush.msra.mxu0 %v6447
    %6489 = vmatpush.msra.mxu0 %v6439
    %6490 = vmatpush.msra.mxu0 %v6431
    %6491 = vmatpush.msra.mxu0 %v6423
    %6492 = vmatpush.msra.mxu0 %v6415
    %6493 = vmatpush.msra.mxu0 %v6407
    %6494 = vmatpush.msra.mxu0 %v6399
    %6495 = vmatpush.msra.mxu0 %v6391
    %6496 = vmatpush.msra.mxu0 %v6383
    %6497 = vmatmul.f32.gmra.mxu0 %v4367
    %v6498 = vpop.f32.mrf.mxu0
    %v6499 = vadd.f32 0.0, %v6498
    %6500 = vmatmul.f32.gmra.mxu0 %v6479
    %v6501 = vpop.f32.mrf.mxu0
    %v6502 = vadd.f32 0.0, %v6501
    %6503 = vdwg.mxu0
    %6504 = vmatpush.msra.mxu0 0.0
    %6505 = vmatpush.msra.mxu0 0.0
    %6506 = vmatpush.msra.mxu0 0.0
    %6507 = vmatpush.msra.mxu0 0.0
    %6508 = vmatpush.msra.mxu0 %v6472
    %6509 = vmatpush.msra.mxu0 %v6464
    %6510 = vmatpush.msra.mxu0 %v6456
    %6511 = vmatpush.msra.mxu0 %v6448
    %6512 = vmatpush.msra.mxu0 %v6440
    %6513 = vmatpush.msra.mxu0 %v6432
    %6514 = vmatpush.msra.mxu0 %v6424
    %6515 = vmatpush.msra.mxu0 %v6416
    %6516 = vmatpush.msra.mxu0 %v6408
    %6517 = vmatpush.msra.mxu0 %v6400
    %6518 = vmatpush.msra.mxu0 %v6392
    %6519 = vmatpush.msra.mxu0 %v6384
    %6520 = vmatmul.f32.gmra.mxu0 %v4367
    %v6521 = vpop.f32.mrf.mxu0
    %v6522 = vadd.f32 0.0, %v6521
    %6523 = vmatmul.f32.gmra.mxu0 %v6479
    %v6524 = vpop.f32.mrf.mxu0
    %v6525 = vadd.f32 0.0, %v6524
    %6526 = vdwg.mxu0
    %6527 = vmatpush.msra.mxu0 0.0
    %6528 = vmatpush.msra.mxu0 0.0
    %6529 = vmatpush.msra.mxu0 0.0
    %6530 = vmatpush.msra.mxu0 0.0
    %6531 = vmatpush.msra.mxu0 %v6473
    %6532 = vmatpush.msra.mxu0 %v6465
    %6533 = vmatpush.msra.mxu0 %v6457
    %6534 = vmatpush.msra.mxu0 %v6449
    %6535 = vmatpush.msra.mxu0 %v6441
    %6536 = vmatpush.msra.mxu0 %v6433
    %6537 = vmatpush.msra.mxu0 %v6425
    %6538 = vmatpush.msra.mxu0 %v6417
    %6539 = vmatpush.msra.mxu0 %v6409
    %6540 = vmatpush.msra.mxu0 %v6401
    %6541 = vmatpush.msra.mxu0 %v6393
    %6542 = vmatpush.msra.mxu0 %v6385
    %6543 = vmatmul.f32.gmra.mxu0 %v4367
    %v6544 = vpop.f32.mrf.mxu0
    %v6545 = vadd.f32 0.0, %v6544
    %6546 = vmatmul.f32.gmra.mxu0 %v6479
    %v6547 = vpop.f32.mrf.mxu0
    %v6548 = vadd.f32 0.0, %v6547
    %6549 = vdwg.mxu0
    %6550 = vmatpush.msra.mxu0 0.0
    %6551 = vmatpush.msra.mxu0 0.0
    %6552 = vmatpush.msra.mxu0 0.0
    %6553 = vmatpush.msra.mxu0 0.0
    %6554 = vmatpush.msra.mxu0 %v6474
    %6555 = vmatpush.msra.mxu0 %v6466
    %6556 = vmatpush.msra.mxu0 %v6458
    %6557 = vmatpush.msra.mxu0 %v6450
    %6558 = vmatpush.msra.mxu0 %v6442
    %6559 = vmatpush.msra.mxu0 %v6434
    %6560 = vmatpush.msra.mxu0 %v6426
    %6561 = vmatpush.msra.mxu0 %v6418
    %6562 = vmatpush.msra.mxu0 %v6410
    %6563 = vmatpush.msra.mxu0 %v6402
    %6564 = vmatpush.msra.mxu0 %v6394
    %6565 = vmatpush.msra.mxu0 %v6386
    %6566 = vmatmul.f32.gmra.mxu0 %v4367
    %v6567 = vpop.f32.mrf.mxu0
    %v6568 = vadd.f32 0.0, %v6567
    %6569 = vmatmul.f32.gmra.mxu0 %v6479
    %v6570 = vpop.f32.mrf.mxu0
    %v6571 = vadd.f32 0.0, %v6570
    %6572 = vdwg.mxu0
    %6573 = vmatpush.msra.mxu0 0.0
    %6574 = vmatpush.msra.mxu0 0.0
    %6575 = vmatpush.msra.mxu0 0.0
    %6576 = vmatpush.msra.mxu0 0.0
    %6577 = vmatpush.msra.mxu0 %v6475
    %6578 = vmatpush.msra.mxu0 %v6467
    %6579 = vmatpush.msra.mxu0 %v6459
    %6580 = vmatpush.msra.mxu0 %v6451
    %6581 = vmatpush.msra.mxu0 %v6443
    %6582 = vmatpush.msra.mxu0 %v6435
    %6583 = vmatpush.msra.mxu0 %v6427
    %6584 = vmatpush.msra.mxu0 %v6419
    %6585 = vmatpush.msra.mxu0 %v6411
    %6586 = vmatpush.msra.mxu0 %v6403
    %6587 = vmatpush.msra.mxu0 %v6395
    %6588 = vmatpush.msra.mxu0 %v6387
    %6589 = vmatmul.f32.gmra.mxu0 %v4367
    %v6590 = vpop.f32.mrf.mxu0
    %v6591 = vadd.f32 0.0, %v6590
    %6592 = vmatmul.f32.gmra.mxu0 %v6479
    %v6593 = vpop.f32.mrf.mxu0
    %v6594 = vadd.f32 0.0, %v6593
    %6595 = vdwg.mxu0
    %6596 = vmatpush.msra.mxu0 0.0
    %6597 = vmatpush.msra.mxu0 0.0
    %6598 = vmatpush.msra.mxu0 0.0
    %6599 = vmatpush.msra.mxu0 0.0
    %6600 = vmatpush.msra.mxu0 %v6476
    %6601 = vmatpush.msra.mxu0 %v6468
    %6602 = vmatpush.msra.mxu0 %v6460
    %6603 = vmatpush.msra.mxu0 %v6452
    %6604 = vmatpush.msra.mxu0 %v6444
    %6605 = vmatpush.msra.mxu0 %v6436
    %6606 = vmatpush.msra.mxu0 %v6428
    %6607 = vmatpush.msra.mxu0 %v6420
    %6608 = vmatpush.msra.mxu0 %v6412
    %6609 = vmatpush.msra.mxu0 %v6404
    %6610 = vmatpush.msra.mxu0 %v6396
    %6611 = vmatpush.msra.mxu0 %v6388
    %6612 = vmatmul.f32.gmra.mxu0 %v4367
    %v6613 = vpop.f32.mrf.mxu0
    %v6614 = vadd.f32 0.0, %v6613
    %6615 = vmatmul.f32.gmra.mxu0 %v6479
    %v6616 = vpop.f32.mrf.mxu0
    %v6617 = vadd.f32 0.0, %v6616
    %6618 = vdwg.mxu0
    %6619 = vmatpush.msra.mxu0 0.0
    %6620 = vmatpush.msra.mxu0 0.0
    %6621 = vmatpush.msra.mxu0 0.0
    %6622 = vmatpush.msra.mxu0 0.0
    %6623 = vmatpush.msra.mxu0 %v6477
    %6624 = vmatpush.msra.mxu0 %v6469
    %6625 = vmatpush.msra.mxu0 %v6461
    %6626 = vmatpush.msra.mxu0 %v6453
    %6627 = vmatpush.msra.mxu0 %v6445
    %6628 = vmatpush.msra.mxu0 %v6437
    %6629 = vmatpush.msra.mxu0 %v6429
    %6630 = vmatpush.msra.mxu0 %v6421
    %6631 = vmatpush.msra.mxu0 %v6413
    %6632 = vmatpush.msra.mxu0 %v6405
    %6633 = vmatpush.msra.mxu0 %v6397
    %6634 = vmatpush.msra.mxu0 %v6389
    %6635 = vmatmul.f32.gmra.mxu0 %v4367
    %v6636 = vpop.f32.mrf.mxu0
    %v6637 = vadd.f32 0.0, %v6636
    %6638 = vmatmul.f32.gmra.mxu0 %v6479
    %v6639 = vpop.f32.mrf.mxu0
    %v6640 = vadd.f32 0.0, %v6639
    %6641 = vdwg.mxu0
    %6642 = vmatpush.msra.mxu0 0.0
    %6643 = vmatpush.msra.mxu0 0.0
    %6644 = vmatpush.msra.mxu0 0.0
    %6645 = vmatpush.msra.mxu0 0.0
    %6646 = vmatpush.msra.mxu0 %v6478
    %6647 = vmatpush.msra.mxu0 %v6470
    %6648 = vmatpush.msra.mxu0 %v6462
    %6649 = vmatpush.msra.mxu0 %v6454
    %6650 = vmatpush.msra.mxu0 %v6446
    %6651 = vmatpush.msra.mxu0 %v6438
    %6652 = vmatpush.msra.mxu0 %v6430
    %6653 = vmatpush.msra.mxu0 %v6422
    %6654 = vmatpush.msra.mxu0 %v6414
    %6655 = vmatpush.msra.mxu0 %v6406
    %6656 = vmatpush.msra.mxu0 %v6398
    %6657 = vmatpush.msra.mxu0 %v6390
    %6658 = vmatmul.f32.gmra.mxu0 %v4367
    %v6659 = vpop.f32.mrf.mxu0
    %v6660 = vadd.f32 0.0, %v6659
    %6661 = vmatmul.f32.gmra.mxu0 %v6479
    %v6662 = vpop.f32.mrf.mxu0
    %v6663 = vadd.f32 0.0, %v6662
    %6664 = vdwg.mxu0
    %v6665 = vadd.f32 %v6367, %v6499
    %v6666 = vadd.f32 %v6368, %v6522
    %v6667 = vadd.f32 %v6369, %v6545
    %v6668 = vadd.f32 %v6370, %v6568
    %v6669 = vadd.f32 %v6371, %v6591
    %v6670 = vadd.f32 %v6372, %v6614
    %v6671 = vadd.f32 %v6373, %v6637
    %v6672 = vadd.f32 %v6374, %v6660
    %v6673 = vadd.f32 %v6375, %v6502
    %v6674 = vadd.f32 %v6376, %v6525
    %v6675 = vadd.f32 %v6377, %v6548
    %v6676 = vadd.f32 %v6378, %v6571
    %v6677 = vadd.f32 %v6379, %v6594
    %v6678 = vadd.f32 %v6380, %v6617
    %v6679 = vadd.f32 %v6381, %v6640
    %v6680 = vadd.f32 %v6382, %v6663
    %v6681 = vadd.f32 %v6665, %v2845
    %v6682 = vadd.f32 %v6666, %v2846
    %v6683 = vadd.f32 %v6667, %v2847
    %v6684 = vadd.f32 %v6668, %v2848
    %v6685 = vadd.f32 %v6669, %v2849
    %v6686 = vadd.f32 %v6670, %v2850
    %v6687 = vadd.f32 %v6671, %v2851
    %v6688 = vadd.f32 %v6672, %v2852
    %v6689 = vadd.f32 %v6673, %v2845
    %v6690 = vadd.f32 %v6674, %v2846
    %v6691 = vadd.f32 %v6675, %v2847
    %v6692 = vadd.f32 %v6676, %v2848
    %v6693 = vadd.f32 %v6677, %v2849
    %v6694 = vadd.f32 %v6678, %v2850
    %v6695 = vadd.f32 %v6679, %v2851
    %v6696 = vadd.f32 %v6680, %v2852
    %v6697 = vmax.f32 %v6681, 0.0
    %v6698 = vmax.f32 %v6682, 0.0
    %v6699 = vmax.f32 %v6683, 0.0
    %v6700 = vmax.f32 %v6684, 0.0
    %v6701 = vmax.f32 %v6685, 0.0
    %v6702 = vmax.f32 %v6686, 0.0
    %v6703 = vmax.f32 %v6687, 0.0
    %v6704 = vmax.f32 %v6688, 0.0
    %v6705 = vmax.f32 %v6689, 0.0
    %v6706 = vmax.f32 %v6690, 0.0
    %v6707 = vmax.f32 %v6691, 0.0
    %v6708 = vmax.f32 %v6692, 0.0
    %v6709 = vmax.f32 %v6693, 0.0
    %v6710 = vmax.f32 %v6694, 0.0
    %v6711 = vmax.f32 %v6695, 0.0
    %v6712 = vmax.f32 %v6696, 0.0
    %6713 = vmatpush.msra.mxu0 %v101
    %6714 = vmatpush.msra.mxu0 %v100
    %6715 = vmatpush.msra.mxu0 %v99
    %6716 = vmatpush.msra.mxu0 %v98
    %6717 = vmatpush.msra.mxu0 %v97
    %6718 = vmatpush.msra.mxu0 %v96
    %6719 = vmatpush.msra.mxu0 %v95
    %6720 = vmatpush.msra.mxu0 %v94
    %6721 = vmatpush.msra.mxu0 %v93
    %6722 = vmatpush.msra.mxu0 %v92
    %6723 = vmatpush.msra.mxu0 %v91
    %6724 = vmatpush.msra.mxu0 %v90
    %6725 = vmatpush.msra.mxu0 %v89
    %6726 = vmatpush.msra.mxu0 %v88
    %6727 = vmatpush.msra.mxu0 %v87
    %6728 = vmatpush.msra.mxu0 %v86
    %6729 = vmatmul.f32.gmra.mxu0 %v6697
    %v6730 = vpop.f32.mrf.mxu0
    %v6731 = vadd.f32 %v2894, %v6730
    %6732 = vmatmul.f32.gmra.mxu0 %v6705
    %v6733 = vpop.f32.mrf.mxu0
    %v6734 = vadd.f32 %v2894, %v6733
    %6735 = vdwg.mxu0
    %6736 = vmatpush.msra.mxu0 %v117
    %6737 = vmatpush.msra.mxu0 %v116
    %6738 = vmatpush.msra.mxu0 %v115
    %6739 = vmatpush.msra.mxu0 %v114
    %6740 = vmatpush.msra.mxu0 %v113
    %6741 = vmatpush.msra.mxu0 %v112
    %6742 = vmatpush.msra.mxu0 %v111
    %6743 = vmatpush.msra.mxu0 %v110
    %6744 = vmatpush.msra.mxu0 %v109
    %6745 = vmatpush.msra.mxu0 %v108
    %6746 = vmatpush.msra.mxu0 %v107
    %6747 = vmatpush.msra.mxu0 %v106
    %6748 = vmatpush.msra.mxu0 %v105
    %6749 = vmatpush.msra.mxu0 %v104
    %6750 = vmatpush.msra.mxu0 %v103
    %6751 = vmatpush.msra.mxu0 %v102
    %6752 = vmatmul.f32.gmra.mxu0 %v6698
    %v6753 = vpop.f32.mrf.mxu0
    %v6754 = vadd.f32 %v6731, %v6753
    %6755 = vmatmul.f32.gmra.mxu0 %v6706
    %v6756 = vpop.f32.mrf.mxu0
    %v6757 = vadd.f32 %v6734, %v6756
    %6758 = vdwg.mxu0
    %v6759 = vmax.f32 %v6754, 0.0
    %v6760 = vmax.f32 %v6757, 0.0
    %6761 = vmatpush.msra.mxu0 %v101
    %6762 = vmatpush.msra.mxu0 %v100
    %6763 = vmatpush.msra.mxu0 %v99
    %6764 = vmatpush.msra.mxu0 %v98
    %6765 = vmatpush.msra.mxu0 %v97
    %6766 = vmatpush.msra.mxu0 %v96
    %6767 = vmatpush.msra.mxu0 %v95
    %6768 = vmatpush.msra.mxu0 %v94
    %6769 = vmatpush.msra.mxu0 %v93
    %6770 = vmatpush.msra.mxu0 %v92
    %6771 = vmatpush.msra.mxu0 %v91
    %6772 = vmatpush.msra.mxu0 %v90
    %6773 = vmatpush.msra.mxu0 %v89
    %6774 = vmatpush.msra.mxu0 %v88
    %6775 = vmatpush.msra.mxu0 %v87
    %6776 = vmatpush.msra.mxu0 %v86
    %6777 = vmatmul.f32.gmra.mxu0 %v6699
    %v6778 = vpop.f32.mrf.mxu0
    %v6779 = vadd.f32 %v2894, %v6778
    %6780 = vmatmul.f32.gmra.mxu0 %v6707
    %v6781 = vpop.f32.mrf.mxu0
    %v6782 = vadd.f32 %v2894, %v6781
    %6783 = vdwg.mxu0
    %6784 = vmatpush.msra.mxu0 %v117
    %6785 = vmatpush.msra.mxu0 %v116
    %6786 = vmatpush.msra.mxu0 %v115
    %6787 = vmatpush.msra.mxu0 %v114
    %6788 = vmatpush.msra.mxu0 %v113
    %6789 = vmatpush.msra.mxu0 %v112
    %6790 = vmatpush.msra.mxu0 %v111
    %6791 = vmatpush.msra.mxu0 %v110
    %6792 = vmatpush.msra.mxu0 %v109
    %6793 = vmatpush.msra.mxu0 %v108
    %6794 = vmatpush.msra.mxu0 %v107
    %6795 = vmatpush.msra.mxu0 %v106
    %6796 = vmatpush.msra.mxu0 %v105
    %6797 = vmatpush.msra.mxu0 %v104
    %6798 = vmatpush.msra.mxu0 %v103
    %6799 = vmatpush.msra.mxu0 %v102
    %6800 = vmatmul.f32.gmra.mxu0 %v6700
    %v6801 = vpop.f32.mrf.mxu0
    %v6802 = vadd.f32 %v6779, %v6801
    %6803 = vmatmul.f32.gmra.mxu0 %v6708
    %v6804 = vpop.f32.mrf.mxu0
    %v6805 = vadd.f32 %v6782, %v6804
    %6806 = vdwg.mxu0
    %v6807 = vmax.f32 %v6802, 0.0
    %v6808 = vmax.f32 %v6805, 0.0
    %6809 = vmatpush.msra.mxu0 %v101
    %6810 = vmatpush.msra.mxu0 %v100
    %6811 = vmatpush.msra.mxu0 %v99
    %6812 = vmatpush.msra.mxu0 %v98
    %6813 = vmatpush.msra.mxu0 %v97
    %6814 = vmatpush.msra.mxu0 %v96
    %6815 = vmatpush.msra.mxu0 %v95
    %6816 = vmatpush.msra.mxu0 %v94
    %6817 = vmatpush.msra.mxu0 %v93
    %6818 = vmatpush.msra.mxu0 %v92
    %6819 = vmatpush.msra.mxu0 %v91
    %6820 = vmatpush.msra.mxu0 %v90
    %6821 = vmatpush.msra.mxu0 %v89
    %6822 = vmatpush.msra.mxu0 %v88
    %6823 = vmatpush.msra.mxu0 %v87
    %6824 = vmatpush.msra.mxu0 %v86
    %6825 = vmatmul.f32.gmra.mxu0 %v6701
    %v6826 = vpop.f32.mrf.mxu0
    %v6827 = vadd.f32 %v2894, %v6826
    %6828 = vmatmul.f32.gmra.mxu0 %v6709
    %v6829 = vpop.f32.mrf.mxu0
    %v6830 = vadd.f32 %v2894, %v6829
    %6831 = vdwg.mxu0
    %6832 = vmatpush.msra.mxu0 %v117
    %6833 = vmatpush.msra.mxu0 %v116
    %6834 = vmatpush.msra.mxu0 %v115
    %6835 = vmatpush.msra.mxu0 %v114
    %6836 = vmatpush.msra.mxu0 %v113
    %6837 = vmatpush.msra.mxu0 %v112
    %6838 = vmatpush.msra.mxu0 %v111
    %6839 = vmatpush.msra.mxu0 %v110
    %6840 = vmatpush.msra.mxu0 %v109
    %6841 = vmatpush.msra.mxu0 %v108
    %6842 = vmatpush.msra.mxu0 %v107
    %6843 = vmatpush.msra.mxu0 %v106
    %6844 = vmatpush.msra.mxu0 %v105
    %6845 = vmatpush.msra.mxu0 %v104
    %6846 = vmatpush.msra.mxu0 %v103
    %6847 = vmatpush.msra.mxu0 %v102
    %6848 = vmatmul.f32.gmra.mxu0 %v6702
    %v6849 = vpop.f32.mrf.mxu0
    %v6850 = vadd.f32 %v6827, %v6849
    %6851 = vmatmul.f32.gmra.mxu0 %v6710
    %v6852 = vpop.f32.mrf.mxu0
    %v6853 = vadd.f32 %v6830, %v6852
    %6854 = vdwg.mxu0
    %v6855 = vmax.f32 %v6850, 0.0
    %v6856 = vmax.f32 %v6853, 0.0
    %6857 = vmatpush.msra.mxu0 %v101
    %6858 = vmatpush.msra.mxu0 %v100
    %6859 = vmatpush.msra.mxu0 %v99
    %6860 = vmatpush.msra.mxu0 %v98
    %6861 = vmatpush.msra.mxu0 %v97
    %6862 = vmatpush.msra.mxu0 %v96
    %6863 = vmatpush.msra.mxu0 %v95
    %6864 = vmatpush.msra.mxu0 %v94
    %6865 = vmatpush.msra.mxu0 %v93
    %6866 = vmatpush.msra.mxu0 %v92
    %6867 = vmatpush.msra.mxu0 %v91
    %6868 = vmatpush.msra.mxu0 %v90
    %6869 = vmatpush.msra.mxu0 %v89
    %6870 = vmatpush.msra.mxu0 %v88
    %6871 = vmatpush.msra.mxu0 %v87
    %6872 = vmatpush.msra.mxu0 %v86
    %6873 = vmatmul.f32.gmra.mxu0 %v6703
    %v6874 = vpop.f32.mrf.mxu0
    %v6875 = vadd.f32 %v2894, %v6874
    %6876 = vmatmul.f32.gmra.mxu0 %v6711
    %v6877 = vpop.f32.mrf.mxu0
    %v6878 = vadd.f32 %v2894, %v6877
    %6879 = vdwg.mxu0
    %6880 = vmatpush.msra.mxu0 %v117
    %6881 = vmatpush.msra.mxu0 %v116
    %6882 = vmatpush.msra.mxu0 %v115
    %6883 = vmatpush.msra.mxu0 %v114
    %6884 = vmatpush.msra.mxu0 %v113
    %6885 = vmatpush.msra.mxu0 %v112
    %6886 = vmatpush.msra.mxu0 %v111
    %6887 = vmatpush.msra.mxu0 %v110
    %6888 = vmatpush.msra.mxu0 %v109
    %6889 = vmatpush.msra.mxu0 %v108
    %6890 = vmatpush.msra.mxu0 %v107
    %6891 = vmatpush.msra.mxu0 %v106
    %6892 = vmatpush.msra.mxu0 %v105
    %6893 = vmatpush.msra.mxu0 %v104
    %6894 = vmatpush.msra.mxu0 %v103
    %6895 = vmatpush.msra.mxu0 %v102
    %6896 = vmatmul.f32.gmra.mxu0 %v6704
    %v6897 = vpop.f32.mrf.mxu0
    %v6898 = vadd.f32 %v6875, %v6897
    %6899 = vmatmul.f32.gmra.mxu0 %v6712
    %v6900 = vpop.f32.mrf.mxu0
    %v6901 = vadd.f32 %v6878, %v6900
    %6902 = vdwg.mxu0
    %v6903 = vmax.f32 %v6898, 0.0
    %v6904 = vmax.f32 %v6901, 0.0
    %v6905 = vld [vmem:[%s5] sm:$0xff]
    %v6906 = vld [vmem:[%s5 + $0x8] sm:$0xff]
    %v6907 = vld [vmem:[%s5 + $0x10] sm:$0xff]
    %v6908 = vld [vmem:[%s5 + $0x18] sm:$0xff]
    %v6909 = vld [vmem:[%s5 + $0x20] sm:$0xff]
    %v6910 = vld [vmem:[%s5 + $0x28] sm:$0xff]
    %v6911 = vld [vmem:[%s5 + $0x30] sm:$0xff]
    %v6912 = vld [vmem:[%s5 + $0x38] sm:$0xff]
    %v6913 = vld [vmem:[%s5 + $0x40] sm:$0xff]
    %v6914 = vld [vmem:[%s5 + $0x48] sm:$0xff]
    %v6915 = vld [vmem:[%s5 + $0x50] sm:$0xff]
    %v6916 = vld [vmem:[%s5 + $0x58] sm:$0xff]
    %v6917 = vld [vmem:[%s5 + $0x60] sm:$0xff]
    %v6918 = vld [vmem:[%s5 + $0x68] sm:$0xff]
    %v6919 = vld [vmem:[%s5 + $0x70] sm:$0xff]
    %v6920 = vld [vmem:[%s5 + $0x78] sm:$0xff]
    %v6921 = vld [vmem:[%s5 + $0x80] sm:$0xff]
    %v6922 = vld [vmem:[%s5 + $0x88] sm:$0xff]
    %v6923 = vld [vmem:[%s5 + $0x90] sm:$0xff]
    %v6924 = vld [vmem:[%s5 + $0x98] sm:$0xff]
    %v6925 = vld [vmem:[%s5 + $0xa0] sm:$0xff]
    %v6926 = vld [vmem:[%s5 + $0xa8] sm:$0xff]
    %v6927 = vld [vmem:[%s5 + $0xb0] sm:$0xff]
    %v6928 = vld [vmem:[%s5 + $0xb8] sm:$0xff]
    %v6929 = vld [vmem:[%s5 + $0xc0] sm:$0xff]
    %v6930 = vld [vmem:[%s5 + $0xc8] sm:$0xff]
    %v6931 = vld [vmem:[%s5 + $0xd0] sm:$0xff]
    %v6932 = vld [vmem:[%s5 + $0xd8] sm:$0xff]
    %v6933 = vld [vmem:[%s5 + $0xe0] sm:$0xff]
    %v6934 = vld [vmem:[%s5 + $0xe8] sm:$0xff]
    %v6935 = vld [vmem:[%s5 + $0xf0] sm:$0xff]
    %v6936 = vld [vmem:[%s5 + $0xf8] sm:$0xff]
    %v6937 = vld [vmem:[%s5 + $0x100] sm:$0xff]
    %v6938 = vld [vmem:[%s5 + $0x108] sm:$0xff]
    %v6939 = vld [vmem:[%s5 + $0x110] sm:$0xff]
    %v6940 = vld [vmem:[%s5 + $0x118] sm:$0xff]
    %v6941 = vld [vmem:[%s5 + $0x120] sm:$0xff]
    %v6942 = vld [vmem:[%s5 + $0x128] sm:$0xff]
    %v6943 = vld [vmem:[%s5 + $0x130] sm:$0xff]
    %v6944 = vld [vmem:[%s5 + $0x138] sm:$0xff]
    %v6945 = vld [vmem:[%s5 + $0x140] sm:$0xff]
    %v6946 = vld [vmem:[%s5 + $0x148] sm:$0xff]
    %v6947 = vld [vmem:[%s5 + $0x150] sm:$0xff]
    %v6948 = vld [vmem:[%s5 + $0x158] sm:$0xff]
    %v6949 = vld [vmem:[%s5 + $0x160] sm:$0xff]
    %v6950 = vld [vmem:[%s5 + $0x168] sm:$0xff]
    %v6951 = vld [vmem:[%s5 + $0x170] sm:$0xff]
    %v6952 = vld [vmem:[%s5 + $0x178] sm:$0xff]
    %v6953 = vld [vmem:[%s5 + $0x180] sm:$0xff]
    %v6954 = vld [vmem:[%s5 + $0x188] sm:$0xff]
    %v6955 = vld [vmem:[%s5 + $0x190] sm:$0xff]
    %v6956 = vld [vmem:[%s5 + $0x198] sm:$0xff]
    %v6957 = vld [vmem:[%s5 + $0x1a0] sm:$0xff]
    %v6958 = vld [vmem:[%s5 + $0x1a8] sm:$0xff]
    %v6959 = vld [vmem:[%s5 + $0x1b0] sm:$0xff]
    %v6960 = vld [vmem:[%s5 + $0x1b8] sm:$0xff]
    %v6961 = vld [vmem:[%s5 + $0x1c0] sm:$0xff]
    %v6962 = vld [vmem:[%s5 + $0x1c8] sm:$0xff]
    %v6963 = vld [vmem:[%s5 + $0x1d0] sm:$0xff]
    %v6964 = vld [vmem:[%s5 + $0x1d8] sm:$0xff]
    %v6965 = vld [vmem:[%s5 + $0x1e0] sm:$0xff]
    %v6966 = vld [vmem:[%s5 + $0x1e8] sm:$0xff]
    %v6967 = vld [vmem:[%s5 + $0x1f0] sm:$0xff]
    %v6968 = vld [vmem:[%s5 + $0x1f8] sm:$0xff]
    %v6969 = vld [vmem:[%s3152] sm:$0xff]
    %v6970 = vld [vmem:[%s3152 + $0x8] sm:$0xff]
    %v6971 = vld [vmem:[%s3152 + $0x10] sm:$0xff]
    %v6972 = vld [vmem:[%s3152 + $0x18] sm:$0xff]
    %v6973 = vld [vmem:[%s3152 + $0x20] sm:$0xff]
    %v6974 = vld [vmem:[%s3152 + $0x28] sm:$0xff]
    %v6975 = vld [vmem:[%s3152 + $0x30] sm:$0xff]
    %v6976 = vld [vmem:[%s3152 + $0x38] sm:$0xff]
    %v6977 = vld [vmem:[%s3152 + $0x40] sm:$0xff]
    %v6978 = vld [vmem:[%s3152 + $0x48] sm:$0xff]
    %v6979 = vld [vmem:[%s3152 + $0x50] sm:$0xff]
    %v6980 = vld [vmem:[%s3152 + $0x58] sm:$0xff]
    %v6981 = vld [vmem:[%s3152 + $0x60] sm:$0xff]
    %v6982 = vld [vmem:[%s3152 + $0x68] sm:$0xff]
    %v6983 = vld [vmem:[%s3152 + $0x70] sm:$0xff]
    %v6984 = vld [vmem:[%s3152 + $0x78] sm:$0xff]
    %v6985 = vld [vmem:[%s3152 + $0x80] sm:$0xff]
    %v6986 = vld [vmem:[%s3152 + $0x88] sm:$0xff]
    %v6987 = vld [vmem:[%s3152 + $0x90] sm:$0xff]
    %v6988 = vld [vmem:[%s3152 + $0x98] sm:$0xff]
    %v6989 = vld [vmem:[%s3152 + $0xa0] sm:$0xff]
    %v6990 = vld [vmem:[%s3152 + $0xa8] sm:$0xff]
    %v6991 = vld [vmem:[%s3152 + $0xb0] sm:$0xff]
    %v6992 = vld [vmem:[%s3152 + $0xb8] sm:$0xff]
    %v6993 = vld [vmem:[%s3152 + $0xc0] sm:$0xff]
    %v6994 = vld [vmem:[%s3152 + $0xc8] sm:$0xff]
    %v6995 = vld [vmem:[%s3152 + $0xd0] sm:$0xff]
    %v6996 = vld [vmem:[%s3152 + $0xd8] sm:$0xff]
    %v6997 = vld [vmem:[%s3152 + $0xe0] sm:$0xff]
    %v6998 = vld [vmem:[%s3152 + $0xe8] sm:$0xff]
    %v6999 = vld [vmem:[%s3152 + $0xf0] sm:$0xff]
    %v7000 = vld [vmem:[%s3152 + $0xf8] sm:$0xff]
    %v7001 = vld [vmem:[%s3152 + $0x100] sm:$0xff]
    %v7002 = vld [vmem:[%s3152 + $0x108] sm:$0xff]
    %v7003 = vld [vmem:[%s3152 + $0x110] sm:$0xff]
    %v7004 = vld [vmem:[%s3152 + $0x118] sm:$0xff]
    %v7005 = vld [vmem:[%s3152 + $0x120] sm:$0xff]
    %v7006 = vld [vmem:[%s3152 + $0x128] sm:$0xff]
    %v7007 = vld [vmem:[%s3152 + $0x130] sm:$0xff]
    %v7008 = vld [vmem:[%s3152 + $0x138] sm:$0xff]
    %v7009 = vld [vmem:[%s3152 + $0x140] sm:$0xff]
    %v7010 = vld [vmem:[%s3152 + $0x148] sm:$0xff]
    %v7011 = vld [vmem:[%s3152 + $0x150] sm:$0xff]
    %v7012 = vld [vmem:[%s3152 + $0x158] sm:$0xff]
    %v7013 = vld [vmem:[%s3152 + $0x160] sm:$0xff]
    %v7014 = vld [vmem:[%s3152 + $0x168] sm:$0xff]
    %v7015 = vld [vmem:[%s3152 + $0x170] sm:$0xff]
    %v7016 = vld [vmem:[%s3152 + $0x178] sm:$0xff]
    %v7017 = vld [vmem:[%s3152 + $0x180] sm:$0xff]
    %v7018 = vld [vmem:[%s3152 + $0x188] sm:$0xff]
    %v7019 = vld [vmem:[%s3152 + $0x190] sm:$0xff]
    %v7020 = vld [vmem:[%s3152 + $0x198] sm:$0xff]
    %v7021 = vld [vmem:[%s3152 + $0x1a0] sm:$0xff]
    %v7022 = vld [vmem:[%s3152 + $0x1a8] sm:$0xff]
    %v7023 = vld [vmem:[%s3152 + $0x1b0] sm:$0xff]
    %v7024 = vld [vmem:[%s3152 + $0x1b8] sm:$0xff]
    %v7025 = vld [vmem:[%s3152 + $0x1c0] sm:$0xff]
    %v7026 = vld [vmem:[%s3152 + $0x1c8] sm:$0xff]
    %v7027 = vld [vmem:[%s3152 + $0x1d0] sm:$0xff]
    %v7028 = vld [vmem:[%s3152 + $0x1d8] sm:$0xff]
    %v7029 = vld [vmem:[%s3152 + $0x1e0] sm:$0xff]
    %v7030 = vld [vmem:[%s3152 + $0x1e8] sm:$0xff]
    %v7031 = vld [vmem:[%s3152 + $0x1f0] sm:$0xff]
    %v7032 = vld [vmem:[%s3152 + $0x1f8] sm:$0xff]
    %v7041 = vrot.slane %v6759, 1
    %v7042 = vrot.slane %v6760, 1
    %v7043 = vsel %vm320, %v7041, %v7042
    %v7044 = vrot.slane %v6807, 1
    %v7045 = vrot.slane %v6808, 1
    %v7046 = vsel %vm320, %v7044, %v7045
    %v7047 = vrot.slane %v6855, 1
    %v7048 = vrot.slane %v6856, 1
    %v7049 = vsel %vm320, %v7047, %v7048
    %v7050 = vrot.slane %v6903, 1
    %v7051 = vrot.slane %v6904, 1
    %v7052 = vsel %vm320, %v7050, %v7051
    %7061 = vmatpush.msra.mxu0 %v6984
    %7062 = vmatpush.msra.mxu0 %v6983
    %7063 = vmatpush.msra.mxu0 %v6982
    %7064 = vmatpush.msra.mxu0 %v6981
    %7065 = vmatpush.msra.mxu0 %v6980
    %7066 = vmatpush.msra.mxu0 %v6979
    %7067 = vmatpush.msra.mxu0 %v6978
    %7068 = vmatpush.msra.mxu0 %v6977
    %7069 = vmatpush.msra.mxu0 %v6976
    %7070 = vmatpush.msra.mxu0 %v6975
    %7071 = vmatpush.msra.mxu0 %v6974
    %7072 = vmatpush.msra.mxu0 %v6973
    %7073 = vmatpush.msra.mxu0 %v6972
    %7074 = vmatpush.msra.mxu0 %v6971
    %7075 = vmatpush.msra.mxu0 %v6970
    %7076 = vmatpush.msra.mxu0 %v6969
    %7077 = vmatmul.f32.gmra.mxu0 %v7043
    %v7078 = vpop.f32.mrf.mxu0
    %v7079 = vadd.f32 0.0, %v7078
    %7080 = vmatmul.f32.gmra.mxu0 %v7042
    %v7081 = vpop.f32.mrf.mxu0
    %v7082 = vadd.f32 0.0, %v7081
    %7083 = vdwg.mxu0
    %7084 = vmatpush.msra.mxu0 %v7000
    %7085 = vmatpush.msra.mxu0 %v6999
    %7086 = vmatpush.msra.mxu0 %v6998
    %7087 = vmatpush.msra.mxu0 %v6997
    %7088 = vmatpush.msra.mxu0 %v6996
    %7089 = vmatpush.msra.mxu0 %v6995
    %7090 = vmatpush.msra.mxu0 %v6994
    %7091 = vmatpush.msra.mxu0 %v6993
    %7092 = vmatpush.msra.mxu0 %v6992
    %7093 = vmatpush.msra.mxu0 %v6991
    %7094 = vmatpush.msra.mxu0 %v6990
    %7095 = vmatpush.msra.mxu0 %v6989
    %7096 = vmatpush.msra.mxu0 %v6988
    %7097 = vmatpush.msra.mxu0 %v6987
    %7098 = vmatpush.msra.mxu0 %v6986
    %7099 = vmatpush.msra.mxu0 %v6985
    %7100 = vmatmul.f32.gmra.mxu0 %v7046
    %v7101 = vpop.f32.mrf.mxu0
    %v7102 = vadd.f32 %v7079, %v7101
    %7103 = vmatmul.f32.gmra.mxu0 %v7045
    %v7104 = vpop.f32.mrf.mxu0
    %v7105 = vadd.f32 %v7082, %v7104
    %7106 = vdwg.mxu0
    %7107 = vmatpush.msra.mxu0 %v7016
    %7108 = vmatpush.msra.mxu0 %v7015
    %7109 = vmatpush.msra.mxu0 %v7014
    %7110 = vmatpush.msra.mxu0 %v7013
    %7111 = vmatpush.msra.mxu0 %v7012
    %7112 = vmatpush.msra.mxu0 %v7011
    %7113 = vmatpush.msra.mxu0 %v7010
    %7114 = vmatpush.msra.mxu0 %v7009
    %7115 = vmatpush.msra.mxu0 %v7008
    %7116 = vmatpush.msra.mxu0 %v7007
    %7117 = vmatpush.msra.mxu0 %v7006
    %7118 = vmatpush.msra.mxu0 %v7005
    %7119 = vmatpush.msra.mxu0 %v7004
    %7120 = vmatpush.msra.mxu0 %v7003
    %7121 = vmatpush.msra.mxu0 %v7002
    %7122 = vmatpush.msra.mxu0 %v7001
    %7123 = vmatmul.f32.gmra.mxu0 %v7049
    %v7124 = vpop.f32.mrf.mxu0
    %v7125 = vadd.f32 %v7102, %v7124
    %7126 = vmatmul.f32.gmra.mxu0 %v7048
    %v7127 = vpop.f32.mrf.mxu0
    %v7128 = vadd.f32 %v7105, %v7127
    %7129 = vdwg.mxu0
    %7130 = vmatpush.msra.mxu0 %v7032
    %7131 = vmatpush.msra.mxu0 %v7031
    %7132 = vmatpush.msra.mxu0 %v7030
    %7133 = vmatpush.msra.mxu0 %v7029
    %7134 = vmatpush.msra.mxu0 %v7028
    %7135 = vmatpush.msra.mxu0 %v7027
    %7136 = vmatpush.msra.mxu0 %v7026
    %7137 = vmatpush.msra.mxu0 %v7025
    %7138 = vmatpush.msra.mxu0 %v7024
    %7139 = vmatpush.msra.mxu0 %v7023
    %7140 = vmatpush.msra.mxu0 %v7022
    %7141 = vmatpush.msra.mxu0 %v7021
    %7142 = vmatpush.msra.mxu0 %v7020
    %7143 = vmatpush.msra.mxu0 %v7019
    %7144 = vmatpush.msra.mxu0 %v7018
    %7145 = vmatpush.msra.mxu0 %v7017
    %7146 = vmatmul.f32.gmra.mxu0 %v7052
    %v7147 = vpop.f32.mrf.mxu0
    %v7148 = vadd.f32 %v7125, %v7147
    %7149 = vmatmul.f32.gmra.mxu0 %v7051
    %v7150 = vpop.f32.mrf.mxu0
    %v7151 = vadd.f32 %v7128, %v7150
    %7152 = vdwg.mxu0
    %7153 = vmatpush.msra.mxu0 %v6920
    %7154 = vmatpush.msra.mxu0 %v6919
    %7155 = vmatpush.msra.mxu0 %v6918
    %7156 = vmatpush.msra.mxu0 %v6917
    %7157 = vmatpush.msra.mxu0 %v6916
    %7158 = vmatpush.msra.mxu0 %v6915
    %7159 = vmatpush.msra.mxu0 %v6914
    %7160 = vmatpush.msra.mxu0 %v6913
    %7161 = vmatpush.msra.mxu0 %v6912
    %7162 = vmatpush.msra.mxu0 %v6911
    %7163 = vmatpush.msra.mxu0 %v6910
    %7164 = vmatpush.msra.mxu0 %v6909
    %7165 = vmatpush.msra.mxu0 %v6908
    %7166 = vmatpush.msra.mxu0 %v6907
    %7167 = vmatpush.msra.mxu0 %v6906
    %7168 = vmatpush.msra.mxu0 %v6905
    %7169 = vmatmul.f32.gmra.mxu0 %v6759
    %v7170 = vpop.f32.mrf.mxu0
    %v7171 = vadd.f32 %v7148, %v7170
    %7172 = vmatmul.f32.gmra.mxu0 %v6760
    %v7173 = vpop.f32.mrf.mxu0
    %v7174 = vadd.f32 %v7151, %v7173
    %7175 = vdwg.mxu0
    %7176 = vmatpush.msra.mxu0 %v6936
    %7177 = vmatpush.msra.mxu0 %v6935
    %7178 = vmatpush.msra.mxu0 %v6934
    %7179 = vmatpush.msra.mxu0 %v6933
    %7180 = vmatpush.msra.mxu0 %v6932
    %7181 = vmatpush.msra.mxu0 %v6931
    %7182 = vmatpush.msra.mxu0 %v6930
    %7183 = vmatpush.msra.mxu0 %v6929
    %7184 = vmatpush.msra.mxu0 %v6928
    %7185 = vmatpush.msra.mxu0 %v6927
    %7186 = vmatpush.msra.mxu0 %v6926
    %7187 = vmatpush.msra.mxu0 %v6925
    %7188 = vmatpush.msra.mxu0 %v6924
    %7189 = vmatpush.msra.mxu0 %v6923
    %7190 = vmatpush.msra.mxu0 %v6922
    %7191 = vmatpush.msra.mxu0 %v6921
    %7192 = vmatmul.f32.gmra.mxu0 %v6807
    %v7193 = vpop.f32.mrf.mxu0
    %v7194 = vadd.f32 %v7171, %v7193
    %7195 = vmatmul.f32.gmra.mxu0 %v6808
    %v7196 = vpop.f32.mrf.mxu0
    %v7197 = vadd.f32 %v7174, %v7196
    %7198 = vdwg.mxu0
    %7199 = vmatpush.msra.mxu0 %v6952
    %7200 = vmatpush.msra.mxu0 %v6951
    %7201 = vmatpush.msra.mxu0 %v6950
    %7202 = vmatpush.msra.mxu0 %v6949
    %7203 = vmatpush.msra.mxu0 %v6948
    %7204 = vmatpush.msra.mxu0 %v6947
    %7205 = vmatpush.msra.mxu0 %v6946
    %7206 = vmatpush.msra.mxu0 %v6945
    %7207 = vmatpush.msra.mxu0 %v6944
    %7208 = vmatpush.msra.mxu0 %v6943
    %7209 = vmatpush.msra.mxu0 %v6942
    %7210 = vmatpush.msra.mxu0 %v6941
    %7211 = vmatpush.msra.mxu0 %v6940
    %7212 = vmatpush.msra.mxu0 %v6939
    %7213 = vmatpush.msra.mxu0 %v6938
    %7214 = vmatpush.msra.mxu0 %v6937
    %7215 = vmatmul.f32.gmra.mxu0 %v6855
    %v7216 = vpop.f32.mrf.mxu0
    %v7217 = vadd.f32 %v7194, %v7216
    %7218 = vmatmul.f32.gmra.mxu0 %v6856
    %v7219 = vpop.f32.mrf.mxu0
    %v7220 = vadd.f32 %v7197, %v7219
    %7221 = vdwg.mxu0
    %7222 = vmatpush.msra.mxu0 %v6968
    %7223 = vmatpush.msra.mxu0 %v6967
    %7224 = vmatpush.msra.mxu0 %v6966
    %7225 = vmatpush.msra.mxu0 %v6965
    %7226 = vmatpush.msra.mxu0 %v6964
    %7227 = vmatpush.msra.mxu0 %v6963
    %7228 = vmatpush.msra.mxu0 %v6962
    %7229 = vmatpush.msra.mxu0 %v6961
    %7230 = vmatpush.msra.mxu0 %v6960
    %7231 = vmatpush.msra.mxu0 %v6959
    %7232 = vmatpush.msra.mxu0 %v6958
    %7233 = vmatpush.msra.mxu0 %v6957
    %7234 = vmatpush.msra.mxu0 %v6956
    %7235 = vmatpush.msra.mxu0 %v6955
    %7236 = vmatpush.msra.mxu0 %v6954
    %7237 = vmatpush.msra.mxu0 %v6953
    %7238 = vmatmul.f32.gmra.mxu0 %v6903
    %v7239 = vpop.f32.mrf.mxu0
    %v7240 = vadd.f32 %v7217, %v7239
    %7241 = vmatmul.f32.gmra.mxu0 %v6904
    %v7242 = vpop.f32.mrf.mxu0
    %v7243 = vadd.f32 %v7220, %v7242
    %7244 = vdwg.mxu0
    %v7245 = vld [vmem:[%s3429] sm:$0xff]
    %v7246 = vld [vmem:[%s3429 + $0x8] sm:$0xff]
    %v7247 = vld [vmem:[%s3429 + $0x10] sm:$0xff]
    %v7248 = vld [vmem:[%s3429 + $0x18] sm:$0xff]
    %v7249 = vld [vmem:[%s3429 + $0x20] sm:$0xff]
    %v7250 = vld [vmem:[%s3429 + $0x28] sm:$0xff]
    %v7251 = vld [vmem:[%s3429 + $0x30] sm:$0xff]
    %v7252 = vld [vmem:[%s3429 + $0x38] sm:$0xff]
    %v7253 = vld [vmem:[%s3429 + $0x40] sm:$0xff]
    %v7254 = vld [vmem:[%s3429 + $0x48] sm:$0xff]
    %v7255 = vld [vmem:[%s3429 + $0x50] sm:$0xff]
    %v7256 = vld [vmem:[%s3429 + $0x58] sm:$0xff]
    %v7257 = vld [vmem:[%s3429 + $0x60] sm:$0xff]
    %v7258 = vld [vmem:[%s3429 + $0x68] sm:$0xff]
    %v7259 = vld [vmem:[%s3429 + $0x70] sm:$0xff]
    %v7260 = vld [vmem:[%s3429 + $0x78] sm:$0xff]
    %v7261 = vld [vmem:[%s3429 + $0x80] sm:$0xff]
    %v7262 = vld [vmem:[%s3429 + $0x88] sm:$0xff]
    %v7263 = vld [vmem:[%s3429 + $0x90] sm:$0xff]
    %v7264 = vld [vmem:[%s3429 + $0x98] sm:$0xff]
    %v7265 = vld [vmem:[%s3429 + $0xa0] sm:$0xff]
    %v7266 = vld [vmem:[%s3429 + $0xa8] sm:$0xff]
    %v7267 = vld [vmem:[%s3429 + $0xb0] sm:$0xff]
    %v7268 = vld [vmem:[%s3429 + $0xb8] sm:$0xff]
    %v7269 = vld [vmem:[%s3429 + $0xc0] sm:$0xff]
    %v7270 = vld [vmem:[%s3429 + $0xc8] sm:$0xff]
    %v7271 = vld [vmem:[%s3429 + $0xd0] sm:$0xff]
    %v7272 = vld [vmem:[%s3429 + $0xd8] sm:$0xff]
    %v7273 = vld [vmem:[%s3429 + $0xe0] sm:$0xff]
    %v7274 = vld [vmem:[%s3429 + $0xe8] sm:$0xff]
    %v7275 = vld [vmem:[%s3429 + $0xf0] sm:$0xff]
    %v7276 = vld [vmem:[%s3429 + $0xf8] sm:$0xff]
    %v7277 = vld [vmem:[%s3429 + $0x100] sm:$0xff]
    %v7278 = vld [vmem:[%s3429 + $0x108] sm:$0xff]
    %v7279 = vld [vmem:[%s3429 + $0x110] sm:$0xff]
    %v7280 = vld [vmem:[%s3429 + $0x118] sm:$0xff]
    %v7281 = vld [vmem:[%s3429 + $0x120] sm:$0xff]
    %v7282 = vld [vmem:[%s3429 + $0x128] sm:$0xff]
    %v7283 = vld [vmem:[%s3429 + $0x130] sm:$0xff]
    %v7284 = vld [vmem:[%s3429 + $0x138] sm:$0xff]
    %v7285 = vld [vmem:[%s3429 + $0x140] sm:$0xff]
    %v7286 = vld [vmem:[%s3429 + $0x148] sm:$0xff]
    %v7287 = vld [vmem:[%s3429 + $0x150] sm:$0xff]
    %v7288 = vld [vmem:[%s3429 + $0x158] sm:$0xff]
    %v7289 = vld [vmem:[%s3429 + $0x160] sm:$0xff]
    %v7290 = vld [vmem:[%s3429 + $0x168] sm:$0xff]
    %v7291 = vld [vmem:[%s3429 + $0x170] sm:$0xff]
    %v7292 = vld [vmem:[%s3429 + $0x178] sm:$0xff]
    %v7293 = vld [vmem:[%s3429 + $0x180] sm:$0xff]
    %v7294 = vld [vmem:[%s3429 + $0x188] sm:$0xff]
    %v7295 = vld [vmem:[%s3429 + $0x190] sm:$0xff]
    %v7296 = vld [vmem:[%s3429 + $0x198] sm:$0xff]
    %v7297 = vld [vmem:[%s3429 + $0x1a0] sm:$0xff]
    %v7298 = vld [vmem:[%s3429 + $0x1a8] sm:$0xff]
    %v7299 = vld [vmem:[%s3429 + $0x1b0] sm:$0xff]
    %v7300 = vld [vmem:[%s3429 + $0x1b8] sm:$0xff]
    %v7301 = vld [vmem:[%s3429 + $0x1c0] sm:$0xff]
    %v7302 = vld [vmem:[%s3429 + $0x1c8] sm:$0xff]
    %v7303 = vld [vmem:[%s3429 + $0x1d0] sm:$0xff]
    %v7304 = vld [vmem:[%s3429 + $0x1d8] sm:$0xff]
    %v7305 = vld [vmem:[%s3429 + $0x1e0] sm:$0xff]
    %v7306 = vld [vmem:[%s3429 + $0x1e8] sm:$0xff]
    %v7307 = vld [vmem:[%s3429 + $0x1f0] sm:$0xff]
    %v7308 = vld [vmem:[%s3429 + $0x1f8] sm:$0xff]
    %v7309 = vrot.slane %v6759, 2
    %v7310 = vrot.slane %v6760, 2
    %v7311 = vsel %vm800, %v7309, %v7310
    %v7312 = vrot.slane %v6807, 2
    %v7313 = vrot.slane %v6808, 2
    %v7314 = vsel %vm800, %v7312, %v7313
    %v7315 = vrot.slane %v6855, 2
    %v7316 = vrot.slane %v6856, 2
    %v7317 = vsel %vm800, %v7315, %v7316
    %v7318 = vrot.slane %v6903, 2
    %v7319 = vrot.slane %v6904, 2
    %v7320 = vsel %vm800, %v7318, %v7319
    %7329 = vmatpush.msra.mxu0 %v7260
    %7330 = vmatpush.msra.mxu0 %v7259
    %7331 = vmatpush.msra.mxu0 %v7258
    %7332 = vmatpush.msra.mxu0 %v7257
    %7333 = vmatpush.msra.mxu0 %v7256
    %7334 = vmatpush.msra.mxu0 %v7255
    %7335 = vmatpush.msra.mxu0 %v7254
    %7336 = vmatpush.msra.mxu0 %v7253
    %7337 = vmatpush.msra.mxu0 %v7252
    %7338 = vmatpush.msra.mxu0 %v7251
    %7339 = vmatpush.msra.mxu0 %v7250
    %7340 = vmatpush.msra.mxu0 %v7249
    %7341 = vmatpush.msra.mxu0 %v7248
    %7342 = vmatpush.msra.mxu0 %v7247
    %7343 = vmatpush.msra.mxu0 %v7246
    %7344 = vmatpush.msra.mxu0 %v7245
    %7345 = vmatmul.f32.gmra.mxu0 %v7311
    %v7346 = vpop.f32.mrf.mxu0
    %v7347 = vadd.f32 0.0, %v7346
    %7348 = vmatmul.f32.gmra.mxu0 %v7310
    %v7349 = vpop.f32.mrf.mxu0
    %v7350 = vadd.f32 0.0, %v7349
    %7351 = vdwg.mxu0
    %7352 = vmatpush.msra.mxu0 %v7276
    %7353 = vmatpush.msra.mxu0 %v7275
    %7354 = vmatpush.msra.mxu0 %v7274
    %7355 = vmatpush.msra.mxu0 %v7273
    %7356 = vmatpush.msra.mxu0 %v7272
    %7357 = vmatpush.msra.mxu0 %v7271
    %7358 = vmatpush.msra.mxu0 %v7270
    %7359 = vmatpush.msra.mxu0 %v7269
    %7360 = vmatpush.msra.mxu0 %v7268
    %7361 = vmatpush.msra.mxu0 %v7267
    %7362 = vmatpush.msra.mxu0 %v7266
    %7363 = vmatpush.msra.mxu0 %v7265
    %7364 = vmatpush.msra.mxu0 %v7264
    %7365 = vmatpush.msra.mxu0 %v7263
    %7366 = vmatpush.msra.mxu0 %v7262
    %7367 = vmatpush.msra.mxu0 %v7261
    %7368 = vmatmul.f32.gmra.mxu0 %v7314
    %v7369 = vpop.f32.mrf.mxu0
    %v7370 = vadd.f32 %v7347, %v7369
    %7371 = vmatmul.f32.gmra.mxu0 %v7313
    %v7372 = vpop.f32.mrf.mxu0
    %v7373 = vadd.f32 %v7350, %v7372
    %7374 = vdwg.mxu0
    %7375 = vmatpush.msra.mxu0 %v7292
    %7376 = vmatpush.msra.mxu0 %v7291
    %7377 = vmatpush.msra.mxu0 %v7290
    %7378 = vmatpush.msra.mxu0 %v7289
    %7379 = vmatpush.msra.mxu0 %v7288
    %7380 = vmatpush.msra.mxu0 %v7287
    %7381 = vmatpush.msra.mxu0 %v7286
    %7382 = vmatpush.msra.mxu0 %v7285
    %7383 = vmatpush.msra.mxu0 %v7284
    %7384 = vmatpush.msra.mxu0 %v7283
    %7385 = vmatpush.msra.mxu0 %v7282
    %7386 = vmatpush.msra.mxu0 %v7281
    %7387 = vmatpush.msra.mxu0 %v7280
    %7388 = vmatpush.msra.mxu0 %v7279
    %7389 = vmatpush.msra.mxu0 %v7278
    %7390 = vmatpush.msra.mxu0 %v7277
    %7391 = vmatmul.f32.gmra.mxu0 %v7317
    %v7392 = vpop.f32.mrf.mxu0
    %v7393 = vadd.f32 %v7370, %v7392
    %7394 = vmatmul.f32.gmra.mxu0 %v7316
    %v7395 = vpop.f32.mrf.mxu0
    %v7396 = vadd.f32 %v7373, %v7395
    %7397 = vdwg.mxu0
    %7398 = vmatpush.msra.mxu0 %v7308
    %7399 = vmatpush.msra.mxu0 %v7307
    %7400 = vmatpush.msra.mxu0 %v7306
    %7401 = vmatpush.msra.mxu0 %v7305
    %7402 = vmatpush.msra.mxu0 %v7304
    %7403 = vmatpush.msra.mxu0 %v7303
    %7404 = vmatpush.msra.mxu0 %v7302
    %7405 = vmatpush.msra.mxu0 %v7301
    %7406 = vmatpush.msra.mxu0 %v7300
    %7407 = vmatpush.msra.mxu0 %v7299
    %7408 = vmatpush.msra.mxu0 %v7298
    %7409 = vmatpush.msra.mxu0 %v7297
    %7410 = vmatpush.msra.mxu0 %v7296
    %7411 = vmatpush.msra.mxu0 %v7295
    %7412 = vmatpush.msra.mxu0 %v7294
    %7413 = vmatpush.msra.mxu0 %v7293
    %7414 = vmatmul.f32.gmra.mxu0 %v7320
    %v7415 = vpop.f32.mrf.mxu0
    %v7416 = vadd.f32 %v7393, %v7415
    %7417 = vmatmul.f32.gmra.mxu0 %v7319
    %v7418 = vpop.f32.mrf.mxu0
    %v7419 = vadd.f32 %v7396, %v7418
    %7420 = vdwg.mxu0
    %v7421 = vadd.f32 %v7240, %v7416
    %v7422 = vadd.f32 %v7243, %v7419
    %v7423 = vld [vmem:[%s3608] sm:$0xff]
    %v7424 = vld [vmem:[%s3608 + $0x8] sm:$0xff]
    %v7425 = vld [vmem:[%s3608 + $0x10] sm:$0xff]
    %v7426 = vld [vmem:[%s3608 + $0x18] sm:$0xff]
    %v7427 = vld [vmem:[%s3608 + $0x20] sm:$0xff]
    %v7428 = vld [vmem:[%s3608 + $0x28] sm:$0xff]
    %v7429 = vld [vmem:[%s3608 + $0x30] sm:$0xff]
    %v7430 = vld [vmem:[%s3608 + $0x38] sm:$0xff]
    %v7431 = vld [vmem:[%s3608 + $0x40] sm:$0xff]
    %v7432 = vld [vmem:[%s3608 + $0x48] sm:$0xff]
    %v7433 = vld [vmem:[%s3608 + $0x50] sm:$0xff]
    %v7434 = vld [vmem:[%s3608 + $0x58] sm:$0xff]
    %v7435 = vld [vmem:[%s3608 + $0x60] sm:$0xff]
    %v7436 = vld [vmem:[%s3608 + $0x68] sm:$0xff]
    %v7437 = vld [vmem:[%s3608 + $0x70] sm:$0xff]
    %v7438 = vld [vmem:[%s3608 + $0x78] sm:$0xff]
    %v7439 = vld [vmem:[%s3608 + $0x80] sm:$0xff]
    %v7440 = vld [vmem:[%s3608 + $0x88] sm:$0xff]
    %v7441 = vld [vmem:[%s3608 + $0x90] sm:$0xff]
    %v7442 = vld [vmem:[%s3608 + $0x98] sm:$0xff]
    %v7443 = vld [vmem:[%s3608 + $0xa0] sm:$0xff]
    %v7444 = vld [vmem:[%s3608 + $0xa8] sm:$0xff]
    %v7445 = vld [vmem:[%s3608 + $0xb0] sm:$0xff]
    %v7446 = vld [vmem:[%s3608 + $0xb8] sm:$0xff]
    %v7447 = vld [vmem:[%s3608 + $0xc0] sm:$0xff]
    %v7448 = vld [vmem:[%s3608 + $0xc8] sm:$0xff]
    %v7449 = vld [vmem:[%s3608 + $0xd0] sm:$0xff]
    %v7450 = vld [vmem:[%s3608 + $0xd8] sm:$0xff]
    %v7451 = vld [vmem:[%s3608 + $0xe0] sm:$0xff]
    %v7452 = vld [vmem:[%s3608 + $0xe8] sm:$0xff]
    %v7453 = vld [vmem:[%s3608 + $0xf0] sm:$0xff]
    %v7454 = vld [vmem:[%s3608 + $0xf8] sm:$0xff]
    %v7455 = vld [vmem:[%s3608 + $0x100] sm:$0xff]
    %v7456 = vld [vmem:[%s3608 + $0x108] sm:$0xff]
    %v7457 = vld [vmem:[%s3608 + $0x110] sm:$0xff]
    %v7458 = vld [vmem:[%s3608 + $0x118] sm:$0xff]
    %v7459 = vld [vmem:[%s3608 + $0x120] sm:$0xff]
    %v7460 = vld [vmem:[%s3608 + $0x128] sm:$0xff]
    %v7461 = vld [vmem:[%s3608 + $0x130] sm:$0xff]
    %v7462 = vld [vmem:[%s3608 + $0x138] sm:$0xff]
    %v7463 = vld [vmem:[%s3608 + $0x140] sm:$0xff]
    %v7464 = vld [vmem:[%s3608 + $0x148] sm:$0xff]
    %v7465 = vld [vmem:[%s3608 + $0x150] sm:$0xff]
    %v7466 = vld [vmem:[%s3608 + $0x158] sm:$0xff]
    %v7467 = vld [vmem:[%s3608 + $0x160] sm:$0xff]
    %v7468 = vld [vmem:[%s3608 + $0x168] sm:$0xff]
    %v7469 = vld [vmem:[%s3608 + $0x170] sm:$0xff]
    %v7470 = vld [vmem:[%s3608 + $0x178] sm:$0xff]
    %v7471 = vld [vmem:[%s3608 + $0x180] sm:$0xff]
    %v7472 = vld [vmem:[%s3608 + $0x188] sm:$0xff]
    %v7473 = vld [vmem:[%s3608 + $0x190] sm:$0xff]
    %v7474 = vld [vmem:[%s3608 + $0x198] sm:$0xff]
    %v7475 = vld [vmem:[%s3608 + $0x1a0] sm:$0xff]
    %v7476 = vld [vmem:[%s3608 + $0x1a8] sm:$0xff]
    %v7477 = vld [vmem:[%s3608 + $0x1b0] sm:$0xff]
    %v7478 = vld [vmem:[%s3608 + $0x1b8] sm:$0xff]
    %v7479 = vld [vmem:[%s3608 + $0x1c0] sm:$0xff]
    %v7480 = vld [vmem:[%s3608 + $0x1c8] sm:$0xff]
    %v7481 = vld [vmem:[%s3608 + $0x1d0] sm:$0xff]
    %v7482 = vld [vmem:[%s3608 + $0x1d8] sm:$0xff]
    %v7483 = vld [vmem:[%s3608 + $0x1e0] sm:$0xff]
    %v7484 = vld [vmem:[%s3608 + $0x1e8] sm:$0xff]
    %v7485 = vld [vmem:[%s3608 + $0x1f0] sm:$0xff]
    %v7486 = vld [vmem:[%s3608 + $0x1f8] sm:$0xff]
    %v7487 = vrot.slane %v6759, 3
    %v7488 = vrot.slane %v6760, 3
    %v7489 = vsel %vm1107, %v7487, %v7488
    %v7490 = vrot.slane %v6807, 3
    %v7491 = vrot.slane %v6808, 3
    %v7492 = vsel %vm1107, %v7490, %v7491
    %v7493 = vrot.slane %v6855, 3
    %v7494 = vrot.slane %v6856, 3
    %v7495 = vsel %vm1107, %v7493, %v7494
    %v7496 = vrot.slane %v6903, 3
    %v7497 = vrot.slane %v6904, 3
    %v7498 = vsel %vm1107, %v7496, %v7497
    %7507 = vmatpush.msra.mxu0 %v7438
    %7508 = vmatpush.msra.mxu0 %v7437
    %7509 = vmatpush.msra.mxu0 %v7436
    %7510 = vmatpush.msra.mxu0 %v7435
    %7511 = vmatpush.msra.mxu0 %v7434
    %7512 = vmatpush.msra.mxu0 %v7433
    %7513 = vmatpush.msra.mxu0 %v7432
    %7514 = vmatpush.msra.mxu0 %v7431
    %7515 = vmatpush.msra.mxu0 %v7430
    %7516 = vmatpush.msra.mxu0 %v7429
    %7517 = vmatpush.msra.mxu0 %v7428
    %7518 = vmatpush.msra.mxu0 %v7427
    %7519 = vmatpush.msra.mxu0 %v7426
    %7520 = vmatpush.msra.mxu0 %v7425
    %7521 = vmatpush.msra.mxu0 %v7424
    %7522 = vmatpush.msra.mxu0 %v7423
    %7523 = vmatmul.f32.gmra.mxu0 %v7489
    %v7524 = vpop.f32.mrf.mxu0
    %v7525 = vadd.f32 0.0, %v7524
    %7526 = vmatmul.f32.gmra.mxu0 %v7488
    %v7527 = vpop.f32.mrf.mxu0
    %v7528 = vadd.f32 0.0, %v7527
    %7529 = vdwg.mxu0
    %7530 = vmatpush.msra.mxu0 %v7454
    %7531 = vmatpush.msra.mxu0 %v7453
    %7532 = vmatpush.msra.mxu0 %v7452
    %7533 = vmatpush.msra.mxu0 %v7451
    %7534 = vmatpush.msra.mxu0 %v7450
    %7535 = vmatpush.msra.mxu0 %v7449
    %7536 = vmatpush.msra.mxu0 %v7448
    %7537 = vmatpush.msra.mxu0 %v7447
    %7538 = vmatpush.msra.mxu0 %v7446
    %7539 = vmatpush.msra.mxu0 %v7445
    %7540 = vmatpush.msra.mxu0 %v7444
    %7541 = vmatpush.msra.mxu0 %v7443
    %7542 = vmatpush.msra.mxu0 %v7442
    %7543 = vmatpush.msra.mxu0 %v7441
    %7544 = vmatpush.msra.mxu0 %v7440
    %7545 = vmatpush.msra.mxu0 %v7439
    %7546 = vmatmul.f32.gmra.mxu0 %v7492
    %v7547 = vpop.f32.mrf.mxu0
    %v7548 = vadd.f32 %v7525, %v7547
    %7549 = vmatmul.f32.gmra.mxu0 %v7491
    %v7550 = vpop.f32.mrf.mxu0
    %v7551 = vadd.f32 %v7528, %v7550
    %7552 = vdwg.mxu0
    %7553 = vmatpush.msra.mxu0 %v7470
    %7554 = vmatpush.msra.mxu0 %v7469
    %7555 = vmatpush.msra.mxu0 %v7468
    %7556 = vmatpush.msra.mxu0 %v7467
    %7557 = vmatpush.msra.mxu0 %v7466
    %7558 = vmatpush.msra.mxu0 %v7465
    %7559 = vmatpush.msra.mxu0 %v7464
    %7560 = vmatpush.msra.mxu0 %v7463
    %7561 = vmatpush.msra.mxu0 %v7462
    %7562 = vmatpush.msra.mxu0 %v7461
    %7563 = vmatpush.msra.mxu0 %v7460
    %7564 = vmatpush.msra.mxu0 %v7459
    %7565 = vmatpush.msra.mxu0 %v7458
    %7566 = vmatpush.msra.mxu0 %v7457
    %7567 = vmatpush.msra.mxu0 %v7456
    %7568 = vmatpush.msra.mxu0 %v7455
    %7569 = vmatmul.f32.gmra.mxu0 %v7495
    %v7570 = vpop.f32.mrf.mxu0
    %v7571 = vadd.f32 %v7548, %v7570
    %7572 = vmatmul.f32.gmra.mxu0 %v7494
    %v7573 = vpop.f32.mrf.mxu0
    %v7574 = vadd.f32 %v7551, %v7573
    %7575 = vdwg.mxu0
    %7576 = vmatpush.msra.mxu0 %v7486
    %7577 = vmatpush.msra.mxu0 %v7485
    %7578 = vmatpush.msra.mxu0 %v7484
    %7579 = vmatpush.msra.mxu0 %v7483
    %7580 = vmatpush.msra.mxu0 %v7482
    %7581 = vmatpush.msra.mxu0 %v7481
    %7582 = vmatpush.msra.mxu0 %v7480
    %7583 = vmatpush.msra.mxu0 %v7479
    %7584 = vmatpush.msra.mxu0 %v7478
    %7585 = vmatpush.msra.mxu0 %v7477
    %7586 = vmatpush.msra.mxu0 %v7476
    %7587 = vmatpush.msra.mxu0 %v7475
    %7588 = vmatpush.msra.mxu0 %v7474
    %7589 = vmatpush.msra.mxu0 %v7473
    %7590 = vmatpush.msra.mxu0 %v7472
    %7591 = vmatpush.msra.mxu0 %v7471
    %7592 = vmatmul.f32.gmra.mxu0 %v7498
    %v7593 = vpop.f32.mrf.mxu0
    %v7594 = vadd.f32 %v7571, %v7593
    %7595 = vmatmul.f32.gmra.mxu0 %v7497
    %v7596 = vpop.f32.mrf.mxu0
    %v7597 = vadd.f32 %v7574, %v7596
    %7598 = vdwg.mxu0
    %v7599 = vadd.f32 %v7421, %v7594
    %v7600 = vadd.f32 %v7422, %v7597
    %v7601 = vld [vmem:[%s3787] sm:$0xff]
    %v7602 = vld [vmem:[%s3787 + $0x8] sm:$0xff]
    %v7603 = vld [vmem:[%s3787 + $0x10] sm:$0xff]
    %v7604 = vld [vmem:[%s3787 + $0x18] sm:$0xff]
    %v7605 = vld [vmem:[%s3787 + $0x20] sm:$0xff]
    %v7606 = vld [vmem:[%s3787 + $0x28] sm:$0xff]
    %v7607 = vld [vmem:[%s3787 + $0x30] sm:$0xff]
    %v7608 = vld [vmem:[%s3787 + $0x38] sm:$0xff]
    %v7609 = vld [vmem:[%s3787 + $0x40] sm:$0xff]
    %v7610 = vld [vmem:[%s3787 + $0x48] sm:$0xff]
    %v7611 = vld [vmem:[%s3787 + $0x50] sm:$0xff]
    %v7612 = vld [vmem:[%s3787 + $0x58] sm:$0xff]
    %v7613 = vld [vmem:[%s3787 + $0x60] sm:$0xff]
    %v7614 = vld [vmem:[%s3787 + $0x68] sm:$0xff]
    %v7615 = vld [vmem:[%s3787 + $0x70] sm:$0xff]
    %v7616 = vld [vmem:[%s3787 + $0x78] sm:$0xff]
    %v7617 = vld [vmem:[%s3787 + $0x80] sm:$0xff]
    %v7618 = vld [vmem:[%s3787 + $0x88] sm:$0xff]
    %v7619 = vld [vmem:[%s3787 + $0x90] sm:$0xff]
    %v7620 = vld [vmem:[%s3787 + $0x98] sm:$0xff]
    %v7621 = vld [vmem:[%s3787 + $0xa0] sm:$0xff]
    %v7622 = vld [vmem:[%s3787 + $0xa8] sm:$0xff]
    %v7623 = vld [vmem:[%s3787 + $0xb0] sm:$0xff]
    %v7624 = vld [vmem:[%s3787 + $0xb8] sm:$0xff]
    %v7625 = vld [vmem:[%s3787 + $0xc0] sm:$0xff]
    %v7626 = vld [vmem:[%s3787 + $0xc8] sm:$0xff]
    %v7627 = vld [vmem:[%s3787 + $0xd0] sm:$0xff]
    %v7628 = vld [vmem:[%s3787 + $0xd8] sm:$0xff]
    %v7629 = vld [vmem:[%s3787 + $0xe0] sm:$0xff]
    %v7630 = vld [vmem:[%s3787 + $0xe8] sm:$0xff]
    %v7631 = vld [vmem:[%s3787 + $0xf0] sm:$0xff]
    %v7632 = vld [vmem:[%s3787 + $0xf8] sm:$0xff]
    %v7633 = vld [vmem:[%s3787 + $0x100] sm:$0xff]
    %v7634 = vld [vmem:[%s3787 + $0x108] sm:$0xff]
    %v7635 = vld [vmem:[%s3787 + $0x110] sm:$0xff]
    %v7636 = vld [vmem:[%s3787 + $0x118] sm:$0xff]
    %v7637 = vld [vmem:[%s3787 + $0x120] sm:$0xff]
    %v7638 = vld [vmem:[%s3787 + $0x128] sm:$0xff]
    %v7639 = vld [vmem:[%s3787 + $0x130] sm:$0xff]
    %v7640 = vld [vmem:[%s3787 + $0x138] sm:$0xff]
    %v7641 = vld [vmem:[%s3787 + $0x140] sm:$0xff]
    %v7642 = vld [vmem:[%s3787 + $0x148] sm:$0xff]
    %v7643 = vld [vmem:[%s3787 + $0x150] sm:$0xff]
    %v7644 = vld [vmem:[%s3787 + $0x158] sm:$0xff]
    %v7645 = vld [vmem:[%s3787 + $0x160] sm:$0xff]
    %v7646 = vld [vmem:[%s3787 + $0x168] sm:$0xff]
    %v7647 = vld [vmem:[%s3787 + $0x170] sm:$0xff]
    %v7648 = vld [vmem:[%s3787 + $0x178] sm:$0xff]
    %v7649 = vld [vmem:[%s3787 + $0x180] sm:$0xff]
    %v7650 = vld [vmem:[%s3787 + $0x188] sm:$0xff]
    %v7651 = vld [vmem:[%s3787 + $0x190] sm:$0xff]
    %v7652 = vld [vmem:[%s3787 + $0x198] sm:$0xff]
    %v7653 = vld [vmem:[%s3787 + $0x1a0] sm:$0xff]
    %v7654 = vld [vmem:[%s3787 + $0x1a8] sm:$0xff]
    %v7655 = vld [vmem:[%s3787 + $0x1b0] sm:$0xff]
    %v7656 = vld [vmem:[%s3787 + $0x1b8] sm:$0xff]
    %v7657 = vld [vmem:[%s3787 + $0x1c0] sm:$0xff]
    %v7658 = vld [vmem:[%s3787 + $0x1c8] sm:$0xff]
    %v7659 = vld [vmem:[%s3787 + $0x1d0] sm:$0xff]
    %v7660 = vld [vmem:[%s3787 + $0x1d8] sm:$0xff]
    %v7661 = vld [vmem:[%s3787 + $0x1e0] sm:$0xff]
    %v7662 = vld [vmem:[%s3787 + $0x1e8] sm:$0xff]
    %v7663 = vld [vmem:[%s3787 + $0x1f0] sm:$0xff]
    %v7664 = vld [vmem:[%s3787 + $0x1f8] sm:$0xff]
    %v7665 = vrot.slane %v6759, 4
    %v7666 = vrot.slane %v6760, 4
    %v7667 = vsel %vm1414, %v7665, %v7666
    %v7668 = vrot.slane %v6807, 4
    %v7669 = vrot.slane %v6808, 4
    %v7670 = vsel %vm1414, %v7668, %v7669
    %v7671 = vrot.slane %v6855, 4
    %v7672 = vrot.slane %v6856, 4
    %v7673 = vsel %vm1414, %v7671, %v7672
    %v7674 = vrot.slane %v6903, 4
    %v7675 = vrot.slane %v6904, 4
    %v7676 = vsel %vm1414, %v7674, %v7675
    %7685 = vmatpush.msra.mxu0 %v7616
    %7686 = vmatpush.msra.mxu0 %v7615
    %7687 = vmatpush.msra.mxu0 %v7614
    %7688 = vmatpush.msra.mxu0 %v7613
    %7689 = vmatpush.msra.mxu0 %v7612
    %7690 = vmatpush.msra.mxu0 %v7611
    %7691 = vmatpush.msra.mxu0 %v7610
    %7692 = vmatpush.msra.mxu0 %v7609
    %7693 = vmatpush.msra.mxu0 %v7608
    %7694 = vmatpush.msra.mxu0 %v7607
    %7695 = vmatpush.msra.mxu0 %v7606
    %7696 = vmatpush.msra.mxu0 %v7605
    %7697 = vmatpush.msra.mxu0 %v7604
    %7698 = vmatpush.msra.mxu0 %v7603
    %7699 = vmatpush.msra.mxu0 %v7602
    %7700 = vmatpush.msra.mxu0 %v7601
    %7701 = vmatmul.f32.gmra.mxu0 %v7667
    %v7702 = vpop.f32.mrf.mxu0
    %v7703 = vadd.f32 0.0, %v7702
    %7704 = vmatmul.f32.gmra.mxu0 %v7666
    %v7705 = vpop.f32.mrf.mxu0
    %v7706 = vadd.f32 0.0, %v7705
    %7707 = vdwg.mxu0
    %7708 = vmatpush.msra.mxu0 %v7632
    %7709 = vmatpush.msra.mxu0 %v7631
    %7710 = vmatpush.msra.mxu0 %v7630
    %7711 = vmatpush.msra.mxu0 %v7629
    %7712 = vmatpush.msra.mxu0 %v7628
    %7713 = vmatpush.msra.mxu0 %v7627
    %7714 = vmatpush.msra.mxu0 %v7626
    %7715 = vmatpush.msra.mxu0 %v7625
    %7716 = vmatpush.msra.mxu0 %v7624
    %7717 = vmatpush.msra.mxu0 %v7623
    %7718 = vmatpush.msra.mxu0 %v7622
    %7719 = vmatpush.msra.mxu0 %v7621
    %7720 = vmatpush.msra.mxu0 %v7620
    %7721 = vmatpush.msra.mxu0 %v7619
    %7722 = vmatpush.msra.mxu0 %v7618
    %7723 = vmatpush.msra.mxu0 %v7617
    %7724 = vmatmul.f32.gmra.mxu0 %v7670
    %v7725 = vpop.f32.mrf.mxu0
    %v7726 = vadd.f32 %v7703, %v7725
    %7727 = vmatmul.f32.gmra.mxu0 %v7669
    %v7728 = vpop.f32.mrf.mxu0
    %v7729 = vadd.f32 %v7706, %v7728
    %7730 = vdwg.mxu0
    %7731 = vmatpush.msra.mxu0 %v7648
    %7732 = vmatpush.msra.mxu0 %v7647
    %7733 = vmatpush.msra.mxu0 %v7646
    %7734 = vmatpush.msra.mxu0 %v7645
    %7735 = vmatpush.msra.mxu0 %v7644
    %7736 = vmatpush.msra.mxu0 %v7643
    %7737 = vmatpush.msra.mxu0 %v7642
    %7738 = vmatpush.msra.mxu0 %v7641
    %7739 = vmatpush.msra.mxu0 %v7640
    %7740 = vmatpush.msra.mxu0 %v7639
    %7741 = vmatpush.msra.mxu0 %v7638
    %7742 = vmatpush.msra.mxu0 %v7637
    %7743 = vmatpush.msra.mxu0 %v7636
    %7744 = vmatpush.msra.mxu0 %v7635
    %7745 = vmatpush.msra.mxu0 %v7634
    %7746 = vmatpush.msra.mxu0 %v7633
    %7747 = vmatmul.f32.gmra.mxu0 %v7673
    %v7748 = vpop.f32.mrf.mxu0
    %v7749 = vadd.f32 %v7726, %v7748
    %7750 = vmatmul.f32.gmra.mxu0 %v7672
    %v7751 = vpop.f32.mrf.mxu0
    %v7752 = vadd.f32 %v7729, %v7751
    %7753 = vdwg.mxu0
    %7754 = vmatpush.msra.mxu0 %v7664
    %7755 = vmatpush.msra.mxu0 %v7663
    %7756 = vmatpush.msra.mxu0 %v7662
    %7757 = vmatpush.msra.mxu0 %v7661
    %7758 = vmatpush.msra.mxu0 %v7660
    %7759 = vmatpush.msra.mxu0 %v7659
    %7760 = vmatpush.msra.mxu0 %v7658
    %7761 = vmatpush.msra.mxu0 %v7657
    %7762 = vmatpush.msra.mxu0 %v7656
    %7763 = vmatpush.msra.mxu0 %v7655
    %7764 = vmatpush.msra.mxu0 %v7654
    %7765 = vmatpush.msra.mxu0 %v7653
    %7766 = vmatpush.msra.mxu0 %v7652
    %7767 = vmatpush.msra.mxu0 %v7651
    %7768 = vmatpush.msra.mxu0 %v7650
    %7769 = vmatpush.msra.mxu0 %v7649
    %7770 = vmatmul.f32.gmra.mxu0 %v7676
    %v7771 = vpop.f32.mrf.mxu0
    %v7772 = vadd.f32 %v7749, %v7771
    %7773 = vmatmul.f32.gmra.mxu0 %v7675
    %v7774 = vpop.f32.mrf.mxu0
    %v7775 = vadd.f32 %v7752, %v7774
    %7776 = vdwg.mxu0
    %v7777 = vadd.f32 %v7599, %v7772
    %v7778 = vadd.f32 %v7600, %v7775
    %v7779 = vadd.f32 %v7777, %v3966
    %v7780 = vadd.f32 %v7778, %v3966
    %s7781 = scalar_lea.vmem %s7, 16
    %7782 = vst.msk [vmem:[%s7781] sm:$0xff] %vm3969, %v7779
    %7783 = vst.msk [vmem:[%s7781 + $0x8] sm:$0xf] %vm3971, %v7780
    // Predicated region
    $region46: #{ndvi_model_net.1} parent=1 // pred_check
      _
    $region47: #{ndvi_model_net.1} parent=1 // pred_check_branch
      %7785 = sbr.rel (0) target = $region49
    $region48: #{ndvi_model_net.1} parent=1 // pred_region
      _
    $region49: #{ndvi_model_net.1} parent=1 // pred_fallthru
      _
    // Predicated region
    $region50: #{ndvi_model_net.1} parent=1 // pred_check
      _
    $region51: #{ndvi_model_net.1} parent=1 // pred_check_branch
      %7787 = sbr.rel (0) target = $region53
    $region52: #{ndvi_model_net.1} parent=1 // pred_region
      _
    $region53: #{ndvi_model_net.1} parent=1 // pred_fallthru
      _
    %7788 = vsyncpa [#allocation4], 1
    %7789 = vsyncpa [#allocation6], 1
    %7790 = vsyncpa [#allocation9], 1

</llo_original>
